<compile_context>
chip_gen: v5e
topology: v5e:2x2
jax: 0.10.0
libtpu: 0.0.40
codegen_flags: <defaults>
</compile_context>

<pallas_src>
import jax
import jax.numpy as jnp
from jax import lax
from jax.experimental import pallas as pl
from jax.experimental.pallas import tpu as pltpu


def _encoder_x_kernel(x_ref, w_ref, b_ref, raw_ref, exp_ref):
    # grid = (head j, reduction step k); outputs are resident across k.
    k = pl.program_id(1)

    @pl.when(k == 0)
    def _():
        raw_ref[...] = jnp.zeros_like(raw_ref)

    # (B, tk) x (L, tk) contracting the lane-dense K axis -> (B, L), f32 acc.
    raw_ref[...] += lax.dot_general(
        x_ref[...], w_ref[...],
        dimension_numbers=(((1,), (1,)), ((), ())),
        preferred_element_type=jnp.float32,
    )

    @pl.when(k == pl.num_programs(1) - 1)
    def _():
        out = raw_ref[...] + b_ref[...]          # bias broadcast (1, L)
        raw_ref[...] = out
        exp_ref[...] = jnp.exp(out)              # scale head uses exp(logvar)


def encoder_x_forward(x, w1, b1, w2, b2, *, k_tiles=1):
    """x: (B, F); w1/w2: (L, F) (PyTorch nn.Linear layout); b1/b2: (L,).

    Returns (mu, logvar, scale) with scale = exp(logvar), matching
    Independent(Normal(loc=mu, scale=torch.exp(logvar)), 1).
    """
    B, F = x.shape
    L, Fw = w1.shape
    assert Fw == F and w2.shape == (L, F) and b1.shape == (L,) and b2.shape == (L,)
    assert F % k_tiles == 0
    tk = F // k_tiles
    assert tk % 128 == 0, "K tile must be lane-aligned (multiple of 128)"

    # bf16 storage halves the HBM weight stream; MXU accumulates in f32.
    x_bf = x.astype(jnp.bfloat16)
    w = jnp.stack([w1, w2], axis=0).astype(jnp.bfloat16)             # (2, L, F)
    b = jnp.stack([b1, b2], axis=0).reshape(2, 1, L).astype(jnp.float32)

    out_shapes = (
        jax.ShapeDtypeStruct((2, B, L), jnp.float32),   # [0]=mu, [1]=logvar
        jax.ShapeDtypeStruct((2, B, L), jnp.float32),   # exp(head) per head
    )

    grid_spec = pltpu.PrefetchScalarGridSpec(
        num_scalar_prefetch=0,
        grid=(2, k_tiles),                      # (head, K reduction) - K last
        in_specs=[
            pl.BlockSpec((B, tk), lambda j, k: (0, k)),            # x tile
            pl.BlockSpec((None, L, tk), lambda j, k: (j, 0, k)),   # W head tile
            pl.BlockSpec((None, 1, L), lambda j, k: (j, 0, 0)),    # bias head
        ],
        out_specs=[
            pl.BlockSpec((None, B, L), lambda j, k: (j, 0, 0)),    # raw (pre-exp)
            pl.BlockSpec((None, B, L), lambda j, k: (j, 0, 0)),    # exp(raw)
        ],
    )

    raw, expv = pl.pallas_call(
        _encoder_x_kernel,
        out_shape=out_shapes,
        grid_spec=grid_spec,
        compiler_params=pltpu.CompilerParams(
            dimension_semantics=("parallel", "arbitrary")),
    )(x_bf, w, b)

    mu = raw[0]
    logvar = raw[1]
    scale = expv[1]
    return mu, logvar, scale


if __name__ == "__main__":
    # Module hyper-params implied by __init__/forward: fc1/fc2 = Linear(768*7*7, latent)
    B = 2
    F = 768 * 7 * 7          # 37632
    LATENT = 32

    key = jax.random.PRNGKey(0)
    kx, kw1, kb1, kw2, kb2 = jax.random.split(key, 5)

    # deterministic synthetic parameters (small scale keeps exp(logvar) finite)
    x = jax.random.normal(kx, (B, F), dtype=jnp.float32)
    w1 = 0.01 * jax.random.normal(kw1, (LATENT, F), dtype=jnp.float32)   # (out, in)
    b1 = 0.01 * jax.random.normal(kb1, (LATENT,), dtype=jnp.float32)
    w2 = 0.01 * jax.random.normal(kw2, (LATENT, F), dtype=jnp.float32)
    b2 = 0.01 * jax.random.normal(kb2, (LATENT,), dtype=jnp.float32)

    mu, logvar, scale = encoder_x_forward(x, w1, b1, w2, b2)
    jax.block_until_ready((mu, logvar, scale))

    # reference in plain JAX on the same bf16-rounded operands
    xr = x.astype(jnp.bfloat16).astype(jnp.float32)
    w1r = w1.astype(jnp.bfloat16).astype(jnp.float32)
    w2r = w2.astype(jnp.bfloat16).astype(jnp.float32)
    mu_ref = jnp.dot(xr, w1r.T, precision=lax.Precision.HIGHEST) + b1
    lv_ref = jnp.dot(xr, w2r.T, precision=lax.Precision.HIGHEST) + b2

    assert jnp.allclose(mu, mu_ref, atol=1e-2, rtol=1e-2)
    assert jnp.allclose(logvar, lv_ref, atol=1e-2, rtol=1e-2)
    assert jnp.allclose(scale, jnp.exp(lv_ref), atol=1e-2, rtol=1e-2)

    print("KERNEL_OK")
</pallas_src>

<mosaic_0001>
module attributes {stable_mosaic.version = 11 : i64} {
  func.func @_encoder_x_kernel(%arg0: i32, %arg1: i32, %arg2: memref<2x37632xbf16, #tpu.memory_space<vmem>>, %arg3: memref<1x32x37632xbf16, #tpu.memory_space<vmem>>, %arg4: memref<1x1x32xf32, #tpu.memory_space<vmem>>, %arg5: memref<1x2x32xf32, #tpu.memory_space<vmem>>, %arg6: memref<1x2x32xf32, #tpu.memory_space<vmem>>) attributes {dimension_semantics = [#tpu.dimension_semantics<parallel>, #tpu.dimension_semantics<arbitrary>], iteration_bounds = array<i64: 2, 1>, scalar_prefetch = 0 : i64, scratch_operands = 0 : i64, tpu.core_type = #tpu.core_type<tc>, window_params = [{transform_indices = @transform_0, window_bounds = array<i64: 2, 37632>}, {transform_indices = @transform_1, window_bounds = array<i64: 1, 32, 37632>}, {transform_indices = @transform_2, window_bounds = array<i64: 1, 1, 32>}, {transform_indices = @transform_3, window_bounds = array<i64: 1, 2, 32>}, {transform_indices = @transform_4, window_bounds = array<i64: 1, 2, 32>}]} {
    %c0_i32 = arith.constant 0 : i32
    %0 = arith.cmpi eq, %arg1, %c0_i32 : i32
    %1 = arith.extui %0 : i1 to i32
    %c0_i32_0 = arith.constant 0 : i32
    %2 = arith.cmpi ne, %1, %c0_i32_0 : i32
    scf.if %2 {
      %cst_13 = arith.constant 0.000000e+00 : f32
      %16 = vector.broadcast %cst_13 : f32 to vector<2x32xf32>
      %c0_14 = arith.constant 0 : index
      %c0_15 = arith.constant 0 : index
      %c0_16 = arith.constant 0 : index
      %17 = vector.load %arg5[%c0_14, %c0_15, %c0_16] : memref<1x2x32xf32, #tpu.memory_space<vmem>>, vector<1x2x32xf32>
      %18 = vector.shape_cast %17 : vector<1x2x32xf32> to vector<2x32xf32>
      %19 = vector.shape_cast %16 : vector<2x32xf32> to vector<1x2x32xf32>
      tpu.vector_store %arg5[%c0_14, %c0_15, %c0_16], %19 {strides = array<i32>} : memref<1x2x32xf32, #tpu.memory_space<vmem>>, vector<1x2x32xf32>,
    } else {
    }
    %c0 = arith.constant 0 : index
    %c0_1 = arith.constant 0 : index
    %c0_2 = arith.constant 0 : index
    %3 = vector.load %arg5[%c0, %c0_1, %c0_2] : memref<1x2x32xf32, #tpu.memory_space<vmem>>, vector<1x2x32xf32>
    %4 = vector.shape_cast %3 : vector<1x2x32xf32> to vector<2x32xf32>
    %c0_3 = arith.constant 0 : index
    %c0_4 = arith.constant 0 : index
    %5 = vector.load %arg2[%c0_3, %c0_4] : memref<2x37632xbf16, #tpu.memory_space<vmem>>, vector<2x37632xbf16>
    %c0_5 = arith.constant 0 : index
    %c0_6 = arith.constant 0 : index
    %c0_7 = arith.constant 0 : index
    %6 = vector.load %arg3[%c0_5, %c0_6, %c0_7] : memref<1x32x37632xbf16, #tpu.memory_space<vmem>>, vector<1x32x37632xbf16>
    %7 = vector.shape_cast %6 : vector<1x32x37632xbf16> to vector<32x37632xbf16>
    %cst = arith.constant dense<0.000000e+00> : vector<2x32xf32>
    %8 = tpu.matmul %5, %7, %cst {dimension_numbers = #tpu.dot_dimension_numbers<[1], [1], [0], [0], [0, 0, 1, 0], [], []>} : vector<2x37632xbf16>, vector<32x37632xbf16>, vector<2x32xf32> -> vector<2x32xf32>
    %9 = arith.addf %4, %8 : vector<2x32xf32>
    %c0_8 = arith.constant 0 : index
    %c0_9 = arith.constant 0 : index
    %c0_10 = arith.constant 0 : index
    %10 = vector.load %arg5[%c0_8, %c0_9, %c0_10] : memref<1x2x32xf32, #tpu.memory_space<vmem>>, vector<1x2x32xf32>
    %11 = vector.shape_cast %10 : vector<1x2x32xf32> to vector<2x32xf32>
    %12 = vector.shape_cast %9 : vector<2x32xf32> to vector<1x2x32xf32>
    tpu.vector_store %arg5[%c0_8, %c0_9, %c0_10], %12 {strides = array<i32>} : memref<1x2x32xf32, #tpu.memory_space<vmem>>, vector<1x2x32xf32>,
    %c0_i32_11 = arith.constant 0 : i32
    %13 = arith.cmpi eq, %arg1, %c0_i32_11 : i32
    %14 = arith.extui %13 : i1 to i32
    %c0_i32_12 = arith.constant 0 : i32
    %15 = arith.cmpi ne, %14, %c0_i32_12 : i32
    scf.if %15 {
      %c0_13 = arith.constant 0 : index
      %c0_14 = arith.constant 0 : index
      %c0_15 = arith.constant 0 : index
      %16 = vector.load %arg5[%c0_13, %c0_14, %c0_15] : memref<1x2x32xf32, #tpu.memory_space<vmem>>, vector<1x2x32xf32>
      %17 = vector.shape_cast %16 : vector<1x2x32xf32> to vector<2x32xf32>
      %c0_16 = arith.constant 0 : index
      %c0_17 = arith.constant 0 : index
      %c0_18 = arith.constant 0 : index
      %18 = vector.load %arg4[%c0_16, %c0_17, %c0_18] : memref<1x1x32xf32, #tpu.memory_space<vmem>>, vector<1x1x32xf32>
      %19 = vector.shape_cast %18 : vector<1x1x32xf32> to vector<1x32xf32>
      %20 = vector.broadcast %19 : vector<1x32xf32> to vector<2x32xf32>
      %21 = arith.addf %17, %20 : vector<2x32xf32>
      %c0_19 = arith.constant 0 : index
      %c0_20 = arith.constant 0 : index
      %c0_21 = arith.constant 0 : index
      %22 = vector.load %arg5[%c0_19, %c0_20, %c0_21] : memref<1x2x32xf32, #tpu.memory_space<vmem>>, vector<1x2x32xf32>
      %23 = vector.shape_cast %22 : vector<1x2x32xf32> to vector<2x32xf32>
      %24 = vector.shape_cast %21 : vector<2x32xf32> to vector<1x2x32xf32>
      tpu.vector_store %arg5[%c0_19, %c0_20, %c0_21], %24 {strides = array<i32>} : memref<1x2x32xf32, #tpu.memory_space<vmem>>, vector<1x2x32xf32>,
      %25 = math.exp %21 : vector<2x32xf32>
      %c0_22 = arith.constant 0 : index
      %c0_23 = arith.constant 0 : index
      %c0_24 = arith.constant 0 : index
      %26 = vector.load %arg6[%c0_22, %c0_23, %c0_24] : memref<1x2x32xf32, #tpu.memory_space<vmem>>, vector<1x2x32xf32>
      %27 = vector.shape_cast %26 : vector<1x2x32xf32> to vector<2x32xf32>
      %28 = vector.shape_cast %25 : vector<2x32xf32> to vector<1x2x32xf32>
      tpu.vector_store %arg6[%c0_22, %c0_23, %c0_24], %28 {strides = array<i32>} : memref<1x2x32xf32, #tpu.memory_space<vmem>>, vector<1x2x32xf32>,
    } else {
    }
    return
  }
  func.func @transform_0(%arg0: i32, %arg1: i32) -> (i32, i32) {
    %c0_i32 = arith.constant 0 : i32
    %c0_i32_0 = arith.constant 0 : i32
    return %c0_i32, %arg1 : i32, i32
  }
  func.func @transform_1(%arg0: i32, %arg1: i32) -> (i32, i32, i32) {
    %c0_i32 = arith.constant 0 : i32
    %c0_i32_0 = arith.constant 0 : i32
    return %arg0, %c0_i32, %arg1 : i32, i32, i32
  }
  func.func @transform_2(%arg0: i32, %arg1: i32) -> (i32, i32, i32) {
    %c0_i32 = arith.constant 0 : i32
    %c0_i32_0 = arith.constant 0 : i32
    %c0_i32_1 = arith.constant 0 : i32
    return %arg0, %c0_i32, %c0_i32_0 : i32, i32, i32
  }
  func.func @transform_3(%arg0: i32, %arg1: i32) -> (i32, i32, i32) {
    %c0_i32 = arith.constant 0 : i32
    %c0_i32_0 = arith.constant 0 : i32
    %c0_i32_1 = arith.constant 0 : i32
    return %arg0, %c0_i32, %c0_i32_0 : i32, i32, i32
  }
  func.func @transform_4(%arg0: i32, %arg1: i32) -> (i32, i32, i32) {
    %c0_i32 = arith.constant 0 : i32
    %c0_i32_0 = arith.constant 0 : i32
    %c0_i32_1 = arith.constant 0 : i32
    return %arg0, %c0_i32, %c0_i32_0 : i32, i32, i32
  }
}

</mosaic_0001>

<llo_original>
// kernel: tpu_custom_call.1
$region0: #{tpu_custom_call.1}
  #allocation0 [shape = 'u32[]', space=smem, size = 0x4, offset = 0x4, fixed_abs, tag = 'smem constant byte address 0x4 - core index']
  #allocation1 [shape = 'u32[72,128]{1,0:T(1,128)}', space=vmem, size = 0x9000, scoped, tag = 'internal scratch']
  %s0 = inlined_call_operand.hbm [shape: bf16[2,37632], index: 0, kind: input, shape index: {}]
  %s1 = inlined_call_operand.hbm [shape: bf16[2,32,37632], index: 1, kind: input, shape index: {}]
  %s2 = inlined_call_operand.hbm [shape: f32[2,1,32], index: 2, kind: input, shape index: {}]
  %s3 = inlined_call_operand.hbm [shape: f32[2,2,32], index: 3, kind: output, shape index: {0}]
  %s4 = inlined_call_operand.hbm [shape: f32[2,2,32], index: 4, kind: output, shape index: {1}]
  %5 = xla_tuple %s3, %s4
  %s6 = sld [smem:[#allocation0]]
  $region73: #{tpu_custom_call.1} parent=0
    _
  %s8 = ssub.s32 1, %s6
  %s9 = scalar_select 0, %s8, %s6
  $region1: #{tpu_custom_call.1} parent=0
    #allocation2 [shape = 'u8[150528]{0}', space=vmem, size = 0x24c00, scoped, tag = 'input window, operand 0, single buffered']
    #allocation3 [shape = 's32[2]{0}', space=sflag, size = 0x8, scoped, tag = 'scoped memory for tpu_custom_call.1']
    #allocation4 [shape = 's32[2]{0}', space=sflag, size = 0x8, scoped, tag = 'scoped memory for tpu_custom_call.1']
    #allocation5 [shape = 'u8[4816896]{0}', space=vmem, size = 0x498000, scoped, tag = 'input window, operand 1']
    #allocation6 [shape = 's32[2]{0}', space=sflag, size = 0x8, scoped, tag = 'scoped memory for tpu_custom_call.1']
    #allocation7 [shape = 'u8[1024]{0}', space=vmem, size = 0x400, scoped, tag = 'input window, operand 2']
    #allocation8 [shape = 'u8[2048]{0}', space=vmem, size = 0x800, scoped, tag = 'output window, operand 0']
    #allocation9 [shape = 'u8[2048]{0}', space=vmem, size = 0x800, scoped, tag = 'output window, operand 1']
    #allocation10 [shape = 's32[2]{0}', space=sflag, size = 0x8, scoped, tag = 'scoped memory for tpu_custom_call.1']
    %10 = vsyncpa [#allocation3], 0
    %11 = vsyncpa [#allocation6], 0
    %s12 = scalar_lea.sflag [#allocation6], 1
    %13 = vsyncpa %s12, 0
    %14 = vsyncpa [#allocation4], 0
    %s15 = scalar_lea.sflag [#allocation4], 1
    %16 = vsyncpa %s15, 0
    %17 = vsyncpa [#allocation10], 0
    %s18 = scalar_lea.sflag [#allocation10], 1
    %19 = vsyncpa %s18, 0
    loop: start=0, step=1, limit=4
    $region2: #{tpu_custom_call.1} parent=1 // loop_pre_header
      _
    $region3: #{tpu_custom_call.1} parent=1 // loop_header
      %s21 = sphi 0, %s25
      %p22 = scmp.ge.s32.totalorder %s21, 4
      %s28 = sphi 0, %s40
      %s29 = sphi 0, %s36
      %s30 = sphi 0, %s28
      %s31 = sphi 0, %s29
      %s32 = sphi 0, %s30
      %s33 = sphi 0, %s31
      %s43 = sphi 0, %s45
      %s46 = sphi 0, %s43
      %s47 = sphi 0, %s46
      %s63 = sphi 0, %s47
      %s71 = sphi 0, %s73
      %s74 = sphi 0, %s71
      %s75 = sphi 0, %s74
      %s91 = sphi 0, %s75
      %s97 = sphi 0, %s99
      %s100 = sphi 0, %s97
      %s101 = sphi 0, %s100
      %s117 = sphi 0, %s101
      %s123 = sphi 0, %s125
      %s126 = sphi 0, %s123
      %s127 = sphi 0, %s126
      %s143 = sphi 0, %s127
      %s149 = sphi 0, %s151
      %s152 = sphi 0, %s149
      %s153 = sphi 0, %s152
      %s169 = sphi 0, %s153
    $region4: #{tpu_custom_call.1} parent=1 // loop_header_branch
      %24 = sbr.rel (%p22) target = $region8
    $region5: #{tpu_custom_call.1} parent=1 // loop_body
      %s26 = ssub.s32 %s21, 1
      %s27 = ssub.s32 %s21, 2
      %s34 = sadd.s32 1, %s29
      %p35 = scmp.ge.s32.totalorder %s34, 1
      %s36 = scalar_select %p35, 0, %s34
      %s37 = sadd.s32 1, %s28
      %s38 = scalar_select %p35, %s37, %s28
      %p39 = scmp.ge.s32.totalorder %s38, 2
      %s40 = scalar_select %p39, 0, %s38
      %s41 = ssub.s32 %s29, %s36
      %p42 = scmp.eq.s32.totalorder %s41, 0
      %s44 = sadd.s32 %s43, 1
      %s45 = scalar_select %p42, %s43, %s44
      %p48 = pneg %p42
      %p49 = scmp.eq.s32.totalorder %s21, 1
      %p50 = por %p48, %p49
      %p51 = scmp.ne.s32.totalorder %s43, %s46
      %p52 = scmp.eq.s32.totalorder %s21, 0
      %p53 = por %p51, %p52
      %p54 = scmp.ne.s32.totalorder %s43, %s46
      %p55 = scmp.eq.s32.totalorder %s26, 1
      %p56 = por %p54, %p55
      %p57 = scmp.ne.s32.totalorder %s46, %s47
      %p58 = scmp.eq.s32.totalorder %s26, 0
      %p59 = por %p57, %p58
      %p60 = scmp.ne.s32.totalorder %s46, %s47
      %p61 = scmp.eq.s32.totalorder %s27, 1
      %p62 = por %p60, %p61
      %p64 = scmp.ne.s32.totalorder %s47, %s63
      %p65 = scmp.eq.s32.totalorder %s27, 0
      %p66 = por %p64, %p65
      %s67 = ssub.s32 %s28, %s40
      %s68 = ssub.s32 %s29, %s36
      %s69 = sor.u32 %s67, %s68
      %p70 = scmp.eq.s32.totalorder %s69, 0
      %s72 = sadd.s32 %s71, 1
      %s73 = scalar_select %p70, %s71, %s72
      %p76 = pneg %p70
      %p77 = scmp.eq.s32.totalorder %s21, 1
      %p78 = por %p76, %p77
      %p79 = scmp.ne.s32.totalorder %s71, %s74
      %p80 = scmp.eq.s32.totalorder %s21, 0
      %p81 = por %p79, %p80
      %p82 = scmp.ne.s32.totalorder %s71, %s74
      %p83 = scmp.eq.s32.totalorder %s26, 1
      %p84 = por %p82, %p83
      %p85 = scmp.ne.s32.totalorder %s74, %s75
      %p86 = scmp.eq.s32.totalorder %s26, 0
      %p87 = por %p85, %p86
      %p88 = scmp.ne.s32.totalorder %s74, %s75
      %p89 = scmp.eq.s32.totalorder %s27, 1
      %p90 = por %p88, %p89
      %p92 = scmp.ne.s32.totalorder %s75, %s91
      %p93 = scmp.eq.s32.totalorder %s27, 0
      %p94 = por %p92, %p93
      %s95 = ssub.s32 %s28, %s40
      %p96 = scmp.eq.s32.totalorder %s95, 0
      %s98 = sadd.s32 %s97, 1
      %s99 = scalar_select %p96, %s97, %s98
      %p102 = pneg %p96
      %p103 = scmp.eq.s32.totalorder %s21, 1
      %p104 = por %p102, %p103
      %p105 = scmp.ne.s32.totalorder %s97, %s100
      %p106 = scmp.eq.s32.totalorder %s21, 0
      %p107 = por %p105, %p106
      %p108 = scmp.ne.s32.totalorder %s97, %s100
      %p109 = scmp.eq.s32.totalorder %s26, 1
      %p110 = por %p108, %p109
      %p111 = scmp.ne.s32.totalorder %s100, %s101
      %p112 = scmp.eq.s32.totalorder %s26, 0
      %p113 = por %p111, %p112
      %p114 = scmp.ne.s32.totalorder %s100, %s101
      %p115 = scmp.eq.s32.totalorder %s27, 1
      %p116 = por %p114, %p115
      %p118 = scmp.ne.s32.totalorder %s101, %s117
      %p119 = scmp.eq.s32.totalorder %s27, 0
      %p120 = por %p118, %p119
      %s121 = ssub.s32 %s28, %s40
      %p122 = scmp.eq.s32.totalorder %s121, 0
      %s124 = sadd.s32 %s123, 1
      %s125 = scalar_select %p122, %s123, %s124
      %p128 = pneg %p122
      %p129 = scmp.eq.s32.totalorder %s21, 1
      %p130 = por %p128, %p129
      %p131 = scmp.ne.s32.totalorder %s123, %s126
      %p132 = scmp.eq.s32.totalorder %s21, 0
      %p133 = por %p131, %p132
      %p134 = scmp.ne.s32.totalorder %s123, %s126
      %p135 = scmp.eq.s32.totalorder %s26, 1
      %p136 = por %p134, %p135
      %p137 = scmp.ne.s32.totalorder %s126, %s127
      %p138 = scmp.eq.s32.totalorder %s26, 0
      %p139 = por %p137, %p138
      %p140 = scmp.ne.s32.totalorder %s126, %s127
      %p141 = scmp.eq.s32.totalorder %s27, 1
      %p142 = por %p140, %p141
      %p144 = scmp.ne.s32.totalorder %s127, %s143
      %p145 = scmp.eq.s32.totalorder %s27, 0
      %p146 = por %p144, %p145
      %s147 = ssub.s32 %s28, %s40
      %p148 = scmp.eq.s32.totalorder %s147, 0
      %s150 = sadd.s32 %s149, 1
      %s151 = scalar_select %p148, %s149, %s150
      %p154 = pneg %p148
      %p155 = scmp.eq.s32.totalorder %s21, 1
      %p156 = por %p154, %p155
      %p157 = scmp.ne.s32.totalorder %s149, %s152
      %p158 = scmp.eq.s32.totalorder %s21, 0
      %p159 = por %p157, %p158
      %p160 = scmp.ne.s32.totalorder %s149, %s152
      %p161 = scmp.eq.s32.totalorder %s26, 1
      %p162 = por %p160, %p161
      %p163 = scmp.ne.s32.totalorder %s152, %s153
      %p164 = scmp.eq.s32.totalorder %s26, 0
      %p165 = por %p163, %p164
      %p166 = scmp.ne.s32.totalorder %s152, %s153
      %p167 = scmp.eq.s32.totalorder %s27, 1
      %p168 = por %p166, %p167
      %p170 = scmp.ne.s32.totalorder %s153, %s169
      %p171 = scmp.eq.s32.totalorder %s27, 0
      %p172 = por %p170, %p171
      %p173 = scmp.le.s32.totalorder 1, %s21
      %p174 = scmp.lt.s32.totalorder %s21, 3
      %p175 = pnand %p173, %p174
      %p176 = pneg %p175
      // Predicated region
      $region9: #{tpu_custom_call.1} parent=5 // pred_check
        _
      $region10: #{tpu_custom_call.1} parent=5 // pred_check_branch
        %178 = sbr.rel (%p175) target = $region12
      $region11: #{tpu_custom_call.1} parent=5 // pred_region
        %s179 = ssub.s32 %s21, 1
        // Predicated region
        $region13: #{tpu_custom_call.1} parent=11 // pred_check
          %p180 = pneg %p59
        $region14: #{tpu_custom_call.1} parent=11 // pred_check_branch
          %182 = sbr.rel (%p180) target = $region16
        $region15: #{tpu_custom_call.1} parent=11 // pred_region
          %s183 = smul.u32 294, %s31
          %185 = vsyncadd [#allocation3], 0
          %s186 = scalar_lea.hbm %s0, %s183
          %s188 = sshll.u32 %s186, 4
          %s189 = int_to_ptr.hbm [resolvable:$true] %s188
          %s190 = sshll.u32 [#allocation2], 4
          %s191 = int_to_ptr.vmem [resolvable:$true] %s190
          %193 = dma.hbm_to_vmem [thread:$0]  %s189, 4704, %s191, [#allocation3]
        $region16: #{tpu_custom_call.1} parent=11 // pred_fallthru
          _
      $region12: #{tpu_custom_call.1} parent=5 // pred_fallthru
        _
      %p194 = scmp.lt.s32.totalorder %s21, 2
      // Predicated region
      $region17: #{tpu_custom_call.1} parent=5 // pred_check
        %p195 = pneg %p194
      $region18: #{tpu_custom_call.1} parent=5 // pred_check_branch
        %197 = sbr.rel (%p195) target = $region20
      $region19: #{tpu_custom_call.1} parent=5 // pred_region
        // Predicated region
        $region21: #{tpu_custom_call.1} parent=19 // pred_check
          %p198 = pneg %p81
        $region22: #{tpu_custom_call.1} parent=19 // pred_check_branch
          %200 = sbr.rel (%p198) target = $region24
        $region23: #{tpu_custom_call.1} parent=19 // pred_region
          %s201 = sand.u32 %s21, 1
          %s202 = scalar_lea.sflag [#allocation6], %s201
          %s203 = sand.u32 %s71, 1
          %s204 = smul.addr %s203, 4704
          %s205 = scalar_lea.vmem [#allocation5], %s204
          %s206 = smul.u32 294, %s29
          %208 = vsyncadd %s202, 0
          %s209 = smul.addr %s28, 1176
          %s210 = sadd.s32 %s206, %s209
          %s211 = smul.addr %s210, 4
          %s212 = scalar_lea.hbm %s1, %s211
          %s213 = sshll.u32 %s212, 4
          %s214 = int_to_ptr.hbm [resolvable:$true] %s213
          %s215 = sshll.u32 %s205, 4
          %s216 = int_to_ptr.vmem [resolvable:$true] %s215
          %221 = dma.hbm_to_vmem [thread:$0]  %s214, 75264, %s216, %s202, 18816, 18816, 1176
        $region24: #{tpu_custom_call.1} parent=19 // pred_fallthru
          _
        // Predicated region
        $region25: #{tpu_custom_call.1} parent=19 // pred_check
          %p222 = pneg %p107
        $region26: #{tpu_custom_call.1} parent=19 // pred_check_branch
          %224 = sbr.rel (%p222) target = $region28
        $region27: #{tpu_custom_call.1} parent=19 // pred_region
          %s225 = sand.u32 %s21, 1
          %s226 = scalar_lea.sflag [#allocation6], %s225
          %s227 = sand.u32 %s97, 1
          %s228 = scalar_lea.vmem [#allocation7], %s227
          %230 = vsyncadd %s226, 0
          %s231 = scalar_lea.hbm %s2, %s28
          %s233 = sshll.u32 %s231, 4
          %s234 = int_to_ptr.hbm [resolvable:$true] %s233
          %s235 = sshll.u32 %s228, 4
          %s236 = int_to_ptr.vmem [resolvable:$true] %s235
          %238 = dma.hbm_to_vmem [thread:$0]  %s234, 16, %s236, %s226
        $region28: #{tpu_custom_call.1} parent=19 // pred_fallthru
          _
      $region20: #{tpu_custom_call.1} parent=5 // pred_fallthru
        _
      %p239 = scmp.le.s32.totalorder 1, %s21
      %p240 = scmp.lt.s32.totalorder %s21, 3
      %p241 = pnand %p239, %p240
      %p242 = pneg %p241
      // Predicated region
      $region29: #{tpu_custom_call.1} parent=5 // pred_check
        _
      $region30: #{tpu_custom_call.1} parent=5 // pred_check_branch
        %244 = sbr.rel (%p241) target = $region32
      $region31: #{tpu_custom_call.1} parent=5 // pred_region
        %s245 = ssub.s32 %s21, 1
        // Predicated region
        $region33: #{tpu_custom_call.1} parent=31 // pred_check
          %p246 = pneg %p59
        $region34: #{tpu_custom_call.1} parent=31 // pred_check_branch
          %248 = sbr.rel (%p246) target = $region36
        $region35: #{tpu_custom_call.1} parent=31 // pred_region
          %250 = dma.done [#allocation3], 4704
        $region36: #{tpu_custom_call.1} parent=31 // pred_fallthru
          _
        %s251 = sand.u32 %s26, 1
        %s252 = scalar_lea.sflag [#allocation6], %s251
        %s253 = sand.u32 %s74, 1
        %s254 = smul.addr %s253, 4704
        %s255 = scalar_lea.vmem [#allocation5], %s254
        // Predicated region
        $region37: #{tpu_custom_call.1} parent=31 // pred_check
          %p256 = pneg %p87
        $region38: #{tpu_custom_call.1} parent=31 // pred_check_branch
          %258 = sbr.rel (%p256) target = $region40
        $region39: #{tpu_custom_call.1} parent=31 // pred_region
          %260 = dma.done %s252, 75264
        $region40: #{tpu_custom_call.1} parent=31 // pred_fallthru
          _
        %s261 = sand.u32 %s26, 1
        %s262 = scalar_lea.sflag [#allocation6], %s261
        %s263 = sand.u32 %s100, 1
        %s264 = scalar_lea.vmem [#allocation7], %s263
        // Predicated region
        $region41: #{tpu_custom_call.1} parent=31 // pred_check
          %p265 = pneg %p113
        $region42: #{tpu_custom_call.1} parent=31 // pred_check_branch
          %267 = sbr.rel (%p265) target = $region44
        $region43: #{tpu_custom_call.1} parent=31 // pred_region
          %269 = dma.done %s262, 16
        $region44: #{tpu_custom_call.1} parent=31 // pred_fallthru
          _
        %p270 = pneg %p59
        %p271 = pneg %p56
        %s272 = sand.u32 %s26, 1
        %s273 = scalar_lea.sflag [#allocation6], %s272
        %s274 = sand.u32 %s74, 1
        %s275 = smul.addr %s274, 4704
        %s276 = scalar_lea.vmem [#allocation5], %s275
        %p277 = pneg %p87
        %p278 = pneg %p84
        %s279 = sand.u32 %s26, 1
        %s280 = scalar_lea.sflag [#allocation6], %s279
        %s281 = sand.u32 %s100, 1
        %s282 = scalar_lea.vmem [#allocation7], %s281
        %p283 = pneg %p113
        %p284 = pneg %p110
        %p285 = pneg %p139
        %p286 = pneg %p136
        %s287 = sand.u32 %s126, 1
        %s288 = scalar_lea.sflag [#allocation4], %s287
        %s289 = sand.u32 %s126, 1
        %s290 = smul.addr %s289, 2
        %s291 = scalar_lea.vmem [#allocation8], %s290
        %p292 = pneg %p165
        %p293 = pneg %p162
        %s294 = sand.u32 %s152, 1
        %s295 = scalar_lea.sflag [#allocation10], %s294
        %s296 = sand.u32 %s152, 1
        %s297 = smul.addr %s296, 2
        %s298 = scalar_lea.vmem [#allocation9], %s297
        %s299 = smul.u32 294, %s31
        %s300 = smul.u32 294, %s31
        %p302 = scmp.eq.s32.totalorder %s31, 0
        // Predicated region
        $region45: #{tpu_custom_call.1} parent=31 // pred_check
          %p303 = pneg %p302
        $region46: #{tpu_custom_call.1} parent=31 // pred_check_branch
          %305 = sbr.rel (%p303) target = $region48
        $region47: #{tpu_custom_call.1} parent=31 // pred_region
          %vm306 = vcmask 254976
          %307 = vst.msk [vmem:[%s291] sm:$0x3] %vm306, 0.0
        $region48: #{tpu_custom_call.1} parent=31 // pred_fallthru
          _
        %v308 = vld [vmem:[%s291] sm:$0x3]
        %v309 = vld [vmem:[#allocation2] sm:$0xff]
        %v310 = vld [vmem:[#allocation2 + $0x8] sm:$0xff]
        %v311 = vld [vmem:[#allocation2 + $0x10] sm:$0xff]
        %v312 = vld [vmem:[#allocation2 + $0x18] sm:$0xff]
        %v313 = vld [vmem:[#allocation2 + $0x20] sm:$0xff]
        %v314 = vld [vmem:[#allocation2 + $0x28] sm:$0xff]
        %v315 = vld [vmem:[#allocation2 + $0x30] sm:$0xff]
        %v316 = vld [vmem:[#allocation2 + $0x38] sm:$0xff]
        %v317 = vld [vmem:[#allocation2 + $0x40] sm:$0xff]
        %v318 = vld [vmem:[#allocation2 + $0x48] sm:$0xff]
        %v319 = vld [vmem:[#allocation2 + $0x50] sm:$0xff]
        %v320 = vld [vmem:[#allocation2 + $0x58] sm:$0xff]
        %v321 = vld [vmem:[#allocation2 + $0x60] sm:$0xff]
        %v322 = vld [vmem:[#allocation2 + $0x68] sm:$0xff]
        %v323 = vld [vmem:[#allocation2 + $0x70] sm:$0xff]
        %v324 = vld [vmem:[#allocation2 + $0x78] sm:$0xff]
        %v325 = vld [vmem:[#allocation2 + $0x80] sm:$0xff]
        %v326 = vld [vmem:[#allocation2 + $0x88] sm:$0xff]
        %v327 = vld [vmem:[#allocation2 + $0x90] sm:$0xff]
        %v328 = vld [vmem:[#allocation2 + $0x98] sm:$0xff]
        %v329 = vld [vmem:[#allocation2 + $0xa0] sm:$0xff]
        %v330 = vld [vmem:[#allocation2 + $0xa8] sm:$0xff]
        %v331 = vld [vmem:[#allocation2 + $0xb0] sm:$0xff]
        %v332 = vld [vmem:[#allocation2 + $0xb8] sm:$0xff]
        %v333 = vld [vmem:[#allocation2 + $0xc0] sm:$0xff]
        %v334 = vld [vmem:[#allocation2 + $0xc8] sm:$0xff]
        %v335 = vld [vmem:[#allocation2 + $0xd0] sm:$0xff]
        %v336 = vld [vmem:[#allocation2 + $0xd8] sm:$0xff]
        %v337 = vld [vmem:[#allocation2 + $0xe0] sm:$0xff]
        %v338 = vld [vmem:[#allocation2 + $0xe8] sm:$0xff]
        %v339 = vld [vmem:[#allocation2 + $0xf0] sm:$0xff]
        %v340 = vld [vmem:[#allocation2 + $0xf8] sm:$0xff]
        %v341 = vld [vmem:[#allocation2 + $0x100] sm:$0xff]
        %v342 = vld [vmem:[#allocation2 + $0x108] sm:$0xff]
        %v343 = vld [vmem:[#allocation2 + $0x110] sm:$0xff]
        %v344 = vld [vmem:[#allocation2 + $0x118] sm:$0xff]
        %v345 = vld [vmem:[#allocation2 + $0x120] sm:$0x3f]
        %v346 = vld [vmem:[%s255] sm:$0xff]
        %v347 = vld [vmem:[%s255 + $0x8] sm:$0xff]
        %v348 = vld [vmem:[%s255 + $0x10] sm:$0xff]
        %v349 = vld [vmem:[%s255 + $0x18] sm:$0xff]
        %v350 = vld [vmem:[%s255 + $0x20] sm:$0xff]
        %v351 = vld [vmem:[%s255 + $0x28] sm:$0xff]
        %v352 = vld [vmem:[%s255 + $0x30] sm:$0xff]
        %v353 = vld [vmem:[%s255 + $0x38] sm:$0xff]
        %v354 = vld [vmem:[%s255 + $0x40] sm:$0xff]
        %v355 = vld [vmem:[%s255 + $0x48] sm:$0xff]
        %v356 = vld [vmem:[%s255 + $0x50] sm:$0xff]
        %v357 = vld [vmem:[%s255 + $0x58] sm:$0xff]
        %v358 = vld [vmem:[%s255 + $0x60] sm:$0xff]
        %v359 = vld [vmem:[%s255 + $0x68] sm:$0xff]
        %v360 = vld [vmem:[%s255 + $0x70] sm:$0xff]
        %v361 = vld [vmem:[%s255 + $0x78] sm:$0xff]
        %v362 = vld [vmem:[%s255 + $0x80] sm:$0xff]
        %v363 = vld [vmem:[%s255 + $0x88] sm:$0xff]
        %v364 = vld [vmem:[%s255 + $0x90] sm:$0xff]
        %v365 = vld [vmem:[%s255 + $0x98] sm:$0xff]
        %v366 = vld [vmem:[%s255 + $0xa0] sm:$0xff]
        %v367 = vld [vmem:[%s255 + $0xa8] sm:$0xff]
        %v368 = vld [vmem:[%s255 + $0xb0] sm:$0xff]
        %v369 = vld [vmem:[%s255 + $0xb8] sm:$0xff]
        %v370 = vld [vmem:[%s255 + $0xc0] sm:$0xff]
        %v371 = vld [vmem:[%s255 + $0xc8] sm:$0xff]
        %v372 = vld [vmem:[%s255 + $0xd0] sm:$0xff]
        %v373 = vld [vmem:[%s255 + $0xd8] sm:$0xff]
        %v374 = vld [vmem:[%s255 + $0xe0] sm:$0xff]
        %v375 = vld [vmem:[%s255 + $0xe8] sm:$0xff]
        %v376 = vld [vmem:[%s255 + $0xf0] sm:$0xff]
        %v377 = vld [vmem:[%s255 + $0xf8] sm:$0xff]
        %v378 = vld [vmem:[%s255 + $0x100] sm:$0xff]
        %v379 = vld [vmem:[%s255 + $0x108] sm:$0xff]
        %v380 = vld [vmem:[%s255 + $0x110] sm:$0xff]
        %v381 = vld [vmem:[%s255 + $0x118] sm:$0xff]
        %v382 = vld [vmem:[%s255 + $0x120] sm:$0xff]
        %v383 = vld [vmem:[%s255 + $0x128] sm:$0xff]
        %v384 = vld [vmem:[%s255 + $0x130] sm:$0xff]
        %v385 = vld [vmem:[%s255 + $0x138] sm:$0xff]
        %v386 = vld [vmem:[%s255 + $0x140] sm:$0xff]
        %v387 = vld [vmem:[%s255 + $0x148] sm:$0xff]
        %v388 = vld [vmem:[%s255 + $0x150] sm:$0xff]
        %v389 = vld [vmem:[%s255 + $0x158] sm:$0xff]
        %v390 = vld [vmem:[%s255 + $0x160] sm:$0xff]
        %v391 = vld [vmem:[%s255 + $0x168] sm:$0xff]
        %v392 = vld [vmem:[%s255 + $0x170] sm:$0xff]
        %v393 = vld [vmem:[%s255 + $0x178] sm:$0xff]
        %v394 = vld [vmem:[%s255 + $0x180] sm:$0xff]
        %v395 = vld [vmem:[%s255 + $0x188] sm:$0xff]
        %v396 = vld [vmem:[%s255 + $0x190] sm:$0xff]
        %v397 = vld [vmem:[%s255 + $0x198] sm:$0xff]
        %v398 = vld [vmem:[%s255 + $0x1a0] sm:$0xff]
        %v399 = vld [vmem:[%s255 + $0x1a8] sm:$0xff]
        %v400 = vld [vmem:[%s255 + $0x1b0] sm:$0xff]
        %v401 = vld [vmem:[%s255 + $0x1b8] sm:$0xff]
        %v402 = vld [vmem:[%s255 + $0x1c0] sm:$0xff]
        %v403 = vld [vmem:[%s255 + $0x1c8] sm:$0xff]
        %v404 = vld [vmem:[%s255 + $0x1d0] sm:$0xff]
        %v405 = vld [vmem:[%s255 + $0x1d8] sm:$0xff]
        %v406 = vld [vmem:[%s255 + $0x1e0] sm:$0xff]
        %v407 = vld [vmem:[%s255 + $0x1e8] sm:$0xff]
        %v408 = vld [vmem:[%s255 + $0x1f0] sm:$0xff]
        %v409 = vld [vmem:[%s255 + $0x1f8] sm:$0xff]
        %v410 = vld [vmem:[%s255 + $0x200] sm:$0xff]
        %v411 = vld [vmem:[%s255 + $0x208] sm:$0xff]
        %v412 = vld [vmem:[%s255 + $0x210] sm:$0xff]
        %v413 = vld [vmem:[%s255 + $0x218] sm:$0xff]
        %v414 = vld [vmem:[%s255 + $0x220] sm:$0xff]
        %v415 = vld [vmem:[%s255 + $0x228] sm:$0xff]
        %v416 = vld [vmem:[%s255 + $0x230] sm:$0xff]
        %v417 = vld [vmem:[%s255 + $0x238] sm:$0xff]
        %v418 = vld [vmem:[%s255 + $0x240] sm:$0xff]
        %v419 = vld [vmem:[%s255 + $0x248] sm:$0xff]
        %v420 = vld [vmem:[%s255 + $0x250] sm:$0xff]
        %v421 = vld [vmem:[%s255 + $0x258] sm:$0xff]
        %v422 = vld [vmem:[%s255 + $0x260] sm:$0xff]
        %v423 = vld [vmem:[%s255 + $0x268] sm:$0xff]
        %v424 = vld [vmem:[%s255 + $0x270] sm:$0xff]
        %v425 = vld [vmem:[%s255 + $0x278] sm:$0xff]
        %v426 = vld [vmem:[%s255 + $0x280] sm:$0xff]
        %v427 = vld [vmem:[%s255 + $0x288] sm:$0xff]
        %v428 = vld [vmem:[%s255 + $0x290] sm:$0xff]
        %v429 = vld [vmem:[%s255 + $0x298] sm:$0xff]
        %v430 = vld [vmem:[%s255 + $0x2a0] sm:$0xff]
        %v431 = vld [vmem:[%s255 + $0x2a8] sm:$0xff]
        %v432 = vld [vmem:[%s255 + $0x2b0] sm:$0xff]
        %v433 = vld [vmem:[%s255 + $0x2b8] sm:$0xff]
        %v434 = vld [vmem:[%s255 + $0x2c0] sm:$0xff]
        %v435 = vld [vmem:[%s255 + $0x2c8] sm:$0xff]
        %v436 = vld [vmem:[%s255 + $0x2d0] sm:$0xff]
        %v437 = vld [vmem:[%s255 + $0x2d8] sm:$0xff]
        %v438 = vld [vmem:[%s255 + $0x2e0] sm:$0xff]
        %v439 = vld [vmem:[%s255 + $0x2e8] sm:$0xff]
        %v440 = vld [vmem:[%s255 + $0x2f0] sm:$0xff]
        %v441 = vld [vmem:[%s255 + $0x2f8] sm:$0xff]
        %v442 = vld [vmem:[%s255 + $0x300] sm:$0xff]
        %v443 = vld [vmem:[%s255 + $0x308] sm:$0xff]
        %v444 = vld [vmem:[%s255 + $0x310] sm:$0xff]
        %v445 = vld [vmem:[%s255 + $0x318] sm:$0xff]
        %v446 = vld [vmem:[%s255 + $0x320] sm:$0xff]
        %v447 = vld [vmem:[%s255 + $0x328] sm:$0xff]
        %v448 = vld [vmem:[%s255 + $0x330] sm:$0xff]
        %v449 = vld [vmem:[%s255 + $0x338] sm:$0xff]
        %v450 = vld [vmem:[%s255 + $0x340] sm:$0xff]
        %v451 = vld [vmem:[%s255 + $0x348] sm:$0xff]
        %v452 = vld [vmem:[%s255 + $0x350] sm:$0xff]
        %v453 = vld [vmem:[%s255 + $0x358] sm:$0xff]
        %v454 = vld [vmem:[%s255 + $0x360] sm:$0xff]
        %v455 = vld [vmem:[%s255 + $0x368] sm:$0xff]
        %v456 = vld [vmem:[%s255 + $0x370] sm:$0xff]
        %v457 = vld [vmem:[%s255 + $0x378] sm:$0xff]
        %v458 = vld [vmem:[%s255 + $0x380] sm:$0xff]
        %v459 = vld [vmem:[%s255 + $0x388] sm:$0xff]
        %v460 = vld [vmem:[%s255 + $0x390] sm:$0xff]
        %v461 = vld [vmem:[%s255 + $0x398] sm:$0xff]
        %v462 = vld [vmem:[%s255 + $0x3a0] sm:$0xff]
        %v463 = vld [vmem:[%s255 + $0x3a8] sm:$0xff]
        %v464 = vld [vmem:[%s255 + $0x3b0] sm:$0xff]
        %v465 = vld [vmem:[%s255 + $0x3b8] sm:$0xff]
        %v466 = vld [vmem:[%s255 + $0x3c0] sm:$0xff]
        %v467 = vld [vmem:[%s255 + $0x3c8] sm:$0xff]
        %v468 = vld [vmem:[%s255 + $0x3d0] sm:$0xff]
        %v469 = vld [vmem:[%s255 + $0x3d8] sm:$0xff]
        %v470 = vld [vmem:[%s255 + $0x3e0] sm:$0xff]
        %v471 = vld [vmem:[%s255 + $0x3e8] sm:$0xff]
        %v472 = vld [vmem:[%s255 + $0x3f0] sm:$0xff]
        %v473 = vld [vmem:[%s255 + $0x3f8] sm:$0xff]
        %v474 = vld [vmem:[%s255 + $0x400] sm:$0xff]
        %v475 = vld [vmem:[%s255 + $0x408] sm:$0xff]
        %v476 = vld [vmem:[%s255 + $0x410] sm:$0xff]
        %v477 = vld [vmem:[%s255 + $0x418] sm:$0xff]
        %v478 = vld [vmem:[%s255 + $0x420] sm:$0xff]
        %v479 = vld [vmem:[%s255 + $0x428] sm:$0xff]
        %v480 = vld [vmem:[%s255 + $0x430] sm:$0xff]
        %v481 = vld [vmem:[%s255 + $0x438] sm:$0xff]
        %v482 = vld [vmem:[%s255 + $0x440] sm:$0xff]
        %v483 = vld [vmem:[%s255 + $0x448] sm:$0xff]
        %v484 = vld [vmem:[%s255 + $0x450] sm:$0xff]
        %v485 = vld [vmem:[%s255 + $0x458] sm:$0xff]
        %v486 = vld [vmem:[%s255 + $0x460] sm:$0xff]
        %v487 = vld [vmem:[%s255 + $0x468] sm:$0xff]
        %v488 = vld [vmem:[%s255 + $0x470] sm:$0xff]
        %v489 = vld [vmem:[%s255 + $0x478] sm:$0xff]
        %v490 = vld [vmem:[%s255 + $0x480] sm:$0xff]
        %v491 = vld [vmem:[%s255 + $0x488] sm:$0xff]
        %v492 = vld [vmem:[%s255 + $0x490] sm:$0xff]
        %v493 = vld [vmem:[%s255 + $0x498] sm:$0xff]
        %v494 = vld [vmem:[%s255 + $0x4a0] sm:$0xff]
        %v495 = vld [vmem:[%s255 + $0x4a8] sm:$0xff]
        %v496 = vld [vmem:[%s255 + $0x4b0] sm:$0xff]
        %v497 = vld [vmem:[%s255 + $0x4b8] sm:$0xff]
        %v498 = vld [vmem:[%s255 + $0x4c0] sm:$0xff]
        %v499 = vld [vmem:[%s255 + $0x4c8] sm:$0xff]
        %v500 = vld [vmem:[%s255 + $0x4d0] sm:$0xff]
        %v501 = vld [vmem:[%s255 + $0x4d8] sm:$0xff]
        %v502 = vld [vmem:[%s255 + $0x4e0] sm:$0xff]
        %v503 = vld [vmem:[%s255 + $0x4e8] sm:$0xff]
        %v504 = vld [vmem:[%s255 + $0x4f0] sm:$0xff]
        %v505 = vld [vmem:[%s255 + $0x4f8] sm:$0xff]
        %v506 = vld [vmem:[%s255 + $0x500] sm:$0xff]
        %v507 = vld [vmem:[%s255 + $0x508] sm:$0xff]
        %v508 = vld [vmem:[%s255 + $0x510] sm:$0xff]
        %v509 = vld [vmem:[%s255 + $0x518] sm:$0xff]
        %v510 = vld [vmem:[%s255 + $0x520] sm:$0xff]
        %v511 = vld [vmem:[%s255 + $0x528] sm:$0xff]
        %v512 = vld [vmem:[%s255 + $0x530] sm:$0xff]
        %v513 = vld [vmem:[%s255 + $0x538] sm:$0xff]
        %v514 = vld [vmem:[%s255 + $0x540] sm:$0xff]
        %v515 = vld [vmem:[%s255 + $0x548] sm:$0xff]
        %v516 = vld [vmem:[%s255 + $0x550] sm:$0xff]
        %v517 = vld [vmem:[%s255 + $0x558] sm:$0xff]
        %v518 = vld [vmem:[%s255 + $0x560] sm:$0xff]
        %v519 = vld [vmem:[%s255 + $0x568] sm:$0xff]
        %v520 = vld [vmem:[%s255 + $0x570] sm:$0xff]
        %v521 = vld [vmem:[%s255 + $0x578] sm:$0xff]
        %v522 = vld [vmem:[%s255 + $0x580] sm:$0xff]
        %v523 = vld [vmem:[%s255 + $0x588] sm:$0xff]
        %v524 = vld [vmem:[%s255 + $0x590] sm:$0xff]
        %v525 = vld [vmem:[%s255 + $0x598] sm:$0xff]
        %v526 = vld [vmem:[%s255 + $0x5a0] sm:$0xff]
        %v527 = vld [vmem:[%s255 + $0x5a8] sm:$0xff]
        %v528 = vld [vmem:[%s255 + $0x5b0] sm:$0xff]
        %v529 = vld [vmem:[%s255 + $0x5b8] sm:$0xff]
        %v530 = vld [vmem:[%s255 + $0x5c0] sm:$0xff]
        %v531 = vld [vmem:[%s255 + $0x5c8] sm:$0xff]
        %v532 = vld [vmem:[%s255 + $0x5d0] sm:$0xff]
        %v533 = vld [vmem:[%s255 + $0x5d8] sm:$0xff]
        %v534 = vld [vmem:[%s255 + $0x5e0] sm:$0xff]
        %v535 = vld [vmem:[%s255 + $0x5e8] sm:$0xff]
        %v536 = vld [vmem:[%s255 + $0x5f0] sm:$0xff]
        %v537 = vld [vmem:[%s255 + $0x5f8] sm:$0xff]
        %v538 = vld [vmem:[%s255 + $0x600] sm:$0xff]
        %v539 = vld [vmem:[%s255 + $0x608] sm:$0xff]
        %v540 = vld [vmem:[%s255 + $0x610] sm:$0xff]
        %v541 = vld [vmem:[%s255 + $0x618] sm:$0xff]
        %v542 = vld [vmem:[%s255 + $0x620] sm:$0xff]
        %v543 = vld [vmem:[%s255 + $0x628] sm:$0xff]
        %v544 = vld [vmem:[%s255 + $0x630] sm:$0xff]
        %v545 = vld [vmem:[%s255 + $0x638] sm:$0xff]
        %v546 = vld [vmem:[%s255 + $0x640] sm:$0xff]
        %v547 = vld [vmem:[%s255 + $0x648] sm:$0xff]
        %v548 = vld [vmem:[%s255 + $0x650] sm:$0xff]
        %v549 = vld [vmem:[%s255 + $0x658] sm:$0xff]
        %v550 = vld [vmem:[%s255 + $0x660] sm:$0xff]
        %v551 = vld [vmem:[%s255 + $0x668] sm:$0xff]
        %v552 = vld [vmem:[%s255 + $0x670] sm:$0xff]
        %v553 = vld [vmem:[%s255 + $0x678] sm:$0xff]
        %v554 = vld [vmem:[%s255 + $0x680] sm:$0xff]
        %v555 = vld [vmem:[%s255 + $0x688] sm:$0xff]
        %v556 = vld [vmem:[%s255 + $0x690] sm:$0xff]
        %v557 = vld [vmem:[%s255 + $0x698] sm:$0xff]
        %v558 = vld [vmem:[%s255 + $0x6a0] sm:$0xff]
        %v559 = vld [vmem:[%s255 + $0x6a8] sm:$0xff]
        %v560 = vld [vmem:[%s255 + $0x6b0] sm:$0xff]
        %v561 = vld [vmem:[%s255 + $0x6b8] sm:$0xff]
        %v562 = vld [vmem:[%s255 + $0x6c0] sm:$0xff]
        %v563 = vld [vmem:[%s255 + $0x6c8] sm:$0xff]
        %v564 = vld [vmem:[%s255 + $0x6d0] sm:$0xff]
        %v565 = vld [vmem:[%s255 + $0x6d8] sm:$0xff]
        %v566 = vld [vmem:[%s255 + $0x6e0] sm:$0xff]
        %v567 = vld [vmem:[%s255 + $0x6e8] sm:$0xff]
        %v568 = vld [vmem:[%s255 + $0x6f0] sm:$0xff]
        %v569 = vld [vmem:[%s255 + $0x6f8] sm:$0xff]
        %v570 = vld [vmem:[%s255 + $0x700] sm:$0xff]
        %v571 = vld [vmem:[%s255 + $0x708] sm:$0xff]
        %v572 = vld [vmem:[%s255 + $0x710] sm:$0xff]
        %v573 = vld [vmem:[%s255 + $0x718] sm:$0xff]
        %v574 = vld [vmem:[%s255 + $0x720] sm:$0xff]
        %v575 = vld [vmem:[%s255 + $0x728] sm:$0xff]
        %v576 = vld [vmem:[%s255 + $0x730] sm:$0xff]
        %v577 = vld [vmem:[%s255 + $0x738] sm:$0xff]
        %v578 = vld [vmem:[%s255 + $0x740] sm:$0xff]
        %v579 = vld [vmem:[%s255 + $0x748] sm:$0xff]
        %v580 = vld [vmem:[%s255 + $0x750] sm:$0xff]
        %v581 = vld [vmem:[%s255 + $0x758] sm:$0xff]
        %v582 = vld [vmem:[%s255 + $0x760] sm:$0xff]
        %v583 = vld [vmem:[%s255 + $0x768] sm:$0xff]
        %v584 = vld [vmem:[%s255 + $0x770] sm:$0xff]
        %v585 = vld [vmem:[%s255 + $0x778] sm:$0xff]
        %v586 = vld [vmem:[%s255 + $0x780] sm:$0xff]
        %v587 = vld [vmem:[%s255 + $0x788] sm:$0xff]
        %v588 = vld [vmem:[%s255 + $0x790] sm:$0xff]
        %v589 = vld [vmem:[%s255 + $0x798] sm:$0xff]
        %v590 = vld [vmem:[%s255 + $0x7a0] sm:$0xff]
        %v591 = vld [vmem:[%s255 + $0x7a8] sm:$0xff]
        %v592 = vld [vmem:[%s255 + $0x7b0] sm:$0xff]
        %v593 = vld [vmem:[%s255 + $0x7b8] sm:$0xff]
        %v594 = vld [vmem:[%s255 + $0x7c0] sm:$0xff]
        %v595 = vld [vmem:[%s255 + $0x7c8] sm:$0xff]
        %v596 = vld [vmem:[%s255 + $0x7d0] sm:$0xff]
        %v597 = vld [vmem:[%s255 + $0x7d8] sm:$0xff]
        %v598 = vld [vmem:[%s255 + $0x7e0] sm:$0xff]
        %v599 = vld [vmem:[%s255 + $0x7e8] sm:$0xff]
        %v600 = vld [vmem:[%s255 + $0x7f0] sm:$0xff]
        %v601 = vld [vmem:[%s255 + $0x7f8] sm:$0xff]
        %v602 = vld [vmem:[%s255 + $0x800] sm:$0xff]
        %v603 = vld [vmem:[%s255 + $0x808] sm:$0xff]
        %v604 = vld [vmem:[%s255 + $0x810] sm:$0xff]
        %v605 = vld [vmem:[%s255 + $0x818] sm:$0xff]
        %v606 = vld [vmem:[%s255 + $0x820] sm:$0xff]
        %v607 = vld [vmem:[%s255 + $0x828] sm:$0xff]
        %v608 = vld [vmem:[%s255 + $0x830] sm:$0xff]
        %v609 = vld [vmem:[%s255 + $0x838] sm:$0xff]
        %v610 = vld [vmem:[%s255 + $0x840] sm:$0xff]
        %v611 = vld [vmem:[%s255 + $0x848] sm:$0xff]
        %v612 = vld [vmem:[%s255 + $0x850] sm:$0xff]
        %v613 = vld [vmem:[%s255 + $0x858] sm:$0xff]
        %v614 = vld [vmem:[%s255 + $0x860] sm:$0xff]
        %v615 = vld [vmem:[%s255 + $0x868] sm:$0xff]
        %v616 = vld [vmem:[%s255 + $0x870] sm:$0xff]
        %v617 = vld [vmem:[%s255 + $0x878] sm:$0xff]
        %v618 = vld [vmem:[%s255 + $0x880] sm:$0xff]
        %v619 = vld [vmem:[%s255 + $0x888] sm:$0xff]
        %v620 = vld [vmem:[%s255 + $0x890] sm:$0xff]
        %v621 = vld [vmem:[%s255 + $0x898] sm:$0xff]
        %v622 = vld [vmem:[%s255 + $0x8a0] sm:$0xff]
        %v623 = vld [vmem:[%s255 + $0x8a8] sm:$0xff]
        %v624 = vld [vmem:[%s255 + $0x8b0] sm:$0xff]
        %v625 = vld [vmem:[%s255 + $0x8b8] sm:$0xff]
        %v626 = vld [vmem:[%s255 + $0x8c0] sm:$0xff]
        %v627 = vld [vmem:[%s255 + $0x8c8] sm:$0xff]
        %v628 = vld [vmem:[%s255 + $0x8d0] sm:$0xff]
        %v629 = vld [vmem:[%s255 + $0x8d8] sm:$0xff]
        %v630 = vld [vmem:[%s255 + $0x8e0] sm:$0xff]
        %v631 = vld [vmem:[%s255 + $0x8e8] sm:$0xff]
        %v632 = vld [vmem:[%s255 + $0x8f0] sm:$0xff]
        %v633 = vld [vmem:[%s255 + $0x8f8] sm:$0xff]
        %v634 = vld [vmem:[%s255 + $0x900] sm:$0xff]
        %v635 = vld [vmem:[%s255 + $0x908] sm:$0xff]
        %v636 = vld [vmem:[%s255 + $0x910] sm:$0xff]
        %v637 = vld [vmem:[%s255 + $0x918] sm:$0xff]
        %v638 = vld [vmem:[%s255 + $0x920] sm:$0xff]
        %v639 = vld [vmem:[%s255 + $0x928] sm:$0xff]
        %v640 = vld [vmem:[%s255 + $0x930] sm:$0xff]
        %v641 = vld [vmem:[%s255 + $0x938] sm:$0xff]
        %v642 = vld [vmem:[%s255 + $0x940] sm:$0xff]
        %v643 = vld [vmem:[%s255 + $0x948] sm:$0xff]
        %v644 = vld [vmem:[%s255 + $0x950] sm:$0xff]
        %v645 = vld [vmem:[%s255 + $0x958] sm:$0xff]
        %v646 = vld [vmem:[%s255 + $0x960] sm:$0xff]
        %v647 = vld [vmem:[%s255 + $0x968] sm:$0xff]
        %v648 = vld [vmem:[%s255 + $0x970] sm:$0xff]
        %v649 = vld [vmem:[%s255 + $0x978] sm:$0xff]
        %v650 = vld [vmem:[%s255 + $0x980] sm:$0xff]
        %v651 = vld [vmem:[%s255 + $0x988] sm:$0xff]
        %v652 = vld [vmem:[%s255 + $0x990] sm:$0xff]
        %v653 = vld [vmem:[%s255 + $0x998] sm:$0xff]
        %v654 = vld [vmem:[%s255 + $0x9a0] sm:$0xff]
        %v655 = vld [vmem:[%s255 + $0x9a8] sm:$0xff]
        %v656 = vld [vmem:[%s255 + $0x9b0] sm:$0xff]
        %v657 = vld [vmem:[%s255 + $0x9b8] sm:$0xff]
        %v658 = vld [vmem:[%s255 + $0x9c0] sm:$0xff]
        %v659 = vld [vmem:[%s255 + $0x9c8] sm:$0xff]
        %v660 = vld [vmem:[%s255 + $0x9d0] sm:$0xff]
        %v661 = vld [vmem:[%s255 + $0x9d8] sm:$0xff]
        %v662 = vld [vmem:[%s255 + $0x9e0] sm:$0xff]
        %v663 = vld [vmem:[%s255 + $0x9e8] sm:$0xff]
        %v664 = vld [vmem:[%s255 + $0x9f0] sm:$0xff]
        %v665 = vld [vmem:[%s255 + $0x9f8] sm:$0xff]
        %v666 = vld [vmem:[%s255 + $0xa00] sm:$0xff]
        %v667 = vld [vmem:[%s255 + $0xa08] sm:$0xff]
        %v668 = vld [vmem:[%s255 + $0xa10] sm:$0xff]
        %v669 = vld [vmem:[%s255 + $0xa18] sm:$0xff]
        %v670 = vld [vmem:[%s255 + $0xa20] sm:$0xff]
        %v671 = vld [vmem:[%s255 + $0xa28] sm:$0xff]
        %v672 = vld [vmem:[%s255 + $0xa30] sm:$0xff]
        %v673 = vld [vmem:[%s255 + $0xa38] sm:$0xff]
        %v674 = vld [vmem:[%s255 + $0xa40] sm:$0xff]
        %v675 = vld [vmem:[%s255 + $0xa48] sm:$0xff]
        %v676 = vld [vmem:[%s255 + $0xa50] sm:$0xff]
        %v677 = vld [vmem:[%s255 + $0xa58] sm:$0xff]
        %v678 = vld [vmem:[%s255 + $0xa60] sm:$0xff]
        %v679 = vld [vmem:[%s255 + $0xa68] sm:$0xff]
        %v680 = vld [vmem:[%s255 + $0xa70] sm:$0xff]
        %v681 = vld [vmem:[%s255 + $0xa78] sm:$0xff]
        %v682 = vld [vmem:[%s255 + $0xa80] sm:$0xff]
        %v683 = vld [vmem:[%s255 + $0xa88] sm:$0xff]
        %v684 = vld [vmem:[%s255 + $0xa90] sm:$0xff]
        %v685 = vld [vmem:[%s255 + $0xa98] sm:$0xff]
        %v686 = vld [vmem:[%s255 + $0xaa0] sm:$0xff]
        %v687 = vld [vmem:[%s255 + $0xaa8] sm:$0xff]
        %v688 = vld [vmem:[%s255 + $0xab0] sm:$0xff]
        %v689 = vld [vmem:[%s255 + $0xab8] sm:$0xff]
        %v690 = vld [vmem:[%s255 + $0xac0] sm:$0xff]
        %v691 = vld [vmem:[%s255 + $0xac8] sm:$0xff]
        %v692 = vld [vmem:[%s255 + $0xad0] sm:$0xff]
        %v693 = vld [vmem:[%s255 + $0xad8] sm:$0xff]
        %v694 = vld [vmem:[%s255 + $0xae0] sm:$0xff]
        %v695 = vld [vmem:[%s255 + $0xae8] sm:$0xff]
        %v696 = vld [vmem:[%s255 + $0xaf0] sm:$0xff]
        %v697 = vld [vmem:[%s255 + $0xaf8] sm:$0xff]
        %v698 = vld [vmem:[%s255 + $0xb00] sm:$0xff]
        %v699 = vld [vmem:[%s255 + $0xb08] sm:$0xff]
        %v700 = vld [vmem:[%s255 + $0xb10] sm:$0xff]
        %v701 = vld [vmem:[%s255 + $0xb18] sm:$0xff]
        %v702 = vld [vmem:[%s255 + $0xb20] sm:$0xff]
        %v703 = vld [vmem:[%s255 + $0xb28] sm:$0xff]
        %v704 = vld [vmem:[%s255 + $0xb30] sm:$0xff]
        %v705 = vld [vmem:[%s255 + $0xb38] sm:$0xff]
        %v706 = vld [vmem:[%s255 + $0xb40] sm:$0xff]
        %v707 = vld [vmem:[%s255 + $0xb48] sm:$0xff]
        %v708 = vld [vmem:[%s255 + $0xb50] sm:$0xff]
        %v709 = vld [vmem:[%s255 + $0xb58] sm:$0xff]
        %v710 = vld [vmem:[%s255 + $0xb60] sm:$0xff]
        %v711 = vld [vmem:[%s255 + $0xb68] sm:$0xff]
        %v712 = vld [vmem:[%s255 + $0xb70] sm:$0xff]
        %v713 = vld [vmem:[%s255 + $0xb78] sm:$0xff]
        %v714 = vld [vmem:[%s255 + $0xb80] sm:$0xff]
        %v715 = vld [vmem:[%s255 + $0xb88] sm:$0xff]
        %v716 = vld [vmem:[%s255 + $0xb90] sm:$0xff]
        %v717 = vld [vmem:[%s255 + $0xb98] sm:$0xff]
        %v718 = vld [vmem:[%s255 + $0xba0] sm:$0xff]
        %v719 = vld [vmem:[%s255 + $0xba8] sm:$0xff]
        %v720 = vld [vmem:[%s255 + $0xbb0] sm:$0xff]
        %v721 = vld [vmem:[%s255 + $0xbb8] sm:$0xff]
        %v722 = vld [vmem:[%s255 + $0xbc0] sm:$0xff]
        %v723 = vld [vmem:[%s255 + $0xbc8] sm:$0xff]
        %v724 = vld [vmem:[%s255 + $0xbd0] sm:$0xff]
        %v725 = vld [vmem:[%s255 + $0xbd8] sm:$0xff]
        %v726 = vld [vmem:[%s255 + $0xbe0] sm:$0xff]
        %v727 = vld [vmem:[%s255 + $0xbe8] sm:$0xff]
        %v728 = vld [vmem:[%s255 + $0xbf0] sm:$0xff]
        %v729 = vld [vmem:[%s255 + $0xbf8] sm:$0xff]
        %v730 = vld [vmem:[%s255 + $0xc00] sm:$0xff]
        %v731 = vld [vmem:[%s255 + $0xc08] sm:$0xff]
        %v732 = vld [vmem:[%s255 + $0xc10] sm:$0xff]
        %v733 = vld [vmem:[%s255 + $0xc18] sm:$0xff]
        %v734 = vld [vmem:[%s255 + $0xc20] sm:$0xff]
        %v735 = vld [vmem:[%s255 + $0xc28] sm:$0xff]
        %v736 = vld [vmem:[%s255 + $0xc30] sm:$0xff]
        %v737 = vld [vmem:[%s255 + $0xc38] sm:$0xff]
        %v738 = vld [vmem:[%s255 + $0xc40] sm:$0xff]
        %v739 = vld [vmem:[%s255 + $0xc48] sm:$0xff]
        %v740 = vld [vmem:[%s255 + $0xc50] sm:$0xff]
        %v741 = vld [vmem:[%s255 + $0xc58] sm:$0xff]
        %v742 = vld [vmem:[%s255 + $0xc60] sm:$0xff]
        %v743 = vld [vmem:[%s255 + $0xc68] sm:$0xff]
        %v744 = vld [vmem:[%s255 + $0xc70] sm:$0xff]
        %v745 = vld [vmem:[%s255 + $0xc78] sm:$0xff]
        %v746 = vld [vmem:[%s255 + $0xc80] sm:$0xff]
        %v747 = vld [vmem:[%s255 + $0xc88] sm:$0xff]
        %v748 = vld [vmem:[%s255 + $0xc90] sm:$0xff]
        %v749 = vld [vmem:[%s255 + $0xc98] sm:$0xff]
        %v750 = vld [vmem:[%s255 + $0xca0] sm:$0xff]
        %v751 = vld [vmem:[%s255 + $0xca8] sm:$0xff]
        %v752 = vld [vmem:[%s255 + $0xcb0] sm:$0xff]
        %v753 = vld [vmem:[%s255 + $0xcb8] sm:$0xff]
        %v754 = vld [vmem:[%s255 + $0xcc0] sm:$0xff]
        %v755 = vld [vmem:[%s255 + $0xcc8] sm:$0xff]
        %v756 = vld [vmem:[%s255 + $0xcd0] sm:$0xff]
        %v757 = vld [vmem:[%s255 + $0xcd8] sm:$0xff]
        %v758 = vld [vmem:[%s255 + $0xce0] sm:$0xff]
        %v759 = vld [vmem:[%s255 + $0xce8] sm:$0xff]
        %v760 = vld [vmem:[%s255 + $0xcf0] sm:$0xff]
        %v761 = vld [vmem:[%s255 + $0xcf8] sm:$0xff]
        %v762 = vld [vmem:[%s255 + $0xd00] sm:$0xff]
        %v763 = vld [vmem:[%s255 + $0xd08] sm:$0xff]
        %v764 = vld [vmem:[%s255 + $0xd10] sm:$0xff]
        %v765 = vld [vmem:[%s255 + $0xd18] sm:$0xff]
        %v766 = vld [vmem:[%s255 + $0xd20] sm:$0xff]
        %v767 = vld [vmem:[%s255 + $0xd28] sm:$0xff]
        %v768 = vld [vmem:[%s255 + $0xd30] sm:$0xff]
        %v769 = vld [vmem:[%s255 + $0xd38] sm:$0xff]
        %v770 = vld [vmem:[%s255 + $0xd40] sm:$0xff]
        %v771 = vld [vmem:[%s255 + $0xd48] sm:$0xff]
        %v772 = vld [vmem:[%s255 + $0xd50] sm:$0xff]
        %v773 = vld [vmem:[%s255 + $0xd58] sm:$0xff]
        %v774 = vld [vmem:[%s255 + $0xd60] sm:$0xff]
        %v775 = vld [vmem:[%s255 + $0xd68] sm:$0xff]
        %v776 = vld [vmem:[%s255 + $0xd70] sm:$0xff]
        %v777 = vld [vmem:[%s255 + $0xd78] sm:$0xff]
        %v778 = vld [vmem:[%s255 + $0xd80] sm:$0xff]
        %v779 = vld [vmem:[%s255 + $0xd88] sm:$0xff]
        %v780 = vld [vmem:[%s255 + $0xd90] sm:$0xff]
        %v781 = vld [vmem:[%s255 + $0xd98] sm:$0xff]
        %v782 = vld [vmem:[%s255 + $0xda0] sm:$0xff]
        %v783 = vld [vmem:[%s255 + $0xda8] sm:$0xff]
        %v784 = vld [vmem:[%s255 + $0xdb0] sm:$0xff]
        %v785 = vld [vmem:[%s255 + $0xdb8] sm:$0xff]
        %v786 = vld [vmem:[%s255 + $0xdc0] sm:$0xff]
        %v787 = vld [vmem:[%s255 + $0xdc8] sm:$0xff]
        %v788 = vld [vmem:[%s255 + $0xdd0] sm:$0xff]
        %v789 = vld [vmem:[%s255 + $0xdd8] sm:$0xff]
        %v790 = vld [vmem:[%s255 + $0xde0] sm:$0xff]
        %v791 = vld [vmem:[%s255 + $0xde8] sm:$0xff]
        %v792 = vld [vmem:[%s255 + $0xdf0] sm:$0xff]
        %v793 = vld [vmem:[%s255 + $0xdf8] sm:$0xff]
        %v794 = vld [vmem:[%s255 + $0xe00] sm:$0xff]
        %v795 = vld [vmem:[%s255 + $0xe08] sm:$0xff]
        %v796 = vld [vmem:[%s255 + $0xe10] sm:$0xff]
        %v797 = vld [vmem:[%s255 + $0xe18] sm:$0xff]
        %v798 = vld [vmem:[%s255 + $0xe20] sm:$0xff]
        %v799 = vld [vmem:[%s255 + $0xe28] sm:$0xff]
        %v800 = vld [vmem:[%s255 + $0xe30] sm:$0xff]
        %v801 = vld [vmem:[%s255 + $0xe38] sm:$0xff]
        %v802 = vld [vmem:[%s255 + $0xe40] sm:$0xff]
        %v803 = vld [vmem:[%s255 + $0xe48] sm:$0xff]
        %v804 = vld [vmem:[%s255 + $0xe50] sm:$0xff]
        %v805 = vld [vmem:[%s255 + $0xe58] sm:$0xff]
        %v806 = vld [vmem:[%s255 + $0xe60] sm:$0xff]
        %v807 = vld [vmem:[%s255 + $0xe68] sm:$0xff]
        %v808 = vld [vmem:[%s255 + $0xe70] sm:$0xff]
        %v809 = vld [vmem:[%s255 + $0xe78] sm:$0xff]
        %v810 = vld [vmem:[%s255 + $0xe80] sm:$0xff]
        %v811 = vld [vmem:[%s255 + $0xe88] sm:$0xff]
        %v812 = vld [vmem:[%s255 + $0xe90] sm:$0xff]
        %v813 = vld [vmem:[%s255 + $0xe98] sm:$0xff]
        %v814 = vld [vmem:[%s255 + $0xea0] sm:$0xff]
        %v815 = vld [vmem:[%s255 + $0xea8] sm:$0xff]
        %v816 = vld [vmem:[%s255 + $0xeb0] sm:$0xff]
        %v817 = vld [vmem:[%s255 + $0xeb8] sm:$0xff]
        %v818 = vld [vmem:[%s255 + $0xec0] sm:$0xff]
        %v819 = vld [vmem:[%s255 + $0xec8] sm:$0xff]
        %v820 = vld [vmem:[%s255 + $0xed0] sm:$0xff]
        %v821 = vld [vmem:[%s255 + $0xed8] sm:$0xff]
        %v822 = vld [vmem:[%s255 + $0xee0] sm:$0xff]
        %v823 = vld [vmem:[%s255 + $0xee8] sm:$0xff]
        %v824 = vld [vmem:[%s255 + $0xef0] sm:$0xff]
        %v825 = vld [vmem:[%s255 + $0xef8] sm:$0xff]
        %v826 = vld [vmem:[%s255 + $0xf00] sm:$0xff]
        %v827 = vld [vmem:[%s255 + $0xf08] sm:$0xff]
        %v828 = vld [vmem:[%s255 + $0xf10] sm:$0xff]
        %v829 = vld [vmem:[%s255 + $0xf18] sm:$0xff]
        %v830 = vld [vmem:[%s255 + $0xf20] sm:$0xff]
        %v831 = vld [vmem:[%s255 + $0xf28] sm:$0xff]
        %v832 = vld [vmem:[%s255 + $0xf30] sm:$0xff]
        %v833 = vld [vmem:[%s255 + $0xf38] sm:$0xff]
        %v834 = vld [vmem:[%s255 + $0xf40] sm:$0xff]
        %v835 = vld [vmem:[%s255 + $0xf48] sm:$0xff]
        %v836 = vld [vmem:[%s255 + $0xf50] sm:$0xff]
        %v837 = vld [vmem:[%s255 + $0xf58] sm:$0xff]
        %v838 = vld [vmem:[%s255 + $0xf60] sm:$0xff]
        %v839 = vld [vmem:[%s255 + $0xf68] sm:$0xff]
        %v840 = vld [vmem:[%s255 + $0xf70] sm:$0xff]
        %v841 = vld [vmem:[%s255 + $0xf78] sm:$0xff]
        %v842 = vld [vmem:[%s255 + $0xf80] sm:$0xff]
        %v843 = vld [vmem:[%s255 + $0xf88] sm:$0xff]
        %v844 = vld [vmem:[%s255 + $0xf90] sm:$0xff]
        %v845 = vld [vmem:[%s255 + $0xf98] sm:$0xff]
        %v846 = vld [vmem:[%s255 + $0xfa0] sm:$0xff]
        %v847 = vld [vmem:[%s255 + $0xfa8] sm:$0xff]
        %v848 = vld [vmem:[%s255 + $0xfb0] sm:$0xff]
        %v849 = vld [vmem:[%s255 + $0xfb8] sm:$0xff]
        %v850 = vld [vmem:[%s255 + $0xfc0] sm:$0xff]
        %v851 = vld [vmem:[%s255 + $0xfc8] sm:$0xff]
        %v852 = vld [vmem:[%s255 + $0xfd0] sm:$0xff]
        %v853 = vld [vmem:[%s255 + $0xfd8] sm:$0xff]
        %v854 = vld [vmem:[%s255 + $0xfe0] sm:$0xff]
        %v855 = vld [vmem:[%s255 + $0xfe8] sm:$0xff]
        %v856 = vld [vmem:[%s255 + $0xff0] sm:$0xff]
        %v857 = vld [vmem:[%s255 + $0xff8] sm:$0xff]
        %v858 = vld [vmem:[%s255 + $0x1000] sm:$0xff]
        %v859 = vld [vmem:[%s255 + $0x1008] sm:$0xff]
        %v860 = vld [vmem:[%s255 + $0x1010] sm:$0xff]
        %v861 = vld [vmem:[%s255 + $0x1018] sm:$0xff]
        %v862 = vld [vmem:[%s255 + $0x1020] sm:$0xff]
        %v863 = vld [vmem:[%s255 + $0x1028] sm:$0xff]
        %v864 = vld [vmem:[%s255 + $0x1030] sm:$0xff]
        %v865 = vld [vmem:[%s255 + $0x1038] sm:$0xff]
        %v866 = vld [vmem:[%s255 + $0x1040] sm:$0xff]
        %v867 = vld [vmem:[%s255 + $0x1048] sm:$0xff]
        %v868 = vld [vmem:[%s255 + $0x1050] sm:$0xff]
        %v869 = vld [vmem:[%s255 + $0x1058] sm:$0xff]
        %v870 = vld [vmem:[%s255 + $0x1060] sm:$0xff]
        %v871 = vld [vmem:[%s255 + $0x1068] sm:$0xff]
        %v872 = vld [vmem:[%s255 + $0x1070] sm:$0xff]
        %v873 = vld [vmem:[%s255 + $0x1078] sm:$0xff]
        %v874 = vld [vmem:[%s255 + $0x1080] sm:$0xff]
        %v875 = vld [vmem:[%s255 + $0x1088] sm:$0xff]
        %v876 = vld [vmem:[%s255 + $0x1090] sm:$0xff]
        %v877 = vld [vmem:[%s255 + $0x1098] sm:$0xff]
        %v878 = vld [vmem:[%s255 + $0x10a0] sm:$0xff]
        %v879 = vld [vmem:[%s255 + $0x10a8] sm:$0xff]
        %v880 = vld [vmem:[%s255 + $0x10b0] sm:$0xff]
        %v881 = vld [vmem:[%s255 + $0x10b8] sm:$0xff]
        %v882 = vld [vmem:[%s255 + $0x10c0] sm:$0xff]
        %v883 = vld [vmem:[%s255 + $0x10c8] sm:$0xff]
        %v884 = vld [vmem:[%s255 + $0x10d0] sm:$0xff]
        %v885 = vld [vmem:[%s255 + $0x10d8] sm:$0xff]
        %v886 = vld [vmem:[%s255 + $0x10e0] sm:$0xff]
        %v887 = vld [vmem:[%s255 + $0x10e8] sm:$0xff]
        %v888 = vld [vmem:[%s255 + $0x10f0] sm:$0xff]
        %v889 = vld [vmem:[%s255 + $0x10f8] sm:$0xff]
        %v890 = vld [vmem:[%s255 + $0x1100] sm:$0xff]
        %v891 = vld [vmem:[%s255 + $0x1108] sm:$0xff]
        %v892 = vld [vmem:[%s255 + $0x1110] sm:$0xff]
        %v893 = vld [vmem:[%s255 + $0x1118] sm:$0xff]
        %v894 = vld [vmem:[%s255 + $0x1120] sm:$0xff]
        %v895 = vld [vmem:[%s255 + $0x1128] sm:$0xff]
        %v896 = vld [vmem:[%s255 + $0x1130] sm:$0xff]
        %v897 = vld [vmem:[%s255 + $0x1138] sm:$0xff]
        %v898 = vld [vmem:[%s255 + $0x1140] sm:$0xff]
        %v899 = vld [vmem:[%s255 + $0x1148] sm:$0xff]
        %v900 = vld [vmem:[%s255 + $0x1150] sm:$0xff]
        %v901 = vld [vmem:[%s255 + $0x1158] sm:$0xff]
        %v902 = vld [vmem:[%s255 + $0x1160] sm:$0xff]
        %v903 = vld [vmem:[%s255 + $0x1168] sm:$0xff]
        %v904 = vld [vmem:[%s255 + $0x1170] sm:$0xff]
        %v905 = vld [vmem:[%s255 + $0x1178] sm:$0xff]
        %v906 = vld [vmem:[%s255 + $0x1180] sm:$0xff]
        %v907 = vld [vmem:[%s255 + $0x1188] sm:$0xff]
        %v908 = vld [vmem:[%s255 + $0x1190] sm:$0xff]
        %v909 = vld [vmem:[%s255 + $0x1198] sm:$0xff]
        %v910 = vld [vmem:[%s255 + $0x11a0] sm:$0xff]
        %v911 = vld [vmem:[%s255 + $0x11a8] sm:$0xff]
        %v912 = vld [vmem:[%s255 + $0x11b0] sm:$0xff]
        %v913 = vld [vmem:[%s255 + $0x11b8] sm:$0xff]
        %v914 = vld [vmem:[%s255 + $0x11c0] sm:$0xff]
        %v915 = vld [vmem:[%s255 + $0x11c8] sm:$0xff]
        %v916 = vld [vmem:[%s255 + $0x11d0] sm:$0xff]
        %v917 = vld [vmem:[%s255 + $0x11d8] sm:$0xff]
        %v918 = vld [vmem:[%s255 + $0x11e0] sm:$0xff]
        %v919 = vld [vmem:[%s255 + $0x11e8] sm:$0xff]
        %v920 = vld [vmem:[%s255 + $0x11f0] sm:$0xff]
        %v921 = vld [vmem:[%s255 + $0x11f8] sm:$0xff]
        %v922 = vld [vmem:[%s255 + $0x1200] sm:$0xff]
        %v923 = vld [vmem:[%s255 + $0x1208] sm:$0xff]
        %v924 = vld [vmem:[%s255 + $0x1210] sm:$0xff]
        %v925 = vld [vmem:[%s255 + $0x1218] sm:$0xff]
        %v926 = vld [vmem:[%s255 + $0x1220] sm:$0xff]
        %v927 = vld [vmem:[%s255 + $0x1228] sm:$0xff]
        %v928 = vld [vmem:[%s255 + $0x1230] sm:$0xff]
        %v929 = vld [vmem:[%s255 + $0x1238] sm:$0xff]
        %v930 = vld [vmem:[%s255 + $0x1240] sm:$0xff]
        %v931 = vld [vmem:[%s255 + $0x1248] sm:$0xff]
        %v932 = vld [vmem:[%s255 + $0x1250] sm:$0xff]
        %v933 = vld [vmem:[%s255 + $0x1258] sm:$0xff]
        %935 = vst [vmem:[#allocation1] ss:$9 sm:$0xff] %v309
        %v936 = vld [vmem:[#allocation1] sm:$0xff]
        %v937 = vld [vmem:[#allocation1 + $0x9] sm:$0xff]
        %v938 = vld [vmem:[#allocation1 + $0x12] sm:$0xff]
        %v939 = vld [vmem:[#allocation1 + $0x1b] sm:$0xff]
        %v940 = vld [vmem:[#allocation1 + $0x24] sm:$0xff]
        %v941 = vld [vmem:[#allocation1 + $0x2d] sm:$0xff]
        %v942 = vld [vmem:[#allocation1 + $0x36] sm:$0xff]
        %v943 = vld [vmem:[#allocation1 + $0x3f] sm:$0xff]
        %945 = vst [vmem:[#allocation1] ss:$9 sm:$0xff] %v310
        %v946 = vld [vmem:[#allocation1] sm:$0xff]
        %v947 = vld [vmem:[#allocation1 + $0x9] sm:$0xff]
        %v948 = vld [vmem:[#allocation1 + $0x12] sm:$0xff]
        %v949 = vld [vmem:[#allocation1 + $0x1b] sm:$0xff]
        %v950 = vld [vmem:[#allocation1 + $0x24] sm:$0xff]
        %v951 = vld [vmem:[#allocation1 + $0x2d] sm:$0xff]
        %v952 = vld [vmem:[#allocation1 + $0x36] sm:$0xff]
        %v953 = vld [vmem:[#allocation1 + $0x3f] sm:$0xff]
        %955 = vst [vmem:[#allocation1] ss:$9 sm:$0xff] %v311
        %v956 = vld [vmem:[#allocation1] sm:$0xff]
        %v957 = vld [vmem:[#allocation1 + $0x9] sm:$0xff]
        %v958 = vld [vmem:[#allocation1 + $0x12] sm:$0xff]
        %v959 = vld [vmem:[#allocation1 + $0x1b] sm:$0xff]
        %v960 = vld [vmem:[#allocation1 + $0x24] sm:$0xff]
        %v961 = vld [vmem:[#allocation1 + $0x2d] sm:$0xff]
        %v962 = vld [vmem:[#allocation1 + $0x36] sm:$0xff]
        %v963 = vld [vmem:[#allocation1 + $0x3f] sm:$0xff]
        %965 = vst [vmem:[#allocation1] ss:$9 sm:$0xff] %v312
        %v966 = vld [vmem:[#allocation1] sm:$0xff]
        %v967 = vld [vmem:[#allocation1 + $0x9] sm:$0xff]
        %v968 = vld [vmem:[#allocation1 + $0x12] sm:$0xff]
        %v969 = vld [vmem:[#allocation1 + $0x1b] sm:$0xff]
        %v970 = vld [vmem:[#allocation1 + $0x24] sm:$0xff]
        %v971 = vld [vmem:[#allocation1 + $0x2d] sm:$0xff]
        %v972 = vld [vmem:[#allocation1 + $0x36] sm:$0xff]
        %v973 = vld [vmem:[#allocation1 + $0x3f] sm:$0xff]
        %975 = vst [vmem:[#allocation1] ss:$9 sm:$0xff] %v313
        %v976 = vld [vmem:[#allocation1] sm:$0xff]
        %v977 = vld [vmem:[#allocation1 + $0x9] sm:$0xff]
        %v978 = vld [vmem:[#allocation1 + $0x12] sm:$0xff]
        %v979 = vld [vmem:[#allocation1 + $0x1b] sm:$0xff]
        %v980 = vld [vmem:[#allocation1 + $0x24] sm:$0xff]
        %v981 = vld [vmem:[#allocation1 + $0x2d] sm:$0xff]
        %v982 = vld [vmem:[#allocation1 + $0x36] sm:$0xff]
        %v983 = vld [vmem:[#allocation1 + $0x3f] sm:$0xff]
        %985 = vst [vmem:[#allocation1] ss:$9 sm:$0xff] %v314
        %v986 = vld [vmem:[#allocation1] sm:$0xff]
        %v987 = vld [vmem:[#allocation1 + $0x9] sm:$0xff]
        %v988 = vld [vmem:[#allocation1 + $0x12] sm:$0xff]
        %v989 = vld [vmem:[#allocation1 + $0x1b] sm:$0xff]
        %v990 = vld [vmem:[#allocation1 + $0x24] sm:$0xff]
        %v991 = vld [vmem:[#allocation1 + $0x2d] sm:$0xff]
        %v992 = vld [vmem:[#allocation1 + $0x36] sm:$0xff]
        %v993 = vld [vmem:[#allocation1 + $0x3f] sm:$0xff]
        %995 = vst [vmem:[#allocation1] ss:$9 sm:$0xff] %v315
        %v996 = vld [vmem:[#allocation1] sm:$0xff]
        %v997 = vld [vmem:[#allocation1 + $0x9] sm:$0xff]
        %v998 = vld [vmem:[#allocation1 + $0x12] sm:$0xff]
        %v999 = vld [vmem:[#allocation1 + $0x1b] sm:$0xff]
        %v1000 = vld [vmem:[#allocation1 + $0x24] sm:$0xff]
        %v1001 = vld [vmem:[#allocation1 + $0x2d] sm:$0xff]
        %v1002 = vld [vmem:[#allocation1 + $0x36] sm:$0xff]
        %v1003 = vld [vmem:[#allocation1 + $0x3f] sm:$0xff]
        %1005 = vst [vmem:[#allocation1] ss:$9 sm:$0xff] %v316
        %v1006 = vld [vmem:[#allocation1] sm:$0xff]
        %v1007 = vld [vmem:[#allocation1 + $0x9] sm:$0xff]
        %v1008 = vld [vmem:[#allocation1 + $0x12] sm:$0xff]
        %v1009 = vld [vmem:[#allocation1 + $0x1b] sm:$0xff]
        %v1010 = vld [vmem:[#allocation1 + $0x24] sm:$0xff]
        %v1011 = vld [vmem:[#allocation1 + $0x2d] sm:$0xff]
        %v1012 = vld [vmem:[#allocation1 + $0x36] sm:$0xff]
        %v1013 = vld [vmem:[#allocation1 + $0x3f] sm:$0xff]
        %1015 = vst [vmem:[#allocation1] ss:$9 sm:$0xff] %v317
        %v1016 = vld [vmem:[#allocation1] sm:$0xff]
        %v1017 = vld [vmem:[#allocation1 + $0x9] sm:$0xff]
        %v1018 = vld [vmem:[#allocation1 + $0x12] sm:$0xff]
        %v1019 = vld [vmem:[#allocation1 + $0x1b] sm:$0xff]
        %v1020 = vld [vmem:[#allocation1 + $0x24] sm:$0xff]
        %v1021 = vld [vmem:[#allocation1 + $0x2d] sm:$0xff]
        %v1022 = vld [vmem:[#allocation1 + $0x36] sm:$0xff]
        %v1023 = vld [vmem:[#allocation1 + $0x3f] sm:$0xff]
        %1025 = vst [vmem:[#allocation1] ss:$9 sm:$0xff] %v318
        %v1026 = vld [vmem:[#allocation1] sm:$0xff]
        %v1027 = vld [vmem:[#allocation1 + $0x9] sm:$0xff]
        %v1028 = vld [vmem:[#allocation1 + $0x12] sm:$0xff]
        %v1029 = vld [vmem:[#allocation1 + $0x1b] sm:$0xff]
        %v1030 = vld [vmem:[#allocation1 + $0x24] sm:$0xff]
        %v1031 = vld [vmem:[#allocation1 + $0x2d] sm:$0xff]
        %v1032 = vld [vmem:[#allocation1 + $0x36] sm:$0xff]
        %v1033 = vld [vmem:[#allocation1 + $0x3f] sm:$0xff]
        %1035 = vst [vmem:[#allocation1] ss:$9 sm:$0xff] %v319
        %v1036 = vld [vmem:[#allocation1] sm:$0xff]
        %v1037 = vld [vmem:[#allocation1 + $0x9] sm:$0xff]
        %v1038 = vld [vmem:[#allocation1 + $0x12] sm:$0xff]
        %v1039 = vld [vmem:[#allocation1 + $0x1b] sm:$0xff]
        %v1040 = vld [vmem:[#allocation1 + $0x24] sm:$0xff]
        %v1041 = vld [vmem:[#allocation1 + $0x2d] sm:$0xff]
        %v1042 = vld [vmem:[#allocation1 + $0x36] sm:$0xff]
        %v1043 = vld [vmem:[#allocation1 + $0x3f] sm:$0xff]
        %1045 = vst [vmem:[#allocation1] ss:$9 sm:$0xff] %v320
        %v1046 = vld [vmem:[#allocation1] sm:$0xff]
        %v1047 = vld [vmem:[#allocation1 + $0x9] sm:$0xff]
        %v1048 = vld [vmem:[#allocation1 + $0x12] sm:$0xff]
        %v1049 = vld [vmem:[#allocation1 + $0x1b] sm:$0xff]
        %v1050 = vld [vmem:[#allocation1 + $0x24] sm:$0xff]
        %v1051 = vld [vmem:[#allocation1 + $0x2d] sm:$0xff]
        %v1052 = vld [vmem:[#allocation1 + $0x36] sm:$0xff]
        %v1053 = vld [vmem:[#allocation1 + $0x3f] sm:$0xff]
        %1055 = vst [vmem:[#allocation1] ss:$9 sm:$0xff] %v321
        %v1056 = vld [vmem:[#allocation1] sm:$0xff]
        %v1057 = vld [vmem:[#allocation1 + $0x9] sm:$0xff]
        %v1058 = vld [vmem:[#allocation1 + $0x12] sm:$0xff]
        %v1059 = vld [vmem:[#allocation1 + $0x1b] sm:$0xff]
        %v1060 = vld [vmem:[#allocation1 + $0x24] sm:$0xff]
        %v1061 = vld [vmem:[#allocation1 + $0x2d] sm:$0xff]
        %v1062 = vld [vmem:[#allocation1 + $0x36] sm:$0xff]
        %v1063 = vld [vmem:[#allocation1 + $0x3f] sm:$0xff]
        %1065 = vst [vmem:[#allocation1] ss:$9 sm:$0xff] %v322
        %v1066 = vld [vmem:[#allocation1] sm:$0xff]
        %v1067 = vld [vmem:[#allocation1 + $0x9] sm:$0xff]
        %v1068 = vld [vmem:[#allocation1 + $0x12] sm:$0xff]
        %v1069 = vld [vmem:[#allocation1 + $0x1b] sm:$0xff]
        %v1070 = vld [vmem:[#allocation1 + $0x24] sm:$0xff]
        %v1071 = vld [vmem:[#allocation1 + $0x2d] sm:$0xff]
        %v1072 = vld [vmem:[#allocation1 + $0x36] sm:$0xff]
        %v1073 = vld [vmem:[#allocation1 + $0x3f] sm:$0xff]
        %1075 = vst [vmem:[#allocation1] ss:$9 sm:$0xff] %v323
        %v1076 = vld [vmem:[#allocation1] sm:$0xff]
        %v1077 = vld [vmem:[#allocation1 + $0x9] sm:$0xff]
        %v1078 = vld [vmem:[#allocation1 + $0x12] sm:$0xff]
        %v1079 = vld [vmem:[#allocation1 + $0x1b] sm:$0xff]
        %v1080 = vld [vmem:[#allocation1 + $0x24] sm:$0xff]
        %v1081 = vld [vmem:[#allocation1 + $0x2d] sm:$0xff]
        %v1082 = vld [vmem:[#allocation1 + $0x36] sm:$0xff]
        %v1083 = vld [vmem:[#allocation1 + $0x3f] sm:$0xff]
        %1085 = vst [vmem:[#allocation1] ss:$9 sm:$0xff] %v324
        %v1086 = vld [vmem:[#allocation1] sm:$0xff]
        %v1087 = vld [vmem:[#allocation1 + $0x9] sm:$0xff]
        %v1088 = vld [vmem:[#allocation1 + $0x12] sm:$0xff]
        %v1089 = vld [vmem:[#allocation1 + $0x1b] sm:$0xff]
        %v1090 = vld [vmem:[#allocation1 + $0x24] sm:$0xff]
        %v1091 = vld [vmem:[#allocation1 + $0x2d] sm:$0xff]
        %v1092 = vld [vmem:[#allocation1 + $0x36] sm:$0xff]
        %v1093 = vld [vmem:[#allocation1 + $0x3f] sm:$0xff]
        %1095 = vst [vmem:[#allocation1] ss:$9 sm:$0xff] %v325
        %v1096 = vld [vmem:[#allocation1] sm:$0xff]
        %v1097 = vld [vmem:[#allocation1 + $0x9] sm:$0xff]
        %v1098 = vld [vmem:[#allocation1 + $0x12] sm:$0xff]
        %v1099 = vld [vmem:[#allocation1 + $0x1b] sm:$0xff]
        %v1100 = vld [vmem:[#allocation1 + $0x24] sm:$0xff]
        %v1101 = vld [vmem:[#allocation1 + $0x2d] sm:$0xff]
        %v1102 = vld [vmem:[#allocation1 + $0x36] sm:$0xff]
        %v1103 = vld [vmem:[#allocation1 + $0x3f] sm:$0xff]
        %1105 = vst [vmem:[#allocation1] ss:$9 sm:$0xff] %v326
        %v1106 = vld [vmem:[#allocation1] sm:$0xff]
        %v1107 = vld [vmem:[#allocation1 + $0x9] sm:$0xff]
        %v1108 = vld [vmem:[#allocation1 + $0x12] sm:$0xff]
        %v1109 = vld [vmem:[#allocation1 + $0x1b] sm:$0xff]
        %v1110 = vld [vmem:[#allocation1 + $0x24] sm:$0xff]
        %v1111 = vld [vmem:[#allocation1 + $0x2d] sm:$0xff]
        %v1112 = vld [vmem:[#allocation1 + $0x36] sm:$0xff]
        %v1113 = vld [vmem:[#allocation1 + $0x3f] sm:$0xff]
        %1115 = vst [vmem:[#allocation1] ss:$9 sm:$0xff] %v327
        %v1116 = vld [vmem:[#allocation1] sm:$0xff]
        %v1117 = vld [vmem:[#allocation1 + $0x9] sm:$0xff]
        %v1118 = vld [vmem:[#allocation1 + $0x12] sm:$0xff]
        %v1119 = vld [vmem:[#allocation1 + $0x1b] sm:$0xff]
        %v1120 = vld [vmem:[#allocation1 + $0x24] sm:$0xff]
        %v1121 = vld [vmem:[#allocation1 + $0x2d] sm:$0xff]
        %v1122 = vld [vmem:[#allocation1 + $0x36] sm:$0xff]
        %v1123 = vld [vmem:[#allocation1 + $0x3f] sm:$0xff]
        %1125 = vst [vmem:[#allocation1] ss:$9 sm:$0xff] %v328
        %v1126 = vld [vmem:[#allocation1] sm:$0xff]
        %v1127 = vld [vmem:[#allocation1 + $0x9] sm:$0xff]
        %v1128 = vld [vmem:[#allocation1 + $0x12] sm:$0xff]
        %v1129 = vld [vmem:[#allocation1 + $0x1b] sm:$0xff]
        %v1130 = vld [vmem:[#allocation1 + $0x24] sm:$0xff]
        %v1131 = vld [vmem:[#allocation1 + $0x2d] sm:$0xff]
        %v1132 = vld [vmem:[#allocation1 + $0x36] sm:$0xff]
        %v1133 = vld [vmem:[#allocation1 + $0x3f] sm:$0xff]
        %1135 = vst [vmem:[#allocation1] ss:$9 sm:$0xff] %v329
        %v1136 = vld [vmem:[#allocation1] sm:$0xff]
        %v1137 = vld [vmem:[#allocation1 + $0x9] sm:$0xff]
        %v1138 = vld [vmem:[#allocation1 + $0x12] sm:$0xff]
        %v1139 = vld [vmem:[#allocation1 + $0x1b] sm:$0xff]
        %v1140 = vld [vmem:[#allocation1 + $0x24] sm:$0xff]
        %v1141 = vld [vmem:[#allocation1 + $0x2d] sm:$0xff]
        %v1142 = vld [vmem:[#allocation1 + $0x36] sm:$0xff]
        %v1143 = vld [vmem:[#allocation1 + $0x3f] sm:$0xff]
        %1145 = vst [vmem:[#allocation1] ss:$9 sm:$0xff] %v330
        %v1146 = vld [vmem:[#allocation1] sm:$0xff]
        %v1147 = vld [vmem:[#allocation1 + $0x9] sm:$0xff]
        %v1148 = vld [vmem:[#allocation1 + $0x12] sm:$0xff]
        %v1149 = vld [vmem:[#allocation1 + $0x1b] sm:$0xff]
        %v1150 = vld [vmem:[#allocation1 + $0x24] sm:$0xff]
        %v1151 = vld [vmem:[#allocation1 + $0x2d] sm:$0xff]
        %v1152 = vld [vmem:[#allocation1 + $0x36] sm:$0xff]
        %v1153 = vld [vmem:[#allocation1 + $0x3f] sm:$0xff]
        %1155 = vst [vmem:[#allocation1] ss:$9 sm:$0xff] %v331
        %v1156 = vld [vmem:[#allocation1] sm:$0xff]
        %v1157 = vld [vmem:[#allocation1 + $0x9] sm:$0xff]
        %v1158 = vld [vmem:[#allocation1 + $0x12] sm:$0xff]
        %v1159 = vld [vmem:[#allocation1 + $0x1b] sm:$0xff]
        %v1160 = vld [vmem:[#allocation1 + $0x24] sm:$0xff]
        %v1161 = vld [vmem:[#allocation1 + $0x2d] sm:$0xff]
        %v1162 = vld [vmem:[#allocation1 + $0x36] sm:$0xff]
        %v1163 = vld [vmem:[#allocation1 + $0x3f] sm:$0xff]
        %1165 = vst [vmem:[#allocation1] ss:$9 sm:$0xff] %v332
        %v1166 = vld [vmem:[#allocation1] sm:$0xff]
        %v1167 = vld [vmem:[#allocation1 + $0x9] sm:$0xff]
        %v1168 = vld [vmem:[#allocation1 + $0x12] sm:$0xff]
        %v1169 = vld [vmem:[#allocation1 + $0x1b] sm:$0xff]
        %v1170 = vld [vmem:[#allocation1 + $0x24] sm:$0xff]
        %v1171 = vld [vmem:[#allocation1 + $0x2d] sm:$0xff]
        %v1172 = vld [vmem:[#allocation1 + $0x36] sm:$0xff]
        %v1173 = vld [vmem:[#allocation1 + $0x3f] sm:$0xff]
        %1175 = vst [vmem:[#allocation1] ss:$9 sm:$0xff] %v333
        %v1176 = vld [vmem:[#allocation1] sm:$0xff]
        %v1177 = vld [vmem:[#allocation1 + $0x9] sm:$0xff]
        %v1178 = vld [vmem:[#allocation1 + $0x12] sm:$0xff]
        %v1179 = vld [vmem:[#allocation1 + $0x1b] sm:$0xff]
        %v1180 = vld [vmem:[#allocation1 + $0x24] sm:$0xff]
        %v1181 = vld [vmem:[#allocation1 + $0x2d] sm:$0xff]
        %v1182 = vld [vmem:[#allocation1 + $0x36] sm:$0xff]
        %v1183 = vld [vmem:[#allocation1 + $0x3f] sm:$0xff]
        %1185 = vst [vmem:[#allocation1] ss:$9 sm:$0xff] %v334
        %v1186 = vld [vmem:[#allocation1] sm:$0xff]
        %v1187 = vld [vmem:[#allocation1 + $0x9] sm:$0xff]
        %v1188 = vld [vmem:[#allocation1 + $0x12] sm:$0xff]
        %v1189 = vld [vmem:[#allocation1 + $0x1b] sm:$0xff]
        %v1190 = vld [vmem:[#allocation1 + $0x24] sm:$0xff]
        %v1191 = vld [vmem:[#allocation1 + $0x2d] sm:$0xff]
        %v1192 = vld [vmem:[#allocation1 + $0x36] sm:$0xff]
        %v1193 = vld [vmem:[#allocation1 + $0x3f] sm:$0xff]
        %1195 = vst [vmem:[#allocation1] ss:$9 sm:$0xff] %v335
        %v1196 = vld [vmem:[#allocation1] sm:$0xff]
        %v1197 = vld [vmem:[#allocation1 + $0x9] sm:$0xff]
        %v1198 = vld [vmem:[#allocation1 + $0x12] sm:$0xff]
        %v1199 = vld [vmem:[#allocation1 + $0x1b] sm:$0xff]
        %v1200 = vld [vmem:[#allocation1 + $0x24] sm:$0xff]
        %v1201 = vld [vmem:[#allocation1 + $0x2d] sm:$0xff]
        %v1202 = vld [vmem:[#allocation1 + $0x36] sm:$0xff]
        %v1203 = vld [vmem:[#allocation1 + $0x3f] sm:$0xff]
        %1205 = vst [vmem:[#allocation1] ss:$9 sm:$0xff] %v336
        %v1206 = vld [vmem:[#allocation1] sm:$0xff]
        %v1207 = vld [vmem:[#allocation1 + $0x9] sm:$0xff]
        %v1208 = vld [vmem:[#allocation1 + $0x12] sm:$0xff]
        %v1209 = vld [vmem:[#allocation1 + $0x1b] sm:$0xff]
        %v1210 = vld [vmem:[#allocation1 + $0x24] sm:$0xff]
        %v1211 = vld [vmem:[#allocation1 + $0x2d] sm:$0xff]
        %v1212 = vld [vmem:[#allocation1 + $0x36] sm:$0xff]
        %v1213 = vld [vmem:[#allocation1 + $0x3f] sm:$0xff]
        %1215 = vst [vmem:[#allocation1] ss:$9 sm:$0xff] %v337
        %v1216 = vld [vmem:[#allocation1] sm:$0xff]
        %v1217 = vld [vmem:[#allocation1 + $0x9] sm:$0xff]
        %v1218 = vld [vmem:[#allocation1 + $0x12] sm:$0xff]
        %v1219 = vld [vmem:[#allocation1 + $0x1b] sm:$0xff]
        %v1220 = vld [vmem:[#allocation1 + $0x24] sm:$0xff]
        %v1221 = vld [vmem:[#allocation1 + $0x2d] sm:$0xff]
        %v1222 = vld [vmem:[#allocation1 + $0x36] sm:$0xff]
        %v1223 = vld [vmem:[#allocation1 + $0x3f] sm:$0xff]
        %1225 = vst [vmem:[#allocation1] ss:$9 sm:$0xff] %v338
        %v1226 = vld [vmem:[#allocation1] sm:$0xff]
        %v1227 = vld [vmem:[#allocation1 + $0x9] sm:$0xff]
        %v1228 = vld [vmem:[#allocation1 + $0x12] sm:$0xff]
        %v1229 = vld [vmem:[#allocation1 + $0x1b] sm:$0xff]
        %v1230 = vld [vmem:[#allocation1 + $0x24] sm:$0xff]
        %v1231 = vld [vmem:[#allocation1 + $0x2d] sm:$0xff]
        %v1232 = vld [vmem:[#allocation1 + $0x36] sm:$0xff]
        %v1233 = vld [vmem:[#allocation1 + $0x3f] sm:$0xff]
        %1235 = vst [vmem:[#allocation1] ss:$9 sm:$0xff] %v339
        %v1236 = vld [vmem:[#allocation1] sm:$0xff]
        %v1237 = vld [vmem:[#allocation1 + $0x9] sm:$0xff]
        %v1238 = vld [vmem:[#allocation1 + $0x12] sm:$0xff]
        %v1239 = vld [vmem:[#allocation1 + $0x1b] sm:$0xff]
        %v1240 = vld [vmem:[#allocation1 + $0x24] sm:$0xff]
        %v1241 = vld [vmem:[#allocation1 + $0x2d] sm:$0xff]
        %v1242 = vld [vmem:[#allocation1 + $0x36] sm:$0xff]
        %v1243 = vld [vmem:[#allocation1 + $0x3f] sm:$0xff]
        %1245 = vst [vmem:[#allocation1] ss:$9 sm:$0xff] %v340
        %v1246 = vld [vmem:[#allocation1] sm:$0xff]
        %v1247 = vld [vmem:[#allocation1 + $0x9] sm:$0xff]
        %v1248 = vld [vmem:[#allocation1 + $0x12] sm:$0xff]
        %v1249 = vld [vmem:[#allocation1 + $0x1b] sm:$0xff]
        %v1250 = vld [vmem:[#allocation1 + $0x24] sm:$0xff]
        %v1251 = vld [vmem:[#allocation1 + $0x2d] sm:$0xff]
        %v1252 = vld [vmem:[#allocation1 + $0x36] sm:$0xff]
        %v1253 = vld [vmem:[#allocation1 + $0x3f] sm:$0xff]
        %1255 = vst [vmem:[#allocation1] ss:$9 sm:$0xff] %v341
        %v1256 = vld [vmem:[#allocation1] sm:$0xff]
        %v1257 = vld [vmem:[#allocation1 + $0x9] sm:$0xff]
        %v1258 = vld [vmem:[#allocation1 + $0x12] sm:$0xff]
        %v1259 = vld [vmem:[#allocation1 + $0x1b] sm:$0xff]
        %v1260 = vld [vmem:[#allocation1 + $0x24] sm:$0xff]
        %v1261 = vld [vmem:[#allocation1 + $0x2d] sm:$0xff]
        %v1262 = vld [vmem:[#allocation1 + $0x36] sm:$0xff]
        %v1263 = vld [vmem:[#allocation1 + $0x3f] sm:$0xff]
        %1265 = vst [vmem:[#allocation1] ss:$9 sm:$0xff] %v342
        %v1266 = vld [vmem:[#allocation1] sm:$0xff]
        %v1267 = vld [vmem:[#allocation1 + $0x9] sm:$0xff]
        %v1268 = vld [vmem:[#allocation1 + $0x12] sm:$0xff]
        %v1269 = vld [vmem:[#allocation1 + $0x1b] sm:$0xff]
        %v1270 = vld [vmem:[#allocation1 + $0x24] sm:$0xff]
        %v1271 = vld [vmem:[#allocation1 + $0x2d] sm:$0xff]
        %v1272 = vld [vmem:[#allocation1 + $0x36] sm:$0xff]
        %v1273 = vld [vmem:[#allocation1 + $0x3f] sm:$0xff]
        %1275 = vst [vmem:[#allocation1] ss:$9 sm:$0xff] %v343
        %v1276 = vld [vmem:[#allocation1] sm:$0xff]
        %v1277 = vld [vmem:[#allocation1 + $0x9] sm:$0xff]
        %v1278 = vld [vmem:[#allocation1 + $0x12] sm:$0xff]
        %v1279 = vld [vmem:[#allocation1 + $0x1b] sm:$0xff]
        %v1280 = vld [vmem:[#allocation1 + $0x24] sm:$0xff]
        %v1281 = vld [vmem:[#allocation1 + $0x2d] sm:$0xff]
        %v1282 = vld [vmem:[#allocation1 + $0x36] sm:$0xff]
        %v1283 = vld [vmem:[#allocation1 + $0x3f] sm:$0xff]
        %1285 = vst [vmem:[#allocation1] ss:$9 sm:$0xff] %v344
        %v1286 = vld [vmem:[#allocation1] sm:$0xff]
        %v1287 = vld [vmem:[#allocation1 + $0x9] sm:$0xff]
        %v1288 = vld [vmem:[#allocation1 + $0x12] sm:$0xff]
        %v1289 = vld [vmem:[#allocation1 + $0x1b] sm:$0xff]
        %v1290 = vld [vmem:[#allocation1 + $0x24] sm:$0xff]
        %v1291 = vld [vmem:[#allocation1 + $0x2d] sm:$0xff]
        %v1292 = vld [vmem:[#allocation1 + $0x36] sm:$0xff]
        %v1293 = vld [vmem:[#allocation1 + $0x3f] sm:$0xff]
        %1295 = vst [vmem:[#allocation1] ss:$9 sm:$0xff] %v345
        %v1296 = vld [vmem:[#allocation1] sm:$0xff]
        %v1297 = vld [vmem:[#allocation1 + $0x9] sm:$0xff]
        %v1298 = vld [vmem:[#allocation1 + $0x12] sm:$0xff]
        %v1299 = vld [vmem:[#allocation1 + $0x1b] sm:$0xff]
        %v1300 = vld [vmem:[#allocation1 + $0x24] sm:$0xff]
        %v1301 = vld [vmem:[#allocation1 + $0x2d] sm:$0xff]
        %v2184 = vunpack.c.l.b16 %v346
        %v2185 = vunpack.c.h.b16 %v346
        %v2186 = vunpack.c.l.b16 %v347
        %v2187 = vunpack.c.h.b16 %v347
        %v2188 = vunpack.c.l.b16 %v348
        %v2189 = vunpack.c.h.b16 %v348
        %v2190 = vunpack.c.l.b16 %v349
        %v2191 = vunpack.c.h.b16 %v349
        %v2192 = vunpack.c.l.b16 %v350
        %v2193 = vunpack.c.h.b16 %v350
        %v2194 = vunpack.c.l.b16 %v351
        %v2195 = vunpack.c.h.b16 %v351
        %v2196 = vunpack.c.l.b16 %v352
        %v2197 = vunpack.c.h.b16 %v352
        %v2198 = vunpack.c.l.b16 %v353
        %v2199 = vunpack.c.h.b16 %v353
        %v2200 = vunpack.c.l.b16 %v354
        %v2201 = vunpack.c.h.b16 %v354
        %v2202 = vunpack.c.l.b16 %v355
        %v2203 = vunpack.c.h.b16 %v355
        %v2204 = vunpack.c.l.b16 %v356
        %v2205 = vunpack.c.h.b16 %v356
        %v2206 = vunpack.c.l.b16 %v357
        %v2207 = vunpack.c.h.b16 %v357
        %v2208 = vunpack.c.l.b16 %v358
        %v2209 = vunpack.c.h.b16 %v358
        %v2210 = vunpack.c.l.b16 %v359
        %v2211 = vunpack.c.h.b16 %v359
        %v2212 = vunpack.c.l.b16 %v360
        %v2213 = vunpack.c.h.b16 %v360
        %v2214 = vunpack.c.l.b16 %v361
        %v2215 = vunpack.c.h.b16 %v361
        %v2216 = vunpack.c.l.b16 %v362
        %v2217 = vunpack.c.h.b16 %v362
        %v2218 = vunpack.c.l.b16 %v363
        %v2219 = vunpack.c.h.b16 %v363
        %v2220 = vunpack.c.l.b16 %v364
        %v2221 = vunpack.c.h.b16 %v364
        %v2222 = vunpack.c.l.b16 %v365
        %v2223 = vunpack.c.h.b16 %v365
        %v2224 = vunpack.c.l.b16 %v366
        %v2225 = vunpack.c.h.b16 %v366
        %v2226 = vunpack.c.l.b16 %v367
        %v2227 = vunpack.c.h.b16 %v367
        %v2228 = vunpack.c.l.b16 %v368
        %v2229 = vunpack.c.h.b16 %v368
        %v2230 = vunpack.c.l.b16 %v369
        %v2231 = vunpack.c.h.b16 %v369
        %v2232 = vunpack.c.l.b16 %v370
        %v2233 = vunpack.c.h.b16 %v370
        %v2234 = vunpack.c.l.b16 %v371
        %v2235 = vunpack.c.h.b16 %v371
        %v2236 = vunpack.c.l.b16 %v372
        %v2237 = vunpack.c.h.b16 %v372
        %v2238 = vunpack.c.l.b16 %v373
        %v2239 = vunpack.c.h.b16 %v373
        %v2240 = vunpack.c.l.b16 %v374
        %v2241 = vunpack.c.h.b16 %v374
        %v2242 = vunpack.c.l.b16 %v375
        %v2243 = vunpack.c.h.b16 %v375
        %v2244 = vunpack.c.l.b16 %v376
        %v2245 = vunpack.c.h.b16 %v376
        %v2246 = vunpack.c.l.b16 %v377
        %v2247 = vunpack.c.h.b16 %v377
        %v2248 = vunpack.c.l.b16 %v378
        %v2249 = vunpack.c.h.b16 %v378
        %v2250 = vunpack.c.l.b16 %v379
        %v2251 = vunpack.c.h.b16 %v379
        %v2252 = vunpack.c.l.b16 %v380
        %v2253 = vunpack.c.h.b16 %v380
        %v2254 = vunpack.c.l.b16 %v381
        %v2255 = vunpack.c.h.b16 %v381
        %v2256 = vunpack.c.l.b16 %v382
        %v2257 = vunpack.c.h.b16 %v382
        %v2258 = vunpack.c.l.b16 %v383
        %v2259 = vunpack.c.h.b16 %v383
        %v2260 = vunpack.c.l.b16 %v384
        %v2261 = vunpack.c.h.b16 %v384
        %v2262 = vunpack.c.l.b16 %v385
        %v2263 = vunpack.c.h.b16 %v385
        %v2264 = vunpack.c.l.b16 %v386
        %v2265 = vunpack.c.h.b16 %v386
        %v2266 = vunpack.c.l.b16 %v387
        %v2267 = vunpack.c.h.b16 %v387
        %v2268 = vunpack.c.l.b16 %v388
        %v2269 = vunpack.c.h.b16 %v388
        %v2270 = vunpack.c.l.b16 %v389
        %v2271 = vunpack.c.h.b16 %v389
        %v2272 = vunpack.c.l.b16 %v390
        %v2273 = vunpack.c.h.b16 %v390
        %v2274 = vunpack.c.l.b16 %v391
        %v2275 = vunpack.c.h.b16 %v391
        %v2276 = vunpack.c.l.b16 %v392
        %v2277 = vunpack.c.h.b16 %v392
        %v2278 = vunpack.c.l.b16 %v393
        %v2279 = vunpack.c.h.b16 %v393
        %v2280 = vunpack.c.l.b16 %v394
        %v2281 = vunpack.c.h.b16 %v394
        %v2282 = vunpack.c.l.b16 %v395
        %v2283 = vunpack.c.h.b16 %v395
        %v2284 = vunpack.c.l.b16 %v396
        %v2285 = vunpack.c.h.b16 %v396
        %v2286 = vunpack.c.l.b16 %v397
        %v2287 = vunpack.c.h.b16 %v397
        %v2288 = vunpack.c.l.b16 %v398
        %v2289 = vunpack.c.h.b16 %v398
        %v2290 = vunpack.c.l.b16 %v399
        %v2291 = vunpack.c.h.b16 %v399
        %v2292 = vunpack.c.l.b16 %v400
        %v2293 = vunpack.c.h.b16 %v400
        %v2294 = vunpack.c.l.b16 %v401
        %v2295 = vunpack.c.h.b16 %v401
        %v2296 = vunpack.c.l.b16 %v402
        %v2297 = vunpack.c.h.b16 %v402
        %v2298 = vunpack.c.l.b16 %v403
        %v2299 = vunpack.c.h.b16 %v403
        %v2300 = vunpack.c.l.b16 %v404
        %v2301 = vunpack.c.h.b16 %v404
        %v2302 = vunpack.c.l.b16 %v405
        %v2303 = vunpack.c.h.b16 %v405
        %v2304 = vunpack.c.l.b16 %v406
        %v2305 = vunpack.c.h.b16 %v406
        %v2306 = vunpack.c.l.b16 %v407
        %v2307 = vunpack.c.h.b16 %v407
        %v2308 = vunpack.c.l.b16 %v408
        %v2309 = vunpack.c.h.b16 %v408
        %v2310 = vunpack.c.l.b16 %v409
        %v2311 = vunpack.c.h.b16 %v409
        %v2312 = vunpack.c.l.b16 %v410
        %v2313 = vunpack.c.h.b16 %v410
        %v2314 = vunpack.c.l.b16 %v411
        %v2315 = vunpack.c.h.b16 %v411
        %v2316 = vunpack.c.l.b16 %v412
        %v2317 = vunpack.c.h.b16 %v412
        %v2318 = vunpack.c.l.b16 %v413
        %v2319 = vunpack.c.h.b16 %v413
        %v2320 = vunpack.c.l.b16 %v414
        %v2321 = vunpack.c.h.b16 %v414
        %v2322 = vunpack.c.l.b16 %v415
        %v2323 = vunpack.c.h.b16 %v415
        %v2324 = vunpack.c.l.b16 %v416
        %v2325 = vunpack.c.h.b16 %v416
        %v2326 = vunpack.c.l.b16 %v417
        %v2327 = vunpack.c.h.b16 %v417
        %v2328 = vunpack.c.l.b16 %v418
        %v2329 = vunpack.c.h.b16 %v418
        %v2330 = vunpack.c.l.b16 %v419
        %v2331 = vunpack.c.h.b16 %v419
        %v2332 = vunpack.c.l.b16 %v420
        %v2333 = vunpack.c.h.b16 %v420
        %v2334 = vunpack.c.l.b16 %v421
        %v2335 = vunpack.c.h.b16 %v421
        %v2336 = vunpack.c.l.b16 %v422
        %v2337 = vunpack.c.h.b16 %v422
        %v2338 = vunpack.c.l.b16 %v423
        %v2339 = vunpack.c.h.b16 %v423
        %v2340 = vunpack.c.l.b16 %v424
        %v2341 = vunpack.c.h.b16 %v424
        %v2342 = vunpack.c.l.b16 %v425
        %v2343 = vunpack.c.h.b16 %v425
        %v2344 = vunpack.c.l.b16 %v426
        %v2345 = vunpack.c.h.b16 %v426
        %v2346 = vunpack.c.l.b16 %v427
        %v2347 = vunpack.c.h.b16 %v427
        %v2348 = vunpack.c.l.b16 %v428
        %v2349 = vunpack.c.h.b16 %v428
        %v2350 = vunpack.c.l.b16 %v429
        %v2351 = vunpack.c.h.b16 %v429
        %v2352 = vunpack.c.l.b16 %v430
        %v2353 = vunpack.c.h.b16 %v430
        %v2354 = vunpack.c.l.b16 %v431
        %v2355 = vunpack.c.h.b16 %v431
        %v2356 = vunpack.c.l.b16 %v432
        %v2357 = vunpack.c.h.b16 %v432
        %v2358 = vunpack.c.l.b16 %v433
        %v2359 = vunpack.c.h.b16 %v433
        %v2360 = vunpack.c.l.b16 %v434
        %v2361 = vunpack.c.h.b16 %v434
        %v2362 = vunpack.c.l.b16 %v435
        %v2363 = vunpack.c.h.b16 %v435
        %v2364 = vunpack.c.l.b16 %v436
        %v2365 = vunpack.c.h.b16 %v436
        %v2366 = vunpack.c.l.b16 %v437
        %v2367 = vunpack.c.h.b16 %v437
        %v2368 = vunpack.c.l.b16 %v438
        %v2369 = vunpack.c.h.b16 %v438
        %v2370 = vunpack.c.l.b16 %v439
        %v2371 = vunpack.c.h.b16 %v439
        %v2372 = vunpack.c.l.b16 %v440
        %v2373 = vunpack.c.h.b16 %v440
        %v2374 = vunpack.c.l.b16 %v441
        %v2375 = vunpack.c.h.b16 %v441
        %v2376 = vunpack.c.l.b16 %v442
        %v2377 = vunpack.c.h.b16 %v442
        %v2378 = vunpack.c.l.b16 %v443
        %v2379 = vunpack.c.h.b16 %v443
        %v2380 = vunpack.c.l.b16 %v444
        %v2381 = vunpack.c.h.b16 %v444
        %v2382 = vunpack.c.l.b16 %v445
        %v2383 = vunpack.c.h.b16 %v445
        %v2384 = vunpack.c.l.b16 %v446
        %v2385 = vunpack.c.h.b16 %v446
        %v2386 = vunpack.c.l.b16 %v447
        %v2387 = vunpack.c.h.b16 %v447
        %v2388 = vunpack.c.l.b16 %v448
        %v2389 = vunpack.c.h.b16 %v448
        %v2390 = vunpack.c.l.b16 %v449
        %v2391 = vunpack.c.h.b16 %v449
        %v2392 = vunpack.c.l.b16 %v450
        %v2393 = vunpack.c.h.b16 %v450
        %v2394 = vunpack.c.l.b16 %v451
        %v2395 = vunpack.c.h.b16 %v451
        %v2396 = vunpack.c.l.b16 %v452
        %v2397 = vunpack.c.h.b16 %v452
        %v2398 = vunpack.c.l.b16 %v453
        %v2399 = vunpack.c.h.b16 %v453
        %v2400 = vunpack.c.l.b16 %v454
        %v2401 = vunpack.c.h.b16 %v454
        %v2402 = vunpack.c.l.b16 %v455
        %v2403 = vunpack.c.h.b16 %v455
        %v2404 = vunpack.c.l.b16 %v456
        %v2405 = vunpack.c.h.b16 %v456
        %v2406 = vunpack.c.l.b16 %v457
        %v2407 = vunpack.c.h.b16 %v457
        %v2408 = vunpack.c.l.b16 %v458
        %v2409 = vunpack.c.h.b16 %v458
        %v2410 = vunpack.c.l.b16 %v459
        %v2411 = vunpack.c.h.b16 %v459
        %v2412 = vunpack.c.l.b16 %v460
        %v2413 = vunpack.c.h.b16 %v460
        %v2414 = vunpack.c.l.b16 %v461
        %v2415 = vunpack.c.h.b16 %v461
        %v2416 = vunpack.c.l.b16 %v462
        %v2417 = vunpack.c.h.b16 %v462
        %v2418 = vunpack.c.l.b16 %v463
        %v2419 = vunpack.c.h.b16 %v463
        %v2420 = vunpack.c.l.b16 %v464
        %v2421 = vunpack.c.h.b16 %v464
        %v2422 = vunpack.c.l.b16 %v465
        %v2423 = vunpack.c.h.b16 %v465
        %v2424 = vunpack.c.l.b16 %v466
        %v2425 = vunpack.c.h.b16 %v466
        %v2426 = vunpack.c.l.b16 %v467
        %v2427 = vunpack.c.h.b16 %v467
        %v2428 = vunpack.c.l.b16 %v468
        %v2429 = vunpack.c.h.b16 %v468
        %v2430 = vunpack.c.l.b16 %v469
        %v2431 = vunpack.c.h.b16 %v469
        %v2432 = vunpack.c.l.b16 %v470
        %v2433 = vunpack.c.h.b16 %v470
        %v2434 = vunpack.c.l.b16 %v471
        %v2435 = vunpack.c.h.b16 %v471
        %v2436 = vunpack.c.l.b16 %v472
        %v2437 = vunpack.c.h.b16 %v472
        %v2438 = vunpack.c.l.b16 %v473
        %v2439 = vunpack.c.h.b16 %v473
        %v2440 = vunpack.c.l.b16 %v474
        %v2441 = vunpack.c.h.b16 %v474
        %v2442 = vunpack.c.l.b16 %v475
        %v2443 = vunpack.c.h.b16 %v475
        %v2444 = vunpack.c.l.b16 %v476
        %v2445 = vunpack.c.h.b16 %v476
        %v2446 = vunpack.c.l.b16 %v477
        %v2447 = vunpack.c.h.b16 %v477
        %v2448 = vunpack.c.l.b16 %v478
        %v2449 = vunpack.c.h.b16 %v478
        %v2450 = vunpack.c.l.b16 %v479
        %v2451 = vunpack.c.h.b16 %v479
        %v2452 = vunpack.c.l.b16 %v480
        %v2453 = vunpack.c.h.b16 %v480
        %v2454 = vunpack.c.l.b16 %v481
        %v2455 = vunpack.c.h.b16 %v481
        %v2456 = vunpack.c.l.b16 %v482
        %v2457 = vunpack.c.h.b16 %v482
        %v2458 = vunpack.c.l.b16 %v483
        %v2459 = vunpack.c.h.b16 %v483
        %v2460 = vunpack.c.l.b16 %v484
        %v2461 = vunpack.c.h.b16 %v484
        %v2462 = vunpack.c.l.b16 %v485
        %v2463 = vunpack.c.h.b16 %v485
        %v2464 = vunpack.c.l.b16 %v486
        %v2465 = vunpack.c.h.b16 %v486
        %v2466 = vunpack.c.l.b16 %v487
        %v2467 = vunpack.c.h.b16 %v487
        %v2468 = vunpack.c.l.b16 %v488
        %v2469 = vunpack.c.h.b16 %v488
        %v2470 = vunpack.c.l.b16 %v489
        %v2471 = vunpack.c.h.b16 %v489
        %v2472 = vunpack.c.l.b16 %v490
        %v2473 = vunpack.c.h.b16 %v490
        %v2474 = vunpack.c.l.b16 %v491
        %v2475 = vunpack.c.h.b16 %v491
        %v2476 = vunpack.c.l.b16 %v492
        %v2477 = vunpack.c.h.b16 %v492
        %v2478 = vunpack.c.l.b16 %v493
        %v2479 = vunpack.c.h.b16 %v493
        %v2480 = vunpack.c.l.b16 %v494
        %v2481 = vunpack.c.h.b16 %v494
        %v2482 = vunpack.c.l.b16 %v495
        %v2483 = vunpack.c.h.b16 %v495
        %v2484 = vunpack.c.l.b16 %v496
        %v2485 = vunpack.c.h.b16 %v496
        %v2486 = vunpack.c.l.b16 %v497
        %v2487 = vunpack.c.h.b16 %v497
        %v2488 = vunpack.c.l.b16 %v498
        %v2489 = vunpack.c.h.b16 %v498
        %v2490 = vunpack.c.l.b16 %v499
        %v2491 = vunpack.c.h.b16 %v499
        %v2492 = vunpack.c.l.b16 %v500
        %v2493 = vunpack.c.h.b16 %v500
        %v2494 = vunpack.c.l.b16 %v501
        %v2495 = vunpack.c.h.b16 %v501
        %v2496 = vunpack.c.l.b16 %v502
        %v2497 = vunpack.c.h.b16 %v502
        %v2498 = vunpack.c.l.b16 %v503
        %v2499 = vunpack.c.h.b16 %v503
        %v2500 = vunpack.c.l.b16 %v504
        %v2501 = vunpack.c.h.b16 %v504
        %v2502 = vunpack.c.l.b16 %v505
        %v2503 = vunpack.c.h.b16 %v505
        %v2504 = vunpack.c.l.b16 %v506
        %v2505 = vunpack.c.h.b16 %v506
        %v2506 = vunpack.c.l.b16 %v507
        %v2507 = vunpack.c.h.b16 %v507
        %v2508 = vunpack.c.l.b16 %v508
        %v2509 = vunpack.c.h.b16 %v508
        %v2510 = vunpack.c.l.b16 %v509
        %v2511 = vunpack.c.h.b16 %v509
        %v2512 = vunpack.c.l.b16 %v510
        %v2513 = vunpack.c.h.b16 %v510
        %v2514 = vunpack.c.l.b16 %v511
        %v2515 = vunpack.c.h.b16 %v511
        %v2516 = vunpack.c.l.b16 %v512
        %v2517 = vunpack.c.h.b16 %v512
        %v2518 = vunpack.c.l.b16 %v513
        %v2519 = vunpack.c.h.b16 %v513
        %v2520 = vunpack.c.l.b16 %v514
        %v2521 = vunpack.c.h.b16 %v514
        %v2522 = vunpack.c.l.b16 %v515
        %v2523 = vunpack.c.h.b16 %v515
        %v2524 = vunpack.c.l.b16 %v516
        %v2525 = vunpack.c.h.b16 %v516
        %v2526 = vunpack.c.l.b16 %v517
        %v2527 = vunpack.c.h.b16 %v517
        %v2528 = vunpack.c.l.b16 %v518
        %v2529 = vunpack.c.h.b16 %v518
        %v2530 = vunpack.c.l.b16 %v519
        %v2531 = vunpack.c.h.b16 %v519
        %v2532 = vunpack.c.l.b16 %v520
        %v2533 = vunpack.c.h.b16 %v520
        %v2534 = vunpack.c.l.b16 %v521
        %v2535 = vunpack.c.h.b16 %v521
        %v2536 = vunpack.c.l.b16 %v522
        %v2537 = vunpack.c.h.b16 %v522
        %v2538 = vunpack.c.l.b16 %v523
        %v2539 = vunpack.c.h.b16 %v523
        %v2540 = vunpack.c.l.b16 %v524
        %v2541 = vunpack.c.h.b16 %v524
        %v2542 = vunpack.c.l.b16 %v525
        %v2543 = vunpack.c.h.b16 %v525
        %v2544 = vunpack.c.l.b16 %v526
        %v2545 = vunpack.c.h.b16 %v526
        %v2546 = vunpack.c.l.b16 %v527
        %v2547 = vunpack.c.h.b16 %v527
        %v2548 = vunpack.c.l.b16 %v528
        %v2549 = vunpack.c.h.b16 %v528
        %v2550 = vunpack.c.l.b16 %v529
        %v2551 = vunpack.c.h.b16 %v529
        %v2552 = vunpack.c.l.b16 %v530
        %v2553 = vunpack.c.h.b16 %v530
        %v2554 = vunpack.c.l.b16 %v531
        %v2555 = vunpack.c.h.b16 %v531
        %v2556 = vunpack.c.l.b16 %v532
        %v2557 = vunpack.c.h.b16 %v532
        %v2558 = vunpack.c.l.b16 %v533
        %v2559 = vunpack.c.h.b16 %v533
        %v2560 = vunpack.c.l.b16 %v534
        %v2561 = vunpack.c.h.b16 %v534
        %v2562 = vunpack.c.l.b16 %v535
        %v2563 = vunpack.c.h.b16 %v535
        %v2564 = vunpack.c.l.b16 %v536
        %v2565 = vunpack.c.h.b16 %v536
        %v2566 = vunpack.c.l.b16 %v537
        %v2567 = vunpack.c.h.b16 %v537
        %v2568 = vunpack.c.l.b16 %v538
        %v2569 = vunpack.c.h.b16 %v538
        %v2570 = vunpack.c.l.b16 %v539
        %v2571 = vunpack.c.h.b16 %v539
        %v2572 = vunpack.c.l.b16 %v540
        %v2573 = vunpack.c.h.b16 %v540
        %v2574 = vunpack.c.l.b16 %v541
        %v2575 = vunpack.c.h.b16 %v541
        %v2576 = vunpack.c.l.b16 %v542
        %v2577 = vunpack.c.h.b16 %v542
        %v2578 = vunpack.c.l.b16 %v543
        %v2579 = vunpack.c.h.b16 %v543
        %v2580 = vunpack.c.l.b16 %v544
        %v2581 = vunpack.c.h.b16 %v544
        %v2582 = vunpack.c.l.b16 %v545
        %v2583 = vunpack.c.h.b16 %v545
        %v2584 = vunpack.c.l.b16 %v546
        %v2585 = vunpack.c.h.b16 %v546
        %v2586 = vunpack.c.l.b16 %v547
        %v2587 = vunpack.c.h.b16 %v547
        %v2588 = vunpack.c.l.b16 %v548
        %v2589 = vunpack.c.h.b16 %v548
        %v2590 = vunpack.c.l.b16 %v549
        %v2591 = vunpack.c.h.b16 %v549
        %v2592 = vunpack.c.l.b16 %v550
        %v2593 = vunpack.c.h.b16 %v550
        %v2594 = vunpack.c.l.b16 %v551
        %v2595 = vunpack.c.h.b16 %v551
        %v2596 = vunpack.c.l.b16 %v552
        %v2597 = vunpack.c.h.b16 %v552
        %v2598 = vunpack.c.l.b16 %v553
        %v2599 = vunpack.c.h.b16 %v553
        %v2600 = vunpack.c.l.b16 %v554
        %v2601 = vunpack.c.h.b16 %v554
        %v2602 = vunpack.c.l.b16 %v555
        %v2603 = vunpack.c.h.b16 %v555
        %v2604 = vunpack.c.l.b16 %v556
        %v2605 = vunpack.c.h.b16 %v556
        %v2606 = vunpack.c.l.b16 %v557
        %v2607 = vunpack.c.h.b16 %v557
        %v2608 = vunpack.c.l.b16 %v558
        %v2609 = vunpack.c.h.b16 %v558
        %v2610 = vunpack.c.l.b16 %v559
        %v2611 = vunpack.c.h.b16 %v559
        %v2612 = vunpack.c.l.b16 %v560
        %v2613 = vunpack.c.h.b16 %v560
        %v2614 = vunpack.c.l.b16 %v561
        %v2615 = vunpack.c.h.b16 %v561
        %v2616 = vunpack.c.l.b16 %v562
        %v2617 = vunpack.c.h.b16 %v562
        %v2618 = vunpack.c.l.b16 %v563
        %v2619 = vunpack.c.h.b16 %v563
        %v2620 = vunpack.c.l.b16 %v564
        %v2621 = vunpack.c.h.b16 %v564
        %v2622 = vunpack.c.l.b16 %v565
        %v2623 = vunpack.c.h.b16 %v565
        %v2624 = vunpack.c.l.b16 %v566
        %v2625 = vunpack.c.h.b16 %v566
        %v2626 = vunpack.c.l.b16 %v567
        %v2627 = vunpack.c.h.b16 %v567
        %v2628 = vunpack.c.l.b16 %v568
        %v2629 = vunpack.c.h.b16 %v568
        %v2630 = vunpack.c.l.b16 %v569
        %v2631 = vunpack.c.h.b16 %v569
        %v2632 = vunpack.c.l.b16 %v570
        %v2633 = vunpack.c.h.b16 %v570
        %v2634 = vunpack.c.l.b16 %v571
        %v2635 = vunpack.c.h.b16 %v571
        %v2636 = vunpack.c.l.b16 %v572
        %v2637 = vunpack.c.h.b16 %v572
        %v2638 = vunpack.c.l.b16 %v573
        %v2639 = vunpack.c.h.b16 %v573
        %v2640 = vunpack.c.l.b16 %v574
        %v2641 = vunpack.c.h.b16 %v574
        %v2642 = vunpack.c.l.b16 %v575
        %v2643 = vunpack.c.h.b16 %v575
        %v2644 = vunpack.c.l.b16 %v576
        %v2645 = vunpack.c.h.b16 %v576
        %v2646 = vunpack.c.l.b16 %v577
        %v2647 = vunpack.c.h.b16 %v577
        %v2648 = vunpack.c.l.b16 %v578
        %v2649 = vunpack.c.h.b16 %v578
        %v2650 = vunpack.c.l.b16 %v579
        %v2651 = vunpack.c.h.b16 %v579
        %v2652 = vunpack.c.l.b16 %v580
        %v2653 = vunpack.c.h.b16 %v580
        %v2654 = vunpack.c.l.b16 %v581
        %v2655 = vunpack.c.h.b16 %v581
        %v2656 = vunpack.c.l.b16 %v582
        %v2657 = vunpack.c.h.b16 %v582
        %v2658 = vunpack.c.l.b16 %v583
        %v2659 = vunpack.c.h.b16 %v583
        %v2660 = vunpack.c.l.b16 %v584
        %v2661 = vunpack.c.h.b16 %v584
        %v2662 = vunpack.c.l.b16 %v585
        %v2663 = vunpack.c.h.b16 %v585
        %v2664 = vunpack.c.l.b16 %v586
        %v2665 = vunpack.c.h.b16 %v586
        %v2666 = vunpack.c.l.b16 %v587
        %v2667 = vunpack.c.h.b16 %v587
        %v2668 = vunpack.c.l.b16 %v588
        %v2669 = vunpack.c.h.b16 %v588
        %v2670 = vunpack.c.l.b16 %v589
        %v2671 = vunpack.c.h.b16 %v589
        %v2672 = vunpack.c.l.b16 %v590
        %v2673 = vunpack.c.h.b16 %v590
        %v2674 = vunpack.c.l.b16 %v591
        %v2675 = vunpack.c.h.b16 %v591
        %v2676 = vunpack.c.l.b16 %v592
        %v2677 = vunpack.c.h.b16 %v592
        %v2678 = vunpack.c.l.b16 %v593
        %v2679 = vunpack.c.h.b16 %v593
        %v2680 = vunpack.c.l.b16 %v594
        %v2681 = vunpack.c.h.b16 %v594
        %v2682 = vunpack.c.l.b16 %v595
        %v2683 = vunpack.c.h.b16 %v595
        %v2684 = vunpack.c.l.b16 %v596
        %v2685 = vunpack.c.h.b16 %v596
        %v2686 = vunpack.c.l.b16 %v597
        %v2687 = vunpack.c.h.b16 %v597
        %v2688 = vunpack.c.l.b16 %v598
        %v2689 = vunpack.c.h.b16 %v598
        %v2690 = vunpack.c.l.b16 %v599
        %v2691 = vunpack.c.h.b16 %v599
        %v2692 = vunpack.c.l.b16 %v600
        %v2693 = vunpack.c.h.b16 %v600
        %v2694 = vunpack.c.l.b16 %v601
        %v2695 = vunpack.c.h.b16 %v601
        %v2696 = vunpack.c.l.b16 %v602
        %v2697 = vunpack.c.h.b16 %v602
        %v2698 = vunpack.c.l.b16 %v603
        %v2699 = vunpack.c.h.b16 %v603
        %v2700 = vunpack.c.l.b16 %v604
        %v2701 = vunpack.c.h.b16 %v604
        %v2702 = vunpack.c.l.b16 %v605
        %v2703 = vunpack.c.h.b16 %v605
        %v2704 = vunpack.c.l.b16 %v606
        %v2705 = vunpack.c.h.b16 %v606
        %v2706 = vunpack.c.l.b16 %v607
        %v2707 = vunpack.c.h.b16 %v607
        %v2708 = vunpack.c.l.b16 %v608
        %v2709 = vunpack.c.h.b16 %v608
        %v2710 = vunpack.c.l.b16 %v609
        %v2711 = vunpack.c.h.b16 %v609
        %v2712 = vunpack.c.l.b16 %v610
        %v2713 = vunpack.c.h.b16 %v610
        %v2714 = vunpack.c.l.b16 %v611
        %v2715 = vunpack.c.h.b16 %v611
        %v2716 = vunpack.c.l.b16 %v612
        %v2717 = vunpack.c.h.b16 %v612
        %v2718 = vunpack.c.l.b16 %v613
        %v2719 = vunpack.c.h.b16 %v613
        %v2720 = vunpack.c.l.b16 %v614
        %v2721 = vunpack.c.h.b16 %v614
        %v2722 = vunpack.c.l.b16 %v615
        %v2723 = vunpack.c.h.b16 %v615
        %v2724 = vunpack.c.l.b16 %v616
        %v2725 = vunpack.c.h.b16 %v616
        %v2726 = vunpack.c.l.b16 %v617
        %v2727 = vunpack.c.h.b16 %v617
        %v2728 = vunpack.c.l.b16 %v618
        %v2729 = vunpack.c.h.b16 %v618
        %v2730 = vunpack.c.l.b16 %v619
        %v2731 = vunpack.c.h.b16 %v619
        %v2732 = vunpack.c.l.b16 %v620
        %v2733 = vunpack.c.h.b16 %v620
        %v2734 = vunpack.c.l.b16 %v621
        %v2735 = vunpack.c.h.b16 %v621
        %v2736 = vunpack.c.l.b16 %v622
        %v2737 = vunpack.c.h.b16 %v622
        %v2738 = vunpack.c.l.b16 %v623
        %v2739 = vunpack.c.h.b16 %v623
        %v2740 = vunpack.c.l.b16 %v624
        %v2741 = vunpack.c.h.b16 %v624
        %v2742 = vunpack.c.l.b16 %v625
        %v2743 = vunpack.c.h.b16 %v625
        %v2744 = vunpack.c.l.b16 %v626
        %v2745 = vunpack.c.h.b16 %v626
        %v2746 = vunpack.c.l.b16 %v627
        %v2747 = vunpack.c.h.b16 %v627
        %v2748 = vunpack.c.l.b16 %v628
        %v2749 = vunpack.c.h.b16 %v628
        %v2750 = vunpack.c.l.b16 %v629
        %v2751 = vunpack.c.h.b16 %v629
        %v2752 = vunpack.c.l.b16 %v630
        %v2753 = vunpack.c.h.b16 %v630
        %v2754 = vunpack.c.l.b16 %v631
        %v2755 = vunpack.c.h.b16 %v631
        %v2756 = vunpack.c.l.b16 %v632
        %v2757 = vunpack.c.h.b16 %v632
        %v2758 = vunpack.c.l.b16 %v633
        %v2759 = vunpack.c.h.b16 %v633
        %v2760 = vunpack.c.l.b16 %v634
        %v2761 = vunpack.c.h.b16 %v634
        %v2762 = vunpack.c.l.b16 %v635
        %v2763 = vunpack.c.h.b16 %v635
        %v2764 = vunpack.c.l.b16 %v636
        %v2765 = vunpack.c.h.b16 %v636
        %v2766 = vunpack.c.l.b16 %v637
        %v2767 = vunpack.c.h.b16 %v637
        %v2768 = vunpack.c.l.b16 %v638
        %v2769 = vunpack.c.h.b16 %v638
        %v2770 = vunpack.c.l.b16 %v639
        %v2771 = vunpack.c.h.b16 %v639
        %v2772 = vunpack.c.l.b16 %v640
        %v2773 = vunpack.c.h.b16 %v640
        %v2774 = vunpack.c.l.b16 %v641
        %v2775 = vunpack.c.h.b16 %v641
        %v2776 = vunpack.c.l.b16 %v642
        %v2777 = vunpack.c.h.b16 %v642
        %v2778 = vunpack.c.l.b16 %v643
        %v2779 = vunpack.c.h.b16 %v643
        %v2780 = vunpack.c.l.b16 %v644
        %v2781 = vunpack.c.h.b16 %v644
        %v2782 = vunpack.c.l.b16 %v645
        %v2783 = vunpack.c.h.b16 %v645
        %v2784 = vunpack.c.l.b16 %v646
        %v2785 = vunpack.c.h.b16 %v646
        %v2786 = vunpack.c.l.b16 %v647
        %v2787 = vunpack.c.h.b16 %v647
        %v2788 = vunpack.c.l.b16 %v648
        %v2789 = vunpack.c.h.b16 %v648
        %v2790 = vunpack.c.l.b16 %v649
        %v2791 = vunpack.c.h.b16 %v649
        %v2792 = vunpack.c.l.b16 %v650
        %v2793 = vunpack.c.h.b16 %v650
        %v2794 = vunpack.c.l.b16 %v651
        %v2795 = vunpack.c.h.b16 %v651
        %v2796 = vunpack.c.l.b16 %v652
        %v2797 = vunpack.c.h.b16 %v652
        %v2798 = vunpack.c.l.b16 %v653
        %v2799 = vunpack.c.h.b16 %v653
        %v2800 = vunpack.c.l.b16 %v654
        %v2801 = vunpack.c.h.b16 %v654
        %v2802 = vunpack.c.l.b16 %v655
        %v2803 = vunpack.c.h.b16 %v655
        %v2804 = vunpack.c.l.b16 %v656
        %v2805 = vunpack.c.h.b16 %v656
        %v2806 = vunpack.c.l.b16 %v657
        %v2807 = vunpack.c.h.b16 %v657
        %v2808 = vunpack.c.l.b16 %v658
        %v2809 = vunpack.c.h.b16 %v658
        %v2810 = vunpack.c.l.b16 %v659
        %v2811 = vunpack.c.h.b16 %v659
        %v2812 = vunpack.c.l.b16 %v660
        %v2813 = vunpack.c.h.b16 %v660
        %v2814 = vunpack.c.l.b16 %v661
        %v2815 = vunpack.c.h.b16 %v661
        %v2816 = vunpack.c.l.b16 %v662
        %v2817 = vunpack.c.h.b16 %v662
        %v2818 = vunpack.c.l.b16 %v663
        %v2819 = vunpack.c.h.b16 %v663
        %v2820 = vunpack.c.l.b16 %v664
        %v2821 = vunpack.c.h.b16 %v664
        %v2822 = vunpack.c.l.b16 %v665
        %v2823 = vunpack.c.h.b16 %v665
        %v2824 = vunpack.c.l.b16 %v666
        %v2825 = vunpack.c.h.b16 %v666
        %v2826 = vunpack.c.l.b16 %v667
        %v2827 = vunpack.c.h.b16 %v667
        %v2828 = vunpack.c.l.b16 %v668
        %v2829 = vunpack.c.h.b16 %v668
        %v2830 = vunpack.c.l.b16 %v669
        %v2831 = vunpack.c.h.b16 %v669
        %v2832 = vunpack.c.l.b16 %v670
        %v2833 = vunpack.c.h.b16 %v670
        %v2834 = vunpack.c.l.b16 %v671
        %v2835 = vunpack.c.h.b16 %v671
        %v2836 = vunpack.c.l.b16 %v672
        %v2837 = vunpack.c.h.b16 %v672
        %v2838 = vunpack.c.l.b16 %v673
        %v2839 = vunpack.c.h.b16 %v673
        %v2840 = vunpack.c.l.b16 %v674
        %v2841 = vunpack.c.h.b16 %v674
        %v2842 = vunpack.c.l.b16 %v675
        %v2843 = vunpack.c.h.b16 %v675
        %v2844 = vunpack.c.l.b16 %v676
        %v2845 = vunpack.c.h.b16 %v676
        %v2846 = vunpack.c.l.b16 %v677
        %v2847 = vunpack.c.h.b16 %v677
        %v2848 = vunpack.c.l.b16 %v678
        %v2849 = vunpack.c.h.b16 %v678
        %v2850 = vunpack.c.l.b16 %v679
        %v2851 = vunpack.c.h.b16 %v679
        %v2852 = vunpack.c.l.b16 %v680
        %v2853 = vunpack.c.h.b16 %v680
        %v2854 = vunpack.c.l.b16 %v681
        %v2855 = vunpack.c.h.b16 %v681
        %v2856 = vunpack.c.l.b16 %v682
        %v2857 = vunpack.c.h.b16 %v682
        %v2858 = vunpack.c.l.b16 %v683
        %v2859 = vunpack.c.h.b16 %v683
        %v2860 = vunpack.c.l.b16 %v684
        %v2861 = vunpack.c.h.b16 %v684
        %v2862 = vunpack.c.l.b16 %v685
        %v2863 = vunpack.c.h.b16 %v685
        %v2864 = vunpack.c.l.b16 %v686
        %v2865 = vunpack.c.h.b16 %v686
        %v2866 = vunpack.c.l.b16 %v687
        %v2867 = vunpack.c.h.b16 %v687
        %v2868 = vunpack.c.l.b16 %v688
        %v2869 = vunpack.c.h.b16 %v688
        %v2870 = vunpack.c.l.b16 %v689
        %v2871 = vunpack.c.h.b16 %v689
        %v2872 = vunpack.c.l.b16 %v690
        %v2873 = vunpack.c.h.b16 %v690
        %v2874 = vunpack.c.l.b16 %v691
        %v2875 = vunpack.c.h.b16 %v691
        %v2876 = vunpack.c.l.b16 %v692
        %v2877 = vunpack.c.h.b16 %v692
        %v2878 = vunpack.c.l.b16 %v693
        %v2879 = vunpack.c.h.b16 %v693
        %v2880 = vunpack.c.l.b16 %v694
        %v2881 = vunpack.c.h.b16 %v694
        %v2882 = vunpack.c.l.b16 %v695
        %v2883 = vunpack.c.h.b16 %v695
        %v2884 = vunpack.c.l.b16 %v696
        %v2885 = vunpack.c.h.b16 %v696
        %v2886 = vunpack.c.l.b16 %v697
        %v2887 = vunpack.c.h.b16 %v697
        %v2888 = vunpack.c.l.b16 %v698
        %v2889 = vunpack.c.h.b16 %v698
        %v2890 = vunpack.c.l.b16 %v699
        %v2891 = vunpack.c.h.b16 %v699
        %v2892 = vunpack.c.l.b16 %v700
        %v2893 = vunpack.c.h.b16 %v700
        %v2894 = vunpack.c.l.b16 %v701
        %v2895 = vunpack.c.h.b16 %v701
        %v2896 = vunpack.c.l.b16 %v702
        %v2897 = vunpack.c.h.b16 %v702
        %v2898 = vunpack.c.l.b16 %v703
        %v2899 = vunpack.c.h.b16 %v703
        %v2900 = vunpack.c.l.b16 %v704
        %v2901 = vunpack.c.h.b16 %v704
        %v2902 = vunpack.c.l.b16 %v705
        %v2903 = vunpack.c.h.b16 %v705
        %v2904 = vunpack.c.l.b16 %v706
        %v2905 = vunpack.c.h.b16 %v706
        %v2906 = vunpack.c.l.b16 %v707
        %v2907 = vunpack.c.h.b16 %v707
        %v2908 = vunpack.c.l.b16 %v708
        %v2909 = vunpack.c.h.b16 %v708
        %v2910 = vunpack.c.l.b16 %v709
        %v2911 = vunpack.c.h.b16 %v709
        %v2912 = vunpack.c.l.b16 %v710
        %v2913 = vunpack.c.h.b16 %v710
        %v2914 = vunpack.c.l.b16 %v711
        %v2915 = vunpack.c.h.b16 %v711
        %v2916 = vunpack.c.l.b16 %v712
        %v2917 = vunpack.c.h.b16 %v712
        %v2918 = vunpack.c.l.b16 %v713
        %v2919 = vunpack.c.h.b16 %v713
        %v2920 = vunpack.c.l.b16 %v714
        %v2921 = vunpack.c.h.b16 %v714
        %v2922 = vunpack.c.l.b16 %v715
        %v2923 = vunpack.c.h.b16 %v715
        %v2924 = vunpack.c.l.b16 %v716
        %v2925 = vunpack.c.h.b16 %v716
        %v2926 = vunpack.c.l.b16 %v717
        %v2927 = vunpack.c.h.b16 %v717
        %v2928 = vunpack.c.l.b16 %v718
        %v2929 = vunpack.c.h.b16 %v718
        %v2930 = vunpack.c.l.b16 %v719
        %v2931 = vunpack.c.h.b16 %v719
        %v2932 = vunpack.c.l.b16 %v720
        %v2933 = vunpack.c.h.b16 %v720
        %v2934 = vunpack.c.l.b16 %v721
        %v2935 = vunpack.c.h.b16 %v721
        %v2936 = vunpack.c.l.b16 %v722
        %v2937 = vunpack.c.h.b16 %v722
        %v2938 = vunpack.c.l.b16 %v723
        %v2939 = vunpack.c.h.b16 %v723
        %v2940 = vunpack.c.l.b16 %v724
        %v2941 = vunpack.c.h.b16 %v724
        %v2942 = vunpack.c.l.b16 %v725
        %v2943 = vunpack.c.h.b16 %v725
        %v2944 = vunpack.c.l.b16 %v726
        %v2945 = vunpack.c.h.b16 %v726
        %v2946 = vunpack.c.l.b16 %v727
        %v2947 = vunpack.c.h.b16 %v727
        %v2948 = vunpack.c.l.b16 %v728
        %v2949 = vunpack.c.h.b16 %v728
        %v2950 = vunpack.c.l.b16 %v729
        %v2951 = vunpack.c.h.b16 %v729
        %v2952 = vunpack.c.l.b16 %v730
        %v2953 = vunpack.c.h.b16 %v730
        %v2954 = vunpack.c.l.b16 %v731
        %v2955 = vunpack.c.h.b16 %v731
        %v2956 = vunpack.c.l.b16 %v732
        %v2957 = vunpack.c.h.b16 %v732
        %v2958 = vunpack.c.l.b16 %v733
        %v2959 = vunpack.c.h.b16 %v733
        %v2960 = vunpack.c.l.b16 %v734
        %v2961 = vunpack.c.h.b16 %v734
        %v2962 = vunpack.c.l.b16 %v735
        %v2963 = vunpack.c.h.b16 %v735
        %v2964 = vunpack.c.l.b16 %v736
        %v2965 = vunpack.c.h.b16 %v736
        %v2966 = vunpack.c.l.b16 %v737
        %v2967 = vunpack.c.h.b16 %v737
        %v2968 = vunpack.c.l.b16 %v738
        %v2969 = vunpack.c.h.b16 %v738
        %v2970 = vunpack.c.l.b16 %v739
        %v2971 = vunpack.c.h.b16 %v739
        %v2972 = vunpack.c.l.b16 %v740
        %v2973 = vunpack.c.h.b16 %v740
        %v2974 = vunpack.c.l.b16 %v741
        %v2975 = vunpack.c.h.b16 %v741
        %v2976 = vunpack.c.l.b16 %v742
        %v2977 = vunpack.c.h.b16 %v742
        %v2978 = vunpack.c.l.b16 %v743
        %v2979 = vunpack.c.h.b16 %v743
        %v2980 = vunpack.c.l.b16 %v744
        %v2981 = vunpack.c.h.b16 %v744
        %v2982 = vunpack.c.l.b16 %v745
        %v2983 = vunpack.c.h.b16 %v745
        %v2984 = vunpack.c.l.b16 %v746
        %v2985 = vunpack.c.h.b16 %v746
        %v2986 = vunpack.c.l.b16 %v747
        %v2987 = vunpack.c.h.b16 %v747
        %v2988 = vunpack.c.l.b16 %v748
        %v2989 = vunpack.c.h.b16 %v748
        %v2990 = vunpack.c.l.b16 %v749
        %v2991 = vunpack.c.h.b16 %v749
        %v2992 = vunpack.c.l.b16 %v750
        %v2993 = vunpack.c.h.b16 %v750
        %v2994 = vunpack.c.l.b16 %v751
        %v2995 = vunpack.c.h.b16 %v751
        %v2996 = vunpack.c.l.b16 %v752
        %v2997 = vunpack.c.h.b16 %v752
        %v2998 = vunpack.c.l.b16 %v753
        %v2999 = vunpack.c.h.b16 %v753
        %v3000 = vunpack.c.l.b16 %v754
        %v3001 = vunpack.c.h.b16 %v754
        %v3002 = vunpack.c.l.b16 %v755
        %v3003 = vunpack.c.h.b16 %v755
        %v3004 = vunpack.c.l.b16 %v756
        %v3005 = vunpack.c.h.b16 %v756
        %v3006 = vunpack.c.l.b16 %v757
        %v3007 = vunpack.c.h.b16 %v757
        %v3008 = vunpack.c.l.b16 %v758
        %v3009 = vunpack.c.h.b16 %v758
        %v3010 = vunpack.c.l.b16 %v759
        %v3011 = vunpack.c.h.b16 %v759
        %v3012 = vunpack.c.l.b16 %v760
        %v3013 = vunpack.c.h.b16 %v760
        %v3014 = vunpack.c.l.b16 %v761
        %v3015 = vunpack.c.h.b16 %v761
        %v3016 = vunpack.c.l.b16 %v762
        %v3017 = vunpack.c.h.b16 %v762
        %v3018 = vunpack.c.l.b16 %v763
        %v3019 = vunpack.c.h.b16 %v763
        %v3020 = vunpack.c.l.b16 %v764
        %v3021 = vunpack.c.h.b16 %v764
        %v3022 = vunpack.c.l.b16 %v765
        %v3023 = vunpack.c.h.b16 %v765
        %v3024 = vunpack.c.l.b16 %v766
        %v3025 = vunpack.c.h.b16 %v766
        %v3026 = vunpack.c.l.b16 %v767
        %v3027 = vunpack.c.h.b16 %v767
        %v3028 = vunpack.c.l.b16 %v768
        %v3029 = vunpack.c.h.b16 %v768
        %v3030 = vunpack.c.l.b16 %v769
        %v3031 = vunpack.c.h.b16 %v769
        %v3032 = vunpack.c.l.b16 %v770
        %v3033 = vunpack.c.h.b16 %v770
        %v3034 = vunpack.c.l.b16 %v771
        %v3035 = vunpack.c.h.b16 %v771
        %v3036 = vunpack.c.l.b16 %v772
        %v3037 = vunpack.c.h.b16 %v772
        %v3038 = vunpack.c.l.b16 %v773
        %v3039 = vunpack.c.h.b16 %v773
        %v3040 = vunpack.c.l.b16 %v774
        %v3041 = vunpack.c.h.b16 %v774
        %v3042 = vunpack.c.l.b16 %v775
        %v3043 = vunpack.c.h.b16 %v775
        %v3044 = vunpack.c.l.b16 %v776
        %v3045 = vunpack.c.h.b16 %v776
        %v3046 = vunpack.c.l.b16 %v777
        %v3047 = vunpack.c.h.b16 %v777
        %v3048 = vunpack.c.l.b16 %v778
        %v3049 = vunpack.c.h.b16 %v778
        %v3050 = vunpack.c.l.b16 %v779
        %v3051 = vunpack.c.h.b16 %v779
        %v3052 = vunpack.c.l.b16 %v780
        %v3053 = vunpack.c.h.b16 %v780
        %v3054 = vunpack.c.l.b16 %v781
        %v3055 = vunpack.c.h.b16 %v781
        %v3056 = vunpack.c.l.b16 %v782
        %v3057 = vunpack.c.h.b16 %v782
        %v3058 = vunpack.c.l.b16 %v783
        %v3059 = vunpack.c.h.b16 %v783
        %v3060 = vunpack.c.l.b16 %v784
        %v3061 = vunpack.c.h.b16 %v784
        %v3062 = vunpack.c.l.b16 %v785
        %v3063 = vunpack.c.h.b16 %v785
        %v3064 = vunpack.c.l.b16 %v786
        %v3065 = vunpack.c.h.b16 %v786
        %v3066 = vunpack.c.l.b16 %v787
        %v3067 = vunpack.c.h.b16 %v787
        %v3068 = vunpack.c.l.b16 %v788
        %v3069 = vunpack.c.h.b16 %v788
        %v3070 = vunpack.c.l.b16 %v789
        %v3071 = vunpack.c.h.b16 %v789
        %v3072 = vunpack.c.l.b16 %v790
        %v3073 = vunpack.c.h.b16 %v790
        %v3074 = vunpack.c.l.b16 %v791
        %v3075 = vunpack.c.h.b16 %v791
        %v3076 = vunpack.c.l.b16 %v792
        %v3077 = vunpack.c.h.b16 %v792
        %v3078 = vunpack.c.l.b16 %v793
        %v3079 = vunpack.c.h.b16 %v793
        %v3080 = vunpack.c.l.b16 %v794
        %v3081 = vunpack.c.h.b16 %v794
        %v3082 = vunpack.c.l.b16 %v795
        %v3083 = vunpack.c.h.b16 %v795
        %v3084 = vunpack.c.l.b16 %v796
        %v3085 = vunpack.c.h.b16 %v796
        %v3086 = vunpack.c.l.b16 %v797
        %v3087 = vunpack.c.h.b16 %v797
        %v3088 = vunpack.c.l.b16 %v798
        %v3089 = vunpack.c.h.b16 %v798
        %v3090 = vunpack.c.l.b16 %v799
        %v3091 = vunpack.c.h.b16 %v799
        %v3092 = vunpack.c.l.b16 %v800
        %v3093 = vunpack.c.h.b16 %v800
        %v3094 = vunpack.c.l.b16 %v801
        %v3095 = vunpack.c.h.b16 %v801
        %v3096 = vunpack.c.l.b16 %v802
        %v3097 = vunpack.c.h.b16 %v802
        %v3098 = vunpack.c.l.b16 %v803
        %v3099 = vunpack.c.h.b16 %v803
        %v3100 = vunpack.c.l.b16 %v804
        %v3101 = vunpack.c.h.b16 %v804
        %v3102 = vunpack.c.l.b16 %v805
        %v3103 = vunpack.c.h.b16 %v805
        %v3104 = vunpack.c.l.b16 %v806
        %v3105 = vunpack.c.h.b16 %v806
        %v3106 = vunpack.c.l.b16 %v807
        %v3107 = vunpack.c.h.b16 %v807
        %v3108 = vunpack.c.l.b16 %v808
        %v3109 = vunpack.c.h.b16 %v808
        %v3110 = vunpack.c.l.b16 %v809
        %v3111 = vunpack.c.h.b16 %v809
        %v3112 = vunpack.c.l.b16 %v810
        %v3113 = vunpack.c.h.b16 %v810
        %v3114 = vunpack.c.l.b16 %v811
        %v3115 = vunpack.c.h.b16 %v811
        %v3116 = vunpack.c.l.b16 %v812
        %v3117 = vunpack.c.h.b16 %v812
        %v3118 = vunpack.c.l.b16 %v813
        %v3119 = vunpack.c.h.b16 %v813
        %v3120 = vunpack.c.l.b16 %v814
        %v3121 = vunpack.c.h.b16 %v814
        %v3122 = vunpack.c.l.b16 %v815
        %v3123 = vunpack.c.h.b16 %v815
        %v3124 = vunpack.c.l.b16 %v816
        %v3125 = vunpack.c.h.b16 %v816
        %v3126 = vunpack.c.l.b16 %v817
        %v3127 = vunpack.c.h.b16 %v817
        %v3128 = vunpack.c.l.b16 %v818
        %v3129 = vunpack.c.h.b16 %v818
        %v3130 = vunpack.c.l.b16 %v819
        %v3131 = vunpack.c.h.b16 %v819
        %v3132 = vunpack.c.l.b16 %v820
        %v3133 = vunpack.c.h.b16 %v820
        %v3134 = vunpack.c.l.b16 %v821
        %v3135 = vunpack.c.h.b16 %v821
        %v3136 = vunpack.c.l.b16 %v822
        %v3137 = vunpack.c.h.b16 %v822
        %v3138 = vunpack.c.l.b16 %v823
        %v3139 = vunpack.c.h.b16 %v823
        %v3140 = vunpack.c.l.b16 %v824
        %v3141 = vunpack.c.h.b16 %v824
        %v3142 = vunpack.c.l.b16 %v825
        %v3143 = vunpack.c.h.b16 %v825
        %v3144 = vunpack.c.l.b16 %v826
        %v3145 = vunpack.c.h.b16 %v826
        %v3146 = vunpack.c.l.b16 %v827
        %v3147 = vunpack.c.h.b16 %v827
        %v3148 = vunpack.c.l.b16 %v828
        %v3149 = vunpack.c.h.b16 %v828
        %v3150 = vunpack.c.l.b16 %v829
        %v3151 = vunpack.c.h.b16 %v829
        %v3152 = vunpack.c.l.b16 %v830
        %v3153 = vunpack.c.h.b16 %v830
        %v3154 = vunpack.c.l.b16 %v831
        %v3155 = vunpack.c.h.b16 %v831
        %v3156 = vunpack.c.l.b16 %v832
        %v3157 = vunpack.c.h.b16 %v832
        %v3158 = vunpack.c.l.b16 %v833
        %v3159 = vunpack.c.h.b16 %v833
        %v3160 = vunpack.c.l.b16 %v834
        %v3161 = vunpack.c.h.b16 %v834
        %v3162 = vunpack.c.l.b16 %v835
        %v3163 = vunpack.c.h.b16 %v835
        %v3164 = vunpack.c.l.b16 %v836
        %v3165 = vunpack.c.h.b16 %v836
        %v3166 = vunpack.c.l.b16 %v837
        %v3167 = vunpack.c.h.b16 %v837
        %v3168 = vunpack.c.l.b16 %v838
        %v3169 = vunpack.c.h.b16 %v838
        %v3170 = vunpack.c.l.b16 %v839
        %v3171 = vunpack.c.h.b16 %v839
        %v3172 = vunpack.c.l.b16 %v840
        %v3173 = vunpack.c.h.b16 %v840
        %v3174 = vunpack.c.l.b16 %v841
        %v3175 = vunpack.c.h.b16 %v841
        %v3176 = vunpack.c.l.b16 %v842
        %v3177 = vunpack.c.h.b16 %v842
        %v3178 = vunpack.c.l.b16 %v843
        %v3179 = vunpack.c.h.b16 %v843
        %v3180 = vunpack.c.l.b16 %v844
        %v3181 = vunpack.c.h.b16 %v844
        %v3182 = vunpack.c.l.b16 %v845
        %v3183 = vunpack.c.h.b16 %v845
        %v3184 = vunpack.c.l.b16 %v846
        %v3185 = vunpack.c.h.b16 %v846
        %v3186 = vunpack.c.l.b16 %v847
        %v3187 = vunpack.c.h.b16 %v847
        %v3188 = vunpack.c.l.b16 %v848
        %v3189 = vunpack.c.h.b16 %v848
        %v3190 = vunpack.c.l.b16 %v849
        %v3191 = vunpack.c.h.b16 %v849
        %v3192 = vunpack.c.l.b16 %v850
        %v3193 = vunpack.c.h.b16 %v850
        %v3194 = vunpack.c.l.b16 %v851
        %v3195 = vunpack.c.h.b16 %v851
        %v3196 = vunpack.c.l.b16 %v852
        %v3197 = vunpack.c.h.b16 %v852
        %v3198 = vunpack.c.l.b16 %v853
        %v3199 = vunpack.c.h.b16 %v853
        %v3200 = vunpack.c.l.b16 %v854
        %v3201 = vunpack.c.h.b16 %v854
        %v3202 = vunpack.c.l.b16 %v855
        %v3203 = vunpack.c.h.b16 %v855
        %v3204 = vunpack.c.l.b16 %v856
        %v3205 = vunpack.c.h.b16 %v856
        %v3206 = vunpack.c.l.b16 %v857
        %v3207 = vunpack.c.h.b16 %v857
        %v3208 = vunpack.c.l.b16 %v858
        %v3209 = vunpack.c.h.b16 %v858
        %v3210 = vunpack.c.l.b16 %v859
        %v3211 = vunpack.c.h.b16 %v859
        %v3212 = vunpack.c.l.b16 %v860
        %v3213 = vunpack.c.h.b16 %v860
        %v3214 = vunpack.c.l.b16 %v861
        %v3215 = vunpack.c.h.b16 %v861
        %v3216 = vunpack.c.l.b16 %v862
        %v3217 = vunpack.c.h.b16 %v862
        %v3218 = vunpack.c.l.b16 %v863
        %v3219 = vunpack.c.h.b16 %v863
        %v3220 = vunpack.c.l.b16 %v864
        %v3221 = vunpack.c.h.b16 %v864
        %v3222 = vunpack.c.l.b16 %v865
        %v3223 = vunpack.c.h.b16 %v865
        %v3224 = vunpack.c.l.b16 %v866
        %v3225 = vunpack.c.h.b16 %v866
        %v3226 = vunpack.c.l.b16 %v867
        %v3227 = vunpack.c.h.b16 %v867
        %v3228 = vunpack.c.l.b16 %v868
        %v3229 = vunpack.c.h.b16 %v868
        %v3230 = vunpack.c.l.b16 %v869
        %v3231 = vunpack.c.h.b16 %v869
        %v3232 = vunpack.c.l.b16 %v870
        %v3233 = vunpack.c.h.b16 %v870
        %v3234 = vunpack.c.l.b16 %v871
        %v3235 = vunpack.c.h.b16 %v871
        %v3236 = vunpack.c.l.b16 %v872
        %v3237 = vunpack.c.h.b16 %v872
        %v3238 = vunpack.c.l.b16 %v873
        %v3239 = vunpack.c.h.b16 %v873
        %v3240 = vunpack.c.l.b16 %v874
        %v3241 = vunpack.c.h.b16 %v874
        %v3242 = vunpack.c.l.b16 %v875
        %v3243 = vunpack.c.h.b16 %v875
        %v3244 = vunpack.c.l.b16 %v876
        %v3245 = vunpack.c.h.b16 %v876
        %v3246 = vunpack.c.l.b16 %v877
        %v3247 = vunpack.c.h.b16 %v877
        %v3248 = vunpack.c.l.b16 %v878
        %v3249 = vunpack.c.h.b16 %v878
        %v3250 = vunpack.c.l.b16 %v879
        %v3251 = vunpack.c.h.b16 %v879
        %v3252 = vunpack.c.l.b16 %v880
        %v3253 = vunpack.c.h.b16 %v880
        %v3254 = vunpack.c.l.b16 %v881
        %v3255 = vunpack.c.h.b16 %v881
        %v3256 = vunpack.c.l.b16 %v882
        %v3257 = vunpack.c.h.b16 %v882
        %v3258 = vunpack.c.l.b16 %v883
        %v3259 = vunpack.c.h.b16 %v883
        %v3260 = vunpack.c.l.b16 %v884
        %v3261 = vunpack.c.h.b16 %v884
        %v3262 = vunpack.c.l.b16 %v885
        %v3263 = vunpack.c.h.b16 %v885
        %v3264 = vunpack.c.l.b16 %v886
        %v3265 = vunpack.c.h.b16 %v886
        %v3266 = vunpack.c.l.b16 %v887
        %v3267 = vunpack.c.h.b16 %v887
        %v3268 = vunpack.c.l.b16 %v888
        %v3269 = vunpack.c.h.b16 %v888
        %v3270 = vunpack.c.l.b16 %v889
        %v3271 = vunpack.c.h.b16 %v889
        %v3272 = vunpack.c.l.b16 %v890
        %v3273 = vunpack.c.h.b16 %v890
        %v3274 = vunpack.c.l.b16 %v891
        %v3275 = vunpack.c.h.b16 %v891
        %v3276 = vunpack.c.l.b16 %v892
        %v3277 = vunpack.c.h.b16 %v892
        %v3278 = vunpack.c.l.b16 %v893
        %v3279 = vunpack.c.h.b16 %v893
        %v3280 = vunpack.c.l.b16 %v894
        %v3281 = vunpack.c.h.b16 %v894
        %v3282 = vunpack.c.l.b16 %v895
        %v3283 = vunpack.c.h.b16 %v895
        %v3284 = vunpack.c.l.b16 %v896
        %v3285 = vunpack.c.h.b16 %v896
        %v3286 = vunpack.c.l.b16 %v897
        %v3287 = vunpack.c.h.b16 %v897
        %v3288 = vunpack.c.l.b16 %v898
        %v3289 = vunpack.c.h.b16 %v898
        %v3290 = vunpack.c.l.b16 %v899
        %v3291 = vunpack.c.h.b16 %v899
        %v3292 = vunpack.c.l.b16 %v900
        %v3293 = vunpack.c.h.b16 %v900
        %v3294 = vunpack.c.l.b16 %v901
        %v3295 = vunpack.c.h.b16 %v901
        %v3296 = vunpack.c.l.b16 %v902
        %v3297 = vunpack.c.h.b16 %v902
        %v3298 = vunpack.c.l.b16 %v903
        %v3299 = vunpack.c.h.b16 %v903
        %v3300 = vunpack.c.l.b16 %v904
        %v3301 = vunpack.c.h.b16 %v904
        %v3302 = vunpack.c.l.b16 %v905
        %v3303 = vunpack.c.h.b16 %v905
        %v3304 = vunpack.c.l.b16 %v906
        %v3305 = vunpack.c.h.b16 %v906
        %v3306 = vunpack.c.l.b16 %v907
        %v3307 = vunpack.c.h.b16 %v907
        %v3308 = vunpack.c.l.b16 %v908
        %v3309 = vunpack.c.h.b16 %v908
        %v3310 = vunpack.c.l.b16 %v909
        %v3311 = vunpack.c.h.b16 %v909
        %v3312 = vunpack.c.l.b16 %v910
        %v3313 = vunpack.c.h.b16 %v910
        %v3314 = vunpack.c.l.b16 %v911
        %v3315 = vunpack.c.h.b16 %v911
        %v3316 = vunpack.c.l.b16 %v912
        %v3317 = vunpack.c.h.b16 %v912
        %v3318 = vunpack.c.l.b16 %v913
        %v3319 = vunpack.c.h.b16 %v913
        %v3320 = vunpack.c.l.b16 %v914
        %v3321 = vunpack.c.h.b16 %v914
        %v3322 = vunpack.c.l.b16 %v915
        %v3323 = vunpack.c.h.b16 %v915
        %v3324 = vunpack.c.l.b16 %v916
        %v3325 = vunpack.c.h.b16 %v916
        %v3326 = vunpack.c.l.b16 %v917
        %v3327 = vunpack.c.h.b16 %v917
        %v3328 = vunpack.c.l.b16 %v918
        %v3329 = vunpack.c.h.b16 %v918
        %v3330 = vunpack.c.l.b16 %v919
        %v3331 = vunpack.c.h.b16 %v919
        %v3332 = vunpack.c.l.b16 %v920
        %v3333 = vunpack.c.h.b16 %v920
        %v3334 = vunpack.c.l.b16 %v921
        %v3335 = vunpack.c.h.b16 %v921
        %v3336 = vunpack.c.l.b16 %v922
        %v3337 = vunpack.c.h.b16 %v922
        %v3338 = vunpack.c.l.b16 %v923
        %v3339 = vunpack.c.h.b16 %v923
        %v3340 = vunpack.c.l.b16 %v924
        %v3341 = vunpack.c.h.b16 %v924
        %v3342 = vunpack.c.l.b16 %v925
        %v3343 = vunpack.c.h.b16 %v925
        %v3344 = vunpack.c.l.b16 %v926
        %v3345 = vunpack.c.h.b16 %v926
        %v3346 = vunpack.c.l.b16 %v927
        %v3347 = vunpack.c.h.b16 %v927
        %v3348 = vunpack.c.l.b16 %v928
        %v3349 = vunpack.c.h.b16 %v928
        %v3350 = vunpack.c.l.b16 %v929
        %v3351 = vunpack.c.h.b16 %v929
        %v3352 = vunpack.c.l.b16 %v930
        %v3353 = vunpack.c.h.b16 %v930
        %v3354 = vunpack.c.l.b16 %v931
        %v3355 = vunpack.c.h.b16 %v931
        %v3356 = vunpack.c.l.b16 %v932
        %v3357 = vunpack.c.h.b16 %v932
        %v3358 = vunpack.c.l.b16 %v933
        %v3359 = vunpack.c.h.b16 %v933
        %v3360 = vpack.c.b16 %v2478, %v2184
        %v3361 = vpack.c.b16 %v2479, %v2185
        %v3362 = vpack.c.b16 %v2480, %v2186
        %v3363 = vpack.c.b16 %v2481, %v2187
        %v3364 = vpack.c.b16 %v2482, %v2188
        %v3365 = vpack.c.b16 %v2483, %v2189
        %v3366 = vpack.c.b16 %v2484, %v2190
        %v3367 = vpack.c.b16 %v2485, %v2191
        %v3368 = vpack.c.b16 %v2486, %v2192
        %v3369 = vpack.c.b16 %v2487, %v2193
        %v3370 = vpack.c.b16 %v2488, %v2194
        %v3371 = vpack.c.b16 %v2489, %v2195
        %v3372 = vpack.c.b16 %v2490, %v2196
        %v3373 = vpack.c.b16 %v2491, %v2197
        %v3374 = vpack.c.b16 %v2492, %v2198
        %v3375 = vpack.c.b16 %v2493, %v2199
        %v3376 = vpack.c.b16 %v2494, %v2200
        %v3377 = vpack.c.b16 %v2495, %v2201
        %v3378 = vpack.c.b16 %v2496, %v2202
        %v3379 = vpack.c.b16 %v2497, %v2203
        %v3380 = vpack.c.b16 %v2498, %v2204
        %v3381 = vpack.c.b16 %v2499, %v2205
        %v3382 = vpack.c.b16 %v2500, %v2206
        %v3383 = vpack.c.b16 %v2501, %v2207
        %v3384 = vpack.c.b16 %v2502, %v2208
        %v3385 = vpack.c.b16 %v2503, %v2209
        %v3386 = vpack.c.b16 %v2504, %v2210
        %v3387 = vpack.c.b16 %v2505, %v2211
        %v3388 = vpack.c.b16 %v2506, %v2212
        %v3389 = vpack.c.b16 %v2507, %v2213
        %v3390 = vpack.c.b16 %v2508, %v2214
        %v3391 = vpack.c.b16 %v2509, %v2215
        %v3392 = vpack.c.b16 %v2510, %v2216
        %v3393 = vpack.c.b16 %v2511, %v2217
        %v3394 = vpack.c.b16 %v2512, %v2218
        %v3395 = vpack.c.b16 %v2513, %v2219
        %v3396 = vpack.c.b16 %v2514, %v2220
        %v3397 = vpack.c.b16 %v2515, %v2221
        %v3398 = vpack.c.b16 %v2516, %v2222
        %v3399 = vpack.c.b16 %v2517, %v2223
        %v3400 = vpack.c.b16 %v2518, %v2224
        %v3401 = vpack.c.b16 %v2519, %v2225
        %v3402 = vpack.c.b16 %v2520, %v2226
        %v3403 = vpack.c.b16 %v2521, %v2227
        %v3404 = vpack.c.b16 %v2522, %v2228
        %v3405 = vpack.c.b16 %v2523, %v2229
        %v3406 = vpack.c.b16 %v2524, %v2230
        %v3407 = vpack.c.b16 %v2525, %v2231
        %v3408 = vpack.c.b16 %v2526, %v2232
        %v3409 = vpack.c.b16 %v2527, %v2233
        %v3410 = vpack.c.b16 %v2528, %v2234
        %v3411 = vpack.c.b16 %v2529, %v2235
        %v3412 = vpack.c.b16 %v2530, %v2236
        %v3413 = vpack.c.b16 %v2531, %v2237
        %v3414 = vpack.c.b16 %v2532, %v2238
        %v3415 = vpack.c.b16 %v2533, %v2239
        %v3416 = vpack.c.b16 %v2534, %v2240
        %v3417 = vpack.c.b16 %v2535, %v2241
        %v3418 = vpack.c.b16 %v2536, %v2242
        %v3419 = vpack.c.b16 %v2537, %v2243
        %v3420 = vpack.c.b16 %v2538, %v2244
        %v3421 = vpack.c.b16 %v2539, %v2245
        %v3422 = vpack.c.b16 %v2540, %v2246
        %v3423 = vpack.c.b16 %v2541, %v2247
        %v3424 = vpack.c.b16 %v2542, %v2248
        %v3425 = vpack.c.b16 %v2543, %v2249
        %v3426 = vpack.c.b16 %v2544, %v2250
        %v3427 = vpack.c.b16 %v2545, %v2251
        %v3428 = vpack.c.b16 %v2546, %v2252
        %v3429 = vpack.c.b16 %v2547, %v2253
        %v3430 = vpack.c.b16 %v2548, %v2254
        %v3431 = vpack.c.b16 %v2549, %v2255
        %v3432 = vpack.c.b16 %v2550, %v2256
        %v3433 = vpack.c.b16 %v2551, %v2257
        %v3434 = vpack.c.b16 %v2552, %v2258
        %v3435 = vpack.c.b16 %v2553, %v2259
        %v3436 = vpack.c.b16 %v2554, %v2260
        %v3437 = vpack.c.b16 %v2555, %v2261
        %v3438 = vpack.c.b16 %v2556, %v2262
        %v3439 = vpack.c.b16 %v2557, %v2263
        %v3440 = vpack.c.b16 %v2558, %v2264
        %v3441 = vpack.c.b16 %v2559, %v2265
        %v3442 = vpack.c.b16 %v2560, %v2266
        %v3443 = vpack.c.b16 %v2561, %v2267
        %v3444 = vpack.c.b16 %v2562, %v2268
        %v3445 = vpack.c.b16 %v2563, %v2269
        %v3446 = vpack.c.b16 %v2564, %v2270
        %v3447 = vpack.c.b16 %v2565, %v2271
        %v3448 = vpack.c.b16 %v2566, %v2272
        %v3449 = vpack.c.b16 %v2567, %v2273
        %v3450 = vpack.c.b16 %v2568, %v2274
        %v3451 = vpack.c.b16 %v2569, %v2275
        %v3452 = vpack.c.b16 %v2570, %v2276
        %v3453 = vpack.c.b16 %v2571, %v2277
        %v3454 = vpack.c.b16 %v2572, %v2278
        %v3455 = vpack.c.b16 %v2573, %v2279
        %v3456 = vpack.c.b16 %v2574, %v2280
        %v3457 = vpack.c.b16 %v2575, %v2281
        %v3458 = vpack.c.b16 %v2576, %v2282
        %v3459 = vpack.c.b16 %v2577, %v2283
        %v3460 = vpack.c.b16 %v2578, %v2284
        %v3461 = vpack.c.b16 %v2579, %v2285
        %v3462 = vpack.c.b16 %v2580, %v2286
        %v3463 = vpack.c.b16 %v2581, %v2287
        %v3464 = vpack.c.b16 %v2582, %v2288
        %v3465 = vpack.c.b16 %v2583, %v2289
        %v3466 = vpack.c.b16 %v2584, %v2290
        %v3467 = vpack.c.b16 %v2585, %v2291
        %v3468 = vpack.c.b16 %v2586, %v2292
        %v3469 = vpack.c.b16 %v2587, %v2293
        %v3470 = vpack.c.b16 %v2588, %v2294
        %v3471 = vpack.c.b16 %v2589, %v2295
        %v3472 = vpack.c.b16 %v2590, %v2296
        %v3473 = vpack.c.b16 %v2591, %v2297
        %v3474 = vpack.c.b16 %v2592, %v2298
        %v3475 = vpack.c.b16 %v2593, %v2299
        %v3476 = vpack.c.b16 %v2594, %v2300
        %v3477 = vpack.c.b16 %v2595, %v2301
        %v3478 = vpack.c.b16 %v2596, %v2302
        %v3479 = vpack.c.b16 %v2597, %v2303
        %v3480 = vpack.c.b16 %v2598, %v2304
        %v3481 = vpack.c.b16 %v2599, %v2305
        %v3482 = vpack.c.b16 %v2600, %v2306
        %v3483 = vpack.c.b16 %v2601, %v2307
        %v3484 = vpack.c.b16 %v2602, %v2308
        %v3485 = vpack.c.b16 %v2603, %v2309
        %v3486 = vpack.c.b16 %v2604, %v2310
        %v3487 = vpack.c.b16 %v2605, %v2311
        %v3488 = vpack.c.b16 %v2606, %v2312
        %v3489 = vpack.c.b16 %v2607, %v2313
        %v3490 = vpack.c.b16 %v2608, %v2314
        %v3491 = vpack.c.b16 %v2609, %v2315
        %v3492 = vpack.c.b16 %v2610, %v2316
        %v3493 = vpack.c.b16 %v2611, %v2317
        %v3494 = vpack.c.b16 %v2612, %v2318
        %v3495 = vpack.c.b16 %v2613, %v2319
        %v3496 = vpack.c.b16 %v2614, %v2320
        %v3497 = vpack.c.b16 %v2615, %v2321
        %v3498 = vpack.c.b16 %v2616, %v2322
        %v3499 = vpack.c.b16 %v2617, %v2323
        %v3500 = vpack.c.b16 %v2618, %v2324
        %v3501 = vpack.c.b16 %v2619, %v2325
        %v3502 = vpack.c.b16 %v2620, %v2326
        %v3503 = vpack.c.b16 %v2621, %v2327
        %v3504 = vpack.c.b16 %v2622, %v2328
        %v3505 = vpack.c.b16 %v2623, %v2329
        %v3506 = vpack.c.b16 %v2624, %v2330
        %v3507 = vpack.c.b16 %v2625, %v2331
        %v3508 = vpack.c.b16 %v2626, %v2332
        %v3509 = vpack.c.b16 %v2627, %v2333
        %v3510 = vpack.c.b16 %v2628, %v2334
        %v3511 = vpack.c.b16 %v2629, %v2335
        %v3512 = vpack.c.b16 %v2630, %v2336
        %v3513 = vpack.c.b16 %v2631, %v2337
        %v3514 = vpack.c.b16 %v2632, %v2338
        %v3515 = vpack.c.b16 %v2633, %v2339
        %v3516 = vpack.c.b16 %v2634, %v2340
        %v3517 = vpack.c.b16 %v2635, %v2341
        %v3518 = vpack.c.b16 %v2636, %v2342
        %v3519 = vpack.c.b16 %v2637, %v2343
        %v3520 = vpack.c.b16 %v2638, %v2344
        %v3521 = vpack.c.b16 %v2639, %v2345
        %v3522 = vpack.c.b16 %v2640, %v2346
        %v3523 = vpack.c.b16 %v2641, %v2347
        %v3524 = vpack.c.b16 %v2642, %v2348
        %v3525 = vpack.c.b16 %v2643, %v2349
        %v3526 = vpack.c.b16 %v2644, %v2350
        %v3527 = vpack.c.b16 %v2645, %v2351
        %v3528 = vpack.c.b16 %v2646, %v2352
        %v3529 = vpack.c.b16 %v2647, %v2353
        %v3530 = vpack.c.b16 %v2648, %v2354
        %v3531 = vpack.c.b16 %v2649, %v2355
        %v3532 = vpack.c.b16 %v2650, %v2356
        %v3533 = vpack.c.b16 %v2651, %v2357
        %v3534 = vpack.c.b16 %v2652, %v2358
        %v3535 = vpack.c.b16 %v2653, %v2359
        %v3536 = vpack.c.b16 %v2654, %v2360
        %v3537 = vpack.c.b16 %v2655, %v2361
        %v3538 = vpack.c.b16 %v2656, %v2362
        %v3539 = vpack.c.b16 %v2657, %v2363
        %v3540 = vpack.c.b16 %v2658, %v2364
        %v3541 = vpack.c.b16 %v2659, %v2365
        %v3542 = vpack.c.b16 %v2660, %v2366
        %v3543 = vpack.c.b16 %v2661, %v2367
        %v3544 = vpack.c.b16 %v2662, %v2368
        %v3545 = vpack.c.b16 %v2663, %v2369
        %v3546 = vpack.c.b16 %v2664, %v2370
        %v3547 = vpack.c.b16 %v2665, %v2371
        %v3548 = vpack.c.b16 %v2666, %v2372
        %v3549 = vpack.c.b16 %v2667, %v2373
        %v3550 = vpack.c.b16 %v2668, %v2374
        %v3551 = vpack.c.b16 %v2669, %v2375
        %v3552 = vpack.c.b16 %v2670, %v2376
        %v3553 = vpack.c.b16 %v2671, %v2377
        %v3554 = vpack.c.b16 %v2672, %v2378
        %v3555 = vpack.c.b16 %v2673, %v2379
        %v3556 = vpack.c.b16 %v2674, %v2380
        %v3557 = vpack.c.b16 %v2675, %v2381
        %v3558 = vpack.c.b16 %v2676, %v2382
        %v3559 = vpack.c.b16 %v2677, %v2383
        %v3560 = vpack.c.b16 %v2678, %v2384
        %v3561 = vpack.c.b16 %v2679, %v2385
        %v3562 = vpack.c.b16 %v2680, %v2386
        %v3563 = vpack.c.b16 %v2681, %v2387
        %v3564 = vpack.c.b16 %v2682, %v2388
        %v3565 = vpack.c.b16 %v2683, %v2389
        %v3566 = vpack.c.b16 %v2684, %v2390
        %v3567 = vpack.c.b16 %v2685, %v2391
        %v3568 = vpack.c.b16 %v2686, %v2392
        %v3569 = vpack.c.b16 %v2687, %v2393
        %v3570 = vpack.c.b16 %v2688, %v2394
        %v3571 = vpack.c.b16 %v2689, %v2395
        %v3572 = vpack.c.b16 %v2690, %v2396
        %v3573 = vpack.c.b16 %v2691, %v2397
        %v3574 = vpack.c.b16 %v2692, %v2398
        %v3575 = vpack.c.b16 %v2693, %v2399
        %v3576 = vpack.c.b16 %v2694, %v2400
        %v3577 = vpack.c.b16 %v2695, %v2401
        %v3578 = vpack.c.b16 %v2696, %v2402
        %v3579 = vpack.c.b16 %v2697, %v2403
        %v3580 = vpack.c.b16 %v2698, %v2404
        %v3581 = vpack.c.b16 %v2699, %v2405
        %v3582 = vpack.c.b16 %v2700, %v2406
        %v3583 = vpack.c.b16 %v2701, %v2407
        %v3584 = vpack.c.b16 %v2702, %v2408
        %v3585 = vpack.c.b16 %v2703, %v2409
        %v3586 = vpack.c.b16 %v2704, %v2410
        %v3587 = vpack.c.b16 %v2705, %v2411
        %v3588 = vpack.c.b16 %v2706, %v2412
        %v3589 = vpack.c.b16 %v2707, %v2413
        %v3590 = vpack.c.b16 %v2708, %v2414
        %v3591 = vpack.c.b16 %v2709, %v2415
        %v3592 = vpack.c.b16 %v2710, %v2416
        %v3593 = vpack.c.b16 %v2711, %v2417
        %v3594 = vpack.c.b16 %v2712, %v2418
        %v3595 = vpack.c.b16 %v2713, %v2419
        %v3596 = vpack.c.b16 %v2714, %v2420
        %v3597 = vpack.c.b16 %v2715, %v2421
        %v3598 = vpack.c.b16 %v2716, %v2422
        %v3599 = vpack.c.b16 %v2717, %v2423
        %v3600 = vpack.c.b16 %v2718, %v2424
        %v3601 = vpack.c.b16 %v2719, %v2425
        %v3602 = vpack.c.b16 %v2720, %v2426
        %v3603 = vpack.c.b16 %v2721, %v2427
        %v3604 = vpack.c.b16 %v2722, %v2428
        %v3605 = vpack.c.b16 %v2723, %v2429
        %v3606 = vpack.c.b16 %v2724, %v2430
        %v3607 = vpack.c.b16 %v2725, %v2431
        %v3608 = vpack.c.b16 %v2726, %v2432
        %v3609 = vpack.c.b16 %v2727, %v2433
        %v3610 = vpack.c.b16 %v2728, %v2434
        %v3611 = vpack.c.b16 %v2729, %v2435
        %v3612 = vpack.c.b16 %v2730, %v2436
        %v3613 = vpack.c.b16 %v2731, %v2437
        %v3614 = vpack.c.b16 %v2732, %v2438
        %v3615 = vpack.c.b16 %v2733, %v2439
        %v3616 = vpack.c.b16 %v2734, %v2440
        %v3617 = vpack.c.b16 %v2735, %v2441
        %v3618 = vpack.c.b16 %v2736, %v2442
        %v3619 = vpack.c.b16 %v2737, %v2443
        %v3620 = vpack.c.b16 %v2738, %v2444
        %v3621 = vpack.c.b16 %v2739, %v2445
        %v3622 = vpack.c.b16 %v2740, %v2446
        %v3623 = vpack.c.b16 %v2741, %v2447
        %v3624 = vpack.c.b16 %v2742, %v2448
        %v3625 = vpack.c.b16 %v2743, %v2449
        %v3626 = vpack.c.b16 %v2744, %v2450
        %v3627 = vpack.c.b16 %v2745, %v2451
        %v3628 = vpack.c.b16 %v2746, %v2452
        %v3629 = vpack.c.b16 %v2747, %v2453
        %v3630 = vpack.c.b16 %v2748, %v2454
        %v3631 = vpack.c.b16 %v2749, %v2455
        %v3632 = vpack.c.b16 %v2750, %v2456
        %v3633 = vpack.c.b16 %v2751, %v2457
        %v3634 = vpack.c.b16 %v2752, %v2458
        %v3635 = vpack.c.b16 %v2753, %v2459
        %v3636 = vpack.c.b16 %v2754, %v2460
        %v3637 = vpack.c.b16 %v2755, %v2461
        %v3638 = vpack.c.b16 %v2756, %v2462
        %v3639 = vpack.c.b16 %v2757, %v2463
        %v3640 = vpack.c.b16 %v2758, %v2464
        %v3641 = vpack.c.b16 %v2759, %v2465
        %v3642 = vpack.c.b16 %v2760, %v2466
        %v3643 = vpack.c.b16 %v2761, %v2467
        %v3644 = vpack.c.b16 %v2762, %v2468
        %v3645 = vpack.c.b16 %v2763, %v2469
        %v3646 = vpack.c.b16 %v2764, %v2470
        %v3647 = vpack.c.b16 %v2765, %v2471
        %v3648 = vpack.c.b16 %v2766, %v2472
        %v3649 = vpack.c.b16 %v2767, %v2473
        %v3650 = vpack.c.b16 %v2768, %v2474
        %v3651 = vpack.c.b16 %v2769, %v2475
        %v3652 = vpack.c.b16 %v2770, %v2476
        %v3653 = vpack.c.b16 %v2771, %v2477
        %v3654 = vpack.c.b16 %v3066, %v2772
        %v3655 = vpack.c.b16 %v3067, %v2773
        %v3656 = vpack.c.b16 %v3068, %v2774
        %v3657 = vpack.c.b16 %v3069, %v2775
        %v3658 = vpack.c.b16 %v3070, %v2776
        %v3659 = vpack.c.b16 %v3071, %v2777
        %v3660 = vpack.c.b16 %v3072, %v2778
        %v3661 = vpack.c.b16 %v3073, %v2779
        %v3662 = vpack.c.b16 %v3074, %v2780
        %v3663 = vpack.c.b16 %v3075, %v2781
        %v3664 = vpack.c.b16 %v3076, %v2782
        %v3665 = vpack.c.b16 %v3077, %v2783
        %v3666 = vpack.c.b16 %v3078, %v2784
        %v3667 = vpack.c.b16 %v3079, %v2785
        %v3668 = vpack.c.b16 %v3080, %v2786
        %v3669 = vpack.c.b16 %v3081, %v2787
        %v3670 = vpack.c.b16 %v3082, %v2788
        %v3671 = vpack.c.b16 %v3083, %v2789
        %v3672 = vpack.c.b16 %v3084, %v2790
        %v3673 = vpack.c.b16 %v3085, %v2791
        %v3674 = vpack.c.b16 %v3086, %v2792
        %v3675 = vpack.c.b16 %v3087, %v2793
        %v3676 = vpack.c.b16 %v3088, %v2794
        %v3677 = vpack.c.b16 %v3089, %v2795
        %v3678 = vpack.c.b16 %v3090, %v2796
        %v3679 = vpack.c.b16 %v3091, %v2797
        %v3680 = vpack.c.b16 %v3092, %v2798
        %v3681 = vpack.c.b16 %v3093, %v2799
        %v3682 = vpack.c.b16 %v3094, %v2800
        %v3683 = vpack.c.b16 %v3095, %v2801
        %v3684 = vpack.c.b16 %v3096, %v2802
        %v3685 = vpack.c.b16 %v3097, %v2803
        %v3686 = vpack.c.b16 %v3098, %v2804
        %v3687 = vpack.c.b16 %v3099, %v2805
        %v3688 = vpack.c.b16 %v3100, %v2806
        %v3689 = vpack.c.b16 %v3101, %v2807
        %v3690 = vpack.c.b16 %v3102, %v2808
        %v3691 = vpack.c.b16 %v3103, %v2809
        %v3692 = vpack.c.b16 %v3104, %v2810
        %v3693 = vpack.c.b16 %v3105, %v2811
        %v3694 = vpack.c.b16 %v3106, %v2812
        %v3695 = vpack.c.b16 %v3107, %v2813
        %v3696 = vpack.c.b16 %v3108, %v2814
        %v3697 = vpack.c.b16 %v3109, %v2815
        %v3698 = vpack.c.b16 %v3110, %v2816
        %v3699 = vpack.c.b16 %v3111, %v2817
        %v3700 = vpack.c.b16 %v3112, %v2818
        %v3701 = vpack.c.b16 %v3113, %v2819
        %v3702 = vpack.c.b16 %v3114, %v2820
        %v3703 = vpack.c.b16 %v3115, %v2821
        %v3704 = vpack.c.b16 %v3116, %v2822
        %v3705 = vpack.c.b16 %v3117, %v2823
        %v3706 = vpack.c.b16 %v3118, %v2824
        %v3707 = vpack.c.b16 %v3119, %v2825
        %v3708 = vpack.c.b16 %v3120, %v2826
        %v3709 = vpack.c.b16 %v3121, %v2827
        %v3710 = vpack.c.b16 %v3122, %v2828
        %v3711 = vpack.c.b16 %v3123, %v2829
        %v3712 = vpack.c.b16 %v3124, %v2830
        %v3713 = vpack.c.b16 %v3125, %v2831
        %v3714 = vpack.c.b16 %v3126, %v2832
        %v3715 = vpack.c.b16 %v3127, %v2833
        %v3716 = vpack.c.b16 %v3128, %v2834
        %v3717 = vpack.c.b16 %v3129, %v2835
        %v3718 = vpack.c.b16 %v3130, %v2836
        %v3719 = vpack.c.b16 %v3131, %v2837
        %v3720 = vpack.c.b16 %v3132, %v2838
        %v3721 = vpack.c.b16 %v3133, %v2839
        %v3722 = vpack.c.b16 %v3134, %v2840
        %v3723 = vpack.c.b16 %v3135, %v2841
        %v3724 = vpack.c.b16 %v3136, %v2842
        %v3725 = vpack.c.b16 %v3137, %v2843
        %v3726 = vpack.c.b16 %v3138, %v2844
        %v3727 = vpack.c.b16 %v3139, %v2845
        %v3728 = vpack.c.b16 %v3140, %v2846
        %v3729 = vpack.c.b16 %v3141, %v2847
        %v3730 = vpack.c.b16 %v3142, %v2848
        %v3731 = vpack.c.b16 %v3143, %v2849
        %v3732 = vpack.c.b16 %v3144, %v2850
        %v3733 = vpack.c.b16 %v3145, %v2851
        %v3734 = vpack.c.b16 %v3146, %v2852
        %v3735 = vpack.c.b16 %v3147, %v2853
        %v3736 = vpack.c.b16 %v3148, %v2854
        %v3737 = vpack.c.b16 %v3149, %v2855
        %v3738 = vpack.c.b16 %v3150, %v2856
        %v3739 = vpack.c.b16 %v3151, %v2857
        %v3740 = vpack.c.b16 %v3152, %v2858
        %v3741 = vpack.c.b16 %v3153, %v2859
        %v3742 = vpack.c.b16 %v3154, %v2860
        %v3743 = vpack.c.b16 %v3155, %v2861
        %v3744 = vpack.c.b16 %v3156, %v2862
        %v3745 = vpack.c.b16 %v3157, %v2863
        %v3746 = vpack.c.b16 %v3158, %v2864
        %v3747 = vpack.c.b16 %v3159, %v2865
        %v3748 = vpack.c.b16 %v3160, %v2866
        %v3749 = vpack.c.b16 %v3161, %v2867
        %v3750 = vpack.c.b16 %v3162, %v2868
        %v3751 = vpack.c.b16 %v3163, %v2869
        %v3752 = vpack.c.b16 %v3164, %v2870
        %v3753 = vpack.c.b16 %v3165, %v2871
        %v3754 = vpack.c.b16 %v3166, %v2872
        %v3755 = vpack.c.b16 %v3167, %v2873
        %v3756 = vpack.c.b16 %v3168, %v2874
        %v3757 = vpack.c.b16 %v3169, %v2875
        %v3758 = vpack.c.b16 %v3170, %v2876
        %v3759 = vpack.c.b16 %v3171, %v2877
        %v3760 = vpack.c.b16 %v3172, %v2878
        %v3761 = vpack.c.b16 %v3173, %v2879
        %v3762 = vpack.c.b16 %v3174, %v2880
        %v3763 = vpack.c.b16 %v3175, %v2881
        %v3764 = vpack.c.b16 %v3176, %v2882
        %v3765 = vpack.c.b16 %v3177, %v2883
        %v3766 = vpack.c.b16 %v3178, %v2884
        %v3767 = vpack.c.b16 %v3179, %v2885
        %v3768 = vpack.c.b16 %v3180, %v2886
        %v3769 = vpack.c.b16 %v3181, %v2887
        %v3770 = vpack.c.b16 %v3182, %v2888
        %v3771 = vpack.c.b16 %v3183, %v2889
        %v3772 = vpack.c.b16 %v3184, %v2890
        %v3773 = vpack.c.b16 %v3185, %v2891
        %v3774 = vpack.c.b16 %v3186, %v2892
        %v3775 = vpack.c.b16 %v3187, %v2893
        %v3776 = vpack.c.b16 %v3188, %v2894
        %v3777 = vpack.c.b16 %v3189, %v2895
        %v3778 = vpack.c.b16 %v3190, %v2896
        %v3779 = vpack.c.b16 %v3191, %v2897
        %v3780 = vpack.c.b16 %v3192, %v2898
        %v3781 = vpack.c.b16 %v3193, %v2899
        %v3782 = vpack.c.b16 %v3194, %v2900
        %v3783 = vpack.c.b16 %v3195, %v2901
        %v3784 = vpack.c.b16 %v3196, %v2902
        %v3785 = vpack.c.b16 %v3197, %v2903
        %v3786 = vpack.c.b16 %v3198, %v2904
        %v3787 = vpack.c.b16 %v3199, %v2905
        %v3788 = vpack.c.b16 %v3200, %v2906
        %v3789 = vpack.c.b16 %v3201, %v2907
        %v3790 = vpack.c.b16 %v3202, %v2908
        %v3791 = vpack.c.b16 %v3203, %v2909
        %v3792 = vpack.c.b16 %v3204, %v2910
        %v3793 = vpack.c.b16 %v3205, %v2911
        %v3794 = vpack.c.b16 %v3206, %v2912
        %v3795 = vpack.c.b16 %v3207, %v2913
        %v3796 = vpack.c.b16 %v3208, %v2914
        %v3797 = vpack.c.b16 %v3209, %v2915
        %v3798 = vpack.c.b16 %v3210, %v2916
        %v3799 = vpack.c.b16 %v3211, %v2917
        %v3800 = vpack.c.b16 %v3212, %v2918
        %v3801 = vpack.c.b16 %v3213, %v2919
        %v3802 = vpack.c.b16 %v3214, %v2920
        %v3803 = vpack.c.b16 %v3215, %v2921
        %v3804 = vpack.c.b16 %v3216, %v2922
        %v3805 = vpack.c.b16 %v3217, %v2923
        %v3806 = vpack.c.b16 %v3218, %v2924
        %v3807 = vpack.c.b16 %v3219, %v2925
        %v3808 = vpack.c.b16 %v3220, %v2926
        %v3809 = vpack.c.b16 %v3221, %v2927
        %v3810 = vpack.c.b16 %v3222, %v2928
        %v3811 = vpack.c.b16 %v3223, %v2929
        %v3812 = vpack.c.b16 %v3224, %v2930
        %v3813 = vpack.c.b16 %v3225, %v2931
        %v3814 = vpack.c.b16 %v3226, %v2932
        %v3815 = vpack.c.b16 %v3227, %v2933
        %v3816 = vpack.c.b16 %v3228, %v2934
        %v3817 = vpack.c.b16 %v3229, %v2935
        %v3818 = vpack.c.b16 %v3230, %v2936
        %v3819 = vpack.c.b16 %v3231, %v2937
        %v3820 = vpack.c.b16 %v3232, %v2938
        %v3821 = vpack.c.b16 %v3233, %v2939
        %v3822 = vpack.c.b16 %v3234, %v2940
        %v3823 = vpack.c.b16 %v3235, %v2941
        %v3824 = vpack.c.b16 %v3236, %v2942
        %v3825 = vpack.c.b16 %v3237, %v2943
        %v3826 = vpack.c.b16 %v3238, %v2944
        %v3827 = vpack.c.b16 %v3239, %v2945
        %v3828 = vpack.c.b16 %v3240, %v2946
        %v3829 = vpack.c.b16 %v3241, %v2947
        %v3830 = vpack.c.b16 %v3242, %v2948
        %v3831 = vpack.c.b16 %v3243, %v2949
        %v3832 = vpack.c.b16 %v3244, %v2950
        %v3833 = vpack.c.b16 %v3245, %v2951
        %v3834 = vpack.c.b16 %v3246, %v2952
        %v3835 = vpack.c.b16 %v3247, %v2953
        %v3836 = vpack.c.b16 %v3248, %v2954
        %v3837 = vpack.c.b16 %v3249, %v2955
        %v3838 = vpack.c.b16 %v3250, %v2956
        %v3839 = vpack.c.b16 %v3251, %v2957
        %v3840 = vpack.c.b16 %v3252, %v2958
        %v3841 = vpack.c.b16 %v3253, %v2959
        %v3842 = vpack.c.b16 %v3254, %v2960
        %v3843 = vpack.c.b16 %v3255, %v2961
        %v3844 = vpack.c.b16 %v3256, %v2962
        %v3845 = vpack.c.b16 %v3257, %v2963
        %v3846 = vpack.c.b16 %v3258, %v2964
        %v3847 = vpack.c.b16 %v3259, %v2965
        %v3848 = vpack.c.b16 %v3260, %v2966
        %v3849 = vpack.c.b16 %v3261, %v2967
        %v3850 = vpack.c.b16 %v3262, %v2968
        %v3851 = vpack.c.b16 %v3263, %v2969
        %v3852 = vpack.c.b16 %v3264, %v2970
        %v3853 = vpack.c.b16 %v3265, %v2971
        %v3854 = vpack.c.b16 %v3266, %v2972
        %v3855 = vpack.c.b16 %v3267, %v2973
        %v3856 = vpack.c.b16 %v3268, %v2974
        %v3857 = vpack.c.b16 %v3269, %v2975
        %v3858 = vpack.c.b16 %v3270, %v2976
        %v3859 = vpack.c.b16 %v3271, %v2977
        %v3860 = vpack.c.b16 %v3272, %v2978
        %v3861 = vpack.c.b16 %v3273, %v2979
        %v3862 = vpack.c.b16 %v3274, %v2980
        %v3863 = vpack.c.b16 %v3275, %v2981
        %v3864 = vpack.c.b16 %v3276, %v2982
        %v3865 = vpack.c.b16 %v3277, %v2983
        %v3866 = vpack.c.b16 %v3278, %v2984
        %v3867 = vpack.c.b16 %v3279, %v2985
        %v3868 = vpack.c.b16 %v3280, %v2986
        %v3869 = vpack.c.b16 %v3281, %v2987
        %v3870 = vpack.c.b16 %v3282, %v2988
        %v3871 = vpack.c.b16 %v3283, %v2989
        %v3872 = vpack.c.b16 %v3284, %v2990
        %v3873 = vpack.c.b16 %v3285, %v2991
        %v3874 = vpack.c.b16 %v3286, %v2992
        %v3875 = vpack.c.b16 %v3287, %v2993
        %v3876 = vpack.c.b16 %v3288, %v2994
        %v3877 = vpack.c.b16 %v3289, %v2995
        %v3878 = vpack.c.b16 %v3290, %v2996
        %v3879 = vpack.c.b16 %v3291, %v2997
        %v3880 = vpack.c.b16 %v3292, %v2998
        %v3881 = vpack.c.b16 %v3293, %v2999
        %v3882 = vpack.c.b16 %v3294, %v3000
        %v3883 = vpack.c.b16 %v3295, %v3001
        %v3884 = vpack.c.b16 %v3296, %v3002
        %v3885 = vpack.c.b16 %v3297, %v3003
        %v3886 = vpack.c.b16 %v3298, %v3004
        %v3887 = vpack.c.b16 %v3299, %v3005
        %v3888 = vpack.c.b16 %v3300, %v3006
        %v3889 = vpack.c.b16 %v3301, %v3007
        %v3890 = vpack.c.b16 %v3302, %v3008
        %v3891 = vpack.c.b16 %v3303, %v3009
        %v3892 = vpack.c.b16 %v3304, %v3010
        %v3893 = vpack.c.b16 %v3305, %v3011
        %v3894 = vpack.c.b16 %v3306, %v3012
        %v3895 = vpack.c.b16 %v3307, %v3013
        %v3896 = vpack.c.b16 %v3308, %v3014
        %v3897 = vpack.c.b16 %v3309, %v3015
        %v3898 = vpack.c.b16 %v3310, %v3016
        %v3899 = vpack.c.b16 %v3311, %v3017
        %v3900 = vpack.c.b16 %v3312, %v3018
        %v3901 = vpack.c.b16 %v3313, %v3019
        %v3902 = vpack.c.b16 %v3314, %v3020
        %v3903 = vpack.c.b16 %v3315, %v3021
        %v3904 = vpack.c.b16 %v3316, %v3022
        %v3905 = vpack.c.b16 %v3317, %v3023
        %v3906 = vpack.c.b16 %v3318, %v3024
        %v3907 = vpack.c.b16 %v3319, %v3025
        %v3908 = vpack.c.b16 %v3320, %v3026
        %v3909 = vpack.c.b16 %v3321, %v3027
        %v3910 = vpack.c.b16 %v3322, %v3028
        %v3911 = vpack.c.b16 %v3323, %v3029
        %v3912 = vpack.c.b16 %v3324, %v3030
        %v3913 = vpack.c.b16 %v3325, %v3031
        %v3914 = vpack.c.b16 %v3326, %v3032
        %v3915 = vpack.c.b16 %v3327, %v3033
        %v3916 = vpack.c.b16 %v3328, %v3034
        %v3917 = vpack.c.b16 %v3329, %v3035
        %v3918 = vpack.c.b16 %v3330, %v3036
        %v3919 = vpack.c.b16 %v3331, %v3037
        %v3920 = vpack.c.b16 %v3332, %v3038
        %v3921 = vpack.c.b16 %v3333, %v3039
        %v3922 = vpack.c.b16 %v3334, %v3040
        %v3923 = vpack.c.b16 %v3335, %v3041
        %v3924 = vpack.c.b16 %v3336, %v3042
        %v3925 = vpack.c.b16 %v3337, %v3043
        %v3926 = vpack.c.b16 %v3338, %v3044
        %v3927 = vpack.c.b16 %v3339, %v3045
        %v3928 = vpack.c.b16 %v3340, %v3046
        %v3929 = vpack.c.b16 %v3341, %v3047
        %v3930 = vpack.c.b16 %v3342, %v3048
        %v3931 = vpack.c.b16 %v3343, %v3049
        %v3932 = vpack.c.b16 %v3344, %v3050
        %v3933 = vpack.c.b16 %v3345, %v3051
        %v3934 = vpack.c.b16 %v3346, %v3052
        %v3935 = vpack.c.b16 %v3347, %v3053
        %v3936 = vpack.c.b16 %v3348, %v3054
        %v3937 = vpack.c.b16 %v3349, %v3055
        %v3938 = vpack.c.b16 %v3350, %v3056
        %v3939 = vpack.c.b16 %v3351, %v3057
        %v3940 = vpack.c.b16 %v3352, %v3058
        %v3941 = vpack.c.b16 %v3353, %v3059
        %v3942 = vpack.c.b16 %v3354, %v3060
        %v3943 = vpack.c.b16 %v3355, %v3061
        %v3944 = vpack.c.b16 %v3356, %v3062
        %v3945 = vpack.c.b16 %v3357, %v3063
        %v3946 = vpack.c.b16 %v3358, %v3064
        %v3947 = vpack.c.b16 %v3359, %v3065
        %4536 = vmatpush.bf16.xpose.msra.mxu0 0
        %4537 = vmatpush.bf16.xpose.msra.mxu0 0
        %4538 = vmatpush.bf16.xpose.msra.mxu0 0
        %4539 = vmatpush.bf16.xpose.msra.mxu0 0
        %4540 = vmatpush.bf16.xpose.msra.mxu0 0
        %4541 = vmatpush.bf16.xpose.msra.mxu0 0
        %4542 = vmatpush.bf16.xpose.msra.mxu0 %v3654
        %4543 = vmatpush.bf16.xpose.msra.mxu0 %v3360
        %4544 = vmatmul.bf16.gmra.mxu0 %v936
        %v4545 = vpop.f32.mrf.mxu0
        %v4546 = vadd.f32 0.0, %v4545
        %v4547 = vpop.f32.mrf.mxu0
        %4548 = vdwg.mxu0
        %4549 = vmatpush.bf16.xpose.msra.mxu0 0
        %4550 = vmatpush.bf16.xpose.msra.mxu0 0
        %4551 = vmatpush.bf16.xpose.msra.mxu0 0
        %4552 = vmatpush.bf16.xpose.msra.mxu0 0
        %4553 = vmatpush.bf16.xpose.msra.mxu0 0
        %4554 = vmatpush.bf16.xpose.msra.mxu0 0
        %4555 = vmatpush.bf16.xpose.msra.mxu0 %v3655
        %4556 = vmatpush.bf16.xpose.msra.mxu0 %v3361
        %4557 = vmatmul.bf16.gmra.mxu0 %v937
        %v4558 = vpop.f32.mrf.mxu0
        %v4559 = vadd.f32 %v4546, %v4558
        %v4560 = vpop.f32.mrf.mxu0
        %4561 = vdwg.mxu0
        %4562 = vmatpush.bf16.xpose.msra.mxu0 0
        %4563 = vmatpush.bf16.xpose.msra.mxu0 0
        %4564 = vmatpush.bf16.xpose.msra.mxu0 0
        %4565 = vmatpush.bf16.xpose.msra.mxu0 0
        %4566 = vmatpush.bf16.xpose.msra.mxu0 0
        %4567 = vmatpush.bf16.xpose.msra.mxu0 0
        %4568 = vmatpush.bf16.xpose.msra.mxu0 %v3656
        %4569 = vmatpush.bf16.xpose.msra.mxu0 %v3362
        %4570 = vmatmul.bf16.gmra.mxu0 %v938
        %v4571 = vpop.f32.mrf.mxu0
        %v4572 = vadd.f32 %v4559, %v4571
        %v4573 = vpop.f32.mrf.mxu0
        %4574 = vdwg.mxu0
        %4575 = vmatpush.bf16.xpose.msra.mxu0 0
        %4576 = vmatpush.bf16.xpose.msra.mxu0 0
        %4577 = vmatpush.bf16.xpose.msra.mxu0 0
        %4578 = vmatpush.bf16.xpose.msra.mxu0 0
        %4579 = vmatpush.bf16.xpose.msra.mxu0 0
        %4580 = vmatpush.bf16.xpose.msra.mxu0 0
        %4581 = vmatpush.bf16.xpose.msra.mxu0 %v3657
        %4582 = vmatpush.bf16.xpose.msra.mxu0 %v3363
        %4583 = vmatmul.bf16.gmra.mxu0 %v939
        %v4584 = vpop.f32.mrf.mxu0
        %v4585 = vadd.f32 %v4572, %v4584
        %v4586 = vpop.f32.mrf.mxu0
        %4587 = vdwg.mxu0
        %4588 = vmatpush.bf16.xpose.msra.mxu0 0
        %4589 = vmatpush.bf16.xpose.msra.mxu0 0
        %4590 = vmatpush.bf16.xpose.msra.mxu0 0
        %4591 = vmatpush.bf16.xpose.msra.mxu0 0
        %4592 = vmatpush.bf16.xpose.msra.mxu0 0
        %4593 = vmatpush.bf16.xpose.msra.mxu0 0
        %4594 = vmatpush.bf16.xpose.msra.mxu0 %v3658
        %4595 = vmatpush.bf16.xpose.msra.mxu0 %v3364
        %4596 = vmatmul.bf16.gmra.mxu0 %v940
        %v4597 = vpop.f32.mrf.mxu0
        %v4598 = vadd.f32 %v4585, %v4597
        %v4599 = vpop.f32.mrf.mxu0
        %4600 = vdwg.mxu0
        %4601 = vmatpush.bf16.xpose.msra.mxu0 0
        %4602 = vmatpush.bf16.xpose.msra.mxu0 0
        %4603 = vmatpush.bf16.xpose.msra.mxu0 0
        %4604 = vmatpush.bf16.xpose.msra.mxu0 0
        %4605 = vmatpush.bf16.xpose.msra.mxu0 0
        %4606 = vmatpush.bf16.xpose.msra.mxu0 0
        %4607 = vmatpush.bf16.xpose.msra.mxu0 %v3659
        %4608 = vmatpush.bf16.xpose.msra.mxu0 %v3365
        %4609 = vmatmul.bf16.gmra.mxu0 %v941
        %v4610 = vpop.f32.mrf.mxu0
        %v4611 = vadd.f32 %v4598, %v4610
        %v4612 = vpop.f32.mrf.mxu0
        %4613 = vdwg.mxu0
        %4614 = vmatpush.bf16.xpose.msra.mxu0 0
        %4615 = vmatpush.bf16.xpose.msra.mxu0 0
        %4616 = vmatpush.bf16.xpose.msra.mxu0 0
        %4617 = vmatpush.bf16.xpose.msra.mxu0 0
        %4618 = vmatpush.bf16.xpose.msra.mxu0 0
        %4619 = vmatpush.bf16.xpose.msra.mxu0 0
        %4620 = vmatpush.bf16.xpose.msra.mxu0 %v3660
        %4621 = vmatpush.bf16.xpose.msra.mxu0 %v3366
        %4622 = vmatmul.bf16.gmra.mxu0 %v942
        %v4623 = vpop.f32.mrf.mxu0
        %v4624 = vadd.f32 %v4611, %v4623
        %v4625 = vpop.f32.mrf.mxu0
        %4626 = vdwg.mxu0
        %4627 = vmatpush.bf16.xpose.msra.mxu0 0
        %4628 = vmatpush.bf16.xpose.msra.mxu0 0
        %4629 = vmatpush.bf16.xpose.msra.mxu0 0
        %4630 = vmatpush.bf16.xpose.msra.mxu0 0
        %4631 = vmatpush.bf16.xpose.msra.mxu0 0
        %4632 = vmatpush.bf16.xpose.msra.mxu0 0
        %4633 = vmatpush.bf16.xpose.msra.mxu0 %v3661
        %4634 = vmatpush.bf16.xpose.msra.mxu0 %v3367
        %4635 = vmatmul.bf16.gmra.mxu0 %v943
        %v4636 = vpop.f32.mrf.mxu0
        %v4637 = vadd.f32 %v4624, %v4636
        %v4638 = vpop.f32.mrf.mxu0
        %4639 = vdwg.mxu0
        %4640 = vmatpush.bf16.xpose.msra.mxu0 0
        %4641 = vmatpush.bf16.xpose.msra.mxu0 0
        %4642 = vmatpush.bf16.xpose.msra.mxu0 0
        %4643 = vmatpush.bf16.xpose.msra.mxu0 0
        %4644 = vmatpush.bf16.xpose.msra.mxu0 0
        %4645 = vmatpush.bf16.xpose.msra.mxu0 0
        %4646 = vmatpush.bf16.xpose.msra.mxu0 %v3662
        %4647 = vmatpush.bf16.xpose.msra.mxu0 %v3368
        %4648 = vmatmul.bf16.gmra.mxu0 %v946
        %v4649 = vpop.f32.mrf.mxu0
        %v4650 = vadd.f32 %v4637, %v4649
        %v4651 = vpop.f32.mrf.mxu0
        %4652 = vdwg.mxu0
        %4653 = vmatpush.bf16.xpose.msra.mxu0 0
        %4654 = vmatpush.bf16.xpose.msra.mxu0 0
        %4655 = vmatpush.bf16.xpose.msra.mxu0 0
        %4656 = vmatpush.bf16.xpose.msra.mxu0 0
        %4657 = vmatpush.bf16.xpose.msra.mxu0 0
        %4658 = vmatpush.bf16.xpose.msra.mxu0 0
        %4659 = vmatpush.bf16.xpose.msra.mxu0 %v3663
        %4660 = vmatpush.bf16.xpose.msra.mxu0 %v3369
        %4661 = vmatmul.bf16.gmra.mxu0 %v947
        %v4662 = vpop.f32.mrf.mxu0
        %v4663 = vadd.f32 %v4650, %v4662
        %v4664 = vpop.f32.mrf.mxu0
        %4665 = vdwg.mxu0
        %4666 = vmatpush.bf16.xpose.msra.mxu0 0
        %4667 = vmatpush.bf16.xpose.msra.mxu0 0
        %4668 = vmatpush.bf16.xpose.msra.mxu0 0
        %4669 = vmatpush.bf16.xpose.msra.mxu0 0
        %4670 = vmatpush.bf16.xpose.msra.mxu0 0
        %4671 = vmatpush.bf16.xpose.msra.mxu0 0
        %4672 = vmatpush.bf16.xpose.msra.mxu0 %v3664
        %4673 = vmatpush.bf16.xpose.msra.mxu0 %v3370
        %4674 = vmatmul.bf16.gmra.mxu0 %v948
        %v4675 = vpop.f32.mrf.mxu0
        %v4676 = vadd.f32 %v4663, %v4675
        %v4677 = vpop.f32.mrf.mxu0
        %4678 = vdwg.mxu0
        %4679 = vmatpush.bf16.xpose.msra.mxu0 0
        %4680 = vmatpush.bf16.xpose.msra.mxu0 0
        %4681 = vmatpush.bf16.xpose.msra.mxu0 0
        %4682 = vmatpush.bf16.xpose.msra.mxu0 0
        %4683 = vmatpush.bf16.xpose.msra.mxu0 0
        %4684 = vmatpush.bf16.xpose.msra.mxu0 0
        %4685 = vmatpush.bf16.xpose.msra.mxu0 %v3665
        %4686 = vmatpush.bf16.xpose.msra.mxu0 %v3371
        %4687 = vmatmul.bf16.gmra.mxu0 %v949
        %v4688 = vpop.f32.mrf.mxu0
        %v4689 = vadd.f32 %v4676, %v4688
        %v4690 = vpop.f32.mrf.mxu0
        %4691 = vdwg.mxu0
        %4692 = vmatpush.bf16.xpose.msra.mxu0 0
        %4693 = vmatpush.bf16.xpose.msra.mxu0 0
        %4694 = vmatpush.bf16.xpose.msra.mxu0 0
        %4695 = vmatpush.bf16.xpose.msra.mxu0 0
        %4696 = vmatpush.bf16.xpose.msra.mxu0 0
        %4697 = vmatpush.bf16.xpose.msra.mxu0 0
        %4698 = vmatpush.bf16.xpose.msra.mxu0 %v3666
        %4699 = vmatpush.bf16.xpose.msra.mxu0 %v3372
        %4700 = vmatmul.bf16.gmra.mxu0 %v950
        %v4701 = vpop.f32.mrf.mxu0
        %v4702 = vadd.f32 %v4689, %v4701
        %v4703 = vpop.f32.mrf.mxu0
        %4704 = vdwg.mxu0
        %4705 = vmatpush.bf16.xpose.msra.mxu0 0
        %4706 = vmatpush.bf16.xpose.msra.mxu0 0
        %4707 = vmatpush.bf16.xpose.msra.mxu0 0
        %4708 = vmatpush.bf16.xpose.msra.mxu0 0
        %4709 = vmatpush.bf16.xpose.msra.mxu0 0
        %4710 = vmatpush.bf16.xpose.msra.mxu0 0
        %4711 = vmatpush.bf16.xpose.msra.mxu0 %v3667
        %4712 = vmatpush.bf16.xpose.msra.mxu0 %v3373
        %4713 = vmatmul.bf16.gmra.mxu0 %v951
        %v4714 = vpop.f32.mrf.mxu0
        %v4715 = vadd.f32 %v4702, %v4714
        %v4716 = vpop.f32.mrf.mxu0
        %4717 = vdwg.mxu0
        %4718 = vmatpush.bf16.xpose.msra.mxu0 0
        %4719 = vmatpush.bf16.xpose.msra.mxu0 0
        %4720 = vmatpush.bf16.xpose.msra.mxu0 0
        %4721 = vmatpush.bf16.xpose.msra.mxu0 0
        %4722 = vmatpush.bf16.xpose.msra.mxu0 0
        %4723 = vmatpush.bf16.xpose.msra.mxu0 0
        %4724 = vmatpush.bf16.xpose.msra.mxu0 %v3668
        %4725 = vmatpush.bf16.xpose.msra.mxu0 %v3374
        %4726 = vmatmul.bf16.gmra.mxu0 %v952
        %v4727 = vpop.f32.mrf.mxu0
        %v4728 = vadd.f32 %v4715, %v4727
        %v4729 = vpop.f32.mrf.mxu0
        %4730 = vdwg.mxu0
        %4731 = vmatpush.bf16.xpose.msra.mxu0 0
        %4732 = vmatpush.bf16.xpose.msra.mxu0 0
        %4733 = vmatpush.bf16.xpose.msra.mxu0 0
        %4734 = vmatpush.bf16.xpose.msra.mxu0 0
        %4735 = vmatpush.bf16.xpose.msra.mxu0 0
        %4736 = vmatpush.bf16.xpose.msra.mxu0 0
        %4737 = vmatpush.bf16.xpose.msra.mxu0 %v3669
        %4738 = vmatpush.bf16.xpose.msra.mxu0 %v3375
        %4739 = vmatmul.bf16.gmra.mxu0 %v953
        %v4740 = vpop.f32.mrf.mxu0
        %v4741 = vadd.f32 %v4728, %v4740
        %v4742 = vpop.f32.mrf.mxu0
        %4743 = vdwg.mxu0
        %4744 = vmatpush.bf16.xpose.msra.mxu0 0
        %4745 = vmatpush.bf16.xpose.msra.mxu0 0
        %4746 = vmatpush.bf16.xpose.msra.mxu0 0
        %4747 = vmatpush.bf16.xpose.msra.mxu0 0
        %4748 = vmatpush.bf16.xpose.msra.mxu0 0
        %4749 = vmatpush.bf16.xpose.msra.mxu0 0
        %4750 = vmatpush.bf16.xpose.msra.mxu0 %v3670
        %4751 = vmatpush.bf16.xpose.msra.mxu0 %v3376
        %4752 = vmatmul.bf16.gmra.mxu0 %v956
        %v4753 = vpop.f32.mrf.mxu0
        %v4754 = vadd.f32 %v4741, %v4753
        %v4755 = vpop.f32.mrf.mxu0
        %4756 = vdwg.mxu0
        %4757 = vmatpush.bf16.xpose.msra.mxu0 0
        %4758 = vmatpush.bf16.xpose.msra.mxu0 0
        %4759 = vmatpush.bf16.xpose.msra.mxu0 0
        %4760 = vmatpush.bf16.xpose.msra.mxu0 0
        %4761 = vmatpush.bf16.xpose.msra.mxu0 0
        %4762 = vmatpush.bf16.xpose.msra.mxu0 0
        %4763 = vmatpush.bf16.xpose.msra.mxu0 %v3671
        %4764 = vmatpush.bf16.xpose.msra.mxu0 %v3377
        %4765 = vmatmul.bf16.gmra.mxu0 %v957
        %v4766 = vpop.f32.mrf.mxu0
        %v4767 = vadd.f32 %v4754, %v4766
        %v4768 = vpop.f32.mrf.mxu0
        %4769 = vdwg.mxu0
        %4770 = vmatpush.bf16.xpose.msra.mxu0 0
        %4771 = vmatpush.bf16.xpose.msra.mxu0 0
        %4772 = vmatpush.bf16.xpose.msra.mxu0 0
        %4773 = vmatpush.bf16.xpose.msra.mxu0 0
        %4774 = vmatpush.bf16.xpose.msra.mxu0 0
        %4775 = vmatpush.bf16.xpose.msra.mxu0 0
        %4776 = vmatpush.bf16.xpose.msra.mxu0 %v3672
        %4777 = vmatpush.bf16.xpose.msra.mxu0 %v3378
        %4778 = vmatmul.bf16.gmra.mxu0 %v958
        %v4779 = vpop.f32.mrf.mxu0
        %v4780 = vadd.f32 %v4767, %v4779
        %v4781 = vpop.f32.mrf.mxu0
        %4782 = vdwg.mxu0
        %4783 = vmatpush.bf16.xpose.msra.mxu0 0
        %4784 = vmatpush.bf16.xpose.msra.mxu0 0
        %4785 = vmatpush.bf16.xpose.msra.mxu0 0
        %4786 = vmatpush.bf16.xpose.msra.mxu0 0
        %4787 = vmatpush.bf16.xpose.msra.mxu0 0
        %4788 = vmatpush.bf16.xpose.msra.mxu0 0
        %4789 = vmatpush.bf16.xpose.msra.mxu0 %v3673
        %4790 = vmatpush.bf16.xpose.msra.mxu0 %v3379
        %4791 = vmatmul.bf16.gmra.mxu0 %v959
        %v4792 = vpop.f32.mrf.mxu0
        %v4793 = vadd.f32 %v4780, %v4792
        %v4794 = vpop.f32.mrf.mxu0
        %4795 = vdwg.mxu0
        %4796 = vmatpush.bf16.xpose.msra.mxu0 0
        %4797 = vmatpush.bf16.xpose.msra.mxu0 0
        %4798 = vmatpush.bf16.xpose.msra.mxu0 0
        %4799 = vmatpush.bf16.xpose.msra.mxu0 0
        %4800 = vmatpush.bf16.xpose.msra.mxu0 0
        %4801 = vmatpush.bf16.xpose.msra.mxu0 0
        %4802 = vmatpush.bf16.xpose.msra.mxu0 %v3674
        %4803 = vmatpush.bf16.xpose.msra.mxu0 %v3380
        %4804 = vmatmul.bf16.gmra.mxu0 %v960
        %v4805 = vpop.f32.mrf.mxu0
        %v4806 = vadd.f32 %v4793, %v4805
        %v4807 = vpop.f32.mrf.mxu0
        %4808 = vdwg.mxu0
        %4809 = vmatpush.bf16.xpose.msra.mxu0 0
        %4810 = vmatpush.bf16.xpose.msra.mxu0 0
        %4811 = vmatpush.bf16.xpose.msra.mxu0 0
        %4812 = vmatpush.bf16.xpose.msra.mxu0 0
        %4813 = vmatpush.bf16.xpose.msra.mxu0 0
        %4814 = vmatpush.bf16.xpose.msra.mxu0 0
        %4815 = vmatpush.bf16.xpose.msra.mxu0 %v3675
        %4816 = vmatpush.bf16.xpose.msra.mxu0 %v3381
        %4817 = vmatmul.bf16.gmra.mxu0 %v961
        %v4818 = vpop.f32.mrf.mxu0
        %v4819 = vadd.f32 %v4806, %v4818
        %v4820 = vpop.f32.mrf.mxu0
        %4821 = vdwg.mxu0
        %4822 = vmatpush.bf16.xpose.msra.mxu0 0
        %4823 = vmatpush.bf16.xpose.msra.mxu0 0
        %4824 = vmatpush.bf16.xpose.msra.mxu0 0
        %4825 = vmatpush.bf16.xpose.msra.mxu0 0
        %4826 = vmatpush.bf16.xpose.msra.mxu0 0
        %4827 = vmatpush.bf16.xpose.msra.mxu0 0
        %4828 = vmatpush.bf16.xpose.msra.mxu0 %v3676
        %4829 = vmatpush.bf16.xpose.msra.mxu0 %v3382
        %4830 = vmatmul.bf16.gmra.mxu0 %v962
        %v4831 = vpop.f32.mrf.mxu0
        %v4832 = vadd.f32 %v4819, %v4831
        %v4833 = vpop.f32.mrf.mxu0
        %4834 = vdwg.mxu0
        %4835 = vmatpush.bf16.xpose.msra.mxu0 0
        %4836 = vmatpush.bf16.xpose.msra.mxu0 0
        %4837 = vmatpush.bf16.xpose.msra.mxu0 0
        %4838 = vmatpush.bf16.xpose.msra.mxu0 0
        %4839 = vmatpush.bf16.xpose.msra.mxu0 0
        %4840 = vmatpush.bf16.xpose.msra.mxu0 0
        %4841 = vmatpush.bf16.xpose.msra.mxu0 %v3677
        %4842 = vmatpush.bf16.xpose.msra.mxu0 %v3383
        %4843 = vmatmul.bf16.gmra.mxu0 %v963
        %v4844 = vpop.f32.mrf.mxu0
        %v4845 = vadd.f32 %v4832, %v4844
        %v4846 = vpop.f32.mrf.mxu0
        %4847 = vdwg.mxu0
        %4848 = vmatpush.bf16.xpose.msra.mxu0 0
        %4849 = vmatpush.bf16.xpose.msra.mxu0 0
        %4850 = vmatpush.bf16.xpose.msra.mxu0 0
        %4851 = vmatpush.bf16.xpose.msra.mxu0 0
        %4852 = vmatpush.bf16.xpose.msra.mxu0 0
        %4853 = vmatpush.bf16.xpose.msra.mxu0 0
        %4854 = vmatpush.bf16.xpose.msra.mxu0 %v3678
        %4855 = vmatpush.bf16.xpose.msra.mxu0 %v3384
        %4856 = vmatmul.bf16.gmra.mxu0 %v966
        %v4857 = vpop.f32.mrf.mxu0
        %v4858 = vadd.f32 %v4845, %v4857
        %v4859 = vpop.f32.mrf.mxu0
        %4860 = vdwg.mxu0
        %4861 = vmatpush.bf16.xpose.msra.mxu0 0
        %4862 = vmatpush.bf16.xpose.msra.mxu0 0
        %4863 = vmatpush.bf16.xpose.msra.mxu0 0
        %4864 = vmatpush.bf16.xpose.msra.mxu0 0
        %4865 = vmatpush.bf16.xpose.msra.mxu0 0
        %4866 = vmatpush.bf16.xpose.msra.mxu0 0
        %4867 = vmatpush.bf16.xpose.msra.mxu0 %v3679
        %4868 = vmatpush.bf16.xpose.msra.mxu0 %v3385
        %4869 = vmatmul.bf16.gmra.mxu0 %v967
        %v4870 = vpop.f32.mrf.mxu0
        %v4871 = vadd.f32 %v4858, %v4870
        %v4872 = vpop.f32.mrf.mxu0
        %4873 = vdwg.mxu0
        %4874 = vmatpush.bf16.xpose.msra.mxu0 0
        %4875 = vmatpush.bf16.xpose.msra.mxu0 0
        %4876 = vmatpush.bf16.xpose.msra.mxu0 0
        %4877 = vmatpush.bf16.xpose.msra.mxu0 0
        %4878 = vmatpush.bf16.xpose.msra.mxu0 0
        %4879 = vmatpush.bf16.xpose.msra.mxu0 0
        %4880 = vmatpush.bf16.xpose.msra.mxu0 %v3680
        %4881 = vmatpush.bf16.xpose.msra.mxu0 %v3386
        %4882 = vmatmul.bf16.gmra.mxu0 %v968
        %v4883 = vpop.f32.mrf.mxu0
        %v4884 = vadd.f32 %v4871, %v4883
        %v4885 = vpop.f32.mrf.mxu0
        %4886 = vdwg.mxu0
        %4887 = vmatpush.bf16.xpose.msra.mxu0 0
        %4888 = vmatpush.bf16.xpose.msra.mxu0 0
        %4889 = vmatpush.bf16.xpose.msra.mxu0 0
        %4890 = vmatpush.bf16.xpose.msra.mxu0 0
        %4891 = vmatpush.bf16.xpose.msra.mxu0 0
        %4892 = vmatpush.bf16.xpose.msra.mxu0 0
        %4893 = vmatpush.bf16.xpose.msra.mxu0 %v3681
        %4894 = vmatpush.bf16.xpose.msra.mxu0 %v3387
        %4895 = vmatmul.bf16.gmra.mxu0 %v969
        %v4896 = vpop.f32.mrf.mxu0
        %v4897 = vadd.f32 %v4884, %v4896
        %v4898 = vpop.f32.mrf.mxu0
        %4899 = vdwg.mxu0
        %4900 = vmatpush.bf16.xpose.msra.mxu0 0
        %4901 = vmatpush.bf16.xpose.msra.mxu0 0
        %4902 = vmatpush.bf16.xpose.msra.mxu0 0
        %4903 = vmatpush.bf16.xpose.msra.mxu0 0
        %4904 = vmatpush.bf16.xpose.msra.mxu0 0
        %4905 = vmatpush.bf16.xpose.msra.mxu0 0
        %4906 = vmatpush.bf16.xpose.msra.mxu0 %v3682
        %4907 = vmatpush.bf16.xpose.msra.mxu0 %v3388
        %4908 = vmatmul.bf16.gmra.mxu0 %v970
        %v4909 = vpop.f32.mrf.mxu0
        %v4910 = vadd.f32 %v4897, %v4909
        %v4911 = vpop.f32.mrf.mxu0
        %4912 = vdwg.mxu0
        %4913 = vmatpush.bf16.xpose.msra.mxu0 0
        %4914 = vmatpush.bf16.xpose.msra.mxu0 0
        %4915 = vmatpush.bf16.xpose.msra.mxu0 0
        %4916 = vmatpush.bf16.xpose.msra.mxu0 0
        %4917 = vmatpush.bf16.xpose.msra.mxu0 0
        %4918 = vmatpush.bf16.xpose.msra.mxu0 0
        %4919 = vmatpush.bf16.xpose.msra.mxu0 %v3683
        %4920 = vmatpush.bf16.xpose.msra.mxu0 %v3389
        %4921 = vmatmul.bf16.gmra.mxu0 %v971
        %v4922 = vpop.f32.mrf.mxu0
        %v4923 = vadd.f32 %v4910, %v4922
        %v4924 = vpop.f32.mrf.mxu0
        %4925 = vdwg.mxu0
        %4926 = vmatpush.bf16.xpose.msra.mxu0 0
        %4927 = vmatpush.bf16.xpose.msra.mxu0 0
        %4928 = vmatpush.bf16.xpose.msra.mxu0 0
        %4929 = vmatpush.bf16.xpose.msra.mxu0 0
        %4930 = vmatpush.bf16.xpose.msra.mxu0 0
        %4931 = vmatpush.bf16.xpose.msra.mxu0 0
        %4932 = vmatpush.bf16.xpose.msra.mxu0 %v3684
        %4933 = vmatpush.bf16.xpose.msra.mxu0 %v3390
        %4934 = vmatmul.bf16.gmra.mxu0 %v972
        %v4935 = vpop.f32.mrf.mxu0
        %v4936 = vadd.f32 %v4923, %v4935
        %v4937 = vpop.f32.mrf.mxu0
        %4938 = vdwg.mxu0
        %4939 = vmatpush.bf16.xpose.msra.mxu0 0
        %4940 = vmatpush.bf16.xpose.msra.mxu0 0
        %4941 = vmatpush.bf16.xpose.msra.mxu0 0
        %4942 = vmatpush.bf16.xpose.msra.mxu0 0
        %4943 = vmatpush.bf16.xpose.msra.mxu0 0
        %4944 = vmatpush.bf16.xpose.msra.mxu0 0
        %4945 = vmatpush.bf16.xpose.msra.mxu0 %v3685
        %4946 = vmatpush.bf16.xpose.msra.mxu0 %v3391
        %4947 = vmatmul.bf16.gmra.mxu0 %v973
        %v4948 = vpop.f32.mrf.mxu0
        %v4949 = vadd.f32 %v4936, %v4948
        %v4950 = vpop.f32.mrf.mxu0
        %4951 = vdwg.mxu0
        %4952 = vmatpush.bf16.xpose.msra.mxu0 0
        %4953 = vmatpush.bf16.xpose.msra.mxu0 0
        %4954 = vmatpush.bf16.xpose.msra.mxu0 0
        %4955 = vmatpush.bf16.xpose.msra.mxu0 0
        %4956 = vmatpush.bf16.xpose.msra.mxu0 0
        %4957 = vmatpush.bf16.xpose.msra.mxu0 0
        %4958 = vmatpush.bf16.xpose.msra.mxu0 %v3686
        %4959 = vmatpush.bf16.xpose.msra.mxu0 %v3392
        %4960 = vmatmul.bf16.gmra.mxu0 %v976
        %v4961 = vpop.f32.mrf.mxu0
        %v4962 = vadd.f32 %v4949, %v4961
        %v4963 = vpop.f32.mrf.mxu0
        %4964 = vdwg.mxu0
        %4965 = vmatpush.bf16.xpose.msra.mxu0 0
        %4966 = vmatpush.bf16.xpose.msra.mxu0 0
        %4967 = vmatpush.bf16.xpose.msra.mxu0 0
        %4968 = vmatpush.bf16.xpose.msra.mxu0 0
        %4969 = vmatpush.bf16.xpose.msra.mxu0 0
        %4970 = vmatpush.bf16.xpose.msra.mxu0 0
        %4971 = vmatpush.bf16.xpose.msra.mxu0 %v3687
        %4972 = vmatpush.bf16.xpose.msra.mxu0 %v3393
        %4973 = vmatmul.bf16.gmra.mxu0 %v977
        %v4974 = vpop.f32.mrf.mxu0
        %v4975 = vadd.f32 %v4962, %v4974
        %v4976 = vpop.f32.mrf.mxu0
        %4977 = vdwg.mxu0
        %4978 = vmatpush.bf16.xpose.msra.mxu0 0
        %4979 = vmatpush.bf16.xpose.msra.mxu0 0
        %4980 = vmatpush.bf16.xpose.msra.mxu0 0
        %4981 = vmatpush.bf16.xpose.msra.mxu0 0
        %4982 = vmatpush.bf16.xpose.msra.mxu0 0
        %4983 = vmatpush.bf16.xpose.msra.mxu0 0
        %4984 = vmatpush.bf16.xpose.msra.mxu0 %v3688
        %4985 = vmatpush.bf16.xpose.msra.mxu0 %v3394
        %4986 = vmatmul.bf16.gmra.mxu0 %v978
        %v4987 = vpop.f32.mrf.mxu0
        %v4988 = vadd.f32 %v4975, %v4987
        %v4989 = vpop.f32.mrf.mxu0
        %4990 = vdwg.mxu0
        %4991 = vmatpush.bf16.xpose.msra.mxu0 0
        %4992 = vmatpush.bf16.xpose.msra.mxu0 0
        %4993 = vmatpush.bf16.xpose.msra.mxu0 0
        %4994 = vmatpush.bf16.xpose.msra.mxu0 0
        %4995 = vmatpush.bf16.xpose.msra.mxu0 0
        %4996 = vmatpush.bf16.xpose.msra.mxu0 0
        %4997 = vmatpush.bf16.xpose.msra.mxu0 %v3689
        %4998 = vmatpush.bf16.xpose.msra.mxu0 %v3395
        %4999 = vmatmul.bf16.gmra.mxu0 %v979
        %v5000 = vpop.f32.mrf.mxu0
        %v5001 = vadd.f32 %v4988, %v5000
        %v5002 = vpop.f32.mrf.mxu0
        %5003 = vdwg.mxu0
        %5004 = vmatpush.bf16.xpose.msra.mxu0 0
        %5005 = vmatpush.bf16.xpose.msra.mxu0 0
        %5006 = vmatpush.bf16.xpose.msra.mxu0 0
        %5007 = vmatpush.bf16.xpose.msra.mxu0 0
        %5008 = vmatpush.bf16.xpose.msra.mxu0 0
        %5009 = vmatpush.bf16.xpose.msra.mxu0 0
        %5010 = vmatpush.bf16.xpose.msra.mxu0 %v3690
        %5011 = vmatpush.bf16.xpose.msra.mxu0 %v3396
        %5012 = vmatmul.bf16.gmra.mxu0 %v980
        %v5013 = vpop.f32.mrf.mxu0
        %v5014 = vadd.f32 %v5001, %v5013
        %v5015 = vpop.f32.mrf.mxu0
        %5016 = vdwg.mxu0
        %5017 = vmatpush.bf16.xpose.msra.mxu0 0
        %5018 = vmatpush.bf16.xpose.msra.mxu0 0
        %5019 = vmatpush.bf16.xpose.msra.mxu0 0
        %5020 = vmatpush.bf16.xpose.msra.mxu0 0
        %5021 = vmatpush.bf16.xpose.msra.mxu0 0
        %5022 = vmatpush.bf16.xpose.msra.mxu0 0
        %5023 = vmatpush.bf16.xpose.msra.mxu0 %v3691
        %5024 = vmatpush.bf16.xpose.msra.mxu0 %v3397
        %5025 = vmatmul.bf16.gmra.mxu0 %v981
        %v5026 = vpop.f32.mrf.mxu0
        %v5027 = vadd.f32 %v5014, %v5026
        %v5028 = vpop.f32.mrf.mxu0
        %5029 = vdwg.mxu0
        %5030 = vmatpush.bf16.xpose.msra.mxu0 0
        %5031 = vmatpush.bf16.xpose.msra.mxu0 0
        %5032 = vmatpush.bf16.xpose.msra.mxu0 0
        %5033 = vmatpush.bf16.xpose.msra.mxu0 0
        %5034 = vmatpush.bf16.xpose.msra.mxu0 0
        %5035 = vmatpush.bf16.xpose.msra.mxu0 0
        %5036 = vmatpush.bf16.xpose.msra.mxu0 %v3692
        %5037 = vmatpush.bf16.xpose.msra.mxu0 %v3398
        %5038 = vmatmul.bf16.gmra.mxu0 %v982
        %v5039 = vpop.f32.mrf.mxu0
        %v5040 = vadd.f32 %v5027, %v5039
        %v5041 = vpop.f32.mrf.mxu0
        %5042 = vdwg.mxu0
        %5043 = vmatpush.bf16.xpose.msra.mxu0 0
        %5044 = vmatpush.bf16.xpose.msra.mxu0 0
        %5045 = vmatpush.bf16.xpose.msra.mxu0 0
        %5046 = vmatpush.bf16.xpose.msra.mxu0 0
        %5047 = vmatpush.bf16.xpose.msra.mxu0 0
        %5048 = vmatpush.bf16.xpose.msra.mxu0 0
        %5049 = vmatpush.bf16.xpose.msra.mxu0 %v3693
        %5050 = vmatpush.bf16.xpose.msra.mxu0 %v3399
        %5051 = vmatmul.bf16.gmra.mxu0 %v983
        %v5052 = vpop.f32.mrf.mxu0
        %v5053 = vadd.f32 %v5040, %v5052
        %v5054 = vpop.f32.mrf.mxu0
        %5055 = vdwg.mxu0
        %5056 = vmatpush.bf16.xpose.msra.mxu0 0
        %5057 = vmatpush.bf16.xpose.msra.mxu0 0
        %5058 = vmatpush.bf16.xpose.msra.mxu0 0
        %5059 = vmatpush.bf16.xpose.msra.mxu0 0
        %5060 = vmatpush.bf16.xpose.msra.mxu0 0
        %5061 = vmatpush.bf16.xpose.msra.mxu0 0
        %5062 = vmatpush.bf16.xpose.msra.mxu0 %v3694
        %5063 = vmatpush.bf16.xpose.msra.mxu0 %v3400
        %5064 = vmatmul.bf16.gmra.mxu0 %v986
        %v5065 = vpop.f32.mrf.mxu0
        %v5066 = vadd.f32 %v5053, %v5065
        %v5067 = vpop.f32.mrf.mxu0
        %5068 = vdwg.mxu0
        %5069 = vmatpush.bf16.xpose.msra.mxu0 0
        %5070 = vmatpush.bf16.xpose.msra.mxu0 0
        %5071 = vmatpush.bf16.xpose.msra.mxu0 0
        %5072 = vmatpush.bf16.xpose.msra.mxu0 0
        %5073 = vmatpush.bf16.xpose.msra.mxu0 0
        %5074 = vmatpush.bf16.xpose.msra.mxu0 0
        %5075 = vmatpush.bf16.xpose.msra.mxu0 %v3695
        %5076 = vmatpush.bf16.xpose.msra.mxu0 %v3401
        %5077 = vmatmul.bf16.gmra.mxu0 %v987
        %v5078 = vpop.f32.mrf.mxu0
        %v5079 = vadd.f32 %v5066, %v5078
        %v5080 = vpop.f32.mrf.mxu0
        %5081 = vdwg.mxu0
        %5082 = vmatpush.bf16.xpose.msra.mxu0 0
        %5083 = vmatpush.bf16.xpose.msra.mxu0 0
        %5084 = vmatpush.bf16.xpose.msra.mxu0 0
        %5085 = vmatpush.bf16.xpose.msra.mxu0 0
        %5086 = vmatpush.bf16.xpose.msra.mxu0 0
        %5087 = vmatpush.bf16.xpose.msra.mxu0 0
        %5088 = vmatpush.bf16.xpose.msra.mxu0 %v3696
        %5089 = vmatpush.bf16.xpose.msra.mxu0 %v3402
        %5090 = vmatmul.bf16.gmra.mxu0 %v988
        %v5091 = vpop.f32.mrf.mxu0
        %v5092 = vadd.f32 %v5079, %v5091
        %v5093 = vpop.f32.mrf.mxu0
        %5094 = vdwg.mxu0
        %5095 = vmatpush.bf16.xpose.msra.mxu0 0
        %5096 = vmatpush.bf16.xpose.msra.mxu0 0
        %5097 = vmatpush.bf16.xpose.msra.mxu0 0
        %5098 = vmatpush.bf16.xpose.msra.mxu0 0
        %5099 = vmatpush.bf16.xpose.msra.mxu0 0
        %5100 = vmatpush.bf16.xpose.msra.mxu0 0
        %5101 = vmatpush.bf16.xpose.msra.mxu0 %v3697
        %5102 = vmatpush.bf16.xpose.msra.mxu0 %v3403
        %5103 = vmatmul.bf16.gmra.mxu0 %v989
        %v5104 = vpop.f32.mrf.mxu0
        %v5105 = vadd.f32 %v5092, %v5104
        %v5106 = vpop.f32.mrf.mxu0
        %5107 = vdwg.mxu0
        %5108 = vmatpush.bf16.xpose.msra.mxu0 0
        %5109 = vmatpush.bf16.xpose.msra.mxu0 0
        %5110 = vmatpush.bf16.xpose.msra.mxu0 0
        %5111 = vmatpush.bf16.xpose.msra.mxu0 0
        %5112 = vmatpush.bf16.xpose.msra.mxu0 0
        %5113 = vmatpush.bf16.xpose.msra.mxu0 0
        %5114 = vmatpush.bf16.xpose.msra.mxu0 %v3698
        %5115 = vmatpush.bf16.xpose.msra.mxu0 %v3404
        %5116 = vmatmul.bf16.gmra.mxu0 %v990
        %v5117 = vpop.f32.mrf.mxu0
        %v5118 = vadd.f32 %v5105, %v5117
        %v5119 = vpop.f32.mrf.mxu0
        %5120 = vdwg.mxu0
        %5121 = vmatpush.bf16.xpose.msra.mxu0 0
        %5122 = vmatpush.bf16.xpose.msra.mxu0 0
        %5123 = vmatpush.bf16.xpose.msra.mxu0 0
        %5124 = vmatpush.bf16.xpose.msra.mxu0 0
        %5125 = vmatpush.bf16.xpose.msra.mxu0 0
        %5126 = vmatpush.bf16.xpose.msra.mxu0 0
        %5127 = vmatpush.bf16.xpose.msra.mxu0 %v3699
        %5128 = vmatpush.bf16.xpose.msra.mxu0 %v3405
        %5129 = vmatmul.bf16.gmra.mxu0 %v991
        %v5130 = vpop.f32.mrf.mxu0
        %v5131 = vadd.f32 %v5118, %v5130
        %v5132 = vpop.f32.mrf.mxu0
        %5133 = vdwg.mxu0
        %5134 = vmatpush.bf16.xpose.msra.mxu0 0
        %5135 = vmatpush.bf16.xpose.msra.mxu0 0
        %5136 = vmatpush.bf16.xpose.msra.mxu0 0
        %5137 = vmatpush.bf16.xpose.msra.mxu0 0
        %5138 = vmatpush.bf16.xpose.msra.mxu0 0
        %5139 = vmatpush.bf16.xpose.msra.mxu0 0
        %5140 = vmatpush.bf16.xpose.msra.mxu0 %v3700
        %5141 = vmatpush.bf16.xpose.msra.mxu0 %v3406
        %5142 = vmatmul.bf16.gmra.mxu0 %v992
        %v5143 = vpop.f32.mrf.mxu0
        %v5144 = vadd.f32 %v5131, %v5143
        %v5145 = vpop.f32.mrf.mxu0
        %5146 = vdwg.mxu0
        %5147 = vmatpush.bf16.xpose.msra.mxu0 0
        %5148 = vmatpush.bf16.xpose.msra.mxu0 0
        %5149 = vmatpush.bf16.xpose.msra.mxu0 0
        %5150 = vmatpush.bf16.xpose.msra.mxu0 0
        %5151 = vmatpush.bf16.xpose.msra.mxu0 0
        %5152 = vmatpush.bf16.xpose.msra.mxu0 0
        %5153 = vmatpush.bf16.xpose.msra.mxu0 %v3701
        %5154 = vmatpush.bf16.xpose.msra.mxu0 %v3407
        %5155 = vmatmul.bf16.gmra.mxu0 %v993
        %v5156 = vpop.f32.mrf.mxu0
        %v5157 = vadd.f32 %v5144, %v5156
        %v5158 = vpop.f32.mrf.mxu0
        %5159 = vdwg.mxu0
        %5160 = vmatpush.bf16.xpose.msra.mxu0 0
        %5161 = vmatpush.bf16.xpose.msra.mxu0 0
        %5162 = vmatpush.bf16.xpose.msra.mxu0 0
        %5163 = vmatpush.bf16.xpose.msra.mxu0 0
        %5164 = vmatpush.bf16.xpose.msra.mxu0 0
        %5165 = vmatpush.bf16.xpose.msra.mxu0 0
        %5166 = vmatpush.bf16.xpose.msra.mxu0 %v3702
        %5167 = vmatpush.bf16.xpose.msra.mxu0 %v3408
        %5168 = vmatmul.bf16.gmra.mxu0 %v996
        %v5169 = vpop.f32.mrf.mxu0
        %v5170 = vadd.f32 %v5157, %v5169
        %v5171 = vpop.f32.mrf.mxu0
        %5172 = vdwg.mxu0
        %5173 = vmatpush.bf16.xpose.msra.mxu0 0
        %5174 = vmatpush.bf16.xpose.msra.mxu0 0
        %5175 = vmatpush.bf16.xpose.msra.mxu0 0
        %5176 = vmatpush.bf16.xpose.msra.mxu0 0
        %5177 = vmatpush.bf16.xpose.msra.mxu0 0
        %5178 = vmatpush.bf16.xpose.msra.mxu0 0
        %5179 = vmatpush.bf16.xpose.msra.mxu0 %v3703
        %5180 = vmatpush.bf16.xpose.msra.mxu0 %v3409
        %5181 = vmatmul.bf16.gmra.mxu0 %v997
        %v5182 = vpop.f32.mrf.mxu0
        %v5183 = vadd.f32 %v5170, %v5182
        %v5184 = vpop.f32.mrf.mxu0
        %5185 = vdwg.mxu0
        %5186 = vmatpush.bf16.xpose.msra.mxu0 0
        %5187 = vmatpush.bf16.xpose.msra.mxu0 0
        %5188 = vmatpush.bf16.xpose.msra.mxu0 0
        %5189 = vmatpush.bf16.xpose.msra.mxu0 0
        %5190 = vmatpush.bf16.xpose.msra.mxu0 0
        %5191 = vmatpush.bf16.xpose.msra.mxu0 0
        %5192 = vmatpush.bf16.xpose.msra.mxu0 %v3704
        %5193 = vmatpush.bf16.xpose.msra.mxu0 %v3410
        %5194 = vmatmul.bf16.gmra.mxu0 %v998
        %v5195 = vpop.f32.mrf.mxu0
        %v5196 = vadd.f32 %v5183, %v5195
        %v5197 = vpop.f32.mrf.mxu0
        %5198 = vdwg.mxu0
        %5199 = vmatpush.bf16.xpose.msra.mxu0 0
        %5200 = vmatpush.bf16.xpose.msra.mxu0 0
        %5201 = vmatpush.bf16.xpose.msra.mxu0 0
        %5202 = vmatpush.bf16.xpose.msra.mxu0 0
        %5203 = vmatpush.bf16.xpose.msra.mxu0 0
        %5204 = vmatpush.bf16.xpose.msra.mxu0 0
        %5205 = vmatpush.bf16.xpose.msra.mxu0 %v3705
        %5206 = vmatpush.bf16.xpose.msra.mxu0 %v3411
        %5207 = vmatmul.bf16.gmra.mxu0 %v999
        %v5208 = vpop.f32.mrf.mxu0
        %v5209 = vadd.f32 %v5196, %v5208
        %v5210 = vpop.f32.mrf.mxu0
        %5211 = vdwg.mxu0
        %5212 = vmatpush.bf16.xpose.msra.mxu0 0
        %5213 = vmatpush.bf16.xpose.msra.mxu0 0
        %5214 = vmatpush.bf16.xpose.msra.mxu0 0
        %5215 = vmatpush.bf16.xpose.msra.mxu0 0
        %5216 = vmatpush.bf16.xpose.msra.mxu0 0
        %5217 = vmatpush.bf16.xpose.msra.mxu0 0
        %5218 = vmatpush.bf16.xpose.msra.mxu0 %v3706
        %5219 = vmatpush.bf16.xpose.msra.mxu0 %v3412
        %5220 = vmatmul.bf16.gmra.mxu0 %v1000
        %v5221 = vpop.f32.mrf.mxu0
        %v5222 = vadd.f32 %v5209, %v5221
        %v5223 = vpop.f32.mrf.mxu0
        %5224 = vdwg.mxu0
        %5225 = vmatpush.bf16.xpose.msra.mxu0 0
        %5226 = vmatpush.bf16.xpose.msra.mxu0 0
        %5227 = vmatpush.bf16.xpose.msra.mxu0 0
        %5228 = vmatpush.bf16.xpose.msra.mxu0 0
        %5229 = vmatpush.bf16.xpose.msra.mxu0 0
        %5230 = vmatpush.bf16.xpose.msra.mxu0 0
        %5231 = vmatpush.bf16.xpose.msra.mxu0 %v3707
        %5232 = vmatpush.bf16.xpose.msra.mxu0 %v3413
        %5233 = vmatmul.bf16.gmra.mxu0 %v1001
        %v5234 = vpop.f32.mrf.mxu0
        %v5235 = vadd.f32 %v5222, %v5234
        %v5236 = vpop.f32.mrf.mxu0
        %5237 = vdwg.mxu0
        %5238 = vmatpush.bf16.xpose.msra.mxu0 0
        %5239 = vmatpush.bf16.xpose.msra.mxu0 0
        %5240 = vmatpush.bf16.xpose.msra.mxu0 0
        %5241 = vmatpush.bf16.xpose.msra.mxu0 0
        %5242 = vmatpush.bf16.xpose.msra.mxu0 0
        %5243 = vmatpush.bf16.xpose.msra.mxu0 0
        %5244 = vmatpush.bf16.xpose.msra.mxu0 %v3708
        %5245 = vmatpush.bf16.xpose.msra.mxu0 %v3414
        %5246 = vmatmul.bf16.gmra.mxu0 %v1002
        %v5247 = vpop.f32.mrf.mxu0
        %v5248 = vadd.f32 %v5235, %v5247
        %v5249 = vpop.f32.mrf.mxu0
        %5250 = vdwg.mxu0
        %5251 = vmatpush.bf16.xpose.msra.mxu0 0
        %5252 = vmatpush.bf16.xpose.msra.mxu0 0
        %5253 = vmatpush.bf16.xpose.msra.mxu0 0
        %5254 = vmatpush.bf16.xpose.msra.mxu0 0
        %5255 = vmatpush.bf16.xpose.msra.mxu0 0
        %5256 = vmatpush.bf16.xpose.msra.mxu0 0
        %5257 = vmatpush.bf16.xpose.msra.mxu0 %v3709
        %5258 = vmatpush.bf16.xpose.msra.mxu0 %v3415
        %5259 = vmatmul.bf16.gmra.mxu0 %v1003
        %v5260 = vpop.f32.mrf.mxu0
        %v5261 = vadd.f32 %v5248, %v5260
        %v5262 = vpop.f32.mrf.mxu0
        %5263 = vdwg.mxu0
        %5264 = vmatpush.bf16.xpose.msra.mxu0 0
        %5265 = vmatpush.bf16.xpose.msra.mxu0 0
        %5266 = vmatpush.bf16.xpose.msra.mxu0 0
        %5267 = vmatpush.bf16.xpose.msra.mxu0 0
        %5268 = vmatpush.bf16.xpose.msra.mxu0 0
        %5269 = vmatpush.bf16.xpose.msra.mxu0 0
        %5270 = vmatpush.bf16.xpose.msra.mxu0 %v3710
        %5271 = vmatpush.bf16.xpose.msra.mxu0 %v3416
        %5272 = vmatmul.bf16.gmra.mxu0 %v1006
        %v5273 = vpop.f32.mrf.mxu0
        %v5274 = vadd.f32 %v5261, %v5273
        %v5275 = vpop.f32.mrf.mxu0
        %5276 = vdwg.mxu0
        %5277 = vmatpush.bf16.xpose.msra.mxu0 0
        %5278 = vmatpush.bf16.xpose.msra.mxu0 0
        %5279 = vmatpush.bf16.xpose.msra.mxu0 0
        %5280 = vmatpush.bf16.xpose.msra.mxu0 0
        %5281 = vmatpush.bf16.xpose.msra.mxu0 0
        %5282 = vmatpush.bf16.xpose.msra.mxu0 0
        %5283 = vmatpush.bf16.xpose.msra.mxu0 %v3711
        %5284 = vmatpush.bf16.xpose.msra.mxu0 %v3417
        %5285 = vmatmul.bf16.gmra.mxu0 %v1007
        %v5286 = vpop.f32.mrf.mxu0
        %v5287 = vadd.f32 %v5274, %v5286
        %v5288 = vpop.f32.mrf.mxu0
        %5289 = vdwg.mxu0
        %5290 = vmatpush.bf16.xpose.msra.mxu0 0
        %5291 = vmatpush.bf16.xpose.msra.mxu0 0
        %5292 = vmatpush.bf16.xpose.msra.mxu0 0
        %5293 = vmatpush.bf16.xpose.msra.mxu0 0
        %5294 = vmatpush.bf16.xpose.msra.mxu0 0
        %5295 = vmatpush.bf16.xpose.msra.mxu0 0
        %5296 = vmatpush.bf16.xpose.msra.mxu0 %v3712
        %5297 = vmatpush.bf16.xpose.msra.mxu0 %v3418
        %5298 = vmatmul.bf16.gmra.mxu0 %v1008
        %v5299 = vpop.f32.mrf.mxu0
        %v5300 = vadd.f32 %v5287, %v5299
        %v5301 = vpop.f32.mrf.mxu0
        %5302 = vdwg.mxu0
        %5303 = vmatpush.bf16.xpose.msra.mxu0 0
        %5304 = vmatpush.bf16.xpose.msra.mxu0 0
        %5305 = vmatpush.bf16.xpose.msra.mxu0 0
        %5306 = vmatpush.bf16.xpose.msra.mxu0 0
        %5307 = vmatpush.bf16.xpose.msra.mxu0 0
        %5308 = vmatpush.bf16.xpose.msra.mxu0 0
        %5309 = vmatpush.bf16.xpose.msra.mxu0 %v3713
        %5310 = vmatpush.bf16.xpose.msra.mxu0 %v3419
        %5311 = vmatmul.bf16.gmra.mxu0 %v1009
        %v5312 = vpop.f32.mrf.mxu0
        %v5313 = vadd.f32 %v5300, %v5312
        %v5314 = vpop.f32.mrf.mxu0
        %5315 = vdwg.mxu0
        %5316 = vmatpush.bf16.xpose.msra.mxu0 0
        %5317 = vmatpush.bf16.xpose.msra.mxu0 0
        %5318 = vmatpush.bf16.xpose.msra.mxu0 0
        %5319 = vmatpush.bf16.xpose.msra.mxu0 0
        %5320 = vmatpush.bf16.xpose.msra.mxu0 0
        %5321 = vmatpush.bf16.xpose.msra.mxu0 0
        %5322 = vmatpush.bf16.xpose.msra.mxu0 %v3714
        %5323 = vmatpush.bf16.xpose.msra.mxu0 %v3420
        %5324 = vmatmul.bf16.gmra.mxu0 %v1010
        %v5325 = vpop.f32.mrf.mxu0
        %v5326 = vadd.f32 %v5313, %v5325
        %v5327 = vpop.f32.mrf.mxu0
        %5328 = vdwg.mxu0
        %5329 = vmatpush.bf16.xpose.msra.mxu0 0
        %5330 = vmatpush.bf16.xpose.msra.mxu0 0
        %5331 = vmatpush.bf16.xpose.msra.mxu0 0
        %5332 = vmatpush.bf16.xpose.msra.mxu0 0
        %5333 = vmatpush.bf16.xpose.msra.mxu0 0
        %5334 = vmatpush.bf16.xpose.msra.mxu0 0
        %5335 = vmatpush.bf16.xpose.msra.mxu0 %v3715
        %5336 = vmatpush.bf16.xpose.msra.mxu0 %v3421
        %5337 = vmatmul.bf16.gmra.mxu0 %v1011
        %v5338 = vpop.f32.mrf.mxu0
        %v5339 = vadd.f32 %v5326, %v5338
        %v5340 = vpop.f32.mrf.mxu0
        %5341 = vdwg.mxu0
        %5342 = vmatpush.bf16.xpose.msra.mxu0 0
        %5343 = vmatpush.bf16.xpose.msra.mxu0 0
        %5344 = vmatpush.bf16.xpose.msra.mxu0 0
        %5345 = vmatpush.bf16.xpose.msra.mxu0 0
        %5346 = vmatpush.bf16.xpose.msra.mxu0 0
        %5347 = vmatpush.bf16.xpose.msra.mxu0 0
        %5348 = vmatpush.bf16.xpose.msra.mxu0 %v3716
        %5349 = vmatpush.bf16.xpose.msra.mxu0 %v3422
        %5350 = vmatmul.bf16.gmra.mxu0 %v1012
        %v5351 = vpop.f32.mrf.mxu0
        %v5352 = vadd.f32 %v5339, %v5351
        %v5353 = vpop.f32.mrf.mxu0
        %5354 = vdwg.mxu0
        %5355 = vmatpush.bf16.xpose.msra.mxu0 0
        %5356 = vmatpush.bf16.xpose.msra.mxu0 0
        %5357 = vmatpush.bf16.xpose.msra.mxu0 0
        %5358 = vmatpush.bf16.xpose.msra.mxu0 0
        %5359 = vmatpush.bf16.xpose.msra.mxu0 0
        %5360 = vmatpush.bf16.xpose.msra.mxu0 0
        %5361 = vmatpush.bf16.xpose.msra.mxu0 %v3717
        %5362 = vmatpush.bf16.xpose.msra.mxu0 %v3423
        %5363 = vmatmul.bf16.gmra.mxu0 %v1013
        %v5364 = vpop.f32.mrf.mxu0
        %v5365 = vadd.f32 %v5352, %v5364
        %v5366 = vpop.f32.mrf.mxu0
        %5367 = vdwg.mxu0
        %5368 = vmatpush.bf16.xpose.msra.mxu0 0
        %5369 = vmatpush.bf16.xpose.msra.mxu0 0
        %5370 = vmatpush.bf16.xpose.msra.mxu0 0
        %5371 = vmatpush.bf16.xpose.msra.mxu0 0
        %5372 = vmatpush.bf16.xpose.msra.mxu0 0
        %5373 = vmatpush.bf16.xpose.msra.mxu0 0
        %5374 = vmatpush.bf16.xpose.msra.mxu0 %v3718
        %5375 = vmatpush.bf16.xpose.msra.mxu0 %v3424
        %5376 = vmatmul.bf16.gmra.mxu0 %v1016
        %v5377 = vpop.f32.mrf.mxu0
        %v5378 = vadd.f32 %v5365, %v5377
        %v5379 = vpop.f32.mrf.mxu0
        %5380 = vdwg.mxu0
        %5381 = vmatpush.bf16.xpose.msra.mxu0 0
        %5382 = vmatpush.bf16.xpose.msra.mxu0 0
        %5383 = vmatpush.bf16.xpose.msra.mxu0 0
        %5384 = vmatpush.bf16.xpose.msra.mxu0 0
        %5385 = vmatpush.bf16.xpose.msra.mxu0 0
        %5386 = vmatpush.bf16.xpose.msra.mxu0 0
        %5387 = vmatpush.bf16.xpose.msra.mxu0 %v3719
        %5388 = vmatpush.bf16.xpose.msra.mxu0 %v3425
        %5389 = vmatmul.bf16.gmra.mxu0 %v1017
        %v5390 = vpop.f32.mrf.mxu0
        %v5391 = vadd.f32 %v5378, %v5390
        %v5392 = vpop.f32.mrf.mxu0
        %5393 = vdwg.mxu0
        %5394 = vmatpush.bf16.xpose.msra.mxu0 0
        %5395 = vmatpush.bf16.xpose.msra.mxu0 0
        %5396 = vmatpush.bf16.xpose.msra.mxu0 0
        %5397 = vmatpush.bf16.xpose.msra.mxu0 0
        %5398 = vmatpush.bf16.xpose.msra.mxu0 0
        %5399 = vmatpush.bf16.xpose.msra.mxu0 0
        %5400 = vmatpush.bf16.xpose.msra.mxu0 %v3720
        %5401 = vmatpush.bf16.xpose.msra.mxu0 %v3426
        %5402 = vmatmul.bf16.gmra.mxu0 %v1018
        %v5403 = vpop.f32.mrf.mxu0
        %v5404 = vadd.f32 %v5391, %v5403
        %v5405 = vpop.f32.mrf.mxu0
        %5406 = vdwg.mxu0
        %5407 = vmatpush.bf16.xpose.msra.mxu0 0
        %5408 = vmatpush.bf16.xpose.msra.mxu0 0
        %5409 = vmatpush.bf16.xpose.msra.mxu0 0
        %5410 = vmatpush.bf16.xpose.msra.mxu0 0
        %5411 = vmatpush.bf16.xpose.msra.mxu0 0
        %5412 = vmatpush.bf16.xpose.msra.mxu0 0
        %5413 = vmatpush.bf16.xpose.msra.mxu0 %v3721
        %5414 = vmatpush.bf16.xpose.msra.mxu0 %v3427
        %5415 = vmatmul.bf16.gmra.mxu0 %v1019
        %v5416 = vpop.f32.mrf.mxu0
        %v5417 = vadd.f32 %v5404, %v5416
        %v5418 = vpop.f32.mrf.mxu0
        %5419 = vdwg.mxu0
        %5420 = vmatpush.bf16.xpose.msra.mxu0 0
        %5421 = vmatpush.bf16.xpose.msra.mxu0 0
        %5422 = vmatpush.bf16.xpose.msra.mxu0 0
        %5423 = vmatpush.bf16.xpose.msra.mxu0 0
        %5424 = vmatpush.bf16.xpose.msra.mxu0 0
        %5425 = vmatpush.bf16.xpose.msra.mxu0 0
        %5426 = vmatpush.bf16.xpose.msra.mxu0 %v3722
        %5427 = vmatpush.bf16.xpose.msra.mxu0 %v3428
        %5428 = vmatmul.bf16.gmra.mxu0 %v1020
        %v5429 = vpop.f32.mrf.mxu0
        %v5430 = vadd.f32 %v5417, %v5429
        %v5431 = vpop.f32.mrf.mxu0
        %5432 = vdwg.mxu0
        %5433 = vmatpush.bf16.xpose.msra.mxu0 0
        %5434 = vmatpush.bf16.xpose.msra.mxu0 0
        %5435 = vmatpush.bf16.xpose.msra.mxu0 0
        %5436 = vmatpush.bf16.xpose.msra.mxu0 0
        %5437 = vmatpush.bf16.xpose.msra.mxu0 0
        %5438 = vmatpush.bf16.xpose.msra.mxu0 0
        %5439 = vmatpush.bf16.xpose.msra.mxu0 %v3723
        %5440 = vmatpush.bf16.xpose.msra.mxu0 %v3429
        %5441 = vmatmul.bf16.gmra.mxu0 %v1021
        %v5442 = vpop.f32.mrf.mxu0
        %v5443 = vadd.f32 %v5430, %v5442
        %v5444 = vpop.f32.mrf.mxu0
        %5445 = vdwg.mxu0
        %5446 = vmatpush.bf16.xpose.msra.mxu0 0
        %5447 = vmatpush.bf16.xpose.msra.mxu0 0
        %5448 = vmatpush.bf16.xpose.msra.mxu0 0
        %5449 = vmatpush.bf16.xpose.msra.mxu0 0
        %5450 = vmatpush.bf16.xpose.msra.mxu0 0
        %5451 = vmatpush.bf16.xpose.msra.mxu0 0
        %5452 = vmatpush.bf16.xpose.msra.mxu0 %v3724
        %5453 = vmatpush.bf16.xpose.msra.mxu0 %v3430
        %5454 = vmatmul.bf16.gmra.mxu0 %v1022
        %v5455 = vpop.f32.mrf.mxu0
        %v5456 = vadd.f32 %v5443, %v5455
        %v5457 = vpop.f32.mrf.mxu0
        %5458 = vdwg.mxu0
        %5459 = vmatpush.bf16.xpose.msra.mxu0 0
        %5460 = vmatpush.bf16.xpose.msra.mxu0 0
        %5461 = vmatpush.bf16.xpose.msra.mxu0 0
        %5462 = vmatpush.bf16.xpose.msra.mxu0 0
        %5463 = vmatpush.bf16.xpose.msra.mxu0 0
        %5464 = vmatpush.bf16.xpose.msra.mxu0 0
        %5465 = vmatpush.bf16.xpose.msra.mxu0 %v3725
        %5466 = vmatpush.bf16.xpose.msra.mxu0 %v3431
        %5467 = vmatmul.bf16.gmra.mxu0 %v1023
        %v5468 = vpop.f32.mrf.mxu0
        %v5469 = vadd.f32 %v5456, %v5468
        %v5470 = vpop.f32.mrf.mxu0
        %5471 = vdwg.mxu0
        %5472 = vmatpush.bf16.xpose.msra.mxu0 0
        %5473 = vmatpush.bf16.xpose.msra.mxu0 0
        %5474 = vmatpush.bf16.xpose.msra.mxu0 0
        %5475 = vmatpush.bf16.xpose.msra.mxu0 0
        %5476 = vmatpush.bf16.xpose.msra.mxu0 0
        %5477 = vmatpush.bf16.xpose.msra.mxu0 0
        %5478 = vmatpush.bf16.xpose.msra.mxu0 %v3726
        %5479 = vmatpush.bf16.xpose.msra.mxu0 %v3432
        %5480 = vmatmul.bf16.gmra.mxu0 %v1026
        %v5481 = vpop.f32.mrf.mxu0
        %v5482 = vadd.f32 %v5469, %v5481
        %v5483 = vpop.f32.mrf.mxu0
        %5484 = vdwg.mxu0
        %5485 = vmatpush.bf16.xpose.msra.mxu0 0
        %5486 = vmatpush.bf16.xpose.msra.mxu0 0
        %5487 = vmatpush.bf16.xpose.msra.mxu0 0
        %5488 = vmatpush.bf16.xpose.msra.mxu0 0
        %5489 = vmatpush.bf16.xpose.msra.mxu0 0
        %5490 = vmatpush.bf16.xpose.msra.mxu0 0
        %5491 = vmatpush.bf16.xpose.msra.mxu0 %v3727
        %5492 = vmatpush.bf16.xpose.msra.mxu0 %v3433
        %5493 = vmatmul.bf16.gmra.mxu0 %v1027
        %v5494 = vpop.f32.mrf.mxu0
        %v5495 = vadd.f32 %v5482, %v5494
        %v5496 = vpop.f32.mrf.mxu0
        %5497 = vdwg.mxu0
        %5498 = vmatpush.bf16.xpose.msra.mxu0 0
        %5499 = vmatpush.bf16.xpose.msra.mxu0 0
        %5500 = vmatpush.bf16.xpose.msra.mxu0 0
        %5501 = vmatpush.bf16.xpose.msra.mxu0 0
        %5502 = vmatpush.bf16.xpose.msra.mxu0 0
        %5503 = vmatpush.bf16.xpose.msra.mxu0 0
        %5504 = vmatpush.bf16.xpose.msra.mxu0 %v3728
        %5505 = vmatpush.bf16.xpose.msra.mxu0 %v3434
        %5506 = vmatmul.bf16.gmra.mxu0 %v1028
        %v5507 = vpop.f32.mrf.mxu0
        %v5508 = vadd.f32 %v5495, %v5507
        %v5509 = vpop.f32.mrf.mxu0
        %5510 = vdwg.mxu0
        %5511 = vmatpush.bf16.xpose.msra.mxu0 0
        %5512 = vmatpush.bf16.xpose.msra.mxu0 0
        %5513 = vmatpush.bf16.xpose.msra.mxu0 0
        %5514 = vmatpush.bf16.xpose.msra.mxu0 0
        %5515 = vmatpush.bf16.xpose.msra.mxu0 0
        %5516 = vmatpush.bf16.xpose.msra.mxu0 0
        %5517 = vmatpush.bf16.xpose.msra.mxu0 %v3729
        %5518 = vmatpush.bf16.xpose.msra.mxu0 %v3435
        %5519 = vmatmul.bf16.gmra.mxu0 %v1029
        %v5520 = vpop.f32.mrf.mxu0
        %v5521 = vadd.f32 %v5508, %v5520
        %v5522 = vpop.f32.mrf.mxu0
        %5523 = vdwg.mxu0
        %5524 = vmatpush.bf16.xpose.msra.mxu0 0
        %5525 = vmatpush.bf16.xpose.msra.mxu0 0
        %5526 = vmatpush.bf16.xpose.msra.mxu0 0
        %5527 = vmatpush.bf16.xpose.msra.mxu0 0
        %5528 = vmatpush.bf16.xpose.msra.mxu0 0
        %5529 = vmatpush.bf16.xpose.msra.mxu0 0
        %5530 = vmatpush.bf16.xpose.msra.mxu0 %v3730
        %5531 = vmatpush.bf16.xpose.msra.mxu0 %v3436
        %5532 = vmatmul.bf16.gmra.mxu0 %v1030
        %v5533 = vpop.f32.mrf.mxu0
        %v5534 = vadd.f32 %v5521, %v5533
        %v5535 = vpop.f32.mrf.mxu0
        %5536 = vdwg.mxu0
        %5537 = vmatpush.bf16.xpose.msra.mxu0 0
        %5538 = vmatpush.bf16.xpose.msra.mxu0 0
        %5539 = vmatpush.bf16.xpose.msra.mxu0 0
        %5540 = vmatpush.bf16.xpose.msra.mxu0 0
        %5541 = vmatpush.bf16.xpose.msra.mxu0 0
        %5542 = vmatpush.bf16.xpose.msra.mxu0 0
        %5543 = vmatpush.bf16.xpose.msra.mxu0 %v3731
        %5544 = vmatpush.bf16.xpose.msra.mxu0 %v3437
        %5545 = vmatmul.bf16.gmra.mxu0 %v1031
        %v5546 = vpop.f32.mrf.mxu0
        %v5547 = vadd.f32 %v5534, %v5546
        %v5548 = vpop.f32.mrf.mxu0
        %5549 = vdwg.mxu0
        %5550 = vmatpush.bf16.xpose.msra.mxu0 0
        %5551 = vmatpush.bf16.xpose.msra.mxu0 0
        %5552 = vmatpush.bf16.xpose.msra.mxu0 0
        %5553 = vmatpush.bf16.xpose.msra.mxu0 0
        %5554 = vmatpush.bf16.xpose.msra.mxu0 0
        %5555 = vmatpush.bf16.xpose.msra.mxu0 0
        %5556 = vmatpush.bf16.xpose.msra.mxu0 %v3732
        %5557 = vmatpush.bf16.xpose.msra.mxu0 %v3438
        %5558 = vmatmul.bf16.gmra.mxu0 %v1032
        %v5559 = vpop.f32.mrf.mxu0
        %v5560 = vadd.f32 %v5547, %v5559
        %v5561 = vpop.f32.mrf.mxu0
        %5562 = vdwg.mxu0
        %5563 = vmatpush.bf16.xpose.msra.mxu0 0
        %5564 = vmatpush.bf16.xpose.msra.mxu0 0
        %5565 = vmatpush.bf16.xpose.msra.mxu0 0
        %5566 = vmatpush.bf16.xpose.msra.mxu0 0
        %5567 = vmatpush.bf16.xpose.msra.mxu0 0
        %5568 = vmatpush.bf16.xpose.msra.mxu0 0
        %5569 = vmatpush.bf16.xpose.msra.mxu0 %v3733
        %5570 = vmatpush.bf16.xpose.msra.mxu0 %v3439
        %5571 = vmatmul.bf16.gmra.mxu0 %v1033
        %v5572 = vpop.f32.mrf.mxu0
        %v5573 = vadd.f32 %v5560, %v5572
        %v5574 = vpop.f32.mrf.mxu0
        %5575 = vdwg.mxu0
        %5576 = vmatpush.bf16.xpose.msra.mxu0 0
        %5577 = vmatpush.bf16.xpose.msra.mxu0 0
        %5578 = vmatpush.bf16.xpose.msra.mxu0 0
        %5579 = vmatpush.bf16.xpose.msra.mxu0 0
        %5580 = vmatpush.bf16.xpose.msra.mxu0 0
        %5581 = vmatpush.bf16.xpose.msra.mxu0 0
        %5582 = vmatpush.bf16.xpose.msra.mxu0 %v3734
        %5583 = vmatpush.bf16.xpose.msra.mxu0 %v3440
        %5584 = vmatmul.bf16.gmra.mxu0 %v1036
        %v5585 = vpop.f32.mrf.mxu0
        %v5586 = vadd.f32 %v5573, %v5585
        %v5587 = vpop.f32.mrf.mxu0
        %5588 = vdwg.mxu0
        %5589 = vmatpush.bf16.xpose.msra.mxu0 0
        %5590 = vmatpush.bf16.xpose.msra.mxu0 0
        %5591 = vmatpush.bf16.xpose.msra.mxu0 0
        %5592 = vmatpush.bf16.xpose.msra.mxu0 0
        %5593 = vmatpush.bf16.xpose.msra.mxu0 0
        %5594 = vmatpush.bf16.xpose.msra.mxu0 0
        %5595 = vmatpush.bf16.xpose.msra.mxu0 %v3735
        %5596 = vmatpush.bf16.xpose.msra.mxu0 %v3441
        %5597 = vmatmul.bf16.gmra.mxu0 %v1037
        %v5598 = vpop.f32.mrf.mxu0
        %v5599 = vadd.f32 %v5586, %v5598
        %v5600 = vpop.f32.mrf.mxu0
        %5601 = vdwg.mxu0
        %5602 = vmatpush.bf16.xpose.msra.mxu0 0
        %5603 = vmatpush.bf16.xpose.msra.mxu0 0
        %5604 = vmatpush.bf16.xpose.msra.mxu0 0
        %5605 = vmatpush.bf16.xpose.msra.mxu0 0
        %5606 = vmatpush.bf16.xpose.msra.mxu0 0
        %5607 = vmatpush.bf16.xpose.msra.mxu0 0
        %5608 = vmatpush.bf16.xpose.msra.mxu0 %v3736
        %5609 = vmatpush.bf16.xpose.msra.mxu0 %v3442
        %5610 = vmatmul.bf16.gmra.mxu0 %v1038
        %v5611 = vpop.f32.mrf.mxu0
        %v5612 = vadd.f32 %v5599, %v5611
        %v5613 = vpop.f32.mrf.mxu0
        %5614 = vdwg.mxu0
        %5615 = vmatpush.bf16.xpose.msra.mxu0 0
        %5616 = vmatpush.bf16.xpose.msra.mxu0 0
        %5617 = vmatpush.bf16.xpose.msra.mxu0 0
        %5618 = vmatpush.bf16.xpose.msra.mxu0 0
        %5619 = vmatpush.bf16.xpose.msra.mxu0 0
        %5620 = vmatpush.bf16.xpose.msra.mxu0 0
        %5621 = vmatpush.bf16.xpose.msra.mxu0 %v3737
        %5622 = vmatpush.bf16.xpose.msra.mxu0 %v3443
        %5623 = vmatmul.bf16.gmra.mxu0 %v1039
        %v5624 = vpop.f32.mrf.mxu0
        %v5625 = vadd.f32 %v5612, %v5624
        %v5626 = vpop.f32.mrf.mxu0
        %5627 = vdwg.mxu0
        %5628 = vmatpush.bf16.xpose.msra.mxu0 0
        %5629 = vmatpush.bf16.xpose.msra.mxu0 0
        %5630 = vmatpush.bf16.xpose.msra.mxu0 0
        %5631 = vmatpush.bf16.xpose.msra.mxu0 0
        %5632 = vmatpush.bf16.xpose.msra.mxu0 0
        %5633 = vmatpush.bf16.xpose.msra.mxu0 0
        %5634 = vmatpush.bf16.xpose.msra.mxu0 %v3738
        %5635 = vmatpush.bf16.xpose.msra.mxu0 %v3444
        %5636 = vmatmul.bf16.gmra.mxu0 %v1040
        %v5637 = vpop.f32.mrf.mxu0
        %v5638 = vadd.f32 %v5625, %v5637
        %v5639 = vpop.f32.mrf.mxu0
        %5640 = vdwg.mxu0
        %5641 = vmatpush.bf16.xpose.msra.mxu0 0
        %5642 = vmatpush.bf16.xpose.msra.mxu0 0
        %5643 = vmatpush.bf16.xpose.msra.mxu0 0
        %5644 = vmatpush.bf16.xpose.msra.mxu0 0
        %5645 = vmatpush.bf16.xpose.msra.mxu0 0
        %5646 = vmatpush.bf16.xpose.msra.mxu0 0
        %5647 = vmatpush.bf16.xpose.msra.mxu0 %v3739
        %5648 = vmatpush.bf16.xpose.msra.mxu0 %v3445
        %5649 = vmatmul.bf16.gmra.mxu0 %v1041
        %v5650 = vpop.f32.mrf.mxu0
        %v5651 = vadd.f32 %v5638, %v5650
        %v5652 = vpop.f32.mrf.mxu0
        %5653 = vdwg.mxu0
        %5654 = vmatpush.bf16.xpose.msra.mxu0 0
        %5655 = vmatpush.bf16.xpose.msra.mxu0 0
        %5656 = vmatpush.bf16.xpose.msra.mxu0 0
        %5657 = vmatpush.bf16.xpose.msra.mxu0 0
        %5658 = vmatpush.bf16.xpose.msra.mxu0 0
        %5659 = vmatpush.bf16.xpose.msra.mxu0 0
        %5660 = vmatpush.bf16.xpose.msra.mxu0 %v3740
        %5661 = vmatpush.bf16.xpose.msra.mxu0 %v3446
        %5662 = vmatmul.bf16.gmra.mxu0 %v1042
        %v5663 = vpop.f32.mrf.mxu0
        %v5664 = vadd.f32 %v5651, %v5663
        %v5665 = vpop.f32.mrf.mxu0
        %5666 = vdwg.mxu0
        %5667 = vmatpush.bf16.xpose.msra.mxu0 0
        %5668 = vmatpush.bf16.xpose.msra.mxu0 0
        %5669 = vmatpush.bf16.xpose.msra.mxu0 0
        %5670 = vmatpush.bf16.xpose.msra.mxu0 0
        %5671 = vmatpush.bf16.xpose.msra.mxu0 0
        %5672 = vmatpush.bf16.xpose.msra.mxu0 0
        %5673 = vmatpush.bf16.xpose.msra.mxu0 %v3741
        %5674 = vmatpush.bf16.xpose.msra.mxu0 %v3447
        %5675 = vmatmul.bf16.gmra.mxu0 %v1043
        %v5676 = vpop.f32.mrf.mxu0
        %v5677 = vadd.f32 %v5664, %v5676
        %v5678 = vpop.f32.mrf.mxu0
        %5679 = vdwg.mxu0
        %5680 = vmatpush.bf16.xpose.msra.mxu0 0
        %5681 = vmatpush.bf16.xpose.msra.mxu0 0
        %5682 = vmatpush.bf16.xpose.msra.mxu0 0
        %5683 = vmatpush.bf16.xpose.msra.mxu0 0
        %5684 = vmatpush.bf16.xpose.msra.mxu0 0
        %5685 = vmatpush.bf16.xpose.msra.mxu0 0
        %5686 = vmatpush.bf16.xpose.msra.mxu0 %v3742
        %5687 = vmatpush.bf16.xpose.msra.mxu0 %v3448
        %5688 = vmatmul.bf16.gmra.mxu0 %v1046
        %v5689 = vpop.f32.mrf.mxu0
        %v5690 = vadd.f32 %v5677, %v5689
        %v5691 = vpop.f32.mrf.mxu0
        %5692 = vdwg.mxu0
        %5693 = vmatpush.bf16.xpose.msra.mxu0 0
        %5694 = vmatpush.bf16.xpose.msra.mxu0 0
        %5695 = vmatpush.bf16.xpose.msra.mxu0 0
        %5696 = vmatpush.bf16.xpose.msra.mxu0 0
        %5697 = vmatpush.bf16.xpose.msra.mxu0 0
        %5698 = vmatpush.bf16.xpose.msra.mxu0 0
        %5699 = vmatpush.bf16.xpose.msra.mxu0 %v3743
        %5700 = vmatpush.bf16.xpose.msra.mxu0 %v3449
        %5701 = vmatmul.bf16.gmra.mxu0 %v1047
        %v5702 = vpop.f32.mrf.mxu0
        %v5703 = vadd.f32 %v5690, %v5702
        %v5704 = vpop.f32.mrf.mxu0
        %5705 = vdwg.mxu0
        %5706 = vmatpush.bf16.xpose.msra.mxu0 0
        %5707 = vmatpush.bf16.xpose.msra.mxu0 0
        %5708 = vmatpush.bf16.xpose.msra.mxu0 0
        %5709 = vmatpush.bf16.xpose.msra.mxu0 0
        %5710 = vmatpush.bf16.xpose.msra.mxu0 0
        %5711 = vmatpush.bf16.xpose.msra.mxu0 0
        %5712 = vmatpush.bf16.xpose.msra.mxu0 %v3744
        %5713 = vmatpush.bf16.xpose.msra.mxu0 %v3450
        %5714 = vmatmul.bf16.gmra.mxu0 %v1048
        %v5715 = vpop.f32.mrf.mxu0
        %v5716 = vadd.f32 %v5703, %v5715
        %v5717 = vpop.f32.mrf.mxu0
        %5718 = vdwg.mxu0
        %5719 = vmatpush.bf16.xpose.msra.mxu0 0
        %5720 = vmatpush.bf16.xpose.msra.mxu0 0
        %5721 = vmatpush.bf16.xpose.msra.mxu0 0
        %5722 = vmatpush.bf16.xpose.msra.mxu0 0
        %5723 = vmatpush.bf16.xpose.msra.mxu0 0
        %5724 = vmatpush.bf16.xpose.msra.mxu0 0
        %5725 = vmatpush.bf16.xpose.msra.mxu0 %v3745
        %5726 = vmatpush.bf16.xpose.msra.mxu0 %v3451
        %5727 = vmatmul.bf16.gmra.mxu0 %v1049
        %v5728 = vpop.f32.mrf.mxu0
        %v5729 = vadd.f32 %v5716, %v5728
        %v5730 = vpop.f32.mrf.mxu0
        %5731 = vdwg.mxu0
        %5732 = vmatpush.bf16.xpose.msra.mxu0 0
        %5733 = vmatpush.bf16.xpose.msra.mxu0 0
        %5734 = vmatpush.bf16.xpose.msra.mxu0 0
        %5735 = vmatpush.bf16.xpose.msra.mxu0 0
        %5736 = vmatpush.bf16.xpose.msra.mxu0 0
        %5737 = vmatpush.bf16.xpose.msra.mxu0 0
        %5738 = vmatpush.bf16.xpose.msra.mxu0 %v3746
        %5739 = vmatpush.bf16.xpose.msra.mxu0 %v3452
        %5740 = vmatmul.bf16.gmra.mxu0 %v1050
        %v5741 = vpop.f32.mrf.mxu0
        %v5742 = vadd.f32 %v5729, %v5741
        %v5743 = vpop.f32.mrf.mxu0
        %5744 = vdwg.mxu0
        %5745 = vmatpush.bf16.xpose.msra.mxu0 0
        %5746 = vmatpush.bf16.xpose.msra.mxu0 0
        %5747 = vmatpush.bf16.xpose.msra.mxu0 0
        %5748 = vmatpush.bf16.xpose.msra.mxu0 0
        %5749 = vmatpush.bf16.xpose.msra.mxu0 0
        %5750 = vmatpush.bf16.xpose.msra.mxu0 0
        %5751 = vmatpush.bf16.xpose.msra.mxu0 %v3747
        %5752 = vmatpush.bf16.xpose.msra.mxu0 %v3453
        %5753 = vmatmul.bf16.gmra.mxu0 %v1051
        %v5754 = vpop.f32.mrf.mxu0
        %v5755 = vadd.f32 %v5742, %v5754
        %v5756 = vpop.f32.mrf.mxu0
        %5757 = vdwg.mxu0
        %5758 = vmatpush.bf16.xpose.msra.mxu0 0
        %5759 = vmatpush.bf16.xpose.msra.mxu0 0
        %5760 = vmatpush.bf16.xpose.msra.mxu0 0
        %5761 = vmatpush.bf16.xpose.msra.mxu0 0
        %5762 = vmatpush.bf16.xpose.msra.mxu0 0
        %5763 = vmatpush.bf16.xpose.msra.mxu0 0
        %5764 = vmatpush.bf16.xpose.msra.mxu0 %v3748
        %5765 = vmatpush.bf16.xpose.msra.mxu0 %v3454
        %5766 = vmatmul.bf16.gmra.mxu0 %v1052
        %v5767 = vpop.f32.mrf.mxu0
        %v5768 = vadd.f32 %v5755, %v5767
        %v5769 = vpop.f32.mrf.mxu0
        %5770 = vdwg.mxu0
        %5771 = vmatpush.bf16.xpose.msra.mxu0 0
        %5772 = vmatpush.bf16.xpose.msra.mxu0 0
        %5773 = vmatpush.bf16.xpose.msra.mxu0 0
        %5774 = vmatpush.bf16.xpose.msra.mxu0 0
        %5775 = vmatpush.bf16.xpose.msra.mxu0 0
        %5776 = vmatpush.bf16.xpose.msra.mxu0 0
        %5777 = vmatpush.bf16.xpose.msra.mxu0 %v3749
        %5778 = vmatpush.bf16.xpose.msra.mxu0 %v3455
        %5779 = vmatmul.bf16.gmra.mxu0 %v1053
        %v5780 = vpop.f32.mrf.mxu0
        %v5781 = vadd.f32 %v5768, %v5780
        %v5782 = vpop.f32.mrf.mxu0
        %5783 = vdwg.mxu0
        %5784 = vmatpush.bf16.xpose.msra.mxu0 0
        %5785 = vmatpush.bf16.xpose.msra.mxu0 0
        %5786 = vmatpush.bf16.xpose.msra.mxu0 0
        %5787 = vmatpush.bf16.xpose.msra.mxu0 0
        %5788 = vmatpush.bf16.xpose.msra.mxu0 0
        %5789 = vmatpush.bf16.xpose.msra.mxu0 0
        %5790 = vmatpush.bf16.xpose.msra.mxu0 %v3750
        %5791 = vmatpush.bf16.xpose.msra.mxu0 %v3456
        %5792 = vmatmul.bf16.gmra.mxu0 %v1056
        %v5793 = vpop.f32.mrf.mxu0
        %v5794 = vadd.f32 %v5781, %v5793
        %v5795 = vpop.f32.mrf.mxu0
        %5796 = vdwg.mxu0
        %5797 = vmatpush.bf16.xpose.msra.mxu0 0
        %5798 = vmatpush.bf16.xpose.msra.mxu0 0
        %5799 = vmatpush.bf16.xpose.msra.mxu0 0
        %5800 = vmatpush.bf16.xpose.msra.mxu0 0
        %5801 = vmatpush.bf16.xpose.msra.mxu0 0
        %5802 = vmatpush.bf16.xpose.msra.mxu0 0
        %5803 = vmatpush.bf16.xpose.msra.mxu0 %v3751
        %5804 = vmatpush.bf16.xpose.msra.mxu0 %v3457
        %5805 = vmatmul.bf16.gmra.mxu0 %v1057
        %v5806 = vpop.f32.mrf.mxu0
        %v5807 = vadd.f32 %v5794, %v5806
        %v5808 = vpop.f32.mrf.mxu0
        %5809 = vdwg.mxu0
        %5810 = vmatpush.bf16.xpose.msra.mxu0 0
        %5811 = vmatpush.bf16.xpose.msra.mxu0 0
        %5812 = vmatpush.bf16.xpose.msra.mxu0 0
        %5813 = vmatpush.bf16.xpose.msra.mxu0 0
        %5814 = vmatpush.bf16.xpose.msra.mxu0 0
        %5815 = vmatpush.bf16.xpose.msra.mxu0 0
        %5816 = vmatpush.bf16.xpose.msra.mxu0 %v3752
        %5817 = vmatpush.bf16.xpose.msra.mxu0 %v3458
        %5818 = vmatmul.bf16.gmra.mxu0 %v1058
        %v5819 = vpop.f32.mrf.mxu0
        %v5820 = vadd.f32 %v5807, %v5819
        %v5821 = vpop.f32.mrf.mxu0
        %5822 = vdwg.mxu0
        %5823 = vmatpush.bf16.xpose.msra.mxu0 0
        %5824 = vmatpush.bf16.xpose.msra.mxu0 0
        %5825 = vmatpush.bf16.xpose.msra.mxu0 0
        %5826 = vmatpush.bf16.xpose.msra.mxu0 0
        %5827 = vmatpush.bf16.xpose.msra.mxu0 0
        %5828 = vmatpush.bf16.xpose.msra.mxu0 0
        %5829 = vmatpush.bf16.xpose.msra.mxu0 %v3753
        %5830 = vmatpush.bf16.xpose.msra.mxu0 %v3459
        %5831 = vmatmul.bf16.gmra.mxu0 %v1059
        %v5832 = vpop.f32.mrf.mxu0
        %v5833 = vadd.f32 %v5820, %v5832
        %v5834 = vpop.f32.mrf.mxu0
        %5835 = vdwg.mxu0
        %5836 = vmatpush.bf16.xpose.msra.mxu0 0
        %5837 = vmatpush.bf16.xpose.msra.mxu0 0
        %5838 = vmatpush.bf16.xpose.msra.mxu0 0
        %5839 = vmatpush.bf16.xpose.msra.mxu0 0
        %5840 = vmatpush.bf16.xpose.msra.mxu0 0
        %5841 = vmatpush.bf16.xpose.msra.mxu0 0
        %5842 = vmatpush.bf16.xpose.msra.mxu0 %v3754
        %5843 = vmatpush.bf16.xpose.msra.mxu0 %v3460
        %5844 = vmatmul.bf16.gmra.mxu0 %v1060
        %v5845 = vpop.f32.mrf.mxu0
        %v5846 = vadd.f32 %v5833, %v5845
        %v5847 = vpop.f32.mrf.mxu0
        %5848 = vdwg.mxu0
        %5849 = vmatpush.bf16.xpose.msra.mxu0 0
        %5850 = vmatpush.bf16.xpose.msra.mxu0 0
        %5851 = vmatpush.bf16.xpose.msra.mxu0 0
        %5852 = vmatpush.bf16.xpose.msra.mxu0 0
        %5853 = vmatpush.bf16.xpose.msra.mxu0 0
        %5854 = vmatpush.bf16.xpose.msra.mxu0 0
        %5855 = vmatpush.bf16.xpose.msra.mxu0 %v3755
        %5856 = vmatpush.bf16.xpose.msra.mxu0 %v3461
        %5857 = vmatmul.bf16.gmra.mxu0 %v1061
        %v5858 = vpop.f32.mrf.mxu0
        %v5859 = vadd.f32 %v5846, %v5858
        %v5860 = vpop.f32.mrf.mxu0
        %5861 = vdwg.mxu0
        %5862 = vmatpush.bf16.xpose.msra.mxu0 0
        %5863 = vmatpush.bf16.xpose.msra.mxu0 0
        %5864 = vmatpush.bf16.xpose.msra.mxu0 0
        %5865 = vmatpush.bf16.xpose.msra.mxu0 0
        %5866 = vmatpush.bf16.xpose.msra.mxu0 0
        %5867 = vmatpush.bf16.xpose.msra.mxu0 0
        %5868 = vmatpush.bf16.xpose.msra.mxu0 %v3756
        %5869 = vmatpush.bf16.xpose.msra.mxu0 %v3462
        %5870 = vmatmul.bf16.gmra.mxu0 %v1062
        %v5871 = vpop.f32.mrf.mxu0
        %v5872 = vadd.f32 %v5859, %v5871
        %v5873 = vpop.f32.mrf.mxu0
        %5874 = vdwg.mxu0
        %5875 = vmatpush.bf16.xpose.msra.mxu0 0
        %5876 = vmatpush.bf16.xpose.msra.mxu0 0
        %5877 = vmatpush.bf16.xpose.msra.mxu0 0
        %5878 = vmatpush.bf16.xpose.msra.mxu0 0
        %5879 = vmatpush.bf16.xpose.msra.mxu0 0
        %5880 = vmatpush.bf16.xpose.msra.mxu0 0
        %5881 = vmatpush.bf16.xpose.msra.mxu0 %v3757
        %5882 = vmatpush.bf16.xpose.msra.mxu0 %v3463
        %5883 = vmatmul.bf16.gmra.mxu0 %v1063
        %v5884 = vpop.f32.mrf.mxu0
        %v5885 = vadd.f32 %v5872, %v5884
        %v5886 = vpop.f32.mrf.mxu0
        %5887 = vdwg.mxu0
        %5888 = vmatpush.bf16.xpose.msra.mxu0 0
        %5889 = vmatpush.bf16.xpose.msra.mxu0 0
        %5890 = vmatpush.bf16.xpose.msra.mxu0 0
        %5891 = vmatpush.bf16.xpose.msra.mxu0 0
        %5892 = vmatpush.bf16.xpose.msra.mxu0 0
        %5893 = vmatpush.bf16.xpose.msra.mxu0 0
        %5894 = vmatpush.bf16.xpose.msra.mxu0 %v3758
        %5895 = vmatpush.bf16.xpose.msra.mxu0 %v3464
        %5896 = vmatmul.bf16.gmra.mxu0 %v1066
        %v5897 = vpop.f32.mrf.mxu0
        %v5898 = vadd.f32 %v5885, %v5897
        %v5899 = vpop.f32.mrf.mxu0
        %5900 = vdwg.mxu0
        %5901 = vmatpush.bf16.xpose.msra.mxu0 0
        %5902 = vmatpush.bf16.xpose.msra.mxu0 0
        %5903 = vmatpush.bf16.xpose.msra.mxu0 0
        %5904 = vmatpush.bf16.xpose.msra.mxu0 0
        %5905 = vmatpush.bf16.xpose.msra.mxu0 0
        %5906 = vmatpush.bf16.xpose.msra.mxu0 0
        %5907 = vmatpush.bf16.xpose.msra.mxu0 %v3759
        %5908 = vmatpush.bf16.xpose.msra.mxu0 %v3465
        %5909 = vmatmul.bf16.gmra.mxu0 %v1067
        %v5910 = vpop.f32.mrf.mxu0
        %v5911 = vadd.f32 %v5898, %v5910
        %v5912 = vpop.f32.mrf.mxu0
        %5913 = vdwg.mxu0
        %5914 = vmatpush.bf16.xpose.msra.mxu0 0
        %5915 = vmatpush.bf16.xpose.msra.mxu0 0
        %5916 = vmatpush.bf16.xpose.msra.mxu0 0
        %5917 = vmatpush.bf16.xpose.msra.mxu0 0
        %5918 = vmatpush.bf16.xpose.msra.mxu0 0
        %5919 = vmatpush.bf16.xpose.msra.mxu0 0
        %5920 = vmatpush.bf16.xpose.msra.mxu0 %v3760
        %5921 = vmatpush.bf16.xpose.msra.mxu0 %v3466
        %5922 = vmatmul.bf16.gmra.mxu0 %v1068
        %v5923 = vpop.f32.mrf.mxu0
        %v5924 = vadd.f32 %v5911, %v5923
        %v5925 = vpop.f32.mrf.mxu0
        %5926 = vdwg.mxu0
        %5927 = vmatpush.bf16.xpose.msra.mxu0 0
        %5928 = vmatpush.bf16.xpose.msra.mxu0 0
        %5929 = vmatpush.bf16.xpose.msra.mxu0 0
        %5930 = vmatpush.bf16.xpose.msra.mxu0 0
        %5931 = vmatpush.bf16.xpose.msra.mxu0 0
        %5932 = vmatpush.bf16.xpose.msra.mxu0 0
        %5933 = vmatpush.bf16.xpose.msra.mxu0 %v3761
        %5934 = vmatpush.bf16.xpose.msra.mxu0 %v3467
        %5935 = vmatmul.bf16.gmra.mxu0 %v1069
        %v5936 = vpop.f32.mrf.mxu0
        %v5937 = vadd.f32 %v5924, %v5936
        %v5938 = vpop.f32.mrf.mxu0
        %5939 = vdwg.mxu0
        %5940 = vmatpush.bf16.xpose.msra.mxu0 0
        %5941 = vmatpush.bf16.xpose.msra.mxu0 0
        %5942 = vmatpush.bf16.xpose.msra.mxu0 0
        %5943 = vmatpush.bf16.xpose.msra.mxu0 0
        %5944 = vmatpush.bf16.xpose.msra.mxu0 0
        %5945 = vmatpush.bf16.xpose.msra.mxu0 0
        %5946 = vmatpush.bf16.xpose.msra.mxu0 %v3762
        %5947 = vmatpush.bf16.xpose.msra.mxu0 %v3468
        %5948 = vmatmul.bf16.gmra.mxu0 %v1070
        %v5949 = vpop.f32.mrf.mxu0
        %v5950 = vadd.f32 %v5937, %v5949
        %v5951 = vpop.f32.mrf.mxu0
        %5952 = vdwg.mxu0
        %5953 = vmatpush.bf16.xpose.msra.mxu0 0
        %5954 = vmatpush.bf16.xpose.msra.mxu0 0
        %5955 = vmatpush.bf16.xpose.msra.mxu0 0
        %5956 = vmatpush.bf16.xpose.msra.mxu0 0
        %5957 = vmatpush.bf16.xpose.msra.mxu0 0
        %5958 = vmatpush.bf16.xpose.msra.mxu0 0
        %5959 = vmatpush.bf16.xpose.msra.mxu0 %v3763
        %5960 = vmatpush.bf16.xpose.msra.mxu0 %v3469
        %5961 = vmatmul.bf16.gmra.mxu0 %v1071
        %v5962 = vpop.f32.mrf.mxu0
        %v5963 = vadd.f32 %v5950, %v5962
        %v5964 = vpop.f32.mrf.mxu0
        %5965 = vdwg.mxu0
        %5966 = vmatpush.bf16.xpose.msra.mxu0 0
        %5967 = vmatpush.bf16.xpose.msra.mxu0 0
        %5968 = vmatpush.bf16.xpose.msra.mxu0 0
        %5969 = vmatpush.bf16.xpose.msra.mxu0 0
        %5970 = vmatpush.bf16.xpose.msra.mxu0 0
        %5971 = vmatpush.bf16.xpose.msra.mxu0 0
        %5972 = vmatpush.bf16.xpose.msra.mxu0 %v3764
        %5973 = vmatpush.bf16.xpose.msra.mxu0 %v3470
        %5974 = vmatmul.bf16.gmra.mxu0 %v1072
        %v5975 = vpop.f32.mrf.mxu0
        %v5976 = vadd.f32 %v5963, %v5975
        %v5977 = vpop.f32.mrf.mxu0
        %5978 = vdwg.mxu0
        %5979 = vmatpush.bf16.xpose.msra.mxu0 0
        %5980 = vmatpush.bf16.xpose.msra.mxu0 0
        %5981 = vmatpush.bf16.xpose.msra.mxu0 0
        %5982 = vmatpush.bf16.xpose.msra.mxu0 0
        %5983 = vmatpush.bf16.xpose.msra.mxu0 0
        %5984 = vmatpush.bf16.xpose.msra.mxu0 0
        %5985 = vmatpush.bf16.xpose.msra.mxu0 %v3765
        %5986 = vmatpush.bf16.xpose.msra.mxu0 %v3471
        %5987 = vmatmul.bf16.gmra.mxu0 %v1073
        %v5988 = vpop.f32.mrf.mxu0
        %v5989 = vadd.f32 %v5976, %v5988
        %v5990 = vpop.f32.mrf.mxu0
        %5991 = vdwg.mxu0
        %5992 = vmatpush.bf16.xpose.msra.mxu0 0
        %5993 = vmatpush.bf16.xpose.msra.mxu0 0
        %5994 = vmatpush.bf16.xpose.msra.mxu0 0
        %5995 = vmatpush.bf16.xpose.msra.mxu0 0
        %5996 = vmatpush.bf16.xpose.msra.mxu0 0
        %5997 = vmatpush.bf16.xpose.msra.mxu0 0
        %5998 = vmatpush.bf16.xpose.msra.mxu0 %v3766
        %5999 = vmatpush.bf16.xpose.msra.mxu0 %v3472
        %6000 = vmatmul.bf16.gmra.mxu0 %v1076
        %v6001 = vpop.f32.mrf.mxu0
        %v6002 = vadd.f32 %v5989, %v6001
        %v6003 = vpop.f32.mrf.mxu0
        %6004 = vdwg.mxu0
        %6005 = vmatpush.bf16.xpose.msra.mxu0 0
        %6006 = vmatpush.bf16.xpose.msra.mxu0 0
        %6007 = vmatpush.bf16.xpose.msra.mxu0 0
        %6008 = vmatpush.bf16.xpose.msra.mxu0 0
        %6009 = vmatpush.bf16.xpose.msra.mxu0 0
        %6010 = vmatpush.bf16.xpose.msra.mxu0 0
        %6011 = vmatpush.bf16.xpose.msra.mxu0 %v3767
        %6012 = vmatpush.bf16.xpose.msra.mxu0 %v3473
        %6013 = vmatmul.bf16.gmra.mxu0 %v1077
        %v6014 = vpop.f32.mrf.mxu0
        %v6015 = vadd.f32 %v6002, %v6014
        %v6016 = vpop.f32.mrf.mxu0
        %6017 = vdwg.mxu0
        %6018 = vmatpush.bf16.xpose.msra.mxu0 0
        %6019 = vmatpush.bf16.xpose.msra.mxu0 0
        %6020 = vmatpush.bf16.xpose.msra.mxu0 0
        %6021 = vmatpush.bf16.xpose.msra.mxu0 0
        %6022 = vmatpush.bf16.xpose.msra.mxu0 0
        %6023 = vmatpush.bf16.xpose.msra.mxu0 0
        %6024 = vmatpush.bf16.xpose.msra.mxu0 %v3768
        %6025 = vmatpush.bf16.xpose.msra.mxu0 %v3474
        %6026 = vmatmul.bf16.gmra.mxu0 %v1078
        %v6027 = vpop.f32.mrf.mxu0
        %v6028 = vadd.f32 %v6015, %v6027
        %v6029 = vpop.f32.mrf.mxu0
        %6030 = vdwg.mxu0
        %6031 = vmatpush.bf16.xpose.msra.mxu0 0
        %6032 = vmatpush.bf16.xpose.msra.mxu0 0
        %6033 = vmatpush.bf16.xpose.msra.mxu0 0
        %6034 = vmatpush.bf16.xpose.msra.mxu0 0
        %6035 = vmatpush.bf16.xpose.msra.mxu0 0
        %6036 = vmatpush.bf16.xpose.msra.mxu0 0
        %6037 = vmatpush.bf16.xpose.msra.mxu0 %v3769
        %6038 = vmatpush.bf16.xpose.msra.mxu0 %v3475
        %6039 = vmatmul.bf16.gmra.mxu0 %v1079
        %v6040 = vpop.f32.mrf.mxu0
        %v6041 = vadd.f32 %v6028, %v6040
        %v6042 = vpop.f32.mrf.mxu0
        %6043 = vdwg.mxu0
        %6044 = vmatpush.bf16.xpose.msra.mxu0 0
        %6045 = vmatpush.bf16.xpose.msra.mxu0 0
        %6046 = vmatpush.bf16.xpose.msra.mxu0 0
        %6047 = vmatpush.bf16.xpose.msra.mxu0 0
        %6048 = vmatpush.bf16.xpose.msra.mxu0 0
        %6049 = vmatpush.bf16.xpose.msra.mxu0 0
        %6050 = vmatpush.bf16.xpose.msra.mxu0 %v3770
        %6051 = vmatpush.bf16.xpose.msra.mxu0 %v3476
        %6052 = vmatmul.bf16.gmra.mxu0 %v1080
        %v6053 = vpop.f32.mrf.mxu0
        %v6054 = vadd.f32 %v6041, %v6053
        %v6055 = vpop.f32.mrf.mxu0
        %6056 = vdwg.mxu0
        %6057 = vmatpush.bf16.xpose.msra.mxu0 0
        %6058 = vmatpush.bf16.xpose.msra.mxu0 0
        %6059 = vmatpush.bf16.xpose.msra.mxu0 0
        %6060 = vmatpush.bf16.xpose.msra.mxu0 0
        %6061 = vmatpush.bf16.xpose.msra.mxu0 0
        %6062 = vmatpush.bf16.xpose.msra.mxu0 0
        %6063 = vmatpush.bf16.xpose.msra.mxu0 %v3771
        %6064 = vmatpush.bf16.xpose.msra.mxu0 %v3477
        %6065 = vmatmul.bf16.gmra.mxu0 %v1081
        %v6066 = vpop.f32.mrf.mxu0
        %v6067 = vadd.f32 %v6054, %v6066
        %v6068 = vpop.f32.mrf.mxu0
        %6069 = vdwg.mxu0
        %6070 = vmatpush.bf16.xpose.msra.mxu0 0
        %6071 = vmatpush.bf16.xpose.msra.mxu0 0
        %6072 = vmatpush.bf16.xpose.msra.mxu0 0
        %6073 = vmatpush.bf16.xpose.msra.mxu0 0
        %6074 = vmatpush.bf16.xpose.msra.mxu0 0
        %6075 = vmatpush.bf16.xpose.msra.mxu0 0
        %6076 = vmatpush.bf16.xpose.msra.mxu0 %v3772
        %6077 = vmatpush.bf16.xpose.msra.mxu0 %v3478
        %6078 = vmatmul.bf16.gmra.mxu0 %v1082
        %v6079 = vpop.f32.mrf.mxu0
        %v6080 = vadd.f32 %v6067, %v6079
        %v6081 = vpop.f32.mrf.mxu0
        %6082 = vdwg.mxu0
        %6083 = vmatpush.bf16.xpose.msra.mxu0 0
        %6084 = vmatpush.bf16.xpose.msra.mxu0 0
        %6085 = vmatpush.bf16.xpose.msra.mxu0 0
        %6086 = vmatpush.bf16.xpose.msra.mxu0 0
        %6087 = vmatpush.bf16.xpose.msra.mxu0 0
        %6088 = vmatpush.bf16.xpose.msra.mxu0 0
        %6089 = vmatpush.bf16.xpose.msra.mxu0 %v3773
        %6090 = vmatpush.bf16.xpose.msra.mxu0 %v3479
        %6091 = vmatmul.bf16.gmra.mxu0 %v1083
        %v6092 = vpop.f32.mrf.mxu0
        %v6093 = vadd.f32 %v6080, %v6092
        %v6094 = vpop.f32.mrf.mxu0
        %6095 = vdwg.mxu0
        %6096 = vmatpush.bf16.xpose.msra.mxu0 0
        %6097 = vmatpush.bf16.xpose.msra.mxu0 0
        %6098 = vmatpush.bf16.xpose.msra.mxu0 0
        %6099 = vmatpush.bf16.xpose.msra.mxu0 0
        %6100 = vmatpush.bf16.xpose.msra.mxu0 0
        %6101 = vmatpush.bf16.xpose.msra.mxu0 0
        %6102 = vmatpush.bf16.xpose.msra.mxu0 %v3774
        %6103 = vmatpush.bf16.xpose.msra.mxu0 %v3480
        %6104 = vmatmul.bf16.gmra.mxu0 %v1086
        %v6105 = vpop.f32.mrf.mxu0
        %v6106 = vadd.f32 %v6093, %v6105
        %v6107 = vpop.f32.mrf.mxu0
        %6108 = vdwg.mxu0
        %6109 = vmatpush.bf16.xpose.msra.mxu0 0
        %6110 = vmatpush.bf16.xpose.msra.mxu0 0
        %6111 = vmatpush.bf16.xpose.msra.mxu0 0
        %6112 = vmatpush.bf16.xpose.msra.mxu0 0
        %6113 = vmatpush.bf16.xpose.msra.mxu0 0
        %6114 = vmatpush.bf16.xpose.msra.mxu0 0
        %6115 = vmatpush.bf16.xpose.msra.mxu0 %v3775
        %6116 = vmatpush.bf16.xpose.msra.mxu0 %v3481
        %6117 = vmatmul.bf16.gmra.mxu0 %v1087
        %v6118 = vpop.f32.mrf.mxu0
        %v6119 = vadd.f32 %v6106, %v6118
        %v6120 = vpop.f32.mrf.mxu0
        %6121 = vdwg.mxu0
        %6122 = vmatpush.bf16.xpose.msra.mxu0 0
        %6123 = vmatpush.bf16.xpose.msra.mxu0 0
        %6124 = vmatpush.bf16.xpose.msra.mxu0 0
        %6125 = vmatpush.bf16.xpose.msra.mxu0 0
        %6126 = vmatpush.bf16.xpose.msra.mxu0 0
        %6127 = vmatpush.bf16.xpose.msra.mxu0 0
        %6128 = vmatpush.bf16.xpose.msra.mxu0 %v3776
        %6129 = vmatpush.bf16.xpose.msra.mxu0 %v3482
        %6130 = vmatmul.bf16.gmra.mxu0 %v1088
        %v6131 = vpop.f32.mrf.mxu0
        %v6132 = vadd.f32 %v6119, %v6131
        %v6133 = vpop.f32.mrf.mxu0
        %6134 = vdwg.mxu0
        %6135 = vmatpush.bf16.xpose.msra.mxu0 0
        %6136 = vmatpush.bf16.xpose.msra.mxu0 0
        %6137 = vmatpush.bf16.xpose.msra.mxu0 0
        %6138 = vmatpush.bf16.xpose.msra.mxu0 0
        %6139 = vmatpush.bf16.xpose.msra.mxu0 0
        %6140 = vmatpush.bf16.xpose.msra.mxu0 0
        %6141 = vmatpush.bf16.xpose.msra.mxu0 %v3777
        %6142 = vmatpush.bf16.xpose.msra.mxu0 %v3483
        %6143 = vmatmul.bf16.gmra.mxu0 %v1089
        %v6144 = vpop.f32.mrf.mxu0
        %v6145 = vadd.f32 %v6132, %v6144
        %v6146 = vpop.f32.mrf.mxu0
        %6147 = vdwg.mxu0
        %6148 = vmatpush.bf16.xpose.msra.mxu0 0
        %6149 = vmatpush.bf16.xpose.msra.mxu0 0
        %6150 = vmatpush.bf16.xpose.msra.mxu0 0
        %6151 = vmatpush.bf16.xpose.msra.mxu0 0
        %6152 = vmatpush.bf16.xpose.msra.mxu0 0
        %6153 = vmatpush.bf16.xpose.msra.mxu0 0
        %6154 = vmatpush.bf16.xpose.msra.mxu0 %v3778
        %6155 = vmatpush.bf16.xpose.msra.mxu0 %v3484
        %6156 = vmatmul.bf16.gmra.mxu0 %v1090
        %v6157 = vpop.f32.mrf.mxu0
        %v6158 = vadd.f32 %v6145, %v6157
        %v6159 = vpop.f32.mrf.mxu0
        %6160 = vdwg.mxu0
        %6161 = vmatpush.bf16.xpose.msra.mxu0 0
        %6162 = vmatpush.bf16.xpose.msra.mxu0 0
        %6163 = vmatpush.bf16.xpose.msra.mxu0 0
        %6164 = vmatpush.bf16.xpose.msra.mxu0 0
        %6165 = vmatpush.bf16.xpose.msra.mxu0 0
        %6166 = vmatpush.bf16.xpose.msra.mxu0 0
        %6167 = vmatpush.bf16.xpose.msra.mxu0 %v3779
        %6168 = vmatpush.bf16.xpose.msra.mxu0 %v3485
        %6169 = vmatmul.bf16.gmra.mxu0 %v1091
        %v6170 = vpop.f32.mrf.mxu0
        %v6171 = vadd.f32 %v6158, %v6170
        %v6172 = vpop.f32.mrf.mxu0
        %6173 = vdwg.mxu0
        %6174 = vmatpush.bf16.xpose.msra.mxu0 0
        %6175 = vmatpush.bf16.xpose.msra.mxu0 0
        %6176 = vmatpush.bf16.xpose.msra.mxu0 0
        %6177 = vmatpush.bf16.xpose.msra.mxu0 0
        %6178 = vmatpush.bf16.xpose.msra.mxu0 0
        %6179 = vmatpush.bf16.xpose.msra.mxu0 0
        %6180 = vmatpush.bf16.xpose.msra.mxu0 %v3780
        %6181 = vmatpush.bf16.xpose.msra.mxu0 %v3486
        %6182 = vmatmul.bf16.gmra.mxu0 %v1092
        %v6183 = vpop.f32.mrf.mxu0
        %v6184 = vadd.f32 %v6171, %v6183
        %v6185 = vpop.f32.mrf.mxu0
        %6186 = vdwg.mxu0
        %6187 = vmatpush.bf16.xpose.msra.mxu0 0
        %6188 = vmatpush.bf16.xpose.msra.mxu0 0
        %6189 = vmatpush.bf16.xpose.msra.mxu0 0
        %6190 = vmatpush.bf16.xpose.msra.mxu0 0
        %6191 = vmatpush.bf16.xpose.msra.mxu0 0
        %6192 = vmatpush.bf16.xpose.msra.mxu0 0
        %6193 = vmatpush.bf16.xpose.msra.mxu0 %v3781
        %6194 = vmatpush.bf16.xpose.msra.mxu0 %v3487
        %6195 = vmatmul.bf16.gmra.mxu0 %v1093
        %v6196 = vpop.f32.mrf.mxu0
        %v6197 = vadd.f32 %v6184, %v6196
        %v6198 = vpop.f32.mrf.mxu0
        %6199 = vdwg.mxu0
        %6200 = vmatpush.bf16.xpose.msra.mxu0 0
        %6201 = vmatpush.bf16.xpose.msra.mxu0 0
        %6202 = vmatpush.bf16.xpose.msra.mxu0 0
        %6203 = vmatpush.bf16.xpose.msra.mxu0 0
        %6204 = vmatpush.bf16.xpose.msra.mxu0 0
        %6205 = vmatpush.bf16.xpose.msra.mxu0 0
        %6206 = vmatpush.bf16.xpose.msra.mxu0 %v3782
        %6207 = vmatpush.bf16.xpose.msra.mxu0 %v3488
        %6208 = vmatmul.bf16.gmra.mxu0 %v1096
        %v6209 = vpop.f32.mrf.mxu0
        %v6210 = vadd.f32 %v6197, %v6209
        %v6211 = vpop.f32.mrf.mxu0
        %6212 = vdwg.mxu0
        %6213 = vmatpush.bf16.xpose.msra.mxu0 0
        %6214 = vmatpush.bf16.xpose.msra.mxu0 0
        %6215 = vmatpush.bf16.xpose.msra.mxu0 0
        %6216 = vmatpush.bf16.xpose.msra.mxu0 0
        %6217 = vmatpush.bf16.xpose.msra.mxu0 0
        %6218 = vmatpush.bf16.xpose.msra.mxu0 0
        %6219 = vmatpush.bf16.xpose.msra.mxu0 %v3783
        %6220 = vmatpush.bf16.xpose.msra.mxu0 %v3489
        %6221 = vmatmul.bf16.gmra.mxu0 %v1097
        %v6222 = vpop.f32.mrf.mxu0
        %v6223 = vadd.f32 %v6210, %v6222
        %v6224 = vpop.f32.mrf.mxu0
        %6225 = vdwg.mxu0
        %6226 = vmatpush.bf16.xpose.msra.mxu0 0
        %6227 = vmatpush.bf16.xpose.msra.mxu0 0
        %6228 = vmatpush.bf16.xpose.msra.mxu0 0
        %6229 = vmatpush.bf16.xpose.msra.mxu0 0
        %6230 = vmatpush.bf16.xpose.msra.mxu0 0
        %6231 = vmatpush.bf16.xpose.msra.mxu0 0
        %6232 = vmatpush.bf16.xpose.msra.mxu0 %v3784
        %6233 = vmatpush.bf16.xpose.msra.mxu0 %v3490
        %6234 = vmatmul.bf16.gmra.mxu0 %v1098
        %v6235 = vpop.f32.mrf.mxu0
        %v6236 = vadd.f32 %v6223, %v6235
        %v6237 = vpop.f32.mrf.mxu0
        %6238 = vdwg.mxu0
        %6239 = vmatpush.bf16.xpose.msra.mxu0 0
        %6240 = vmatpush.bf16.xpose.msra.mxu0 0
        %6241 = vmatpush.bf16.xpose.msra.mxu0 0
        %6242 = vmatpush.bf16.xpose.msra.mxu0 0
        %6243 = vmatpush.bf16.xpose.msra.mxu0 0
        %6244 = vmatpush.bf16.xpose.msra.mxu0 0
        %6245 = vmatpush.bf16.xpose.msra.mxu0 %v3785
        %6246 = vmatpush.bf16.xpose.msra.mxu0 %v3491
        %6247 = vmatmul.bf16.gmra.mxu0 %v1099
        %v6248 = vpop.f32.mrf.mxu0
        %v6249 = vadd.f32 %v6236, %v6248
        %v6250 = vpop.f32.mrf.mxu0
        %6251 = vdwg.mxu0
        %6252 = vmatpush.bf16.xpose.msra.mxu0 0
        %6253 = vmatpush.bf16.xpose.msra.mxu0 0
        %6254 = vmatpush.bf16.xpose.msra.mxu0 0
        %6255 = vmatpush.bf16.xpose.msra.mxu0 0
        %6256 = vmatpush.bf16.xpose.msra.mxu0 0
        %6257 = vmatpush.bf16.xpose.msra.mxu0 0
        %6258 = vmatpush.bf16.xpose.msra.mxu0 %v3786
        %6259 = vmatpush.bf16.xpose.msra.mxu0 %v3492
        %6260 = vmatmul.bf16.gmra.mxu0 %v1100
        %v6261 = vpop.f32.mrf.mxu0
        %v6262 = vadd.f32 %v6249, %v6261
        %v6263 = vpop.f32.mrf.mxu0
        %6264 = vdwg.mxu0
        %6265 = vmatpush.bf16.xpose.msra.mxu0 0
        %6266 = vmatpush.bf16.xpose.msra.mxu0 0
        %6267 = vmatpush.bf16.xpose.msra.mxu0 0
        %6268 = vmatpush.bf16.xpose.msra.mxu0 0
        %6269 = vmatpush.bf16.xpose.msra.mxu0 0
        %6270 = vmatpush.bf16.xpose.msra.mxu0 0
        %6271 = vmatpush.bf16.xpose.msra.mxu0 %v3787
        %6272 = vmatpush.bf16.xpose.msra.mxu0 %v3493
        %6273 = vmatmul.bf16.gmra.mxu0 %v1101
        %v6274 = vpop.f32.mrf.mxu0
        %v6275 = vadd.f32 %v6262, %v6274
        %v6276 = vpop.f32.mrf.mxu0
        %6277 = vdwg.mxu0
        %6278 = vmatpush.bf16.xpose.msra.mxu0 0
        %6279 = vmatpush.bf16.xpose.msra.mxu0 0
        %6280 = vmatpush.bf16.xpose.msra.mxu0 0
        %6281 = vmatpush.bf16.xpose.msra.mxu0 0
        %6282 = vmatpush.bf16.xpose.msra.mxu0 0
        %6283 = vmatpush.bf16.xpose.msra.mxu0 0
        %6284 = vmatpush.bf16.xpose.msra.mxu0 %v3788
        %6285 = vmatpush.bf16.xpose.msra.mxu0 %v3494
        %6286 = vmatmul.bf16.gmra.mxu0 %v1102
        %v6287 = vpop.f32.mrf.mxu0
        %v6288 = vadd.f32 %v6275, %v6287
        %v6289 = vpop.f32.mrf.mxu0
        %6290 = vdwg.mxu0
        %6291 = vmatpush.bf16.xpose.msra.mxu0 0
        %6292 = vmatpush.bf16.xpose.msra.mxu0 0
        %6293 = vmatpush.bf16.xpose.msra.mxu0 0
        %6294 = vmatpush.bf16.xpose.msra.mxu0 0
        %6295 = vmatpush.bf16.xpose.msra.mxu0 0
        %6296 = vmatpush.bf16.xpose.msra.mxu0 0
        %6297 = vmatpush.bf16.xpose.msra.mxu0 %v3789
        %6298 = vmatpush.bf16.xpose.msra.mxu0 %v3495
        %6299 = vmatmul.bf16.gmra.mxu0 %v1103
        %v6300 = vpop.f32.mrf.mxu0
        %v6301 = vadd.f32 %v6288, %v6300
        %v6302 = vpop.f32.mrf.mxu0
        %6303 = vdwg.mxu0
        %6304 = vmatpush.bf16.xpose.msra.mxu0 0
        %6305 = vmatpush.bf16.xpose.msra.mxu0 0
        %6306 = vmatpush.bf16.xpose.msra.mxu0 0
        %6307 = vmatpush.bf16.xpose.msra.mxu0 0
        %6308 = vmatpush.bf16.xpose.msra.mxu0 0
        %6309 = vmatpush.bf16.xpose.msra.mxu0 0
        %6310 = vmatpush.bf16.xpose.msra.mxu0 %v3790
        %6311 = vmatpush.bf16.xpose.msra.mxu0 %v3496
        %6312 = vmatmul.bf16.gmra.mxu0 %v1106
        %v6313 = vpop.f32.mrf.mxu0
        %v6314 = vadd.f32 %v6301, %v6313
        %v6315 = vpop.f32.mrf.mxu0
        %6316 = vdwg.mxu0
        %6317 = vmatpush.bf16.xpose.msra.mxu0 0
        %6318 = vmatpush.bf16.xpose.msra.mxu0 0
        %6319 = vmatpush.bf16.xpose.msra.mxu0 0
        %6320 = vmatpush.bf16.xpose.msra.mxu0 0
        %6321 = vmatpush.bf16.xpose.msra.mxu0 0
        %6322 = vmatpush.bf16.xpose.msra.mxu0 0
        %6323 = vmatpush.bf16.xpose.msra.mxu0 %v3791
        %6324 = vmatpush.bf16.xpose.msra.mxu0 %v3497
        %6325 = vmatmul.bf16.gmra.mxu0 %v1107
        %v6326 = vpop.f32.mrf.mxu0
        %v6327 = vadd.f32 %v6314, %v6326
        %v6328 = vpop.f32.mrf.mxu0
        %6329 = vdwg.mxu0
        %6330 = vmatpush.bf16.xpose.msra.mxu0 0
        %6331 = vmatpush.bf16.xpose.msra.mxu0 0
        %6332 = vmatpush.bf16.xpose.msra.mxu0 0
        %6333 = vmatpush.bf16.xpose.msra.mxu0 0
        %6334 = vmatpush.bf16.xpose.msra.mxu0 0
        %6335 = vmatpush.bf16.xpose.msra.mxu0 0
        %6336 = vmatpush.bf16.xpose.msra.mxu0 %v3792
        %6337 = vmatpush.bf16.xpose.msra.mxu0 %v3498
        %6338 = vmatmul.bf16.gmra.mxu0 %v1108
        %v6339 = vpop.f32.mrf.mxu0
        %v6340 = vadd.f32 %v6327, %v6339
        %v6341 = vpop.f32.mrf.mxu0
        %6342 = vdwg.mxu0
        %6343 = vmatpush.bf16.xpose.msra.mxu0 0
        %6344 = vmatpush.bf16.xpose.msra.mxu0 0
        %6345 = vmatpush.bf16.xpose.msra.mxu0 0
        %6346 = vmatpush.bf16.xpose.msra.mxu0 0
        %6347 = vmatpush.bf16.xpose.msra.mxu0 0
        %6348 = vmatpush.bf16.xpose.msra.mxu0 0
        %6349 = vmatpush.bf16.xpose.msra.mxu0 %v3793
        %6350 = vmatpush.bf16.xpose.msra.mxu0 %v3499
        %6351 = vmatmul.bf16.gmra.mxu0 %v1109
        %v6352 = vpop.f32.mrf.mxu0
        %v6353 = vadd.f32 %v6340, %v6352
        %v6354 = vpop.f32.mrf.mxu0
        %6355 = vdwg.mxu0
        %6356 = vmatpush.bf16.xpose.msra.mxu0 0
        %6357 = vmatpush.bf16.xpose.msra.mxu0 0
        %6358 = vmatpush.bf16.xpose.msra.mxu0 0
        %6359 = vmatpush.bf16.xpose.msra.mxu0 0
        %6360 = vmatpush.bf16.xpose.msra.mxu0 0
        %6361 = vmatpush.bf16.xpose.msra.mxu0 0
        %6362 = vmatpush.bf16.xpose.msra.mxu0 %v3794
        %6363 = vmatpush.bf16.xpose.msra.mxu0 %v3500
        %6364 = vmatmul.bf16.gmra.mxu0 %v1110
        %v6365 = vpop.f32.mrf.mxu0
        %v6366 = vadd.f32 %v6353, %v6365
        %v6367 = vpop.f32.mrf.mxu0
        %6368 = vdwg.mxu0
        %6369 = vmatpush.bf16.xpose.msra.mxu0 0
        %6370 = vmatpush.bf16.xpose.msra.mxu0 0
        %6371 = vmatpush.bf16.xpose.msra.mxu0 0
        %6372 = vmatpush.bf16.xpose.msra.mxu0 0
        %6373 = vmatpush.bf16.xpose.msra.mxu0 0
        %6374 = vmatpush.bf16.xpose.msra.mxu0 0
        %6375 = vmatpush.bf16.xpose.msra.mxu0 %v3795
        %6376 = vmatpush.bf16.xpose.msra.mxu0 %v3501
        %6377 = vmatmul.bf16.gmra.mxu0 %v1111
        %v6378 = vpop.f32.mrf.mxu0
        %v6379 = vadd.f32 %v6366, %v6378
        %v6380 = vpop.f32.mrf.mxu0
        %6381 = vdwg.mxu0
        %6382 = vmatpush.bf16.xpose.msra.mxu0 0
        %6383 = vmatpush.bf16.xpose.msra.mxu0 0
        %6384 = vmatpush.bf16.xpose.msra.mxu0 0
        %6385 = vmatpush.bf16.xpose.msra.mxu0 0
        %6386 = vmatpush.bf16.xpose.msra.mxu0 0
        %6387 = vmatpush.bf16.xpose.msra.mxu0 0
        %6388 = vmatpush.bf16.xpose.msra.mxu0 %v3796
        %6389 = vmatpush.bf16.xpose.msra.mxu0 %v3502
        %6390 = vmatmul.bf16.gmra.mxu0 %v1112
        %v6391 = vpop.f32.mrf.mxu0
        %v6392 = vadd.f32 %v6379, %v6391
        %v6393 = vpop.f32.mrf.mxu0
        %6394 = vdwg.mxu0
        %6395 = vmatpush.bf16.xpose.msra.mxu0 0
        %6396 = vmatpush.bf16.xpose.msra.mxu0 0
        %6397 = vmatpush.bf16.xpose.msra.mxu0 0
        %6398 = vmatpush.bf16.xpose.msra.mxu0 0
        %6399 = vmatpush.bf16.xpose.msra.mxu0 0
        %6400 = vmatpush.bf16.xpose.msra.mxu0 0
        %6401 = vmatpush.bf16.xpose.msra.mxu0 %v3797
        %6402 = vmatpush.bf16.xpose.msra.mxu0 %v3503
        %6403 = vmatmul.bf16.gmra.mxu0 %v1113
        %v6404 = vpop.f32.mrf.mxu0
        %v6405 = vadd.f32 %v6392, %v6404
        %v6406 = vpop.f32.mrf.mxu0
        %6407 = vdwg.mxu0
        %6408 = vmatpush.bf16.xpose.msra.mxu0 0
        %6409 = vmatpush.bf16.xpose.msra.mxu0 0
        %6410 = vmatpush.bf16.xpose.msra.mxu0 0
        %6411 = vmatpush.bf16.xpose.msra.mxu0 0
        %6412 = vmatpush.bf16.xpose.msra.mxu0 0
        %6413 = vmatpush.bf16.xpose.msra.mxu0 0
        %6414 = vmatpush.bf16.xpose.msra.mxu0 %v3798
        %6415 = vmatpush.bf16.xpose.msra.mxu0 %v3504
        %6416 = vmatmul.bf16.gmra.mxu0 %v1116
        %v6417 = vpop.f32.mrf.mxu0
        %v6418 = vadd.f32 %v6405, %v6417
        %v6419 = vpop.f32.mrf.mxu0
        %6420 = vdwg.mxu0
        %6421 = vmatpush.bf16.xpose.msra.mxu0 0
        %6422 = vmatpush.bf16.xpose.msra.mxu0 0
        %6423 = vmatpush.bf16.xpose.msra.mxu0 0
        %6424 = vmatpush.bf16.xpose.msra.mxu0 0
        %6425 = vmatpush.bf16.xpose.msra.mxu0 0
        %6426 = vmatpush.bf16.xpose.msra.mxu0 0
        %6427 = vmatpush.bf16.xpose.msra.mxu0 %v3799
        %6428 = vmatpush.bf16.xpose.msra.mxu0 %v3505
        %6429 = vmatmul.bf16.gmra.mxu0 %v1117
        %v6430 = vpop.f32.mrf.mxu0
        %v6431 = vadd.f32 %v6418, %v6430
        %v6432 = vpop.f32.mrf.mxu0
        %6433 = vdwg.mxu0
        %6434 = vmatpush.bf16.xpose.msra.mxu0 0
        %6435 = vmatpush.bf16.xpose.msra.mxu0 0
        %6436 = vmatpush.bf16.xpose.msra.mxu0 0
        %6437 = vmatpush.bf16.xpose.msra.mxu0 0
        %6438 = vmatpush.bf16.xpose.msra.mxu0 0
        %6439 = vmatpush.bf16.xpose.msra.mxu0 0
        %6440 = vmatpush.bf16.xpose.msra.mxu0 %v3800
        %6441 = vmatpush.bf16.xpose.msra.mxu0 %v3506
        %6442 = vmatmul.bf16.gmra.mxu0 %v1118
        %v6443 = vpop.f32.mrf.mxu0
        %v6444 = vadd.f32 %v6431, %v6443
        %v6445 = vpop.f32.mrf.mxu0
        %6446 = vdwg.mxu0
        %6447 = vmatpush.bf16.xpose.msra.mxu0 0
        %6448 = vmatpush.bf16.xpose.msra.mxu0 0
        %6449 = vmatpush.bf16.xpose.msra.mxu0 0
        %6450 = vmatpush.bf16.xpose.msra.mxu0 0
        %6451 = vmatpush.bf16.xpose.msra.mxu0 0
        %6452 = vmatpush.bf16.xpose.msra.mxu0 0
        %6453 = vmatpush.bf16.xpose.msra.mxu0 %v3801
        %6454 = vmatpush.bf16.xpose.msra.mxu0 %v3507
        %6455 = vmatmul.bf16.gmra.mxu0 %v1119
        %v6456 = vpop.f32.mrf.mxu0
        %v6457 = vadd.f32 %v6444, %v6456
        %v6458 = vpop.f32.mrf.mxu0
        %6459 = vdwg.mxu0
        %6460 = vmatpush.bf16.xpose.msra.mxu0 0
        %6461 = vmatpush.bf16.xpose.msra.mxu0 0
        %6462 = vmatpush.bf16.xpose.msra.mxu0 0
        %6463 = vmatpush.bf16.xpose.msra.mxu0 0
        %6464 = vmatpush.bf16.xpose.msra.mxu0 0
        %6465 = vmatpush.bf16.xpose.msra.mxu0 0
        %6466 = vmatpush.bf16.xpose.msra.mxu0 %v3802
        %6467 = vmatpush.bf16.xpose.msra.mxu0 %v3508
        %6468 = vmatmul.bf16.gmra.mxu0 %v1120
        %v6469 = vpop.f32.mrf.mxu0
        %v6470 = vadd.f32 %v6457, %v6469
        %v6471 = vpop.f32.mrf.mxu0
        %6472 = vdwg.mxu0
        %6473 = vmatpush.bf16.xpose.msra.mxu0 0
        %6474 = vmatpush.bf16.xpose.msra.mxu0 0
        %6475 = vmatpush.bf16.xpose.msra.mxu0 0
        %6476 = vmatpush.bf16.xpose.msra.mxu0 0
        %6477 = vmatpush.bf16.xpose.msra.mxu0 0
        %6478 = vmatpush.bf16.xpose.msra.mxu0 0
        %6479 = vmatpush.bf16.xpose.msra.mxu0 %v3803
        %6480 = vmatpush.bf16.xpose.msra.mxu0 %v3509
        %6481 = vmatmul.bf16.gmra.mxu0 %v1121
        %v6482 = vpop.f32.mrf.mxu0
        %v6483 = vadd.f32 %v6470, %v6482
        %v6484 = vpop.f32.mrf.mxu0
        %6485 = vdwg.mxu0
        %6486 = vmatpush.bf16.xpose.msra.mxu0 0
        %6487 = vmatpush.bf16.xpose.msra.mxu0 0
        %6488 = vmatpush.bf16.xpose.msra.mxu0 0
        %6489 = vmatpush.bf16.xpose.msra.mxu0 0
        %6490 = vmatpush.bf16.xpose.msra.mxu0 0
        %6491 = vmatpush.bf16.xpose.msra.mxu0 0
        %6492 = vmatpush.bf16.xpose.msra.mxu0 %v3804
        %6493 = vmatpush.bf16.xpose.msra.mxu0 %v3510
        %6494 = vmatmul.bf16.gmra.mxu0 %v1122
        %v6495 = vpop.f32.mrf.mxu0
        %v6496 = vadd.f32 %v6483, %v6495
        %v6497 = vpop.f32.mrf.mxu0
        %6498 = vdwg.mxu0
        %6499 = vmatpush.bf16.xpose.msra.mxu0 0
        %6500 = vmatpush.bf16.xpose.msra.mxu0 0
        %6501 = vmatpush.bf16.xpose.msra.mxu0 0
        %6502 = vmatpush.bf16.xpose.msra.mxu0 0
        %6503 = vmatpush.bf16.xpose.msra.mxu0 0
        %6504 = vmatpush.bf16.xpose.msra.mxu0 0
        %6505 = vmatpush.bf16.xpose.msra.mxu0 %v3805
        %6506 = vmatpush.bf16.xpose.msra.mxu0 %v3511
        %6507 = vmatmul.bf16.gmra.mxu0 %v1123
        %v6508 = vpop.f32.mrf.mxu0
        %v6509 = vadd.f32 %v6496, %v6508
        %v6510 = vpop.f32.mrf.mxu0
        %6511 = vdwg.mxu0
        %6512 = vmatpush.bf16.xpose.msra.mxu0 0
        %6513 = vmatpush.bf16.xpose.msra.mxu0 0
        %6514 = vmatpush.bf16.xpose.msra.mxu0 0
        %6515 = vmatpush.bf16.xpose.msra.mxu0 0
        %6516 = vmatpush.bf16.xpose.msra.mxu0 0
        %6517 = vmatpush.bf16.xpose.msra.mxu0 0
        %6518 = vmatpush.bf16.xpose.msra.mxu0 %v3806
        %6519 = vmatpush.bf16.xpose.msra.mxu0 %v3512
        %6520 = vmatmul.bf16.gmra.mxu0 %v1126
        %v6521 = vpop.f32.mrf.mxu0
        %v6522 = vadd.f32 %v6509, %v6521
        %v6523 = vpop.f32.mrf.mxu0
        %6524 = vdwg.mxu0
        %6525 = vmatpush.bf16.xpose.msra.mxu0 0
        %6526 = vmatpush.bf16.xpose.msra.mxu0 0
        %6527 = vmatpush.bf16.xpose.msra.mxu0 0
        %6528 = vmatpush.bf16.xpose.msra.mxu0 0
        %6529 = vmatpush.bf16.xpose.msra.mxu0 0
        %6530 = vmatpush.bf16.xpose.msra.mxu0 0
        %6531 = vmatpush.bf16.xpose.msra.mxu0 %v3807
        %6532 = vmatpush.bf16.xpose.msra.mxu0 %v3513
        %6533 = vmatmul.bf16.gmra.mxu0 %v1127
        %v6534 = vpop.f32.mrf.mxu0
        %v6535 = vadd.f32 %v6522, %v6534
        %v6536 = vpop.f32.mrf.mxu0
        %6537 = vdwg.mxu0
        %6538 = vmatpush.bf16.xpose.msra.mxu0 0
        %6539 = vmatpush.bf16.xpose.msra.mxu0 0
        %6540 = vmatpush.bf16.xpose.msra.mxu0 0
        %6541 = vmatpush.bf16.xpose.msra.mxu0 0
        %6542 = vmatpush.bf16.xpose.msra.mxu0 0
        %6543 = vmatpush.bf16.xpose.msra.mxu0 0
        %6544 = vmatpush.bf16.xpose.msra.mxu0 %v3808
        %6545 = vmatpush.bf16.xpose.msra.mxu0 %v3514
        %6546 = vmatmul.bf16.gmra.mxu0 %v1128
        %v6547 = vpop.f32.mrf.mxu0
        %v6548 = vadd.f32 %v6535, %v6547
        %v6549 = vpop.f32.mrf.mxu0
        %6550 = vdwg.mxu0
        %6551 = vmatpush.bf16.xpose.msra.mxu0 0
        %6552 = vmatpush.bf16.xpose.msra.mxu0 0
        %6553 = vmatpush.bf16.xpose.msra.mxu0 0
        %6554 = vmatpush.bf16.xpose.msra.mxu0 0
        %6555 = vmatpush.bf16.xpose.msra.mxu0 0
        %6556 = vmatpush.bf16.xpose.msra.mxu0 0
        %6557 = vmatpush.bf16.xpose.msra.mxu0 %v3809
        %6558 = vmatpush.bf16.xpose.msra.mxu0 %v3515
        %6559 = vmatmul.bf16.gmra.mxu0 %v1129
        %v6560 = vpop.f32.mrf.mxu0
        %v6561 = vadd.f32 %v6548, %v6560
        %v6562 = vpop.f32.mrf.mxu0
        %6563 = vdwg.mxu0
        %6564 = vmatpush.bf16.xpose.msra.mxu0 0
        %6565 = vmatpush.bf16.xpose.msra.mxu0 0
        %6566 = vmatpush.bf16.xpose.msra.mxu0 0
        %6567 = vmatpush.bf16.xpose.msra.mxu0 0
        %6568 = vmatpush.bf16.xpose.msra.mxu0 0
        %6569 = vmatpush.bf16.xpose.msra.mxu0 0
        %6570 = vmatpush.bf16.xpose.msra.mxu0 %v3810
        %6571 = vmatpush.bf16.xpose.msra.mxu0 %v3516
        %6572 = vmatmul.bf16.gmra.mxu0 %v1130
        %v6573 = vpop.f32.mrf.mxu0
        %v6574 = vadd.f32 %v6561, %v6573
        %v6575 = vpop.f32.mrf.mxu0
        %6576 = vdwg.mxu0
        %6577 = vmatpush.bf16.xpose.msra.mxu0 0
        %6578 = vmatpush.bf16.xpose.msra.mxu0 0
        %6579 = vmatpush.bf16.xpose.msra.mxu0 0
        %6580 = vmatpush.bf16.xpose.msra.mxu0 0
        %6581 = vmatpush.bf16.xpose.msra.mxu0 0
        %6582 = vmatpush.bf16.xpose.msra.mxu0 0
        %6583 = vmatpush.bf16.xpose.msra.mxu0 %v3811
        %6584 = vmatpush.bf16.xpose.msra.mxu0 %v3517
        %6585 = vmatmul.bf16.gmra.mxu0 %v1131
        %v6586 = vpop.f32.mrf.mxu0
        %v6587 = vadd.f32 %v6574, %v6586
        %v6588 = vpop.f32.mrf.mxu0
        %6589 = vdwg.mxu0
        %6590 = vmatpush.bf16.xpose.msra.mxu0 0
        %6591 = vmatpush.bf16.xpose.msra.mxu0 0
        %6592 = vmatpush.bf16.xpose.msra.mxu0 0
        %6593 = vmatpush.bf16.xpose.msra.mxu0 0
        %6594 = vmatpush.bf16.xpose.msra.mxu0 0
        %6595 = vmatpush.bf16.xpose.msra.mxu0 0
        %6596 = vmatpush.bf16.xpose.msra.mxu0 %v3812
        %6597 = vmatpush.bf16.xpose.msra.mxu0 %v3518
        %6598 = vmatmul.bf16.gmra.mxu0 %v1132
        %v6599 = vpop.f32.mrf.mxu0
        %v6600 = vadd.f32 %v6587, %v6599
        %v6601 = vpop.f32.mrf.mxu0
        %6602 = vdwg.mxu0
        %6603 = vmatpush.bf16.xpose.msra.mxu0 0
        %6604 = vmatpush.bf16.xpose.msra.mxu0 0
        %6605 = vmatpush.bf16.xpose.msra.mxu0 0
        %6606 = vmatpush.bf16.xpose.msra.mxu0 0
        %6607 = vmatpush.bf16.xpose.msra.mxu0 0
        %6608 = vmatpush.bf16.xpose.msra.mxu0 0
        %6609 = vmatpush.bf16.xpose.msra.mxu0 %v3813
        %6610 = vmatpush.bf16.xpose.msra.mxu0 %v3519
        %6611 = vmatmul.bf16.gmra.mxu0 %v1133
        %v6612 = vpop.f32.mrf.mxu0
        %v6613 = vadd.f32 %v6600, %v6612
        %v6614 = vpop.f32.mrf.mxu0
        %6615 = vdwg.mxu0
        %6616 = vmatpush.bf16.xpose.msra.mxu0 0
        %6617 = vmatpush.bf16.xpose.msra.mxu0 0
        %6618 = vmatpush.bf16.xpose.msra.mxu0 0
        %6619 = vmatpush.bf16.xpose.msra.mxu0 0
        %6620 = vmatpush.bf16.xpose.msra.mxu0 0
        %6621 = vmatpush.bf16.xpose.msra.mxu0 0
        %6622 = vmatpush.bf16.xpose.msra.mxu0 %v3814
        %6623 = vmatpush.bf16.xpose.msra.mxu0 %v3520
        %6624 = vmatmul.bf16.gmra.mxu0 %v1136
        %v6625 = vpop.f32.mrf.mxu0
        %v6626 = vadd.f32 %v6613, %v6625
        %v6627 = vpop.f32.mrf.mxu0
        %6628 = vdwg.mxu0
        %6629 = vmatpush.bf16.xpose.msra.mxu0 0
        %6630 = vmatpush.bf16.xpose.msra.mxu0 0
        %6631 = vmatpush.bf16.xpose.msra.mxu0 0
        %6632 = vmatpush.bf16.xpose.msra.mxu0 0
        %6633 = vmatpush.bf16.xpose.msra.mxu0 0
        %6634 = vmatpush.bf16.xpose.msra.mxu0 0
        %6635 = vmatpush.bf16.xpose.msra.mxu0 %v3815
        %6636 = vmatpush.bf16.xpose.msra.mxu0 %v3521
        %6637 = vmatmul.bf16.gmra.mxu0 %v1137
        %v6638 = vpop.f32.mrf.mxu0
        %v6639 = vadd.f32 %v6626, %v6638
        %v6640 = vpop.f32.mrf.mxu0
        %6641 = vdwg.mxu0
        %6642 = vmatpush.bf16.xpose.msra.mxu0 0
        %6643 = vmatpush.bf16.xpose.msra.mxu0 0
        %6644 = vmatpush.bf16.xpose.msra.mxu0 0
        %6645 = vmatpush.bf16.xpose.msra.mxu0 0
        %6646 = vmatpush.bf16.xpose.msra.mxu0 0
        %6647 = vmatpush.bf16.xpose.msra.mxu0 0
        %6648 = vmatpush.bf16.xpose.msra.mxu0 %v3816
        %6649 = vmatpush.bf16.xpose.msra.mxu0 %v3522
        %6650 = vmatmul.bf16.gmra.mxu0 %v1138
        %v6651 = vpop.f32.mrf.mxu0
        %v6652 = vadd.f32 %v6639, %v6651
        %v6653 = vpop.f32.mrf.mxu0
        %6654 = vdwg.mxu0
        %6655 = vmatpush.bf16.xpose.msra.mxu0 0
        %6656 = vmatpush.bf16.xpose.msra.mxu0 0
        %6657 = vmatpush.bf16.xpose.msra.mxu0 0
        %6658 = vmatpush.bf16.xpose.msra.mxu0 0
        %6659 = vmatpush.bf16.xpose.msra.mxu0 0
        %6660 = vmatpush.bf16.xpose.msra.mxu0 0
        %6661 = vmatpush.bf16.xpose.msra.mxu0 %v3817
        %6662 = vmatpush.bf16.xpose.msra.mxu0 %v3523
        %6663 = vmatmul.bf16.gmra.mxu0 %v1139
        %v6664 = vpop.f32.mrf.mxu0
        %v6665 = vadd.f32 %v6652, %v6664
        %v6666 = vpop.f32.mrf.mxu0
        %6667 = vdwg.mxu0
        %6668 = vmatpush.bf16.xpose.msra.mxu0 0
        %6669 = vmatpush.bf16.xpose.msra.mxu0 0
        %6670 = vmatpush.bf16.xpose.msra.mxu0 0
        %6671 = vmatpush.bf16.xpose.msra.mxu0 0
        %6672 = vmatpush.bf16.xpose.msra.mxu0 0
        %6673 = vmatpush.bf16.xpose.msra.mxu0 0
        %6674 = vmatpush.bf16.xpose.msra.mxu0 %v3818
        %6675 = vmatpush.bf16.xpose.msra.mxu0 %v3524
        %6676 = vmatmul.bf16.gmra.mxu0 %v1140
        %v6677 = vpop.f32.mrf.mxu0
        %v6678 = vadd.f32 %v6665, %v6677
        %v6679 = vpop.f32.mrf.mxu0
        %6680 = vdwg.mxu0
        %6681 = vmatpush.bf16.xpose.msra.mxu0 0
        %6682 = vmatpush.bf16.xpose.msra.mxu0 0
        %6683 = vmatpush.bf16.xpose.msra.mxu0 0
        %6684 = vmatpush.bf16.xpose.msra.mxu0 0
        %6685 = vmatpush.bf16.xpose.msra.mxu0 0
        %6686 = vmatpush.bf16.xpose.msra.mxu0 0
        %6687 = vmatpush.bf16.xpose.msra.mxu0 %v3819
        %6688 = vmatpush.bf16.xpose.msra.mxu0 %v3525
        %6689 = vmatmul.bf16.gmra.mxu0 %v1141
        %v6690 = vpop.f32.mrf.mxu0
        %v6691 = vadd.f32 %v6678, %v6690
        %v6692 = vpop.f32.mrf.mxu0
        %6693 = vdwg.mxu0
        %6694 = vmatpush.bf16.xpose.msra.mxu0 0
        %6695 = vmatpush.bf16.xpose.msra.mxu0 0
        %6696 = vmatpush.bf16.xpose.msra.mxu0 0
        %6697 = vmatpush.bf16.xpose.msra.mxu0 0
        %6698 = vmatpush.bf16.xpose.msra.mxu0 0
        %6699 = vmatpush.bf16.xpose.msra.mxu0 0
        %6700 = vmatpush.bf16.xpose.msra.mxu0 %v3820
        %6701 = vmatpush.bf16.xpose.msra.mxu0 %v3526
        %6702 = vmatmul.bf16.gmra.mxu0 %v1142
        %v6703 = vpop.f32.mrf.mxu0
        %v6704 = vadd.f32 %v6691, %v6703
        %v6705 = vpop.f32.mrf.mxu0
        %6706 = vdwg.mxu0
        %6707 = vmatpush.bf16.xpose.msra.mxu0 0
        %6708 = vmatpush.bf16.xpose.msra.mxu0 0
        %6709 = vmatpush.bf16.xpose.msra.mxu0 0
        %6710 = vmatpush.bf16.xpose.msra.mxu0 0
        %6711 = vmatpush.bf16.xpose.msra.mxu0 0
        %6712 = vmatpush.bf16.xpose.msra.mxu0 0
        %6713 = vmatpush.bf16.xpose.msra.mxu0 %v3821
        %6714 = vmatpush.bf16.xpose.msra.mxu0 %v3527
        %6715 = vmatmul.bf16.gmra.mxu0 %v1143
        %v6716 = vpop.f32.mrf.mxu0
        %v6717 = vadd.f32 %v6704, %v6716
        %v6718 = vpop.f32.mrf.mxu0
        %6719 = vdwg.mxu0
        %6720 = vmatpush.bf16.xpose.msra.mxu0 0
        %6721 = vmatpush.bf16.xpose.msra.mxu0 0
        %6722 = vmatpush.bf16.xpose.msra.mxu0 0
        %6723 = vmatpush.bf16.xpose.msra.mxu0 0
        %6724 = vmatpush.bf16.xpose.msra.mxu0 0
        %6725 = vmatpush.bf16.xpose.msra.mxu0 0
        %6726 = vmatpush.bf16.xpose.msra.mxu0 %v3822
        %6727 = vmatpush.bf16.xpose.msra.mxu0 %v3528
        %6728 = vmatmul.bf16.gmra.mxu0 %v1146
        %v6729 = vpop.f32.mrf.mxu0
        %v6730 = vadd.f32 %v6717, %v6729
        %v6731 = vpop.f32.mrf.mxu0
        %6732 = vdwg.mxu0
        %6733 = vmatpush.bf16.xpose.msra.mxu0 0
        %6734 = vmatpush.bf16.xpose.msra.mxu0 0
        %6735 = vmatpush.bf16.xpose.msra.mxu0 0
        %6736 = vmatpush.bf16.xpose.msra.mxu0 0
        %6737 = vmatpush.bf16.xpose.msra.mxu0 0
        %6738 = vmatpush.bf16.xpose.msra.mxu0 0
        %6739 = vmatpush.bf16.xpose.msra.mxu0 %v3823
        %6740 = vmatpush.bf16.xpose.msra.mxu0 %v3529
        %6741 = vmatmul.bf16.gmra.mxu0 %v1147
        %v6742 = vpop.f32.mrf.mxu0
        %v6743 = vadd.f32 %v6730, %v6742
        %v6744 = vpop.f32.mrf.mxu0
        %6745 = vdwg.mxu0
        %6746 = vmatpush.bf16.xpose.msra.mxu0 0
        %6747 = vmatpush.bf16.xpose.msra.mxu0 0
        %6748 = vmatpush.bf16.xpose.msra.mxu0 0
        %6749 = vmatpush.bf16.xpose.msra.mxu0 0
        %6750 = vmatpush.bf16.xpose.msra.mxu0 0
        %6751 = vmatpush.bf16.xpose.msra.mxu0 0
        %6752 = vmatpush.bf16.xpose.msra.mxu0 %v3824
        %6753 = vmatpush.bf16.xpose.msra.mxu0 %v3530
        %6754 = vmatmul.bf16.gmra.mxu0 %v1148
        %v6755 = vpop.f32.mrf.mxu0
        %v6756 = vadd.f32 %v6743, %v6755
        %v6757 = vpop.f32.mrf.mxu0
        %6758 = vdwg.mxu0
        %6759 = vmatpush.bf16.xpose.msra.mxu0 0
        %6760 = vmatpush.bf16.xpose.msra.mxu0 0
        %6761 = vmatpush.bf16.xpose.msra.mxu0 0
        %6762 = vmatpush.bf16.xpose.msra.mxu0 0
        %6763 = vmatpush.bf16.xpose.msra.mxu0 0
        %6764 = vmatpush.bf16.xpose.msra.mxu0 0
        %6765 = vmatpush.bf16.xpose.msra.mxu0 %v3825
        %6766 = vmatpush.bf16.xpose.msra.mxu0 %v3531
        %6767 = vmatmul.bf16.gmra.mxu0 %v1149
        %v6768 = vpop.f32.mrf.mxu0
        %v6769 = vadd.f32 %v6756, %v6768
        %v6770 = vpop.f32.mrf.mxu0
        %6771 = vdwg.mxu0
        %6772 = vmatpush.bf16.xpose.msra.mxu0 0
        %6773 = vmatpush.bf16.xpose.msra.mxu0 0
        %6774 = vmatpush.bf16.xpose.msra.mxu0 0
        %6775 = vmatpush.bf16.xpose.msra.mxu0 0
        %6776 = vmatpush.bf16.xpose.msra.mxu0 0
        %6777 = vmatpush.bf16.xpose.msra.mxu0 0
        %6778 = vmatpush.bf16.xpose.msra.mxu0 %v3826
        %6779 = vmatpush.bf16.xpose.msra.mxu0 %v3532
        %6780 = vmatmul.bf16.gmra.mxu0 %v1150
        %v6781 = vpop.f32.mrf.mxu0
        %v6782 = vadd.f32 %v6769, %v6781
        %v6783 = vpop.f32.mrf.mxu0
        %6784 = vdwg.mxu0
        %6785 = vmatpush.bf16.xpose.msra.mxu0 0
        %6786 = vmatpush.bf16.xpose.msra.mxu0 0
        %6787 = vmatpush.bf16.xpose.msra.mxu0 0
        %6788 = vmatpush.bf16.xpose.msra.mxu0 0
        %6789 = vmatpush.bf16.xpose.msra.mxu0 0
        %6790 = vmatpush.bf16.xpose.msra.mxu0 0
        %6791 = vmatpush.bf16.xpose.msra.mxu0 %v3827
        %6792 = vmatpush.bf16.xpose.msra.mxu0 %v3533
        %6793 = vmatmul.bf16.gmra.mxu0 %v1151
        %v6794 = vpop.f32.mrf.mxu0
        %v6795 = vadd.f32 %v6782, %v6794
        %v6796 = vpop.f32.mrf.mxu0
        %6797 = vdwg.mxu0
        %6798 = vmatpush.bf16.xpose.msra.mxu0 0
        %6799 = vmatpush.bf16.xpose.msra.mxu0 0
        %6800 = vmatpush.bf16.xpose.msra.mxu0 0
        %6801 = vmatpush.bf16.xpose.msra.mxu0 0
        %6802 = vmatpush.bf16.xpose.msra.mxu0 0
        %6803 = vmatpush.bf16.xpose.msra.mxu0 0
        %6804 = vmatpush.bf16.xpose.msra.mxu0 %v3828
        %6805 = vmatpush.bf16.xpose.msra.mxu0 %v3534
        %6806 = vmatmul.bf16.gmra.mxu0 %v1152
        %v6807 = vpop.f32.mrf.mxu0
        %v6808 = vadd.f32 %v6795, %v6807
        %v6809 = vpop.f32.mrf.mxu0
        %6810 = vdwg.mxu0
        %6811 = vmatpush.bf16.xpose.msra.mxu0 0
        %6812 = vmatpush.bf16.xpose.msra.mxu0 0
        %6813 = vmatpush.bf16.xpose.msra.mxu0 0
        %6814 = vmatpush.bf16.xpose.msra.mxu0 0
        %6815 = vmatpush.bf16.xpose.msra.mxu0 0
        %6816 = vmatpush.bf16.xpose.msra.mxu0 0
        %6817 = vmatpush.bf16.xpose.msra.mxu0 %v3829
        %6818 = vmatpush.bf16.xpose.msra.mxu0 %v3535
        %6819 = vmatmul.bf16.gmra.mxu0 %v1153
        %v6820 = vpop.f32.mrf.mxu0
        %v6821 = vadd.f32 %v6808, %v6820
        %v6822 = vpop.f32.mrf.mxu0
        %6823 = vdwg.mxu0
        %6824 = vmatpush.bf16.xpose.msra.mxu0 0
        %6825 = vmatpush.bf16.xpose.msra.mxu0 0
        %6826 = vmatpush.bf16.xpose.msra.mxu0 0
        %6827 = vmatpush.bf16.xpose.msra.mxu0 0
        %6828 = vmatpush.bf16.xpose.msra.mxu0 0
        %6829 = vmatpush.bf16.xpose.msra.mxu0 0
        %6830 = vmatpush.bf16.xpose.msra.mxu0 %v3830
        %6831 = vmatpush.bf16.xpose.msra.mxu0 %v3536
        %6832 = vmatmul.bf16.gmra.mxu0 %v1156
        %v6833 = vpop.f32.mrf.mxu0
        %v6834 = vadd.f32 %v6821, %v6833
        %v6835 = vpop.f32.mrf.mxu0
        %6836 = vdwg.mxu0
        %6837 = vmatpush.bf16.xpose.msra.mxu0 0
        %6838 = vmatpush.bf16.xpose.msra.mxu0 0
        %6839 = vmatpush.bf16.xpose.msra.mxu0 0
        %6840 = vmatpush.bf16.xpose.msra.mxu0 0
        %6841 = vmatpush.bf16.xpose.msra.mxu0 0
        %6842 = vmatpush.bf16.xpose.msra.mxu0 0
        %6843 = vmatpush.bf16.xpose.msra.mxu0 %v3831
        %6844 = vmatpush.bf16.xpose.msra.mxu0 %v3537
        %6845 = vmatmul.bf16.gmra.mxu0 %v1157
        %v6846 = vpop.f32.mrf.mxu0
        %v6847 = vadd.f32 %v6834, %v6846
        %v6848 = vpop.f32.mrf.mxu0
        %6849 = vdwg.mxu0
        %6850 = vmatpush.bf16.xpose.msra.mxu0 0
        %6851 = vmatpush.bf16.xpose.msra.mxu0 0
        %6852 = vmatpush.bf16.xpose.msra.mxu0 0
        %6853 = vmatpush.bf16.xpose.msra.mxu0 0
        %6854 = vmatpush.bf16.xpose.msra.mxu0 0
        %6855 = vmatpush.bf16.xpose.msra.mxu0 0
        %6856 = vmatpush.bf16.xpose.msra.mxu0 %v3832
        %6857 = vmatpush.bf16.xpose.msra.mxu0 %v3538
        %6858 = vmatmul.bf16.gmra.mxu0 %v1158
        %v6859 = vpop.f32.mrf.mxu0
        %v6860 = vadd.f32 %v6847, %v6859
        %v6861 = vpop.f32.mrf.mxu0
        %6862 = vdwg.mxu0
        %6863 = vmatpush.bf16.xpose.msra.mxu0 0
        %6864 = vmatpush.bf16.xpose.msra.mxu0 0
        %6865 = vmatpush.bf16.xpose.msra.mxu0 0
        %6866 = vmatpush.bf16.xpose.msra.mxu0 0
        %6867 = vmatpush.bf16.xpose.msra.mxu0 0
        %6868 = vmatpush.bf16.xpose.msra.mxu0 0
        %6869 = vmatpush.bf16.xpose.msra.mxu0 %v3833
        %6870 = vmatpush.bf16.xpose.msra.mxu0 %v3539
        %6871 = vmatmul.bf16.gmra.mxu0 %v1159
        %v6872 = vpop.f32.mrf.mxu0
        %v6873 = vadd.f32 %v6860, %v6872
        %v6874 = vpop.f32.mrf.mxu0
        %6875 = vdwg.mxu0
        %6876 = vmatpush.bf16.xpose.msra.mxu0 0
        %6877 = vmatpush.bf16.xpose.msra.mxu0 0
        %6878 = vmatpush.bf16.xpose.msra.mxu0 0
        %6879 = vmatpush.bf16.xpose.msra.mxu0 0
        %6880 = vmatpush.bf16.xpose.msra.mxu0 0
        %6881 = vmatpush.bf16.xpose.msra.mxu0 0
        %6882 = vmatpush.bf16.xpose.msra.mxu0 %v3834
        %6883 = vmatpush.bf16.xpose.msra.mxu0 %v3540
        %6884 = vmatmul.bf16.gmra.mxu0 %v1160
        %v6885 = vpop.f32.mrf.mxu0
        %v6886 = vadd.f32 %v6873, %v6885
        %v6887 = vpop.f32.mrf.mxu0
        %6888 = vdwg.mxu0
        %6889 = vmatpush.bf16.xpose.msra.mxu0 0
        %6890 = vmatpush.bf16.xpose.msra.mxu0 0
        %6891 = vmatpush.bf16.xpose.msra.mxu0 0
        %6892 = vmatpush.bf16.xpose.msra.mxu0 0
        %6893 = vmatpush.bf16.xpose.msra.mxu0 0
        %6894 = vmatpush.bf16.xpose.msra.mxu0 0
        %6895 = vmatpush.bf16.xpose.msra.mxu0 %v3835
        %6896 = vmatpush.bf16.xpose.msra.mxu0 %v3541
        %6897 = vmatmul.bf16.gmra.mxu0 %v1161
        %v6898 = vpop.f32.mrf.mxu0
        %v6899 = vadd.f32 %v6886, %v6898
        %v6900 = vpop.f32.mrf.mxu0
        %6901 = vdwg.mxu0
        %6902 = vmatpush.bf16.xpose.msra.mxu0 0
        %6903 = vmatpush.bf16.xpose.msra.mxu0 0
        %6904 = vmatpush.bf16.xpose.msra.mxu0 0
        %6905 = vmatpush.bf16.xpose.msra.mxu0 0
        %6906 = vmatpush.bf16.xpose.msra.mxu0 0
        %6907 = vmatpush.bf16.xpose.msra.mxu0 0
        %6908 = vmatpush.bf16.xpose.msra.mxu0 %v3836
        %6909 = vmatpush.bf16.xpose.msra.mxu0 %v3542
        %6910 = vmatmul.bf16.gmra.mxu0 %v1162
        %v6911 = vpop.f32.mrf.mxu0
        %v6912 = vadd.f32 %v6899, %v6911
        %v6913 = vpop.f32.mrf.mxu0
        %6914 = vdwg.mxu0
        %6915 = vmatpush.bf16.xpose.msra.mxu0 0
        %6916 = vmatpush.bf16.xpose.msra.mxu0 0
        %6917 = vmatpush.bf16.xpose.msra.mxu0 0
        %6918 = vmatpush.bf16.xpose.msra.mxu0 0
        %6919 = vmatpush.bf16.xpose.msra.mxu0 0
        %6920 = vmatpush.bf16.xpose.msra.mxu0 0
        %6921 = vmatpush.bf16.xpose.msra.mxu0 %v3837
        %6922 = vmatpush.bf16.xpose.msra.mxu0 %v3543
        %6923 = vmatmul.bf16.gmra.mxu0 %v1163
        %v6924 = vpop.f32.mrf.mxu0
        %v6925 = vadd.f32 %v6912, %v6924
        %v6926 = vpop.f32.mrf.mxu0
        %6927 = vdwg.mxu0
        %6928 = vmatpush.bf16.xpose.msra.mxu0 0
        %6929 = vmatpush.bf16.xpose.msra.mxu0 0
        %6930 = vmatpush.bf16.xpose.msra.mxu0 0
        %6931 = vmatpush.bf16.xpose.msra.mxu0 0
        %6932 = vmatpush.bf16.xpose.msra.mxu0 0
        %6933 = vmatpush.bf16.xpose.msra.mxu0 0
        %6934 = vmatpush.bf16.xpose.msra.mxu0 %v3838
        %6935 = vmatpush.bf16.xpose.msra.mxu0 %v3544
        %6936 = vmatmul.bf16.gmra.mxu0 %v1166
        %v6937 = vpop.f32.mrf.mxu0
        %v6938 = vadd.f32 %v6925, %v6937
        %v6939 = vpop.f32.mrf.mxu0
        %6940 = vdwg.mxu0
        %6941 = vmatpush.bf16.xpose.msra.mxu0 0
        %6942 = vmatpush.bf16.xpose.msra.mxu0 0
        %6943 = vmatpush.bf16.xpose.msra.mxu0 0
        %6944 = vmatpush.bf16.xpose.msra.mxu0 0
        %6945 = vmatpush.bf16.xpose.msra.mxu0 0
        %6946 = vmatpush.bf16.xpose.msra.mxu0 0
        %6947 = vmatpush.bf16.xpose.msra.mxu0 %v3839
        %6948 = vmatpush.bf16.xpose.msra.mxu0 %v3545
        %6949 = vmatmul.bf16.gmra.mxu0 %v1167
        %v6950 = vpop.f32.mrf.mxu0
        %v6951 = vadd.f32 %v6938, %v6950
        %v6952 = vpop.f32.mrf.mxu0
        %6953 = vdwg.mxu0
        %6954 = vmatpush.bf16.xpose.msra.mxu0 0
        %6955 = vmatpush.bf16.xpose.msra.mxu0 0
        %6956 = vmatpush.bf16.xpose.msra.mxu0 0
        %6957 = vmatpush.bf16.xpose.msra.mxu0 0
        %6958 = vmatpush.bf16.xpose.msra.mxu0 0
        %6959 = vmatpush.bf16.xpose.msra.mxu0 0
        %6960 = vmatpush.bf16.xpose.msra.mxu0 %v3840
        %6961 = vmatpush.bf16.xpose.msra.mxu0 %v3546
        %6962 = vmatmul.bf16.gmra.mxu0 %v1168
        %v6963 = vpop.f32.mrf.mxu0
        %v6964 = vadd.f32 %v6951, %v6963
        %v6965 = vpop.f32.mrf.mxu0
        %6966 = vdwg.mxu0
        %6967 = vmatpush.bf16.xpose.msra.mxu0 0
        %6968 = vmatpush.bf16.xpose.msra.mxu0 0
        %6969 = vmatpush.bf16.xpose.msra.mxu0 0
        %6970 = vmatpush.bf16.xpose.msra.mxu0 0
        %6971 = vmatpush.bf16.xpose.msra.mxu0 0
        %6972 = vmatpush.bf16.xpose.msra.mxu0 0
        %6973 = vmatpush.bf16.xpose.msra.mxu0 %v3841
        %6974 = vmatpush.bf16.xpose.msra.mxu0 %v3547
        %6975 = vmatmul.bf16.gmra.mxu0 %v1169
        %v6976 = vpop.f32.mrf.mxu0
        %v6977 = vadd.f32 %v6964, %v6976
        %v6978 = vpop.f32.mrf.mxu0
        %6979 = vdwg.mxu0
        %6980 = vmatpush.bf16.xpose.msra.mxu0 0
        %6981 = vmatpush.bf16.xpose.msra.mxu0 0
        %6982 = vmatpush.bf16.xpose.msra.mxu0 0
        %6983 = vmatpush.bf16.xpose.msra.mxu0 0
        %6984 = vmatpush.bf16.xpose.msra.mxu0 0
        %6985 = vmatpush.bf16.xpose.msra.mxu0 0
        %6986 = vmatpush.bf16.xpose.msra.mxu0 %v3842
        %6987 = vmatpush.bf16.xpose.msra.mxu0 %v3548
        %6988 = vmatmul.bf16.gmra.mxu0 %v1170
        %v6989 = vpop.f32.mrf.mxu0
        %v6990 = vadd.f32 %v6977, %v6989
        %v6991 = vpop.f32.mrf.mxu0
        %6992 = vdwg.mxu0
        %6993 = vmatpush.bf16.xpose.msra.mxu0 0
        %6994 = vmatpush.bf16.xpose.msra.mxu0 0
        %6995 = vmatpush.bf16.xpose.msra.mxu0 0
        %6996 = vmatpush.bf16.xpose.msra.mxu0 0
        %6997 = vmatpush.bf16.xpose.msra.mxu0 0
        %6998 = vmatpush.bf16.xpose.msra.mxu0 0
        %6999 = vmatpush.bf16.xpose.msra.mxu0 %v3843
        %7000 = vmatpush.bf16.xpose.msra.mxu0 %v3549
        %7001 = vmatmul.bf16.gmra.mxu0 %v1171
        %v7002 = vpop.f32.mrf.mxu0
        %v7003 = vadd.f32 %v6990, %v7002
        %v7004 = vpop.f32.mrf.mxu0
        %7005 = vdwg.mxu0
        %7006 = vmatpush.bf16.xpose.msra.mxu0 0
        %7007 = vmatpush.bf16.xpose.msra.mxu0 0
        %7008 = vmatpush.bf16.xpose.msra.mxu0 0
        %7009 = vmatpush.bf16.xpose.msra.mxu0 0
        %7010 = vmatpush.bf16.xpose.msra.mxu0 0
        %7011 = vmatpush.bf16.xpose.msra.mxu0 0
        %7012 = vmatpush.bf16.xpose.msra.mxu0 %v3844
        %7013 = vmatpush.bf16.xpose.msra.mxu0 %v3550
        %7014 = vmatmul.bf16.gmra.mxu0 %v1172
        %v7015 = vpop.f32.mrf.mxu0
        %v7016 = vadd.f32 %v7003, %v7015
        %v7017 = vpop.f32.mrf.mxu0
        %7018 = vdwg.mxu0
        %7019 = vmatpush.bf16.xpose.msra.mxu0 0
        %7020 = vmatpush.bf16.xpose.msra.mxu0 0
        %7021 = vmatpush.bf16.xpose.msra.mxu0 0
        %7022 = vmatpush.bf16.xpose.msra.mxu0 0
        %7023 = vmatpush.bf16.xpose.msra.mxu0 0
        %7024 = vmatpush.bf16.xpose.msra.mxu0 0
        %7025 = vmatpush.bf16.xpose.msra.mxu0 %v3845
        %7026 = vmatpush.bf16.xpose.msra.mxu0 %v3551
        %7027 = vmatmul.bf16.gmra.mxu0 %v1173
        %v7028 = vpop.f32.mrf.mxu0
        %v7029 = vadd.f32 %v7016, %v7028
        %v7030 = vpop.f32.mrf.mxu0
        %7031 = vdwg.mxu0
        %7032 = vmatpush.bf16.xpose.msra.mxu0 0
        %7033 = vmatpush.bf16.xpose.msra.mxu0 0
        %7034 = vmatpush.bf16.xpose.msra.mxu0 0
        %7035 = vmatpush.bf16.xpose.msra.mxu0 0
        %7036 = vmatpush.bf16.xpose.msra.mxu0 0
        %7037 = vmatpush.bf16.xpose.msra.mxu0 0
        %7038 = vmatpush.bf16.xpose.msra.mxu0 %v3846
        %7039 = vmatpush.bf16.xpose.msra.mxu0 %v3552
        %7040 = vmatmul.bf16.gmra.mxu0 %v1176
        %v7041 = vpop.f32.mrf.mxu0
        %v7042 = vadd.f32 %v7029, %v7041
        %v7043 = vpop.f32.mrf.mxu0
        %7044 = vdwg.mxu0
        %7045 = vmatpush.bf16.xpose.msra.mxu0 0
        %7046 = vmatpush.bf16.xpose.msra.mxu0 0
        %7047 = vmatpush.bf16.xpose.msra.mxu0 0
        %7048 = vmatpush.bf16.xpose.msra.mxu0 0
        %7049 = vmatpush.bf16.xpose.msra.mxu0 0
        %7050 = vmatpush.bf16.xpose.msra.mxu0 0
        %7051 = vmatpush.bf16.xpose.msra.mxu0 %v3847
        %7052 = vmatpush.bf16.xpose.msra.mxu0 %v3553
        %7053 = vmatmul.bf16.gmra.mxu0 %v1177
        %v7054 = vpop.f32.mrf.mxu0
        %v7055 = vadd.f32 %v7042, %v7054
        %v7056 = vpop.f32.mrf.mxu0
        %7057 = vdwg.mxu0
        %7058 = vmatpush.bf16.xpose.msra.mxu0 0
        %7059 = vmatpush.bf16.xpose.msra.mxu0 0
        %7060 = vmatpush.bf16.xpose.msra.mxu0 0
        %7061 = vmatpush.bf16.xpose.msra.mxu0 0
        %7062 = vmatpush.bf16.xpose.msra.mxu0 0
        %7063 = vmatpush.bf16.xpose.msra.mxu0 0
        %7064 = vmatpush.bf16.xpose.msra.mxu0 %v3848
        %7065 = vmatpush.bf16.xpose.msra.mxu0 %v3554
        %7066 = vmatmul.bf16.gmra.mxu0 %v1178
        %v7067 = vpop.f32.mrf.mxu0
        %v7068 = vadd.f32 %v7055, %v7067
        %v7069 = vpop.f32.mrf.mxu0
        %7070 = vdwg.mxu0
        %7071 = vmatpush.bf16.xpose.msra.mxu0 0
        %7072 = vmatpush.bf16.xpose.msra.mxu0 0
        %7073 = vmatpush.bf16.xpose.msra.mxu0 0
        %7074 = vmatpush.bf16.xpose.msra.mxu0 0
        %7075 = vmatpush.bf16.xpose.msra.mxu0 0
        %7076 = vmatpush.bf16.xpose.msra.mxu0 0
        %7077 = vmatpush.bf16.xpose.msra.mxu0 %v3849
        %7078 = vmatpush.bf16.xpose.msra.mxu0 %v3555
        %7079 = vmatmul.bf16.gmra.mxu0 %v1179
        %v7080 = vpop.f32.mrf.mxu0
        %v7081 = vadd.f32 %v7068, %v7080
        %v7082 = vpop.f32.mrf.mxu0
        %7083 = vdwg.mxu0
        %7084 = vmatpush.bf16.xpose.msra.mxu0 0
        %7085 = vmatpush.bf16.xpose.msra.mxu0 0
        %7086 = vmatpush.bf16.xpose.msra.mxu0 0
        %7087 = vmatpush.bf16.xpose.msra.mxu0 0
        %7088 = vmatpush.bf16.xpose.msra.mxu0 0
        %7089 = vmatpush.bf16.xpose.msra.mxu0 0
        %7090 = vmatpush.bf16.xpose.msra.mxu0 %v3850
        %7091 = vmatpush.bf16.xpose.msra.mxu0 %v3556
        %7092 = vmatmul.bf16.gmra.mxu0 %v1180
        %v7093 = vpop.f32.mrf.mxu0
        %v7094 = vadd.f32 %v7081, %v7093
        %v7095 = vpop.f32.mrf.mxu0
        %7096 = vdwg.mxu0
        %7097 = vmatpush.bf16.xpose.msra.mxu0 0
        %7098 = vmatpush.bf16.xpose.msra.mxu0 0
        %7099 = vmatpush.bf16.xpose.msra.mxu0 0
        %7100 = vmatpush.bf16.xpose.msra.mxu0 0
        %7101 = vmatpush.bf16.xpose.msra.mxu0 0
        %7102 = vmatpush.bf16.xpose.msra.mxu0 0
        %7103 = vmatpush.bf16.xpose.msra.mxu0 %v3851
        %7104 = vmatpush.bf16.xpose.msra.mxu0 %v3557
        %7105 = vmatmul.bf16.gmra.mxu0 %v1181
        %v7106 = vpop.f32.mrf.mxu0
        %v7107 = vadd.f32 %v7094, %v7106
        %v7108 = vpop.f32.mrf.mxu0
        %7109 = vdwg.mxu0
        %7110 = vmatpush.bf16.xpose.msra.mxu0 0
        %7111 = vmatpush.bf16.xpose.msra.mxu0 0
        %7112 = vmatpush.bf16.xpose.msra.mxu0 0
        %7113 = vmatpush.bf16.xpose.msra.mxu0 0
        %7114 = vmatpush.bf16.xpose.msra.mxu0 0
        %7115 = vmatpush.bf16.xpose.msra.mxu0 0
        %7116 = vmatpush.bf16.xpose.msra.mxu0 %v3852
        %7117 = vmatpush.bf16.xpose.msra.mxu0 %v3558
        %7118 = vmatmul.bf16.gmra.mxu0 %v1182
        %v7119 = vpop.f32.mrf.mxu0
        %v7120 = vadd.f32 %v7107, %v7119
        %v7121 = vpop.f32.mrf.mxu0
        %7122 = vdwg.mxu0
        %7123 = vmatpush.bf16.xpose.msra.mxu0 0
        %7124 = vmatpush.bf16.xpose.msra.mxu0 0
        %7125 = vmatpush.bf16.xpose.msra.mxu0 0
        %7126 = vmatpush.bf16.xpose.msra.mxu0 0
        %7127 = vmatpush.bf16.xpose.msra.mxu0 0
        %7128 = vmatpush.bf16.xpose.msra.mxu0 0
        %7129 = vmatpush.bf16.xpose.msra.mxu0 %v3853
        %7130 = vmatpush.bf16.xpose.msra.mxu0 %v3559
        %7131 = vmatmul.bf16.gmra.mxu0 %v1183
        %v7132 = vpop.f32.mrf.mxu0
        %v7133 = vadd.f32 %v7120, %v7132
        %v7134 = vpop.f32.mrf.mxu0
        %7135 = vdwg.mxu0
        %7136 = vmatpush.bf16.xpose.msra.mxu0 0
        %7137 = vmatpush.bf16.xpose.msra.mxu0 0
        %7138 = vmatpush.bf16.xpose.msra.mxu0 0
        %7139 = vmatpush.bf16.xpose.msra.mxu0 0
        %7140 = vmatpush.bf16.xpose.msra.mxu0 0
        %7141 = vmatpush.bf16.xpose.msra.mxu0 0
        %7142 = vmatpush.bf16.xpose.msra.mxu0 %v3854
        %7143 = vmatpush.bf16.xpose.msra.mxu0 %v3560
        %7144 = vmatmul.bf16.gmra.mxu0 %v1186
        %v7145 = vpop.f32.mrf.mxu0
        %v7146 = vadd.f32 %v7133, %v7145
        %v7147 = vpop.f32.mrf.mxu0
        %7148 = vdwg.mxu0
        %7149 = vmatpush.bf16.xpose.msra.mxu0 0
        %7150 = vmatpush.bf16.xpose.msra.mxu0 0
        %7151 = vmatpush.bf16.xpose.msra.mxu0 0
        %7152 = vmatpush.bf16.xpose.msra.mxu0 0
        %7153 = vmatpush.bf16.xpose.msra.mxu0 0
        %7154 = vmatpush.bf16.xpose.msra.mxu0 0
        %7155 = vmatpush.bf16.xpose.msra.mxu0 %v3855
        %7156 = vmatpush.bf16.xpose.msra.mxu0 %v3561
        %7157 = vmatmul.bf16.gmra.mxu0 %v1187
        %v7158 = vpop.f32.mrf.mxu0
        %v7159 = vadd.f32 %v7146, %v7158
        %v7160 = vpop.f32.mrf.mxu0
        %7161 = vdwg.mxu0
        %7162 = vmatpush.bf16.xpose.msra.mxu0 0
        %7163 = vmatpush.bf16.xpose.msra.mxu0 0
        %7164 = vmatpush.bf16.xpose.msra.mxu0 0
        %7165 = vmatpush.bf16.xpose.msra.mxu0 0
        %7166 = vmatpush.bf16.xpose.msra.mxu0 0
        %7167 = vmatpush.bf16.xpose.msra.mxu0 0
        %7168 = vmatpush.bf16.xpose.msra.mxu0 %v3856
        %7169 = vmatpush.bf16.xpose.msra.mxu0 %v3562
        %7170 = vmatmul.bf16.gmra.mxu0 %v1188
        %v7171 = vpop.f32.mrf.mxu0
        %v7172 = vadd.f32 %v7159, %v7171
        %v7173 = vpop.f32.mrf.mxu0
        %7174 = vdwg.mxu0
        %7175 = vmatpush.bf16.xpose.msra.mxu0 0
        %7176 = vmatpush.bf16.xpose.msra.mxu0 0
        %7177 = vmatpush.bf16.xpose.msra.mxu0 0
        %7178 = vmatpush.bf16.xpose.msra.mxu0 0
        %7179 = vmatpush.bf16.xpose.msra.mxu0 0
        %7180 = vmatpush.bf16.xpose.msra.mxu0 0
        %7181 = vmatpush.bf16.xpose.msra.mxu0 %v3857
        %7182 = vmatpush.bf16.xpose.msra.mxu0 %v3563
        %7183 = vmatmul.bf16.gmra.mxu0 %v1189
        %v7184 = vpop.f32.mrf.mxu0
        %v7185 = vadd.f32 %v7172, %v7184
        %v7186 = vpop.f32.mrf.mxu0
        %7187 = vdwg.mxu0
        %7188 = vmatpush.bf16.xpose.msra.mxu0 0
        %7189 = vmatpush.bf16.xpose.msra.mxu0 0
        %7190 = vmatpush.bf16.xpose.msra.mxu0 0
        %7191 = vmatpush.bf16.xpose.msra.mxu0 0
        %7192 = vmatpush.bf16.xpose.msra.mxu0 0
        %7193 = vmatpush.bf16.xpose.msra.mxu0 0
        %7194 = vmatpush.bf16.xpose.msra.mxu0 %v3858
        %7195 = vmatpush.bf16.xpose.msra.mxu0 %v3564
        %7196 = vmatmul.bf16.gmra.mxu0 %v1190
        %v7197 = vpop.f32.mrf.mxu0
        %v7198 = vadd.f32 %v7185, %v7197
        %v7199 = vpop.f32.mrf.mxu0
        %7200 = vdwg.mxu0
        %7201 = vmatpush.bf16.xpose.msra.mxu0 0
        %7202 = vmatpush.bf16.xpose.msra.mxu0 0
        %7203 = vmatpush.bf16.xpose.msra.mxu0 0
        %7204 = vmatpush.bf16.xpose.msra.mxu0 0
        %7205 = vmatpush.bf16.xpose.msra.mxu0 0
        %7206 = vmatpush.bf16.xpose.msra.mxu0 0
        %7207 = vmatpush.bf16.xpose.msra.mxu0 %v3859
        %7208 = vmatpush.bf16.xpose.msra.mxu0 %v3565
        %7209 = vmatmul.bf16.gmra.mxu0 %v1191
        %v7210 = vpop.f32.mrf.mxu0
        %v7211 = vadd.f32 %v7198, %v7210
        %v7212 = vpop.f32.mrf.mxu0
        %7213 = vdwg.mxu0
        %7214 = vmatpush.bf16.xpose.msra.mxu0 0
        %7215 = vmatpush.bf16.xpose.msra.mxu0 0
        %7216 = vmatpush.bf16.xpose.msra.mxu0 0
        %7217 = vmatpush.bf16.xpose.msra.mxu0 0
        %7218 = vmatpush.bf16.xpose.msra.mxu0 0
        %7219 = vmatpush.bf16.xpose.msra.mxu0 0
        %7220 = vmatpush.bf16.xpose.msra.mxu0 %v3860
        %7221 = vmatpush.bf16.xpose.msra.mxu0 %v3566
        %7222 = vmatmul.bf16.gmra.mxu0 %v1192
        %v7223 = vpop.f32.mrf.mxu0
        %v7224 = vadd.f32 %v7211, %v7223
        %v7225 = vpop.f32.mrf.mxu0
        %7226 = vdwg.mxu0
        %7227 = vmatpush.bf16.xpose.msra.mxu0 0
        %7228 = vmatpush.bf16.xpose.msra.mxu0 0
        %7229 = vmatpush.bf16.xpose.msra.mxu0 0
        %7230 = vmatpush.bf16.xpose.msra.mxu0 0
        %7231 = vmatpush.bf16.xpose.msra.mxu0 0
        %7232 = vmatpush.bf16.xpose.msra.mxu0 0
        %7233 = vmatpush.bf16.xpose.msra.mxu0 %v3861
        %7234 = vmatpush.bf16.xpose.msra.mxu0 %v3567
        %7235 = vmatmul.bf16.gmra.mxu0 %v1193
        %v7236 = vpop.f32.mrf.mxu0
        %v7237 = vadd.f32 %v7224, %v7236
        %v7238 = vpop.f32.mrf.mxu0
        %7239 = vdwg.mxu0
        %7240 = vmatpush.bf16.xpose.msra.mxu0 0
        %7241 = vmatpush.bf16.xpose.msra.mxu0 0
        %7242 = vmatpush.bf16.xpose.msra.mxu0 0
        %7243 = vmatpush.bf16.xpose.msra.mxu0 0
        %7244 = vmatpush.bf16.xpose.msra.mxu0 0
        %7245 = vmatpush.bf16.xpose.msra.mxu0 0
        %7246 = vmatpush.bf16.xpose.msra.mxu0 %v3862
        %7247 = vmatpush.bf16.xpose.msra.mxu0 %v3568
        %7248 = vmatmul.bf16.gmra.mxu0 %v1196
        %v7249 = vpop.f32.mrf.mxu0
        %v7250 = vadd.f32 %v7237, %v7249
        %v7251 = vpop.f32.mrf.mxu0
        %7252 = vdwg.mxu0
        %7253 = vmatpush.bf16.xpose.msra.mxu0 0
        %7254 = vmatpush.bf16.xpose.msra.mxu0 0
        %7255 = vmatpush.bf16.xpose.msra.mxu0 0
        %7256 = vmatpush.bf16.xpose.msra.mxu0 0
        %7257 = vmatpush.bf16.xpose.msra.mxu0 0
        %7258 = vmatpush.bf16.xpose.msra.mxu0 0
        %7259 = vmatpush.bf16.xpose.msra.mxu0 %v3863
        %7260 = vmatpush.bf16.xpose.msra.mxu0 %v3569
        %7261 = vmatmul.bf16.gmra.mxu0 %v1197
        %v7262 = vpop.f32.mrf.mxu0
        %v7263 = vadd.f32 %v7250, %v7262
        %v7264 = vpop.f32.mrf.mxu0
        %7265 = vdwg.mxu0
        %7266 = vmatpush.bf16.xpose.msra.mxu0 0
        %7267 = vmatpush.bf16.xpose.msra.mxu0 0
        %7268 = vmatpush.bf16.xpose.msra.mxu0 0
        %7269 = vmatpush.bf16.xpose.msra.mxu0 0
        %7270 = vmatpush.bf16.xpose.msra.mxu0 0
        %7271 = vmatpush.bf16.xpose.msra.mxu0 0
        %7272 = vmatpush.bf16.xpose.msra.mxu0 %v3864
        %7273 = vmatpush.bf16.xpose.msra.mxu0 %v3570
        %7274 = vmatmul.bf16.gmra.mxu0 %v1198
        %v7275 = vpop.f32.mrf.mxu0
        %v7276 = vadd.f32 %v7263, %v7275
        %v7277 = vpop.f32.mrf.mxu0
        %7278 = vdwg.mxu0
        %7279 = vmatpush.bf16.xpose.msra.mxu0 0
        %7280 = vmatpush.bf16.xpose.msra.mxu0 0
        %7281 = vmatpush.bf16.xpose.msra.mxu0 0
        %7282 = vmatpush.bf16.xpose.msra.mxu0 0
        %7283 = vmatpush.bf16.xpose.msra.mxu0 0
        %7284 = vmatpush.bf16.xpose.msra.mxu0 0
        %7285 = vmatpush.bf16.xpose.msra.mxu0 %v3865
        %7286 = vmatpush.bf16.xpose.msra.mxu0 %v3571
        %7287 = vmatmul.bf16.gmra.mxu0 %v1199
        %v7288 = vpop.f32.mrf.mxu0
        %v7289 = vadd.f32 %v7276, %v7288
        %v7290 = vpop.f32.mrf.mxu0
        %7291 = vdwg.mxu0
        %7292 = vmatpush.bf16.xpose.msra.mxu0 0
        %7293 = vmatpush.bf16.xpose.msra.mxu0 0
        %7294 = vmatpush.bf16.xpose.msra.mxu0 0
        %7295 = vmatpush.bf16.xpose.msra.mxu0 0
        %7296 = vmatpush.bf16.xpose.msra.mxu0 0
        %7297 = vmatpush.bf16.xpose.msra.mxu0 0
        %7298 = vmatpush.bf16.xpose.msra.mxu0 %v3866
        %7299 = vmatpush.bf16.xpose.msra.mxu0 %v3572
        %7300 = vmatmul.bf16.gmra.mxu0 %v1200
        %v7301 = vpop.f32.mrf.mxu0
        %v7302 = vadd.f32 %v7289, %v7301
        %v7303 = vpop.f32.mrf.mxu0
        %7304 = vdwg.mxu0
        %7305 = vmatpush.bf16.xpose.msra.mxu0 0
        %7306 = vmatpush.bf16.xpose.msra.mxu0 0
        %7307 = vmatpush.bf16.xpose.msra.mxu0 0
        %7308 = vmatpush.bf16.xpose.msra.mxu0 0
        %7309 = vmatpush.bf16.xpose.msra.mxu0 0
        %7310 = vmatpush.bf16.xpose.msra.mxu0 0
        %7311 = vmatpush.bf16.xpose.msra.mxu0 %v3867
        %7312 = vmatpush.bf16.xpose.msra.mxu0 %v3573
        %7313 = vmatmul.bf16.gmra.mxu0 %v1201
        %v7314 = vpop.f32.mrf.mxu0
        %v7315 = vadd.f32 %v7302, %v7314
        %v7316 = vpop.f32.mrf.mxu0
        %7317 = vdwg.mxu0
        %7318 = vmatpush.bf16.xpose.msra.mxu0 0
        %7319 = vmatpush.bf16.xpose.msra.mxu0 0
        %7320 = vmatpush.bf16.xpose.msra.mxu0 0
        %7321 = vmatpush.bf16.xpose.msra.mxu0 0
        %7322 = vmatpush.bf16.xpose.msra.mxu0 0
        %7323 = vmatpush.bf16.xpose.msra.mxu0 0
        %7324 = vmatpush.bf16.xpose.msra.mxu0 %v3868
        %7325 = vmatpush.bf16.xpose.msra.mxu0 %v3574
        %7326 = vmatmul.bf16.gmra.mxu0 %v1202
        %v7327 = vpop.f32.mrf.mxu0
        %v7328 = vadd.f32 %v7315, %v7327
        %v7329 = vpop.f32.mrf.mxu0
        %7330 = vdwg.mxu0
        %7331 = vmatpush.bf16.xpose.msra.mxu0 0
        %7332 = vmatpush.bf16.xpose.msra.mxu0 0
        %7333 = vmatpush.bf16.xpose.msra.mxu0 0
        %7334 = vmatpush.bf16.xpose.msra.mxu0 0
        %7335 = vmatpush.bf16.xpose.msra.mxu0 0
        %7336 = vmatpush.bf16.xpose.msra.mxu0 0
        %7337 = vmatpush.bf16.xpose.msra.mxu0 %v3869
        %7338 = vmatpush.bf16.xpose.msra.mxu0 %v3575
        %7339 = vmatmul.bf16.gmra.mxu0 %v1203
        %v7340 = vpop.f32.mrf.mxu0
        %v7341 = vadd.f32 %v7328, %v7340
        %v7342 = vpop.f32.mrf.mxu0
        %7343 = vdwg.mxu0
        %7344 = vmatpush.bf16.xpose.msra.mxu0 0
        %7345 = vmatpush.bf16.xpose.msra.mxu0 0
        %7346 = vmatpush.bf16.xpose.msra.mxu0 0
        %7347 = vmatpush.bf16.xpose.msra.mxu0 0
        %7348 = vmatpush.bf16.xpose.msra.mxu0 0
        %7349 = vmatpush.bf16.xpose.msra.mxu0 0
        %7350 = vmatpush.bf16.xpose.msra.mxu0 %v3870
        %7351 = vmatpush.bf16.xpose.msra.mxu0 %v3576
        %7352 = vmatmul.bf16.gmra.mxu0 %v1206
        %v7353 = vpop.f32.mrf.mxu0
        %v7354 = vadd.f32 %v7341, %v7353
        %v7355 = vpop.f32.mrf.mxu0
        %7356 = vdwg.mxu0
        %7357 = vmatpush.bf16.xpose.msra.mxu0 0
        %7358 = vmatpush.bf16.xpose.msra.mxu0 0
        %7359 = vmatpush.bf16.xpose.msra.mxu0 0
        %7360 = vmatpush.bf16.xpose.msra.mxu0 0
        %7361 = vmatpush.bf16.xpose.msra.mxu0 0
        %7362 = vmatpush.bf16.xpose.msra.mxu0 0
        %7363 = vmatpush.bf16.xpose.msra.mxu0 %v3871
        %7364 = vmatpush.bf16.xpose.msra.mxu0 %v3577
        %7365 = vmatmul.bf16.gmra.mxu0 %v1207
        %v7366 = vpop.f32.mrf.mxu0
        %v7367 = vadd.f32 %v7354, %v7366
        %v7368 = vpop.f32.mrf.mxu0
        %7369 = vdwg.mxu0
        %7370 = vmatpush.bf16.xpose.msra.mxu0 0
        %7371 = vmatpush.bf16.xpose.msra.mxu0 0
        %7372 = vmatpush.bf16.xpose.msra.mxu0 0
        %7373 = vmatpush.bf16.xpose.msra.mxu0 0
        %7374 = vmatpush.bf16.xpose.msra.mxu0 0
        %7375 = vmatpush.bf16.xpose.msra.mxu0 0
        %7376 = vmatpush.bf16.xpose.msra.mxu0 %v3872
        %7377 = vmatpush.bf16.xpose.msra.mxu0 %v3578
        %7378 = vmatmul.bf16.gmra.mxu0 %v1208
        %v7379 = vpop.f32.mrf.mxu0
        %v7380 = vadd.f32 %v7367, %v7379
        %v7381 = vpop.f32.mrf.mxu0
        %7382 = vdwg.mxu0
        %7383 = vmatpush.bf16.xpose.msra.mxu0 0
        %7384 = vmatpush.bf16.xpose.msra.mxu0 0
        %7385 = vmatpush.bf16.xpose.msra.mxu0 0
        %7386 = vmatpush.bf16.xpose.msra.mxu0 0
        %7387 = vmatpush.bf16.xpose.msra.mxu0 0
        %7388 = vmatpush.bf16.xpose.msra.mxu0 0
        %7389 = vmatpush.bf16.xpose.msra.mxu0 %v3873
        %7390 = vmatpush.bf16.xpose.msra.mxu0 %v3579
        %7391 = vmatmul.bf16.gmra.mxu0 %v1209
        %v7392 = vpop.f32.mrf.mxu0
        %v7393 = vadd.f32 %v7380, %v7392
        %v7394 = vpop.f32.mrf.mxu0
        %7395 = vdwg.mxu0
        %7396 = vmatpush.bf16.xpose.msra.mxu0 0
        %7397 = vmatpush.bf16.xpose.msra.mxu0 0
        %7398 = vmatpush.bf16.xpose.msra.mxu0 0
        %7399 = vmatpush.bf16.xpose.msra.mxu0 0
        %7400 = vmatpush.bf16.xpose.msra.mxu0 0
        %7401 = vmatpush.bf16.xpose.msra.mxu0 0
        %7402 = vmatpush.bf16.xpose.msra.mxu0 %v3874
        %7403 = vmatpush.bf16.xpose.msra.mxu0 %v3580
        %7404 = vmatmul.bf16.gmra.mxu0 %v1210
        %v7405 = vpop.f32.mrf.mxu0
        %v7406 = vadd.f32 %v7393, %v7405
        %v7407 = vpop.f32.mrf.mxu0
        %7408 = vdwg.mxu0
        %7409 = vmatpush.bf16.xpose.msra.mxu0 0
        %7410 = vmatpush.bf16.xpose.msra.mxu0 0
        %7411 = vmatpush.bf16.xpose.msra.mxu0 0
        %7412 = vmatpush.bf16.xpose.msra.mxu0 0
        %7413 = vmatpush.bf16.xpose.msra.mxu0 0
        %7414 = vmatpush.bf16.xpose.msra.mxu0 0
        %7415 = vmatpush.bf16.xpose.msra.mxu0 %v3875
        %7416 = vmatpush.bf16.xpose.msra.mxu0 %v3581
        %7417 = vmatmul.bf16.gmra.mxu0 %v1211
        %v7418 = vpop.f32.mrf.mxu0
        %v7419 = vadd.f32 %v7406, %v7418
        %v7420 = vpop.f32.mrf.mxu0
        %7421 = vdwg.mxu0
        %7422 = vmatpush.bf16.xpose.msra.mxu0 0
        %7423 = vmatpush.bf16.xpose.msra.mxu0 0
        %7424 = vmatpush.bf16.xpose.msra.mxu0 0
        %7425 = vmatpush.bf16.xpose.msra.mxu0 0
        %7426 = vmatpush.bf16.xpose.msra.mxu0 0
        %7427 = vmatpush.bf16.xpose.msra.mxu0 0
        %7428 = vmatpush.bf16.xpose.msra.mxu0 %v3876
        %7429 = vmatpush.bf16.xpose.msra.mxu0 %v3582
        %7430 = vmatmul.bf16.gmra.mxu0 %v1212
        %v7431 = vpop.f32.mrf.mxu0
        %v7432 = vadd.f32 %v7419, %v7431
        %v7433 = vpop.f32.mrf.mxu0
        %7434 = vdwg.mxu0
        %7435 = vmatpush.bf16.xpose.msra.mxu0 0
        %7436 = vmatpush.bf16.xpose.msra.mxu0 0
        %7437 = vmatpush.bf16.xpose.msra.mxu0 0
        %7438 = vmatpush.bf16.xpose.msra.mxu0 0
        %7439 = vmatpush.bf16.xpose.msra.mxu0 0
        %7440 = vmatpush.bf16.xpose.msra.mxu0 0
        %7441 = vmatpush.bf16.xpose.msra.mxu0 %v3877
        %7442 = vmatpush.bf16.xpose.msra.mxu0 %v3583
        %7443 = vmatmul.bf16.gmra.mxu0 %v1213
        %v7444 = vpop.f32.mrf.mxu0
        %v7445 = vadd.f32 %v7432, %v7444
        %v7446 = vpop.f32.mrf.mxu0
        %7447 = vdwg.mxu0
        %7448 = vmatpush.bf16.xpose.msra.mxu0 0
        %7449 = vmatpush.bf16.xpose.msra.mxu0 0
        %7450 = vmatpush.bf16.xpose.msra.mxu0 0
        %7451 = vmatpush.bf16.xpose.msra.mxu0 0
        %7452 = vmatpush.bf16.xpose.msra.mxu0 0
        %7453 = vmatpush.bf16.xpose.msra.mxu0 0
        %7454 = vmatpush.bf16.xpose.msra.mxu0 %v3878
        %7455 = vmatpush.bf16.xpose.msra.mxu0 %v3584
        %7456 = vmatmul.bf16.gmra.mxu0 %v1216
        %v7457 = vpop.f32.mrf.mxu0
        %v7458 = vadd.f32 %v7445, %v7457
        %v7459 = vpop.f32.mrf.mxu0
        %7460 = vdwg.mxu0
        %7461 = vmatpush.bf16.xpose.msra.mxu0 0
        %7462 = vmatpush.bf16.xpose.msra.mxu0 0
        %7463 = vmatpush.bf16.xpose.msra.mxu0 0
        %7464 = vmatpush.bf16.xpose.msra.mxu0 0
        %7465 = vmatpush.bf16.xpose.msra.mxu0 0
        %7466 = vmatpush.bf16.xpose.msra.mxu0 0
        %7467 = vmatpush.bf16.xpose.msra.mxu0 %v3879
        %7468 = vmatpush.bf16.xpose.msra.mxu0 %v3585
        %7469 = vmatmul.bf16.gmra.mxu0 %v1217
        %v7470 = vpop.f32.mrf.mxu0
        %v7471 = vadd.f32 %v7458, %v7470
        %v7472 = vpop.f32.mrf.mxu0
        %7473 = vdwg.mxu0
        %7474 = vmatpush.bf16.xpose.msra.mxu0 0
        %7475 = vmatpush.bf16.xpose.msra.mxu0 0
        %7476 = vmatpush.bf16.xpose.msra.mxu0 0
        %7477 = vmatpush.bf16.xpose.msra.mxu0 0
        %7478 = vmatpush.bf16.xpose.msra.mxu0 0
        %7479 = vmatpush.bf16.xpose.msra.mxu0 0
        %7480 = vmatpush.bf16.xpose.msra.mxu0 %v3880
        %7481 = vmatpush.bf16.xpose.msra.mxu0 %v3586
        %7482 = vmatmul.bf16.gmra.mxu0 %v1218
        %v7483 = vpop.f32.mrf.mxu0
        %v7484 = vadd.f32 %v7471, %v7483
        %v7485 = vpop.f32.mrf.mxu0
        %7486 = vdwg.mxu0
        %7487 = vmatpush.bf16.xpose.msra.mxu0 0
        %7488 = vmatpush.bf16.xpose.msra.mxu0 0
        %7489 = vmatpush.bf16.xpose.msra.mxu0 0
        %7490 = vmatpush.bf16.xpose.msra.mxu0 0
        %7491 = vmatpush.bf16.xpose.msra.mxu0 0
        %7492 = vmatpush.bf16.xpose.msra.mxu0 0
        %7493 = vmatpush.bf16.xpose.msra.mxu0 %v3881
        %7494 = vmatpush.bf16.xpose.msra.mxu0 %v3587
        %7495 = vmatmul.bf16.gmra.mxu0 %v1219
        %v7496 = vpop.f32.mrf.mxu0
        %v7497 = vadd.f32 %v7484, %v7496
        %v7498 = vpop.f32.mrf.mxu0
        %7499 = vdwg.mxu0
        %7500 = vmatpush.bf16.xpose.msra.mxu0 0
        %7501 = vmatpush.bf16.xpose.msra.mxu0 0
        %7502 = vmatpush.bf16.xpose.msra.mxu0 0
        %7503 = vmatpush.bf16.xpose.msra.mxu0 0
        %7504 = vmatpush.bf16.xpose.msra.mxu0 0
        %7505 = vmatpush.bf16.xpose.msra.mxu0 0
        %7506 = vmatpush.bf16.xpose.msra.mxu0 %v3882
        %7507 = vmatpush.bf16.xpose.msra.mxu0 %v3588
        %7508 = vmatmul.bf16.gmra.mxu0 %v1220
        %v7509 = vpop.f32.mrf.mxu0
        %v7510 = vadd.f32 %v7497, %v7509
        %v7511 = vpop.f32.mrf.mxu0
        %7512 = vdwg.mxu0
        %7513 = vmatpush.bf16.xpose.msra.mxu0 0
        %7514 = vmatpush.bf16.xpose.msra.mxu0 0
        %7515 = vmatpush.bf16.xpose.msra.mxu0 0
        %7516 = vmatpush.bf16.xpose.msra.mxu0 0
        %7517 = vmatpush.bf16.xpose.msra.mxu0 0
        %7518 = vmatpush.bf16.xpose.msra.mxu0 0
        %7519 = vmatpush.bf16.xpose.msra.mxu0 %v3883
        %7520 = vmatpush.bf16.xpose.msra.mxu0 %v3589
        %7521 = vmatmul.bf16.gmra.mxu0 %v1221
        %v7522 = vpop.f32.mrf.mxu0
        %v7523 = vadd.f32 %v7510, %v7522
        %v7524 = vpop.f32.mrf.mxu0
        %7525 = vdwg.mxu0
        %7526 = vmatpush.bf16.xpose.msra.mxu0 0
        %7527 = vmatpush.bf16.xpose.msra.mxu0 0
        %7528 = vmatpush.bf16.xpose.msra.mxu0 0
        %7529 = vmatpush.bf16.xpose.msra.mxu0 0
        %7530 = vmatpush.bf16.xpose.msra.mxu0 0
        %7531 = vmatpush.bf16.xpose.msra.mxu0 0
        %7532 = vmatpush.bf16.xpose.msra.mxu0 %v3884
        %7533 = vmatpush.bf16.xpose.msra.mxu0 %v3590
        %7534 = vmatmul.bf16.gmra.mxu0 %v1222
        %v7535 = vpop.f32.mrf.mxu0
        %v7536 = vadd.f32 %v7523, %v7535
        %v7537 = vpop.f32.mrf.mxu0
        %7538 = vdwg.mxu0
        %7539 = vmatpush.bf16.xpose.msra.mxu0 0
        %7540 = vmatpush.bf16.xpose.msra.mxu0 0
        %7541 = vmatpush.bf16.xpose.msra.mxu0 0
        %7542 = vmatpush.bf16.xpose.msra.mxu0 0
        %7543 = vmatpush.bf16.xpose.msra.mxu0 0
        %7544 = vmatpush.bf16.xpose.msra.mxu0 0
        %7545 = vmatpush.bf16.xpose.msra.mxu0 %v3885
        %7546 = vmatpush.bf16.xpose.msra.mxu0 %v3591
        %7547 = vmatmul.bf16.gmra.mxu0 %v1223
        %v7548 = vpop.f32.mrf.mxu0
        %v7549 = vadd.f32 %v7536, %v7548
        %v7550 = vpop.f32.mrf.mxu0
        %7551 = vdwg.mxu0
        %7552 = vmatpush.bf16.xpose.msra.mxu0 0
        %7553 = vmatpush.bf16.xpose.msra.mxu0 0
        %7554 = vmatpush.bf16.xpose.msra.mxu0 0
        %7555 = vmatpush.bf16.xpose.msra.mxu0 0
        %7556 = vmatpush.bf16.xpose.msra.mxu0 0
        %7557 = vmatpush.bf16.xpose.msra.mxu0 0
        %7558 = vmatpush.bf16.xpose.msra.mxu0 %v3886
        %7559 = vmatpush.bf16.xpose.msra.mxu0 %v3592
        %7560 = vmatmul.bf16.gmra.mxu0 %v1226
        %v7561 = vpop.f32.mrf.mxu0
        %v7562 = vadd.f32 %v7549, %v7561
        %v7563 = vpop.f32.mrf.mxu0
        %7564 = vdwg.mxu0
        %7565 = vmatpush.bf16.xpose.msra.mxu0 0
        %7566 = vmatpush.bf16.xpose.msra.mxu0 0
        %7567 = vmatpush.bf16.xpose.msra.mxu0 0
        %7568 = vmatpush.bf16.xpose.msra.mxu0 0
        %7569 = vmatpush.bf16.xpose.msra.mxu0 0
        %7570 = vmatpush.bf16.xpose.msra.mxu0 0
        %7571 = vmatpush.bf16.xpose.msra.mxu0 %v3887
        %7572 = vmatpush.bf16.xpose.msra.mxu0 %v3593
        %7573 = vmatmul.bf16.gmra.mxu0 %v1227
        %v7574 = vpop.f32.mrf.mxu0
        %v7575 = vadd.f32 %v7562, %v7574
        %v7576 = vpop.f32.mrf.mxu0
        %7577 = vdwg.mxu0
        %7578 = vmatpush.bf16.xpose.msra.mxu0 0
        %7579 = vmatpush.bf16.xpose.msra.mxu0 0
        %7580 = vmatpush.bf16.xpose.msra.mxu0 0
        %7581 = vmatpush.bf16.xpose.msra.mxu0 0
        %7582 = vmatpush.bf16.xpose.msra.mxu0 0
        %7583 = vmatpush.bf16.xpose.msra.mxu0 0
        %7584 = vmatpush.bf16.xpose.msra.mxu0 %v3888
        %7585 = vmatpush.bf16.xpose.msra.mxu0 %v3594
        %7586 = vmatmul.bf16.gmra.mxu0 %v1228
        %v7587 = vpop.f32.mrf.mxu0
        %v7588 = vadd.f32 %v7575, %v7587
        %v7589 = vpop.f32.mrf.mxu0
        %7590 = vdwg.mxu0
        %7591 = vmatpush.bf16.xpose.msra.mxu0 0
        %7592 = vmatpush.bf16.xpose.msra.mxu0 0
        %7593 = vmatpush.bf16.xpose.msra.mxu0 0
        %7594 = vmatpush.bf16.xpose.msra.mxu0 0
        %7595 = vmatpush.bf16.xpose.msra.mxu0 0
        %7596 = vmatpush.bf16.xpose.msra.mxu0 0
        %7597 = vmatpush.bf16.xpose.msra.mxu0 %v3889
        %7598 = vmatpush.bf16.xpose.msra.mxu0 %v3595
        %7599 = vmatmul.bf16.gmra.mxu0 %v1229
        %v7600 = vpop.f32.mrf.mxu0
        %v7601 = vadd.f32 %v7588, %v7600
        %v7602 = vpop.f32.mrf.mxu0
        %7603 = vdwg.mxu0
        %7604 = vmatpush.bf16.xpose.msra.mxu0 0
        %7605 = vmatpush.bf16.xpose.msra.mxu0 0
        %7606 = vmatpush.bf16.xpose.msra.mxu0 0
        %7607 = vmatpush.bf16.xpose.msra.mxu0 0
        %7608 = vmatpush.bf16.xpose.msra.mxu0 0
        %7609 = vmatpush.bf16.xpose.msra.mxu0 0
        %7610 = vmatpush.bf16.xpose.msra.mxu0 %v3890
        %7611 = vmatpush.bf16.xpose.msra.mxu0 %v3596
        %7612 = vmatmul.bf16.gmra.mxu0 %v1230
        %v7613 = vpop.f32.mrf.mxu0
        %v7614 = vadd.f32 %v7601, %v7613
        %v7615 = vpop.f32.mrf.mxu0
        %7616 = vdwg.mxu0
        %7617 = vmatpush.bf16.xpose.msra.mxu0 0
        %7618 = vmatpush.bf16.xpose.msra.mxu0 0
        %7619 = vmatpush.bf16.xpose.msra.mxu0 0
        %7620 = vmatpush.bf16.xpose.msra.mxu0 0
        %7621 = vmatpush.bf16.xpose.msra.mxu0 0
        %7622 = vmatpush.bf16.xpose.msra.mxu0 0
        %7623 = vmatpush.bf16.xpose.msra.mxu0 %v3891
        %7624 = vmatpush.bf16.xpose.msra.mxu0 %v3597
        %7625 = vmatmul.bf16.gmra.mxu0 %v1231
        %v7626 = vpop.f32.mrf.mxu0
        %v7627 = vadd.f32 %v7614, %v7626
        %v7628 = vpop.f32.mrf.mxu0
        %7629 = vdwg.mxu0
        %7630 = vmatpush.bf16.xpose.msra.mxu0 0
        %7631 = vmatpush.bf16.xpose.msra.mxu0 0
        %7632 = vmatpush.bf16.xpose.msra.mxu0 0
        %7633 = vmatpush.bf16.xpose.msra.mxu0 0
        %7634 = vmatpush.bf16.xpose.msra.mxu0 0
        %7635 = vmatpush.bf16.xpose.msra.mxu0 0
        %7636 = vmatpush.bf16.xpose.msra.mxu0 %v3892
        %7637 = vmatpush.bf16.xpose.msra.mxu0 %v3598
        %7638 = vmatmul.bf16.gmra.mxu0 %v1232
        %v7639 = vpop.f32.mrf.mxu0
        %v7640 = vadd.f32 %v7627, %v7639
        %v7641 = vpop.f32.mrf.mxu0
        %7642 = vdwg.mxu0
        %7643 = vmatpush.bf16.xpose.msra.mxu0 0
        %7644 = vmatpush.bf16.xpose.msra.mxu0 0
        %7645 = vmatpush.bf16.xpose.msra.mxu0 0
        %7646 = vmatpush.bf16.xpose.msra.mxu0 0
        %7647 = vmatpush.bf16.xpose.msra.mxu0 0
        %7648 = vmatpush.bf16.xpose.msra.mxu0 0
        %7649 = vmatpush.bf16.xpose.msra.mxu0 %v3893
        %7650 = vmatpush.bf16.xpose.msra.mxu0 %v3599
        %7651 = vmatmul.bf16.gmra.mxu0 %v1233
        %v7652 = vpop.f32.mrf.mxu0
        %v7653 = vadd.f32 %v7640, %v7652
        %v7654 = vpop.f32.mrf.mxu0
        %7655 = vdwg.mxu0
        %7656 = vmatpush.bf16.xpose.msra.mxu0 0
        %7657 = vmatpush.bf16.xpose.msra.mxu0 0
        %7658 = vmatpush.bf16.xpose.msra.mxu0 0
        %7659 = vmatpush.bf16.xpose.msra.mxu0 0
        %7660 = vmatpush.bf16.xpose.msra.mxu0 0
        %7661 = vmatpush.bf16.xpose.msra.mxu0 0
        %7662 = vmatpush.bf16.xpose.msra.mxu0 %v3894
        %7663 = vmatpush.bf16.xpose.msra.mxu0 %v3600
        %7664 = vmatmul.bf16.gmra.mxu0 %v1236
        %v7665 = vpop.f32.mrf.mxu0
        %v7666 = vadd.f32 %v7653, %v7665
        %v7667 = vpop.f32.mrf.mxu0
        %7668 = vdwg.mxu0
        %7669 = vmatpush.bf16.xpose.msra.mxu0 0
        %7670 = vmatpush.bf16.xpose.msra.mxu0 0
        %7671 = vmatpush.bf16.xpose.msra.mxu0 0
        %7672 = vmatpush.bf16.xpose.msra.mxu0 0
        %7673 = vmatpush.bf16.xpose.msra.mxu0 0
        %7674 = vmatpush.bf16.xpose.msra.mxu0 0
        %7675 = vmatpush.bf16.xpose.msra.mxu0 %v3895
        %7676 = vmatpush.bf16.xpose.msra.mxu0 %v3601
        %7677 = vmatmul.bf16.gmra.mxu0 %v1237
        %v7678 = vpop.f32.mrf.mxu0
        %v7679 = vadd.f32 %v7666, %v7678
        %v7680 = vpop.f32.mrf.mxu0
        %7681 = vdwg.mxu0
        %7682 = vmatpush.bf16.xpose.msra.mxu0 0
        %7683 = vmatpush.bf16.xpose.msra.mxu0 0
        %7684 = vmatpush.bf16.xpose.msra.mxu0 0
        %7685 = vmatpush.bf16.xpose.msra.mxu0 0
        %7686 = vmatpush.bf16.xpose.msra.mxu0 0
        %7687 = vmatpush.bf16.xpose.msra.mxu0 0
        %7688 = vmatpush.bf16.xpose.msra.mxu0 %v3896
        %7689 = vmatpush.bf16.xpose.msra.mxu0 %v3602
        %7690 = vmatmul.bf16.gmra.mxu0 %v1238
        %v7691 = vpop.f32.mrf.mxu0
        %v7692 = vadd.f32 %v7679, %v7691
        %v7693 = vpop.f32.mrf.mxu0
        %7694 = vdwg.mxu0
        %7695 = vmatpush.bf16.xpose.msra.mxu0 0
        %7696 = vmatpush.bf16.xpose.msra.mxu0 0
        %7697 = vmatpush.bf16.xpose.msra.mxu0 0
        %7698 = vmatpush.bf16.xpose.msra.mxu0 0
        %7699 = vmatpush.bf16.xpose.msra.mxu0 0
        %7700 = vmatpush.bf16.xpose.msra.mxu0 0
        %7701 = vmatpush.bf16.xpose.msra.mxu0 %v3897
        %7702 = vmatpush.bf16.xpose.msra.mxu0 %v3603
        %7703 = vmatmul.bf16.gmra.mxu0 %v1239
        %v7704 = vpop.f32.mrf.mxu0
        %v7705 = vadd.f32 %v7692, %v7704
        %v7706 = vpop.f32.mrf.mxu0
        %7707 = vdwg.mxu0
        %7708 = vmatpush.bf16.xpose.msra.mxu0 0
        %7709 = vmatpush.bf16.xpose.msra.mxu0 0
        %7710 = vmatpush.bf16.xpose.msra.mxu0 0
        %7711 = vmatpush.bf16.xpose.msra.mxu0 0
        %7712 = vmatpush.bf16.xpose.msra.mxu0 0
        %7713 = vmatpush.bf16.xpose.msra.mxu0 0
        %7714 = vmatpush.bf16.xpose.msra.mxu0 %v3898
        %7715 = vmatpush.bf16.xpose.msra.mxu0 %v3604
        %7716 = vmatmul.bf16.gmra.mxu0 %v1240
        %v7717 = vpop.f32.mrf.mxu0
        %v7718 = vadd.f32 %v7705, %v7717
        %v7719 = vpop.f32.mrf.mxu0
        %7720 = vdwg.mxu0
        %7721 = vmatpush.bf16.xpose.msra.mxu0 0
        %7722 = vmatpush.bf16.xpose.msra.mxu0 0
        %7723 = vmatpush.bf16.xpose.msra.mxu0 0
        %7724 = vmatpush.bf16.xpose.msra.mxu0 0
        %7725 = vmatpush.bf16.xpose.msra.mxu0 0
        %7726 = vmatpush.bf16.xpose.msra.mxu0 0
        %7727 = vmatpush.bf16.xpose.msra.mxu0 %v3899
        %7728 = vmatpush.bf16.xpose.msra.mxu0 %v3605
        %7729 = vmatmul.bf16.gmra.mxu0 %v1241
        %v7730 = vpop.f32.mrf.mxu0
        %v7731 = vadd.f32 %v7718, %v7730
        %v7732 = vpop.f32.mrf.mxu0
        %7733 = vdwg.mxu0
        %7734 = vmatpush.bf16.xpose.msra.mxu0 0
        %7735 = vmatpush.bf16.xpose.msra.mxu0 0
        %7736 = vmatpush.bf16.xpose.msra.mxu0 0
        %7737 = vmatpush.bf16.xpose.msra.mxu0 0
        %7738 = vmatpush.bf16.xpose.msra.mxu0 0
        %7739 = vmatpush.bf16.xpose.msra.mxu0 0
        %7740 = vmatpush.bf16.xpose.msra.mxu0 %v3900
        %7741 = vmatpush.bf16.xpose.msra.mxu0 %v3606
        %7742 = vmatmul.bf16.gmra.mxu0 %v1242
        %v7743 = vpop.f32.mrf.mxu0
        %v7744 = vadd.f32 %v7731, %v7743
        %v7745 = vpop.f32.mrf.mxu0
        %7746 = vdwg.mxu0
        %7747 = vmatpush.bf16.xpose.msra.mxu0 0
        %7748 = vmatpush.bf16.xpose.msra.mxu0 0
        %7749 = vmatpush.bf16.xpose.msra.mxu0 0
        %7750 = vmatpush.bf16.xpose.msra.mxu0 0
        %7751 = vmatpush.bf16.xpose.msra.mxu0 0
        %7752 = vmatpush.bf16.xpose.msra.mxu0 0
        %7753 = vmatpush.bf16.xpose.msra.mxu0 %v3901
        %7754 = vmatpush.bf16.xpose.msra.mxu0 %v3607
        %7755 = vmatmul.bf16.gmra.mxu0 %v1243
        %v7756 = vpop.f32.mrf.mxu0
        %v7757 = vadd.f32 %v7744, %v7756
        %v7758 = vpop.f32.mrf.mxu0
        %7759 = vdwg.mxu0
        %7760 = vmatpush.bf16.xpose.msra.mxu0 0
        %7761 = vmatpush.bf16.xpose.msra.mxu0 0
        %7762 = vmatpush.bf16.xpose.msra.mxu0 0
        %7763 = vmatpush.bf16.xpose.msra.mxu0 0
        %7764 = vmatpush.bf16.xpose.msra.mxu0 0
        %7765 = vmatpush.bf16.xpose.msra.mxu0 0
        %7766 = vmatpush.bf16.xpose.msra.mxu0 %v3902
        %7767 = vmatpush.bf16.xpose.msra.mxu0 %v3608
        %7768 = vmatmul.bf16.gmra.mxu0 %v1246
        %v7769 = vpop.f32.mrf.mxu0
        %v7770 = vadd.f32 %v7757, %v7769
        %v7771 = vpop.f32.mrf.mxu0
        %7772 = vdwg.mxu0
        %7773 = vmatpush.bf16.xpose.msra.mxu0 0
        %7774 = vmatpush.bf16.xpose.msra.mxu0 0
        %7775 = vmatpush.bf16.xpose.msra.mxu0 0
        %7776 = vmatpush.bf16.xpose.msra.mxu0 0
        %7777 = vmatpush.bf16.xpose.msra.mxu0 0
        %7778 = vmatpush.bf16.xpose.msra.mxu0 0
        %7779 = vmatpush.bf16.xpose.msra.mxu0 %v3903
        %7780 = vmatpush.bf16.xpose.msra.mxu0 %v3609
        %7781 = vmatmul.bf16.gmra.mxu0 %v1247
        %v7782 = vpop.f32.mrf.mxu0
        %v7783 = vadd.f32 %v7770, %v7782
        %v7784 = vpop.f32.mrf.mxu0
        %7785 = vdwg.mxu0
        %7786 = vmatpush.bf16.xpose.msra.mxu0 0
        %7787 = vmatpush.bf16.xpose.msra.mxu0 0
        %7788 = vmatpush.bf16.xpose.msra.mxu0 0
        %7789 = vmatpush.bf16.xpose.msra.mxu0 0
        %7790 = vmatpush.bf16.xpose.msra.mxu0 0
        %7791 = vmatpush.bf16.xpose.msra.mxu0 0
        %7792 = vmatpush.bf16.xpose.msra.mxu0 %v3904
        %7793 = vmatpush.bf16.xpose.msra.mxu0 %v3610
        %7794 = vmatmul.bf16.gmra.mxu0 %v1248
        %v7795 = vpop.f32.mrf.mxu0
        %v7796 = vadd.f32 %v7783, %v7795
        %v7797 = vpop.f32.mrf.mxu0
        %7798 = vdwg.mxu0
        %7799 = vmatpush.bf16.xpose.msra.mxu0 0
        %7800 = vmatpush.bf16.xpose.msra.mxu0 0
        %7801 = vmatpush.bf16.xpose.msra.mxu0 0
        %7802 = vmatpush.bf16.xpose.msra.mxu0 0
        %7803 = vmatpush.bf16.xpose.msra.mxu0 0
        %7804 = vmatpush.bf16.xpose.msra.mxu0 0
        %7805 = vmatpush.bf16.xpose.msra.mxu0 %v3905
        %7806 = vmatpush.bf16.xpose.msra.mxu0 %v3611
        %7807 = vmatmul.bf16.gmra.mxu0 %v1249
        %v7808 = vpop.f32.mrf.mxu0
        %v7809 = vadd.f32 %v7796, %v7808
        %v7810 = vpop.f32.mrf.mxu0
        %7811 = vdwg.mxu0
        %7812 = vmatpush.bf16.xpose.msra.mxu0 0
        %7813 = vmatpush.bf16.xpose.msra.mxu0 0
        %7814 = vmatpush.bf16.xpose.msra.mxu0 0
        %7815 = vmatpush.bf16.xpose.msra.mxu0 0
        %7816 = vmatpush.bf16.xpose.msra.mxu0 0
        %7817 = vmatpush.bf16.xpose.msra.mxu0 0
        %7818 = vmatpush.bf16.xpose.msra.mxu0 %v3906
        %7819 = vmatpush.bf16.xpose.msra.mxu0 %v3612
        %7820 = vmatmul.bf16.gmra.mxu0 %v1250
        %v7821 = vpop.f32.mrf.mxu0
        %v7822 = vadd.f32 %v7809, %v7821
        %v7823 = vpop.f32.mrf.mxu0
        %7824 = vdwg.mxu0
        %7825 = vmatpush.bf16.xpose.msra.mxu0 0
        %7826 = vmatpush.bf16.xpose.msra.mxu0 0
        %7827 = vmatpush.bf16.xpose.msra.mxu0 0
        %7828 = vmatpush.bf16.xpose.msra.mxu0 0
        %7829 = vmatpush.bf16.xpose.msra.mxu0 0
        %7830 = vmatpush.bf16.xpose.msra.mxu0 0
        %7831 = vmatpush.bf16.xpose.msra.mxu0 %v3907
        %7832 = vmatpush.bf16.xpose.msra.mxu0 %v3613
        %7833 = vmatmul.bf16.gmra.mxu0 %v1251
        %v7834 = vpop.f32.mrf.mxu0
        %v7835 = vadd.f32 %v7822, %v7834
        %v7836 = vpop.f32.mrf.mxu0
        %7837 = vdwg.mxu0
        %7838 = vmatpush.bf16.xpose.msra.mxu0 0
        %7839 = vmatpush.bf16.xpose.msra.mxu0 0
        %7840 = vmatpush.bf16.xpose.msra.mxu0 0
        %7841 = vmatpush.bf16.xpose.msra.mxu0 0
        %7842 = vmatpush.bf16.xpose.msra.mxu0 0
        %7843 = vmatpush.bf16.xpose.msra.mxu0 0
        %7844 = vmatpush.bf16.xpose.msra.mxu0 %v3908
        %7845 = vmatpush.bf16.xpose.msra.mxu0 %v3614
        %7846 = vmatmul.bf16.gmra.mxu0 %v1252
        %v7847 = vpop.f32.mrf.mxu0
        %v7848 = vadd.f32 %v7835, %v7847
        %v7849 = vpop.f32.mrf.mxu0
        %7850 = vdwg.mxu0
        %7851 = vmatpush.bf16.xpose.msra.mxu0 0
        %7852 = vmatpush.bf16.xpose.msra.mxu0 0
        %7853 = vmatpush.bf16.xpose.msra.mxu0 0
        %7854 = vmatpush.bf16.xpose.msra.mxu0 0
        %7855 = vmatpush.bf16.xpose.msra.mxu0 0
        %7856 = vmatpush.bf16.xpose.msra.mxu0 0
        %7857 = vmatpush.bf16.xpose.msra.mxu0 %v3909
        %7858 = vmatpush.bf16.xpose.msra.mxu0 %v3615
        %7859 = vmatmul.bf16.gmra.mxu0 %v1253
        %v7860 = vpop.f32.mrf.mxu0
        %v7861 = vadd.f32 %v7848, %v7860
        %v7862 = vpop.f32.mrf.mxu0
        %7863 = vdwg.mxu0
        %7864 = vmatpush.bf16.xpose.msra.mxu0 0
        %7865 = vmatpush.bf16.xpose.msra.mxu0 0
        %7866 = vmatpush.bf16.xpose.msra.mxu0 0
        %7867 = vmatpush.bf16.xpose.msra.mxu0 0
        %7868 = vmatpush.bf16.xpose.msra.mxu0 0
        %7869 = vmatpush.bf16.xpose.msra.mxu0 0
        %7870 = vmatpush.bf16.xpose.msra.mxu0 %v3910
        %7871 = vmatpush.bf16.xpose.msra.mxu0 %v3616
        %7872 = vmatmul.bf16.gmra.mxu0 %v1256
        %v7873 = vpop.f32.mrf.mxu0
        %v7874 = vadd.f32 %v7861, %v7873
        %v7875 = vpop.f32.mrf.mxu0
        %7876 = vdwg.mxu0
        %7877 = vmatpush.bf16.xpose.msra.mxu0 0
        %7878 = vmatpush.bf16.xpose.msra.mxu0 0
        %7879 = vmatpush.bf16.xpose.msra.mxu0 0
        %7880 = vmatpush.bf16.xpose.msra.mxu0 0
        %7881 = vmatpush.bf16.xpose.msra.mxu0 0
        %7882 = vmatpush.bf16.xpose.msra.mxu0 0
        %7883 = vmatpush.bf16.xpose.msra.mxu0 %v3911
        %7884 = vmatpush.bf16.xpose.msra.mxu0 %v3617
        %7885 = vmatmul.bf16.gmra.mxu0 %v1257
        %v7886 = vpop.f32.mrf.mxu0
        %v7887 = vadd.f32 %v7874, %v7886
        %v7888 = vpop.f32.mrf.mxu0
        %7889 = vdwg.mxu0
        %7890 = vmatpush.bf16.xpose.msra.mxu0 0
        %7891 = vmatpush.bf16.xpose.msra.mxu0 0
        %7892 = vmatpush.bf16.xpose.msra.mxu0 0
        %7893 = vmatpush.bf16.xpose.msra.mxu0 0
        %7894 = vmatpush.bf16.xpose.msra.mxu0 0
        %7895 = vmatpush.bf16.xpose.msra.mxu0 0
        %7896 = vmatpush.bf16.xpose.msra.mxu0 %v3912
        %7897 = vmatpush.bf16.xpose.msra.mxu0 %v3618
        %7898 = vmatmul.bf16.gmra.mxu0 %v1258
        %v7899 = vpop.f32.mrf.mxu0
        %v7900 = vadd.f32 %v7887, %v7899
        %v7901 = vpop.f32.mrf.mxu0
        %7902 = vdwg.mxu0
        %7903 = vmatpush.bf16.xpose.msra.mxu0 0
        %7904 = vmatpush.bf16.xpose.msra.mxu0 0
        %7905 = vmatpush.bf16.xpose.msra.mxu0 0
        %7906 = vmatpush.bf16.xpose.msra.mxu0 0
        %7907 = vmatpush.bf16.xpose.msra.mxu0 0
        %7908 = vmatpush.bf16.xpose.msra.mxu0 0
        %7909 = vmatpush.bf16.xpose.msra.mxu0 %v3913
        %7910 = vmatpush.bf16.xpose.msra.mxu0 %v3619
        %7911 = vmatmul.bf16.gmra.mxu0 %v1259
        %v7912 = vpop.f32.mrf.mxu0
        %v7913 = vadd.f32 %v7900, %v7912
        %v7914 = vpop.f32.mrf.mxu0
        %7915 = vdwg.mxu0
        %7916 = vmatpush.bf16.xpose.msra.mxu0 0
        %7917 = vmatpush.bf16.xpose.msra.mxu0 0
        %7918 = vmatpush.bf16.xpose.msra.mxu0 0
        %7919 = vmatpush.bf16.xpose.msra.mxu0 0
        %7920 = vmatpush.bf16.xpose.msra.mxu0 0
        %7921 = vmatpush.bf16.xpose.msra.mxu0 0
        %7922 = vmatpush.bf16.xpose.msra.mxu0 %v3914
        %7923 = vmatpush.bf16.xpose.msra.mxu0 %v3620
        %7924 = vmatmul.bf16.gmra.mxu0 %v1260
        %v7925 = vpop.f32.mrf.mxu0
        %v7926 = vadd.f32 %v7913, %v7925
        %v7927 = vpop.f32.mrf.mxu0
        %7928 = vdwg.mxu0
        %7929 = vmatpush.bf16.xpose.msra.mxu0 0
        %7930 = vmatpush.bf16.xpose.msra.mxu0 0
        %7931 = vmatpush.bf16.xpose.msra.mxu0 0
        %7932 = vmatpush.bf16.xpose.msra.mxu0 0
        %7933 = vmatpush.bf16.xpose.msra.mxu0 0
        %7934 = vmatpush.bf16.xpose.msra.mxu0 0
        %7935 = vmatpush.bf16.xpose.msra.mxu0 %v3915
        %7936 = vmatpush.bf16.xpose.msra.mxu0 %v3621
        %7937 = vmatmul.bf16.gmra.mxu0 %v1261
        %v7938 = vpop.f32.mrf.mxu0
        %v7939 = vadd.f32 %v7926, %v7938
        %v7940 = vpop.f32.mrf.mxu0
        %7941 = vdwg.mxu0
        %7942 = vmatpush.bf16.xpose.msra.mxu0 0
        %7943 = vmatpush.bf16.xpose.msra.mxu0 0
        %7944 = vmatpush.bf16.xpose.msra.mxu0 0
        %7945 = vmatpush.bf16.xpose.msra.mxu0 0
        %7946 = vmatpush.bf16.xpose.msra.mxu0 0
        %7947 = vmatpush.bf16.xpose.msra.mxu0 0
        %7948 = vmatpush.bf16.xpose.msra.mxu0 %v3916
        %7949 = vmatpush.bf16.xpose.msra.mxu0 %v3622
        %7950 = vmatmul.bf16.gmra.mxu0 %v1262
        %v7951 = vpop.f32.mrf.mxu0
        %v7952 = vadd.f32 %v7939, %v7951
        %v7953 = vpop.f32.mrf.mxu0
        %7954 = vdwg.mxu0
        %7955 = vmatpush.bf16.xpose.msra.mxu0 0
        %7956 = vmatpush.bf16.xpose.msra.mxu0 0
        %7957 = vmatpush.bf16.xpose.msra.mxu0 0
        %7958 = vmatpush.bf16.xpose.msra.mxu0 0
        %7959 = vmatpush.bf16.xpose.msra.mxu0 0
        %7960 = vmatpush.bf16.xpose.msra.mxu0 0
        %7961 = vmatpush.bf16.xpose.msra.mxu0 %v3917
        %7962 = vmatpush.bf16.xpose.msra.mxu0 %v3623
        %7963 = vmatmul.bf16.gmra.mxu0 %v1263
        %v7964 = vpop.f32.mrf.mxu0
        %v7965 = vadd.f32 %v7952, %v7964
        %v7966 = vpop.f32.mrf.mxu0
        %7967 = vdwg.mxu0
        %7968 = vmatpush.bf16.xpose.msra.mxu0 0
        %7969 = vmatpush.bf16.xpose.msra.mxu0 0
        %7970 = vmatpush.bf16.xpose.msra.mxu0 0
        %7971 = vmatpush.bf16.xpose.msra.mxu0 0
        %7972 = vmatpush.bf16.xpose.msra.mxu0 0
        %7973 = vmatpush.bf16.xpose.msra.mxu0 0
        %7974 = vmatpush.bf16.xpose.msra.mxu0 %v3918
        %7975 = vmatpush.bf16.xpose.msra.mxu0 %v3624
        %7976 = vmatmul.bf16.gmra.mxu0 %v1266
        %v7977 = vpop.f32.mrf.mxu0
        %v7978 = vadd.f32 %v7965, %v7977
        %v7979 = vpop.f32.mrf.mxu0
        %7980 = vdwg.mxu0
        %7981 = vmatpush.bf16.xpose.msra.mxu0 0
        %7982 = vmatpush.bf16.xpose.msra.mxu0 0
        %7983 = vmatpush.bf16.xpose.msra.mxu0 0
        %7984 = vmatpush.bf16.xpose.msra.mxu0 0
        %7985 = vmatpush.bf16.xpose.msra.mxu0 0
        %7986 = vmatpush.bf16.xpose.msra.mxu0 0
        %7987 = vmatpush.bf16.xpose.msra.mxu0 %v3919
        %7988 = vmatpush.bf16.xpose.msra.mxu0 %v3625
        %7989 = vmatmul.bf16.gmra.mxu0 %v1267
        %v7990 = vpop.f32.mrf.mxu0
        %v7991 = vadd.f32 %v7978, %v7990
        %v7992 = vpop.f32.mrf.mxu0
        %7993 = vdwg.mxu0
        %7994 = vmatpush.bf16.xpose.msra.mxu0 0
        %7995 = vmatpush.bf16.xpose.msra.mxu0 0
        %7996 = vmatpush.bf16.xpose.msra.mxu0 0
        %7997 = vmatpush.bf16.xpose.msra.mxu0 0
        %7998 = vmatpush.bf16.xpose.msra.mxu0 0
        %7999 = vmatpush.bf16.xpose.msra.mxu0 0
        %8000 = vmatpush.bf16.xpose.msra.mxu0 %v3920
        %8001 = vmatpush.bf16.xpose.msra.mxu0 %v3626
        %8002 = vmatmul.bf16.gmra.mxu0 %v1268
        %v8003 = vpop.f32.mrf.mxu0
        %v8004 = vadd.f32 %v7991, %v8003
        %v8005 = vpop.f32.mrf.mxu0
        %8006 = vdwg.mxu0
        %8007 = vmatpush.bf16.xpose.msra.mxu0 0
        %8008 = vmatpush.bf16.xpose.msra.mxu0 0
        %8009 = vmatpush.bf16.xpose.msra.mxu0 0
        %8010 = vmatpush.bf16.xpose.msra.mxu0 0
        %8011 = vmatpush.bf16.xpose.msra.mxu0 0
        %8012 = vmatpush.bf16.xpose.msra.mxu0 0
        %8013 = vmatpush.bf16.xpose.msra.mxu0 %v3921
        %8014 = vmatpush.bf16.xpose.msra.mxu0 %v3627
        %8015 = vmatmul.bf16.gmra.mxu0 %v1269
        %v8016 = vpop.f32.mrf.mxu0
        %v8017 = vadd.f32 %v8004, %v8016
        %v8018 = vpop.f32.mrf.mxu0
        %8019 = vdwg.mxu0
        %8020 = vmatpush.bf16.xpose.msra.mxu0 0
        %8021 = vmatpush.bf16.xpose.msra.mxu0 0
        %8022 = vmatpush.bf16.xpose.msra.mxu0 0
        %8023 = vmatpush.bf16.xpose.msra.mxu0 0
        %8024 = vmatpush.bf16.xpose.msra.mxu0 0
        %8025 = vmatpush.bf16.xpose.msra.mxu0 0
        %8026 = vmatpush.bf16.xpose.msra.mxu0 %v3922
        %8027 = vmatpush.bf16.xpose.msra.mxu0 %v3628
        %8028 = vmatmul.bf16.gmra.mxu0 %v1270
        %v8029 = vpop.f32.mrf.mxu0
        %v8030 = vadd.f32 %v8017, %v8029
        %v8031 = vpop.f32.mrf.mxu0
        %8032 = vdwg.mxu0
        %8033 = vmatpush.bf16.xpose.msra.mxu0 0
        %8034 = vmatpush.bf16.xpose.msra.mxu0 0
        %8035 = vmatpush.bf16.xpose.msra.mxu0 0
        %8036 = vmatpush.bf16.xpose.msra.mxu0 0
        %8037 = vmatpush.bf16.xpose.msra.mxu0 0
        %8038 = vmatpush.bf16.xpose.msra.mxu0 0
        %8039 = vmatpush.bf16.xpose.msra.mxu0 %v3923
        %8040 = vmatpush.bf16.xpose.msra.mxu0 %v3629
        %8041 = vmatmul.bf16.gmra.mxu0 %v1271
        %v8042 = vpop.f32.mrf.mxu0
        %v8043 = vadd.f32 %v8030, %v8042
        %v8044 = vpop.f32.mrf.mxu0
        %8045 = vdwg.mxu0
        %8046 = vmatpush.bf16.xpose.msra.mxu0 0
        %8047 = vmatpush.bf16.xpose.msra.mxu0 0
        %8048 = vmatpush.bf16.xpose.msra.mxu0 0
        %8049 = vmatpush.bf16.xpose.msra.mxu0 0
        %8050 = vmatpush.bf16.xpose.msra.mxu0 0
        %8051 = vmatpush.bf16.xpose.msra.mxu0 0
        %8052 = vmatpush.bf16.xpose.msra.mxu0 %v3924
        %8053 = vmatpush.bf16.xpose.msra.mxu0 %v3630
        %8054 = vmatmul.bf16.gmra.mxu0 %v1272
        %v8055 = vpop.f32.mrf.mxu0
        %v8056 = vadd.f32 %v8043, %v8055
        %v8057 = vpop.f32.mrf.mxu0
        %8058 = vdwg.mxu0
        %8059 = vmatpush.bf16.xpose.msra.mxu0 0
        %8060 = vmatpush.bf16.xpose.msra.mxu0 0
        %8061 = vmatpush.bf16.xpose.msra.mxu0 0
        %8062 = vmatpush.bf16.xpose.msra.mxu0 0
        %8063 = vmatpush.bf16.xpose.msra.mxu0 0
        %8064 = vmatpush.bf16.xpose.msra.mxu0 0
        %8065 = vmatpush.bf16.xpose.msra.mxu0 %v3925
        %8066 = vmatpush.bf16.xpose.msra.mxu0 %v3631
        %8067 = vmatmul.bf16.gmra.mxu0 %v1273
        %v8068 = vpop.f32.mrf.mxu0
        %v8069 = vadd.f32 %v8056, %v8068
        %v8070 = vpop.f32.mrf.mxu0
        %8071 = vdwg.mxu0
        %8072 = vmatpush.bf16.xpose.msra.mxu0 0
        %8073 = vmatpush.bf16.xpose.msra.mxu0 0
        %8074 = vmatpush.bf16.xpose.msra.mxu0 0
        %8075 = vmatpush.bf16.xpose.msra.mxu0 0
        %8076 = vmatpush.bf16.xpose.msra.mxu0 0
        %8077 = vmatpush.bf16.xpose.msra.mxu0 0
        %8078 = vmatpush.bf16.xpose.msra.mxu0 %v3926
        %8079 = vmatpush.bf16.xpose.msra.mxu0 %v3632
        %8080 = vmatmul.bf16.gmra.mxu0 %v1276
        %v8081 = vpop.f32.mrf.mxu0
        %v8082 = vadd.f32 %v8069, %v8081
        %v8083 = vpop.f32.mrf.mxu0
        %8084 = vdwg.mxu0
        %8085 = vmatpush.bf16.xpose.msra.mxu0 0
        %8086 = vmatpush.bf16.xpose.msra.mxu0 0
        %8087 = vmatpush.bf16.xpose.msra.mxu0 0
        %8088 = vmatpush.bf16.xpose.msra.mxu0 0
        %8089 = vmatpush.bf16.xpose.msra.mxu0 0
        %8090 = vmatpush.bf16.xpose.msra.mxu0 0
        %8091 = vmatpush.bf16.xpose.msra.mxu0 %v3927
        %8092 = vmatpush.bf16.xpose.msra.mxu0 %v3633
        %8093 = vmatmul.bf16.gmra.mxu0 %v1277
        %v8094 = vpop.f32.mrf.mxu0
        %v8095 = vadd.f32 %v8082, %v8094
        %v8096 = vpop.f32.mrf.mxu0
        %8097 = vdwg.mxu0
        %8098 = vmatpush.bf16.xpose.msra.mxu0 0
        %8099 = vmatpush.bf16.xpose.msra.mxu0 0
        %8100 = vmatpush.bf16.xpose.msra.mxu0 0
        %8101 = vmatpush.bf16.xpose.msra.mxu0 0
        %8102 = vmatpush.bf16.xpose.msra.mxu0 0
        %8103 = vmatpush.bf16.xpose.msra.mxu0 0
        %8104 = vmatpush.bf16.xpose.msra.mxu0 %v3928
        %8105 = vmatpush.bf16.xpose.msra.mxu0 %v3634
        %8106 = vmatmul.bf16.gmra.mxu0 %v1278
        %v8107 = vpop.f32.mrf.mxu0
        %v8108 = vadd.f32 %v8095, %v8107
        %v8109 = vpop.f32.mrf.mxu0
        %8110 = vdwg.mxu0
        %8111 = vmatpush.bf16.xpose.msra.mxu0 0
        %8112 = vmatpush.bf16.xpose.msra.mxu0 0
        %8113 = vmatpush.bf16.xpose.msra.mxu0 0
        %8114 = vmatpush.bf16.xpose.msra.mxu0 0
        %8115 = vmatpush.bf16.xpose.msra.mxu0 0
        %8116 = vmatpush.bf16.xpose.msra.mxu0 0
        %8117 = vmatpush.bf16.xpose.msra.mxu0 %v3929
        %8118 = vmatpush.bf16.xpose.msra.mxu0 %v3635
        %8119 = vmatmul.bf16.gmra.mxu0 %v1279
        %v8120 = vpop.f32.mrf.mxu0
        %v8121 = vadd.f32 %v8108, %v8120
        %v8122 = vpop.f32.mrf.mxu0
        %8123 = vdwg.mxu0
        %8124 = vmatpush.bf16.xpose.msra.mxu0 0
        %8125 = vmatpush.bf16.xpose.msra.mxu0 0
        %8126 = vmatpush.bf16.xpose.msra.mxu0 0
        %8127 = vmatpush.bf16.xpose.msra.mxu0 0
        %8128 = vmatpush.bf16.xpose.msra.mxu0 0
        %8129 = vmatpush.bf16.xpose.msra.mxu0 0
        %8130 = vmatpush.bf16.xpose.msra.mxu0 %v3930
        %8131 = vmatpush.bf16.xpose.msra.mxu0 %v3636
        %8132 = vmatmul.bf16.gmra.mxu0 %v1280
        %v8133 = vpop.f32.mrf.mxu0
        %v8134 = vadd.f32 %v8121, %v8133
        %v8135 = vpop.f32.mrf.mxu0
        %8136 = vdwg.mxu0
        %8137 = vmatpush.bf16.xpose.msra.mxu0 0
        %8138 = vmatpush.bf16.xpose.msra.mxu0 0
        %8139 = vmatpush.bf16.xpose.msra.mxu0 0
        %8140 = vmatpush.bf16.xpose.msra.mxu0 0
        %8141 = vmatpush.bf16.xpose.msra.mxu0 0
        %8142 = vmatpush.bf16.xpose.msra.mxu0 0
        %8143 = vmatpush.bf16.xpose.msra.mxu0 %v3931
        %8144 = vmatpush.bf16.xpose.msra.mxu0 %v3637
        %8145 = vmatmul.bf16.gmra.mxu0 %v1281
        %v8146 = vpop.f32.mrf.mxu0
        %v8147 = vadd.f32 %v8134, %v8146
        %v8148 = vpop.f32.mrf.mxu0
        %8149 = vdwg.mxu0
        %8150 = vmatpush.bf16.xpose.msra.mxu0 0
        %8151 = vmatpush.bf16.xpose.msra.mxu0 0
        %8152 = vmatpush.bf16.xpose.msra.mxu0 0
        %8153 = vmatpush.bf16.xpose.msra.mxu0 0
        %8154 = vmatpush.bf16.xpose.msra.mxu0 0
        %8155 = vmatpush.bf16.xpose.msra.mxu0 0
        %8156 = vmatpush.bf16.xpose.msra.mxu0 %v3932
        %8157 = vmatpush.bf16.xpose.msra.mxu0 %v3638
        %8158 = vmatmul.bf16.gmra.mxu0 %v1282
        %v8159 = vpop.f32.mrf.mxu0
        %v8160 = vadd.f32 %v8147, %v8159
        %v8161 = vpop.f32.mrf.mxu0
        %8162 = vdwg.mxu0
        %8163 = vmatpush.bf16.xpose.msra.mxu0 0
        %8164 = vmatpush.bf16.xpose.msra.mxu0 0
        %8165 = vmatpush.bf16.xpose.msra.mxu0 0
        %8166 = vmatpush.bf16.xpose.msra.mxu0 0
        %8167 = vmatpush.bf16.xpose.msra.mxu0 0
        %8168 = vmatpush.bf16.xpose.msra.mxu0 0
        %8169 = vmatpush.bf16.xpose.msra.mxu0 %v3933
        %8170 = vmatpush.bf16.xpose.msra.mxu0 %v3639
        %8171 = vmatmul.bf16.gmra.mxu0 %v1283
        %v8172 = vpop.f32.mrf.mxu0
        %v8173 = vadd.f32 %v8160, %v8172
        %v8174 = vpop.f32.mrf.mxu0
        %8175 = vdwg.mxu0
        %8176 = vmatpush.bf16.xpose.msra.mxu0 0
        %8177 = vmatpush.bf16.xpose.msra.mxu0 0
        %8178 = vmatpush.bf16.xpose.msra.mxu0 0
        %8179 = vmatpush.bf16.xpose.msra.mxu0 0
        %8180 = vmatpush.bf16.xpose.msra.mxu0 0
        %8181 = vmatpush.bf16.xpose.msra.mxu0 0
        %8182 = vmatpush.bf16.xpose.msra.mxu0 %v3934
        %8183 = vmatpush.bf16.xpose.msra.mxu0 %v3640
        %8184 = vmatmul.bf16.gmra.mxu0 %v1286
        %v8185 = vpop.f32.mrf.mxu0
        %v8186 = vadd.f32 %v8173, %v8185
        %v8187 = vpop.f32.mrf.mxu0
        %8188 = vdwg.mxu0
        %8189 = vmatpush.bf16.xpose.msra.mxu0 0
        %8190 = vmatpush.bf16.xpose.msra.mxu0 0
        %8191 = vmatpush.bf16.xpose.msra.mxu0 0
        %8192 = vmatpush.bf16.xpose.msra.mxu0 0
        %8193 = vmatpush.bf16.xpose.msra.mxu0 0
        %8194 = vmatpush.bf16.xpose.msra.mxu0 0
        %8195 = vmatpush.bf16.xpose.msra.mxu0 %v3935
        %8196 = vmatpush.bf16.xpose.msra.mxu0 %v3641
        %8197 = vmatmul.bf16.gmra.mxu0 %v1287
        %v8198 = vpop.f32.mrf.mxu0
        %v8199 = vadd.f32 %v8186, %v8198
        %v8200 = vpop.f32.mrf.mxu0
        %8201 = vdwg.mxu0
        %8202 = vmatpush.bf16.xpose.msra.mxu0 0
        %8203 = vmatpush.bf16.xpose.msra.mxu0 0
        %8204 = vmatpush.bf16.xpose.msra.mxu0 0
        %8205 = vmatpush.bf16.xpose.msra.mxu0 0
        %8206 = vmatpush.bf16.xpose.msra.mxu0 0
        %8207 = vmatpush.bf16.xpose.msra.mxu0 0
        %8208 = vmatpush.bf16.xpose.msra.mxu0 %v3936
        %8209 = vmatpush.bf16.xpose.msra.mxu0 %v3642
        %8210 = vmatmul.bf16.gmra.mxu0 %v1288
        %v8211 = vpop.f32.mrf.mxu0
        %v8212 = vadd.f32 %v8199, %v8211
        %v8213 = vpop.f32.mrf.mxu0
        %8214 = vdwg.mxu0
        %8215 = vmatpush.bf16.xpose.msra.mxu0 0
        %8216 = vmatpush.bf16.xpose.msra.mxu0 0
        %8217 = vmatpush.bf16.xpose.msra.mxu0 0
        %8218 = vmatpush.bf16.xpose.msra.mxu0 0
        %8219 = vmatpush.bf16.xpose.msra.mxu0 0
        %8220 = vmatpush.bf16.xpose.msra.mxu0 0
        %8221 = vmatpush.bf16.xpose.msra.mxu0 %v3937
        %8222 = vmatpush.bf16.xpose.msra.mxu0 %v3643
        %8223 = vmatmul.bf16.gmra.mxu0 %v1289
        %v8224 = vpop.f32.mrf.mxu0
        %v8225 = vadd.f32 %v8212, %v8224
        %v8226 = vpop.f32.mrf.mxu0
        %8227 = vdwg.mxu0
        %8228 = vmatpush.bf16.xpose.msra.mxu0 0
        %8229 = vmatpush.bf16.xpose.msra.mxu0 0
        %8230 = vmatpush.bf16.xpose.msra.mxu0 0
        %8231 = vmatpush.bf16.xpose.msra.mxu0 0
        %8232 = vmatpush.bf16.xpose.msra.mxu0 0
        %8233 = vmatpush.bf16.xpose.msra.mxu0 0
        %8234 = vmatpush.bf16.xpose.msra.mxu0 %v3938
        %8235 = vmatpush.bf16.xpose.msra.mxu0 %v3644
        %8236 = vmatmul.bf16.gmra.mxu0 %v1290
        %v8237 = vpop.f32.mrf.mxu0
        %v8238 = vadd.f32 %v8225, %v8237
        %v8239 = vpop.f32.mrf.mxu0
        %8240 = vdwg.mxu0
        %8241 = vmatpush.bf16.xpose.msra.mxu0 0
        %8242 = vmatpush.bf16.xpose.msra.mxu0 0
        %8243 = vmatpush.bf16.xpose.msra.mxu0 0
        %8244 = vmatpush.bf16.xpose.msra.mxu0 0
        %8245 = vmatpush.bf16.xpose.msra.mxu0 0
        %8246 = vmatpush.bf16.xpose.msra.mxu0 0
        %8247 = vmatpush.bf16.xpose.msra.mxu0 %v3939
        %8248 = vmatpush.bf16.xpose.msra.mxu0 %v3645
        %8249 = vmatmul.bf16.gmra.mxu0 %v1291
        %v8250 = vpop.f32.mrf.mxu0
        %v8251 = vadd.f32 %v8238, %v8250
        %v8252 = vpop.f32.mrf.mxu0
        %8253 = vdwg.mxu0
        %8254 = vmatpush.bf16.xpose.msra.mxu0 0
        %8255 = vmatpush.bf16.xpose.msra.mxu0 0
        %8256 = vmatpush.bf16.xpose.msra.mxu0 0
        %8257 = vmatpush.bf16.xpose.msra.mxu0 0
        %8258 = vmatpush.bf16.xpose.msra.mxu0 0
        %8259 = vmatpush.bf16.xpose.msra.mxu0 0
        %8260 = vmatpush.bf16.xpose.msra.mxu0 %v3940
        %8261 = vmatpush.bf16.xpose.msra.mxu0 %v3646
        %8262 = vmatmul.bf16.gmra.mxu0 %v1292
        %v8263 = vpop.f32.mrf.mxu0
        %v8264 = vadd.f32 %v8251, %v8263
        %v8265 = vpop.f32.mrf.mxu0
        %8266 = vdwg.mxu0
        %8267 = vmatpush.bf16.xpose.msra.mxu0 0
        %8268 = vmatpush.bf16.xpose.msra.mxu0 0
        %8269 = vmatpush.bf16.xpose.msra.mxu0 0
        %8270 = vmatpush.bf16.xpose.msra.mxu0 0
        %8271 = vmatpush.bf16.xpose.msra.mxu0 0
        %8272 = vmatpush.bf16.xpose.msra.mxu0 0
        %8273 = vmatpush.bf16.xpose.msra.mxu0 %v3941
        %8274 = vmatpush.bf16.xpose.msra.mxu0 %v3647
        %8275 = vmatmul.bf16.gmra.mxu0 %v1293
        %v8276 = vpop.f32.mrf.mxu0
        %v8277 = vadd.f32 %v8264, %v8276
        %v8278 = vpop.f32.mrf.mxu0
        %8279 = vdwg.mxu0
        %8280 = vmatpush.bf16.xpose.msra.mxu0 0
        %8281 = vmatpush.bf16.xpose.msra.mxu0 0
        %8282 = vmatpush.bf16.xpose.msra.mxu0 0
        %8283 = vmatpush.bf16.xpose.msra.mxu0 0
        %8284 = vmatpush.bf16.xpose.msra.mxu0 0
        %8285 = vmatpush.bf16.xpose.msra.mxu0 0
        %8286 = vmatpush.bf16.xpose.msra.mxu0 %v3942
        %8287 = vmatpush.bf16.xpose.msra.mxu0 %v3648
        %8288 = vmatmul.bf16.gmra.mxu0 %v1296
        %v8289 = vpop.f32.mrf.mxu0
        %v8290 = vadd.f32 %v8277, %v8289
        %v8291 = vpop.f32.mrf.mxu0
        %8292 = vdwg.mxu0
        %8293 = vmatpush.bf16.xpose.msra.mxu0 0
        %8294 = vmatpush.bf16.xpose.msra.mxu0 0
        %8295 = vmatpush.bf16.xpose.msra.mxu0 0
        %8296 = vmatpush.bf16.xpose.msra.mxu0 0
        %8297 = vmatpush.bf16.xpose.msra.mxu0 0
        %8298 = vmatpush.bf16.xpose.msra.mxu0 0
        %8299 = vmatpush.bf16.xpose.msra.mxu0 %v3943
        %8300 = vmatpush.bf16.xpose.msra.mxu0 %v3649
        %8301 = vmatmul.bf16.gmra.mxu0 %v1297
        %v8302 = vpop.f32.mrf.mxu0
        %v8303 = vadd.f32 %v8290, %v8302
        %v8304 = vpop.f32.mrf.mxu0
        %8305 = vdwg.mxu0
        %8306 = vmatpush.bf16.xpose.msra.mxu0 0
        %8307 = vmatpush.bf16.xpose.msra.mxu0 0
        %8308 = vmatpush.bf16.xpose.msra.mxu0 0
        %8309 = vmatpush.bf16.xpose.msra.mxu0 0
        %8310 = vmatpush.bf16.xpose.msra.mxu0 0
        %8311 = vmatpush.bf16.xpose.msra.mxu0 0
        %8312 = vmatpush.bf16.xpose.msra.mxu0 %v3944
        %8313 = vmatpush.bf16.xpose.msra.mxu0 %v3650
        %8314 = vmatmul.bf16.gmra.mxu0 %v1298
        %v8315 = vpop.f32.mrf.mxu0
        %v8316 = vadd.f32 %v8303, %v8315
        %v8317 = vpop.f32.mrf.mxu0
        %8318 = vdwg.mxu0
        %8319 = vmatpush.bf16.xpose.msra.mxu0 0
        %8320 = vmatpush.bf16.xpose.msra.mxu0 0
        %8321 = vmatpush.bf16.xpose.msra.mxu0 0
        %8322 = vmatpush.bf16.xpose.msra.mxu0 0
        %8323 = vmatpush.bf16.xpose.msra.mxu0 0
        %8324 = vmatpush.bf16.xpose.msra.mxu0 0
        %8325 = vmatpush.bf16.xpose.msra.mxu0 %v3945
        %8326 = vmatpush.bf16.xpose.msra.mxu0 %v3651
        %8327 = vmatmul.bf16.gmra.mxu0 %v1299
        %v8328 = vpop.f32.mrf.mxu0
        %v8329 = vadd.f32 %v8316, %v8328
        %v8330 = vpop.f32.mrf.mxu0
        %8331 = vdwg.mxu0
        %8332 = vmatpush.bf16.xpose.msra.mxu0 0
        %8333 = vmatpush.bf16.xpose.msra.mxu0 0
        %8334 = vmatpush.bf16.xpose.msra.mxu0 0
        %8335 = vmatpush.bf16.xpose.msra.mxu0 0
        %8336 = vmatpush.bf16.xpose.msra.mxu0 0
        %8337 = vmatpush.bf16.xpose.msra.mxu0 0
        %8338 = vmatpush.bf16.xpose.msra.mxu0 %v3946
        %8339 = vmatpush.bf16.xpose.msra.mxu0 %v3652
        %8340 = vmatmul.bf16.gmra.mxu0 %v1300
        %v8341 = vpop.f32.mrf.mxu0
        %v8342 = vadd.f32 %v8329, %v8341
        %v8343 = vpop.f32.mrf.mxu0
        %8344 = vdwg.mxu0
        %8345 = vmatpush.bf16.xpose.msra.mxu0 0
        %8346 = vmatpush.bf16.xpose.msra.mxu0 0
        %8347 = vmatpush.bf16.xpose.msra.mxu0 0
        %8348 = vmatpush.bf16.xpose.msra.mxu0 0
        %8349 = vmatpush.bf16.xpose.msra.mxu0 0
        %8350 = vmatpush.bf16.xpose.msra.mxu0 0
        %8351 = vmatpush.bf16.xpose.msra.mxu0 %v3947
        %8352 = vmatpush.bf16.xpose.msra.mxu0 %v3653
        %8353 = vmatmul.bf16.gmra.mxu0 %v1301
        %v8354 = vpop.f32.mrf.mxu0
        %v8355 = vadd.f32 %v8342, %v8354
        %v8356 = vpop.f32.mrf.mxu0
        %8357 = vdwg.mxu0
        %v8358 = vadd.f32 %v308, %v8355
        %vm8359 = vcmask 254976
        %8360 = vst.msk [vmem:[%s291] sm:$0x3] %vm8359, %v8358
        // Predicated region
        $region49: #{tpu_custom_call.1} parent=31 // pred_check
          %p8361 = pneg %p302
        $region50: #{tpu_custom_call.1} parent=31 // pred_check_branch
          %8363 = sbr.rel (%p8361) target = $region52
        $region51: #{tpu_custom_call.1} parent=31 // pred_region
          %v8364 = vld [vmem:[%s291] sm:$0x3]
          %v8365 = vld [vmem:[%s264] sm:$0x1]
          %v8367 = vperm.slane %v8365, 0
          %v8369 = vadd.f32 %v8364, %v8367
          %8370 = vst.msk [vmem:[%s291] sm:$0x3] %vm8359, %v8369
          %v8371 = vmul.f32 %v8369, 1.442695
          %v8372 = vpow.pop %v8371
          %8373 = vst.msk [vmem:[%s298] sm:$0x3] %vm8359, %v8372
        $region52: #{tpu_custom_call.1} parent=31 // pred_fallthru
          _
        %s8374 = sand.u32 %s126, 1
        %s8375 = scalar_lea.sflag [#allocation4], %s8374
        %s8376 = sand.u32 %s126, 1
        %s8377 = smul.addr %s8376, 2
        %s8378 = scalar_lea.vmem [#allocation8], %s8377
        %s8379 = sand.u32 %s152, 1
        %s8380 = scalar_lea.sflag [#allocation10], %s8379
        %s8381 = sand.u32 %s152, 1
        %s8382 = smul.addr %s8381, 2
        %s8383 = scalar_lea.vmem [#allocation9], %s8382
        // Predicated region
        $region53: #{tpu_custom_call.1} parent=31 // pred_check
          %p8384 = pneg %p136
        $region54: #{tpu_custom_call.1} parent=31 // pred_check_branch
          %8386 = sbr.rel (%p8384) target = $region56
        $region55: #{tpu_custom_call.1} parent=31 // pred_region
          %8388 = vsyncadd %s8375, 0
          %s8389 = smul.addr %s30, 2
          %s8390 = scalar_lea.hbm %s3, %s8389
          %s8392 = sshll.u32 %s8378, 4
          %s8393 = int_to_ptr.vmem [resolvable:$true] %s8392
          %s8394 = sshll.u32 %s8390, 4
          %s8395 = int_to_ptr.hbm [resolvable:$true] %s8394
          %8397 = dma.vmem_to_hbm [thread:$0]  %s8393, 32, %s8395, %s8375
        $region56: #{tpu_custom_call.1} parent=31 // pred_fallthru
          _
        // Predicated region
        $region57: #{tpu_custom_call.1} parent=31 // pred_check
          %p8398 = pneg %p162
        $region58: #{tpu_custom_call.1} parent=31 // pred_check_branch
          %8400 = sbr.rel (%p8398) target = $region60
        $region59: #{tpu_custom_call.1} parent=31 // pred_region
          %8402 = vsyncadd %s8380, 0
          %s8403 = smul.addr %s30, 2
          %s8404 = scalar_lea.hbm %s4, %s8403
          %s8406 = sshll.u32 %s8383, 4
          %s8407 = int_to_ptr.vmem [resolvable:$true] %s8406
          %s8408 = sshll.u32 %s8404, 4
          %s8409 = int_to_ptr.hbm [resolvable:$true] %s8408
          %8411 = dma.vmem_to_hbm [thread:$0]  %s8407, 32, %s8409, %s8380
        $region60: #{tpu_custom_call.1} parent=31 // pred_fallthru
          _
      $region32: #{tpu_custom_call.1} parent=5 // pred_fallthru
        _
      %p8412 = scmp.le.s32.totalorder 2, %s21
      // Predicated region
      $region61: #{tpu_custom_call.1} parent=5 // pred_check
        %p8413 = pneg %p8412
      $region62: #{tpu_custom_call.1} parent=5 // pred_check_branch
        %8415 = sbr.rel (%p8413) target = $region64
      $region63: #{tpu_custom_call.1} parent=5 // pred_region
        %s8416 = ssub.s32 %s21, 2
        // Predicated region
        $region65: #{tpu_custom_call.1} parent=63 // pred_check
          %p8417 = pneg %p142
        $region66: #{tpu_custom_call.1} parent=63 // pred_check_branch
          %8419 = sbr.rel (%p8417) target = $region68
        $region67: #{tpu_custom_call.1} parent=63 // pred_region
          %s8420 = sand.u32 %s127, 1
          %s8421 = scalar_lea.sflag [#allocation4], %s8420
          %s8422 = sand.u32 %s127, 1
          %s8423 = smul.addr %s8422, 2
          %s8424 = scalar_lea.vmem [#allocation8], %s8423
          %8426 = dma.done %s8421, 32
        $region68: #{tpu_custom_call.1} parent=63 // pred_fallthru
          _
        // Predicated region
        $region69: #{tpu_custom_call.1} parent=63 // pred_check
          %p8427 = pneg %p168
        $region70: #{tpu_custom_call.1} parent=63 // pred_check_branch
          %8429 = sbr.rel (%p8427) target = $region72
        $region71: #{tpu_custom_call.1} parent=63 // pred_region
          %s8430 = sand.u32 %s153, 1
          %s8431 = scalar_lea.sflag [#allocation10], %s8430
          %s8432 = sand.u32 %s153, 1
          %s8433 = smul.addr %s8432, 2
          %s8434 = scalar_lea.vmem [#allocation9], %s8433
          %8436 = dma.done %s8431, 32
        $region72: #{tpu_custom_call.1} parent=63 // pred_fallthru
          _
      $region64: #{tpu_custom_call.1} parent=5 // pred_fallthru
        _
    $region6: #{tpu_custom_call.1} parent=1 // loop_footer
      %s25 = sadd.s32 1, %s21
    $region7: #{tpu_custom_call.1} parent=1 // loop_footer_branch
      %20 = sbr.rel target = $region3
    $region8: #{tpu_custom_call.1} parent=1 // loop_exit
      _
    %8437 = vsyncpa [#allocation3], 1
    %s8438 = scalar_lea.sflag [#allocation3], 1
    %8439 = vsyncpa %s8438, 1
    %8440 = vsyncpa [#allocation6], 1
    %s8441 = scalar_lea.sflag [#allocation6], 1
    %8442 = vsyncpa %s8441, 1
    %8443 = vsyncpa [#allocation4], 1
    %s8444 = scalar_lea.sflag [#allocation4], 1
    %8445 = vsyncpa %s8444, 1
    %8446 = vsyncpa [#allocation10], 1
    %s8447 = scalar_lea.sflag [#allocation10], 1
    %8448 = vsyncpa %s8447, 1

</llo_original>
